<compile_context>
chip_gen: v7x
topology: tpu7x:2x2x1
jax: 0.10.0
libtpu: 0.0.40
codegen_flags: <defaults>
</compile_context>

<pallas_src>
import math
import functools

import jax
import jax.numpy as jnp
from jax.experimental import pallas as pl
from jax.experimental.pallas import tpu as pltpu

WINDOW_SIZE = 11
SIGMA = 1.5
PAD = WINDOW_SIZE // 2
C1 = 0.01 ** 2
C2 = 0.03 ** 2
MAX_BT = 16     # hard cap on images / grid step (bounds the unrolled vertical loop)
MXU_ROWS = 256  # v6e/v7x MXU rows (128 on v5e; 256 is a fine fill target there too)


def gaussian_1d(window_size, sigma):
    g = [math.exp(-((x - window_size // 2) ** 2) / float(2 * sigma ** 2))
         for x in range(window_size)]
    s = sum(g)
    return [v / s for v in g]


# deterministic "parameter" (the normalized Gaussian window)
W1D = gaussian_1d(WINDOW_SIZE, SIGMA)


def _band_matrix(n):
    """Banded Gaussian operator M (n,n): M[i, k] = w[k - i + PAD] for |k-i|<=PAD.

    (M @ X) is the zero-padded vertical 1-D blur of X and (X @ M) the zero-padded
    horizontal blur — the Gaussian window is symmetric, so the SAME matrix serves
    as both the left and the right operator (no transpose needed).  The clipped
    band at the edges is exactly F.conv2d's zero padding.
    """
    w = jnp.asarray(W1D, jnp.float32)
    idx = jnp.arange(n)
    d = idx[None, :] - idx[:, None]          # d[i, k] = k - i
    taps = w[jnp.clip(d + PAD, 0, WINDOW_SIZE - 1)]
    return jnp.where(jnp.abs(d) <= PAD, taps, 0.0).astype(jnp.float32)


def _split_bf16(x):
    """Two-limb bf16 split of an f32 array: x ~= hi + lo (hi = bf16(x))."""
    hi = x.astype(jnp.bfloat16)
    lo = (x - hi.astype(jnp.float32)).astype(jnp.bfloat16)
    return hi, lo


def _ssim_kernel(i1_ref, i2_ref, bh_hi_ref, bh_lo_ref, bw_hi_ref, bw_lo_ref,
                 out_ref, *, bt, h, w):
    """One batch tile of bt images per grid step.

    i1_ref, i2_ref:       (bt, H, W) f32
    bh_hi/lo_ref:         (H, H) bf16  precomputed limbs of the vertical operator
    bw_hi/lo_ref:         (W, W) bf16  precomputed limbs of the horizontal operator
    out_ref:              (1, bt, W) f32 per-image column sums of the SSIM map
    """
    x1 = i1_ref[...]
    x2 = i2_ref[...]

    bh_hi = bh_hi_ref[...]   # rank-2, never broadcast / replicated per image
    bh_lo = bh_lo_ref[...]
    bw_hi = bw_hi_ref[...]
    bw_lo = bw_lo_ref[...]

    def mm(a, b):
        return jnp.dot(a, b, preferred_element_type=jnp.float32)

    def blur(m):
        # Zero-padded separable 11x11 Gaussian blur:  Bh @ m @ Bw  (per image).
        # Horizontal pass: one flattened (bt*H, W) @ (W, W) matmul (M = bt*H).
        # Vertical pass:   bt rank-2 (H, H) @ (H, W) matmuls (static unroll).
        # 3-pass bf16 limb product per pass (~f32 accuracy; lo@lo term ~1e-6 rel
        # is intentionally dropped — keep it that way, sigma cancellation below).
        m_hi, m_lo = _split_bf16(m.reshape(bt * h, w))
        t = mm(m_hi, bw_hi) + mm(m_hi, bw_lo) + mm(m_lo, bw_hi)      # (bt*H, W)
        t_hi, t_lo = _split_bf16(t.reshape(bt, h, w))
        cols = [mm(bh_hi, t_hi[b]) + mm(bh_lo, t_hi[b]) + mm(bh_hi, t_lo[b])
                for b in range(bt)]
        return jnp.stack(cols, axis=0)                               # (bt, H, W)

    mu1 = blur(x1)
    mu2 = blur(x2)
    s11 = blur(x1 * x1)
    s22 = blur(x2 * x2)
    s12 = blur(x1 * x2)

    mu1_sq = mu1 * mu1
    mu2_sq = mu2 * mu2
    mu1_mu2 = mu1 * mu2
    sigma1_sq = s11 - mu1_sq
    sigma2_sq = s22 - mu2_sq
    sigma12 = s12 - mu1_mu2

    num = (2.0 * mu1_mu2 + C1) * (2.0 * sigma12 + C2)
    den = (mu1_sq + mu2_sq + C1) * (sigma1_sq + sigma2_sq + C2)

    # EUP reciprocal + one Newton step (2 VPU ops) ~= exact f32 divide, keeps the
    # divide off the VPU's critical path.
    r = pl.reciprocal(den, approx=True)
    r = r * (2.0 - den * r)
    ssim_map = num * r                                               # (bt, H, W)

    # Lane-dense per-image partial sums: reduce H (sublanes), keep W on lanes.
    out_ref[...] = jnp.sum(ssim_map, axis=1).reshape(1, bt, w)


def _pick_tiling(B, H, W):
    """VMEM-budget-aware batch-tile selection (per TPU generation)."""
    try:
        vmem_cap = int(pltpu.get_tpu_info().vmem_capacity_bytes)
    except Exception:
        vmem_cap = 64 * 1024 * 1024          # conservative default (v7x per-core)
    vmem_budget = vmem_cap * 3 // 4          # ~48 MiB on v7x, ~96 MiB on v5e/v6e

    # Per-image working set per step: 2 inputs x 2 pipeline buffers + ~12
    # f32-equivalent temporaries (5 blurred maps, products, data limbs).
    per_img_bytes = 16 * H * W * 4
    op_bytes = 8 * (H * H + W * W)           # bf16 hi/lo operators, double-buffered
    bt_vmem = max(1, (vmem_budget - op_bytes) // per_img_bytes)

    bt_fill = -(-MXU_ROWS // H)              # images needed so M = bt*H fills MXU rows
    bt = int(max(1, min(B, bt_vmem, bt_fill, MAX_BT)))

    # Rebalance: smallest bt giving the same step count -> minimal batch padding,
    # and G >= 2 whenever B > bt (2-TC sharding of the "parallel" grid axis on v7x).
    G = -(-B // bt)
    bt = -(-B // G)

    vmem_limit = max(32 * 1024 * 1024, int(vmem_cap * 0.85))
    return int(bt), int(G), int(vmem_limit)


def ssim_pallas(img1, img2):
    """SSIM.forward equivalent. img1/img2: (N, C, H, W), C >= 3."""
    # the module slices to the first 3 channels (glue)
    img1 = img1[:, :3, :, :].astype(jnp.float32)
    img2 = img2[:, :3, :, :].astype(jnp.float32)
    N, C, H, W = img1.shape
    B = N * C

    # collapse (N, C) -> one batch axis; no spatial padding needed (the banded
    # operators implement the zero padding implicitly).
    x1 = img1.reshape(B, H, W)
    x2 = img2.reshape(B, H, W)

    bt, G, vmem_limit = _pick_tiling(B, H, W)
    Bp = G * bt
    pad_b = Bp - B
    if pad_b:   # padded images are dropped after the call
        x1 = jnp.pad(x1, ((0, pad_b), (0, 0), (0, 0)))
        x2 = jnp.pad(x2, ((0, pad_b), (0, 0), (0, 0)))

    # Precompute the bf16 hi/lo limbs of the rank-2 banded operators once in the
    # wrapper (review item 5); the Gaussian is symmetric so the same matrix works
    # as left (vertical) and right (horizontal) operator.
    bh = _band_matrix(H)
    bw = _band_matrix(W)
    bh_hi, bh_lo = _split_bf16(bh)
    bw_hi, bw_lo = _split_bf16(bw)

    kernel = functools.partial(_ssim_kernel, bt=bt, h=H, w=W)

    flops = G * (5 * 3 * 2 * bt * H * W * (H + W) + 45 * bt * H * W)
    bytes_accessed = 4 * 2 * Bp * H * W + G * 4 * (H * H + W * W) + 4 * Bp * W

    partial = pl.pallas_call(
        kernel,
        out_shape=jax.ShapeDtypeStruct((G, bt, W), jnp.float32),
        grid_spec=pltpu.PrefetchScalarGridSpec(
            num_scalar_prefetch=0,
            grid=(G,),
            in_specs=[
                pl.BlockSpec((bt, H, W), lambda g: (g, 0, 0)),
                pl.BlockSpec((bt, H, W), lambda g: (g, 0, 0)),
                pl.BlockSpec((H, H), lambda g: (0, 0)),
                pl.BlockSpec((H, H), lambda g: (0, 0)),
                pl.BlockSpec((W, W), lambda g: (0, 0)),
                pl.BlockSpec((W, W), lambda g: (0, 0)),
            ],
            out_specs=pl.BlockSpec((1, bt, W), lambda g: (g, 0, 0)),
        ),
        compiler_params=pltpu.CompilerParams(
            dimension_semantics=("parallel",),
            vmem_limit_bytes=int(vmem_limit)),
        cost_estimate=pl.CostEstimate(
            flops=int(flops), transcendentals=int(Bp * H * W),
            bytes_accessed=int(bytes_accessed)),
    )(x1, x2, bh_hi, bh_lo, bw_hi, bw_lo)

    # size_average=True -> mean over (N, 3, H, W); drop batch-padding images.
    per_img_cols = partial.reshape(Bp, W)[:B]
    return jnp.sum(per_img_cols) / jnp.float32(B * H * W)


def _ssim_reference(img1, img2):
    """Pure-JAX reference (true depthwise conv, full f32 precision)."""
    img1 = img1[:, :3, :, :].astype(jnp.float32)
    img2 = img2[:, :3, :, :].astype(jnp.float32)
    C = img1.shape[1]
    w1d = jnp.asarray(W1D, jnp.float32)
    w2d = jnp.outer(w1d, w1d)
    window = jnp.broadcast_to(w2d[None, None], (C, 1, WINDOW_SIZE, WINDOW_SIZE))

    def conv(x):
        return jax.lax.conv_general_dilated(
            x, window, window_strides=(1, 1),
            padding=[(PAD, PAD), (PAD, PAD)],
            dimension_numbers=("NCHW", "OIHW", "NCHW"),
            feature_group_count=C,
            precision=jax.lax.Precision.HIGHEST)

    mu1, mu2 = conv(img1), conv(img2)
    mu1_sq, mu2_sq, mu1_mu2 = mu1 * mu1, mu2 * mu2, mu1 * mu2
    sigma1_sq = conv(img1 * img1) - mu1_sq
    sigma2_sq = conv(img2 * img2) - mu2_sq
    sigma12 = conv(img1 * img2) - mu1_mu2
    ssim_map = ((2 * mu1_mu2 + C1) * (2 * sigma12 + C2)) / (
        (mu1_sq + mu2_sq + C1) * (sigma1_sq + sigma2_sq + C2))
    return ssim_map.mean()


if __name__ == "__main__":
    key = jax.random.PRNGKey(0)
    k1, k2 = jax.random.split(key)
    # small NCHW inputs; the module uses only the first 3 channels
    img1 = jax.random.uniform(k1, (2, 4, 16, 16), dtype=jnp.float32)
    img2 = jax.random.uniform(k2, (2, 4, 16, 16), dtype=jnp.float32)

    out = ssim_pallas(img1, img2)
    jax.block_until_ready(out)

    ref = _ssim_reference(img1, img2)
    jax.block_until_ready(ref)

    # The 3-pass bf16 MXU blur carries ~1e-5-level absolute error on the SSIM
    # mean (vs. exact f32); the approx reciprocal is Newton-refined to ~f32.
    assert jnp.allclose(out, ref, rtol=2e-3, atol=2e-4), (out, ref)

    print("KERNEL_OK")
</pallas_src>

<mosaic_0001>
module attributes {stable_mosaic.version = 11 : i64} {
  func.func @_ssim_kernel(%arg0: i32, %arg1: memref<6x16x16xf32, #tpu.memory_space<vmem>>, %arg2: memref<6x16x16xf32, #tpu.memory_space<vmem>>, %arg3: memref<16x16xbf16, #tpu.memory_space<vmem>>, %arg4: memref<16x16xbf16, #tpu.memory_space<vmem>>, %arg5: memref<16x16xbf16, #tpu.memory_space<vmem>>, %arg6: memref<16x16xbf16, #tpu.memory_space<vmem>>, %arg7: memref<1x6x16xf32, #tpu.memory_space<vmem>>) attributes {dimension_semantics = [#tpu.dimension_semantics<parallel>], iteration_bounds = array<i64: 1>, scalar_prefetch = 0 : i64, scratch_operands = 0 : i64, tpu.core_type = #tpu.core_type<tc>, window_params = [{transform_indices = @transform_0, window_bounds = array<i64: 6, 16, 16>}, {transform_indices = @transform_1, window_bounds = array<i64: 6, 16, 16>}, {pipeline_mode = #tpu.pipeline_mode<synchronous>, transform_indices = @transform_2, window_bounds = array<i64: 16, 16>}, {pipeline_mode = #tpu.pipeline_mode<synchronous>, transform_indices = @transform_3, window_bounds = array<i64: 16, 16>}, {pipeline_mode = #tpu.pipeline_mode<synchronous>, transform_indices = @transform_4, window_bounds = array<i64: 16, 16>}, {pipeline_mode = #tpu.pipeline_mode<synchronous>, transform_indices = @transform_5, window_bounds = array<i64: 16, 16>}, {transform_indices = @transform_6, window_bounds = array<i64: 1, 6, 16>}]} {
    %c0 = arith.constant 0 : index
    %c0_0 = arith.constant 0 : index
    %c0_1 = arith.constant 0 : index
    %0 = vector.load %arg1[%c0, %c0_0, %c0_1] : memref<6x16x16xf32, #tpu.memory_space<vmem>>, vector<6x16x16xf32>
    %c0_2 = arith.constant 0 : index
    %c0_3 = arith.constant 0 : index
    %c0_4 = arith.constant 0 : index
    %1 = vector.load %arg2[%c0_2, %c0_3, %c0_4] : memref<6x16x16xf32, #tpu.memory_space<vmem>>, vector<6x16x16xf32>
    %c0_5 = arith.constant 0 : index
    %c0_6 = arith.constant 0 : index
    %2 = vector.load %arg3[%c0_5, %c0_6] : memref<16x16xbf16, #tpu.memory_space<vmem>>, vector<16x16xbf16>
    %c0_7 = arith.constant 0 : index
    %c0_8 = arith.constant 0 : index
    %3 = vector.load %arg4[%c0_7, %c0_8] : memref<16x16xbf16, #tpu.memory_space<vmem>>, vector<16x16xbf16>
    %c0_9 = arith.constant 0 : index
    %c0_10 = arith.constant 0 : index
    %4 = vector.load %arg5[%c0_9, %c0_10] : memref<16x16xbf16, #tpu.memory_space<vmem>>, vector<16x16xbf16>
    %c0_11 = arith.constant 0 : index
    %c0_12 = arith.constant 0 : index
    %5 = vector.load %arg6[%c0_11, %c0_12] : memref<16x16xbf16, #tpu.memory_space<vmem>>, vector<16x16xbf16>
    %6 = vector.shape_cast %0 : vector<6x16x16xf32> to vector<96x16xf32>
    %7 = arith.truncf %6 : vector<96x16xf32> to vector<96x16xbf16>
    %8 = arith.extf %7 : vector<96x16xbf16> to vector<96x16xf32>
    %9 = arith.subf %6, %8 : vector<96x16xf32>
    %10 = arith.truncf %9 : vector<96x16xf32> to vector<96x16xbf16>
    %cst = arith.constant dense<0.000000e+00> : vector<96x16xf32>
    %11 = tpu.matmul %7, %4, %cst {dimension_numbers = #tpu.dot_dimension_numbers<[1], [0], [0], [1], [0, 0, 1, 1], [], []>} : vector<96x16xbf16>, vector<16x16xbf16>, vector<96x16xf32> -> vector<96x16xf32>
    %cst_13 = arith.constant dense<0.000000e+00> : vector<96x16xf32>
    %12 = tpu.matmul %7, %5, %cst_13 {dimension_numbers = #tpu.dot_dimension_numbers<[1], [0], [0], [1], [0, 0, 1, 1], [], []>} : vector<96x16xbf16>, vector<16x16xbf16>, vector<96x16xf32> -> vector<96x16xf32>
    %13 = arith.addf %11, %12 : vector<96x16xf32>
    %cst_14 = arith.constant dense<0.000000e+00> : vector<96x16xf32>
    %14 = tpu.matmul %10, %4, %cst_14 {dimension_numbers = #tpu.dot_dimension_numbers<[1], [0], [0], [1], [0, 0, 1, 1], [], []>} : vector<96x16xbf16>, vector<16x16xbf16>, vector<96x16xf32> -> vector<96x16xf32>
    %15 = arith.addf %13, %14 : vector<96x16xf32>
    %16 = vector.shape_cast %15 : vector<96x16xf32> to vector<6x16x16xf32>
    %17 = arith.truncf %16 : vector<6x16x16xf32> to vector<6x16x16xbf16>
    %18 = arith.extf %17 : vector<6x16x16xbf16> to vector<6x16x16xf32>
    %19 = arith.subf %16, %18 : vector<6x16x16xf32>
    %20 = arith.truncf %19 : vector<6x16x16xf32> to vector<6x16x16xbf16>
    %21 = vector.extract_strided_slice %17 {offsets = [0, 0, 0], sizes = [1, 16, 16], strides = [1, 1, 1]} : vector<6x16x16xbf16> to vector<1x16x16xbf16>
    %22 = vector.shape_cast %21 : vector<1x16x16xbf16> to vector<16x16xbf16>
    %cst_15 = arith.constant dense<0.000000e+00> : vector<16x16xf32>
    %23 = tpu.matmul %2, %22, %cst_15 {dimension_numbers = #tpu.dot_dimension_numbers<[1], [0], [0], [1], [0, 0, 1, 1], [], []>} : vector<16x16xbf16>, vector<16x16xbf16>, vector<16x16xf32> -> vector<16x16xf32>
    %24 = vector.extract_strided_slice %17 {offsets = [0, 0, 0], sizes = [1, 16, 16], strides = [1, 1, 1]} : vector<6x16x16xbf16> to vector<1x16x16xbf16>
    %25 = vector.shape_cast %24 : vector<1x16x16xbf16> to vector<16x16xbf16>
    %cst_16 = arith.constant dense<0.000000e+00> : vector<16x16xf32>
    %26 = tpu.matmul %3, %25, %cst_16 {dimension_numbers = #tpu.dot_dimension_numbers<[1], [0], [0], [1], [0, 0, 1, 1], [], []>} : vector<16x16xbf16>, vector<16x16xbf16>, vector<16x16xf32> -> vector<16x16xf32>
    %27 = arith.addf %23, %26 : vector<16x16xf32>
    %28 = vector.extract_strided_slice %20 {offsets = [0, 0, 0], sizes = [1, 16, 16], strides = [1, 1, 1]} : vector<6x16x16xbf16> to vector<1x16x16xbf16>
    %29 = vector.shape_cast %28 : vector<1x16x16xbf16> to vector<16x16xbf16>
    %cst_17 = arith.constant dense<0.000000e+00> : vector<16x16xf32>
    %30 = tpu.matmul %2, %29, %cst_17 {dimension_numbers = #tpu.dot_dimension_numbers<[1], [0], [0], [1], [0, 0, 1, 1], [], []>} : vector<16x16xbf16>, vector<16x16xbf16>, vector<16x16xf32> -> vector<16x16xf32>
    %31 = arith.addf %27, %30 : vector<16x16xf32>
    %32 = vector.extract_strided_slice %17 {offsets = [1, 0, 0], sizes = [1, 16, 16], strides = [1, 1, 1]} : vector<6x16x16xbf16> to vector<1x16x16xbf16>
    %33 = vector.shape_cast %32 : vector<1x16x16xbf16> to vector<16x16xbf16>
    %cst_18 = arith.constant dense<0.000000e+00> : vector<16x16xf32>
    %34 = tpu.matmul %2, %33, %cst_18 {dimension_numbers = #tpu.dot_dimension_numbers<[1], [0], [0], [1], [0, 0, 1, 1], [], []>} : vector<16x16xbf16>, vector<16x16xbf16>, vector<16x16xf32> -> vector<16x16xf32>
    %35 = vector.extract_strided_slice %17 {offsets = [1, 0, 0], sizes = [1, 16, 16], strides = [1, 1, 1]} : vector<6x16x16xbf16> to vector<1x16x16xbf16>
    %36 = vector.shape_cast %35 : vector<1x16x16xbf16> to vector<16x16xbf16>
    %cst_19 = arith.constant dense<0.000000e+00> : vector<16x16xf32>
    %37 = tpu.matmul %3, %36, %cst_19 {dimension_numbers = #tpu.dot_dimension_numbers<[1], [0], [0], [1], [0, 0, 1, 1], [], []>} : vector<16x16xbf16>, vector<16x16xbf16>, vector<16x16xf32> -> vector<16x16xf32>
    %38 = arith.addf %34, %37 : vector<16x16xf32>
    %39 = vector.extract_strided_slice %20 {offsets = [1, 0, 0], sizes = [1, 16, 16], strides = [1, 1, 1]} : vector<6x16x16xbf16> to vector<1x16x16xbf16>
    %40 = vector.shape_cast %39 : vector<1x16x16xbf16> to vector<16x16xbf16>
    %cst_20 = arith.constant dense<0.000000e+00> : vector<16x16xf32>
    %41 = tpu.matmul %2, %40, %cst_20 {dimension_numbers = #tpu.dot_dimension_numbers<[1], [0], [0], [1], [0, 0, 1, 1], [], []>} : vector<16x16xbf16>, vector<16x16xbf16>, vector<16x16xf32> -> vector<16x16xf32>
    %42 = arith.addf %38, %41 : vector<16x16xf32>
    %43 = vector.extract_strided_slice %17 {offsets = [2, 0, 0], sizes = [1, 16, 16], strides = [1, 1, 1]} : vector<6x16x16xbf16> to vector<1x16x16xbf16>
    %44 = vector.shape_cast %43 : vector<1x16x16xbf16> to vector<16x16xbf16>
    %cst_21 = arith.constant dense<0.000000e+00> : vector<16x16xf32>
    %45 = tpu.matmul %2, %44, %cst_21 {dimension_numbers = #tpu.dot_dimension_numbers<[1], [0], [0], [1], [0, 0, 1, 1], [], []>} : vector<16x16xbf16>, vector<16x16xbf16>, vector<16x16xf32> -> vector<16x16xf32>
    %46 = vector.extract_strided_slice %17 {offsets = [2, 0, 0], sizes = [1, 16, 16], strides = [1, 1, 1]} : vector<6x16x16xbf16> to vector<1x16x16xbf16>
    %47 = vector.shape_cast %46 : vector<1x16x16xbf16> to vector<16x16xbf16>
    %cst_22 = arith.constant dense<0.000000e+00> : vector<16x16xf32>
    %48 = tpu.matmul %3, %47, %cst_22 {dimension_numbers = #tpu.dot_dimension_numbers<[1], [0], [0], [1], [0, 0, 1, 1], [], []>} : vector<16x16xbf16>, vector<16x16xbf16>, vector<16x16xf32> -> vector<16x16xf32>
    %49 = arith.addf %45, %48 : vector<16x16xf32>
    %50 = vector.extract_strided_slice %20 {offsets = [2, 0, 0], sizes = [1, 16, 16], strides = [1, 1, 1]} : vector<6x16x16xbf16> to vector<1x16x16xbf16>
    %51 = vector.shape_cast %50 : vector<1x16x16xbf16> to vector<16x16xbf16>
    %cst_23 = arith.constant dense<0.000000e+00> : vector<16x16xf32>
    %52 = tpu.matmul %2, %51, %cst_23 {dimension_numbers = #tpu.dot_dimension_numbers<[1], [0], [0], [1], [0, 0, 1, 1], [], []>} : vector<16x16xbf16>, vector<16x16xbf16>, vector<16x16xf32> -> vector<16x16xf32>
    %53 = arith.addf %49, %52 : vector<16x16xf32>
    %54 = vector.extract_strided_slice %17 {offsets = [3, 0, 0], sizes = [1, 16, 16], strides = [1, 1, 1]} : vector<6x16x16xbf16> to vector<1x16x16xbf16>
    %55 = vector.shape_cast %54 : vector<1x16x16xbf16> to vector<16x16xbf16>
    %cst_24 = arith.constant dense<0.000000e+00> : vector<16x16xf32>
    %56 = tpu.matmul %2, %55, %cst_24 {dimension_numbers = #tpu.dot_dimension_numbers<[1], [0], [0], [1], [0, 0, 1, 1], [], []>} : vector<16x16xbf16>, vector<16x16xbf16>, vector<16x16xf32> -> vector<16x16xf32>
    %57 = vector.extract_strided_slice %17 {offsets = [3, 0, 0], sizes = [1, 16, 16], strides = [1, 1, 1]} : vector<6x16x16xbf16> to vector<1x16x16xbf16>
    %58 = vector.shape_cast %57 : vector<1x16x16xbf16> to vector<16x16xbf16>
    %cst_25 = arith.constant dense<0.000000e+00> : vector<16x16xf32>
    %59 = tpu.matmul %3, %58, %cst_25 {dimension_numbers = #tpu.dot_dimension_numbers<[1], [0], [0], [1], [0, 0, 1, 1], [], []>} : vector<16x16xbf16>, vector<16x16xbf16>, vector<16x16xf32> -> vector<16x16xf32>
    %60 = arith.addf %56, %59 : vector<16x16xf32>
    %61 = vector.extract_strided_slice %20 {offsets = [3, 0, 0], sizes = [1, 16, 16], strides = [1, 1, 1]} : vector<6x16x16xbf16> to vector<1x16x16xbf16>
    %62 = vector.shape_cast %61 : vector<1x16x16xbf16> to vector<16x16xbf16>
    %cst_26 = arith.constant dense<0.000000e+00> : vector<16x16xf32>
    %63 = tpu.matmul %2, %62, %cst_26 {dimension_numbers = #tpu.dot_dimension_numbers<[1], [0], [0], [1], [0, 0, 1, 1], [], []>} : vector<16x16xbf16>, vector<16x16xbf16>, vector<16x16xf32> -> vector<16x16xf32>
    %64 = arith.addf %60, %63 : vector<16x16xf32>
    %65 = vector.extract_strided_slice %17 {offsets = [4, 0, 0], sizes = [1, 16, 16], strides = [1, 1, 1]} : vector<6x16x16xbf16> to vector<1x16x16xbf16>
    %66 = vector.shape_cast %65 : vector<1x16x16xbf16> to vector<16x16xbf16>
    %cst_27 = arith.constant dense<0.000000e+00> : vector<16x16xf32>
    %67 = tpu.matmul %2, %66, %cst_27 {dimension_numbers = #tpu.dot_dimension_numbers<[1], [0], [0], [1], [0, 0, 1, 1], [], []>} : vector<16x16xbf16>, vector<16x16xbf16>, vector<16x16xf32> -> vector<16x16xf32>
    %68 = vector.extract_strided_slice %17 {offsets = [4, 0, 0], sizes = [1, 16, 16], strides = [1, 1, 1]} : vector<6x16x16xbf16> to vector<1x16x16xbf16>
    %69 = vector.shape_cast %68 : vector<1x16x16xbf16> to vector<16x16xbf16>
    %cst_28 = arith.constant dense<0.000000e+00> : vector<16x16xf32>
    %70 = tpu.matmul %3, %69, %cst_28 {dimension_numbers = #tpu.dot_dimension_numbers<[1], [0], [0], [1], [0, 0, 1, 1], [], []>} : vector<16x16xbf16>, vector<16x16xbf16>, vector<16x16xf32> -> vector<16x16xf32>
    %71 = arith.addf %67, %70 : vector<16x16xf32>
    %72 = vector.extract_strided_slice %20 {offsets = [4, 0, 0], sizes = [1, 16, 16], strides = [1, 1, 1]} : vector<6x16x16xbf16> to vector<1x16x16xbf16>
    %73 = vector.shape_cast %72 : vector<1x16x16xbf16> to vector<16x16xbf16>
    %cst_29 = arith.constant dense<0.000000e+00> : vector<16x16xf32>
    %74 = tpu.matmul %2, %73, %cst_29 {dimension_numbers = #tpu.dot_dimension_numbers<[1], [0], [0], [1], [0, 0, 1, 1], [], []>} : vector<16x16xbf16>, vector<16x16xbf16>, vector<16x16xf32> -> vector<16x16xf32>
    %75 = arith.addf %71, %74 : vector<16x16xf32>
    %76 = vector.extract_strided_slice %17 {offsets = [5, 0, 0], sizes = [1, 16, 16], strides = [1, 1, 1]} : vector<6x16x16xbf16> to vector<1x16x16xbf16>
    %77 = vector.shape_cast %76 : vector<1x16x16xbf16> to vector<16x16xbf16>
    %cst_30 = arith.constant dense<0.000000e+00> : vector<16x16xf32>
    %78 = tpu.matmul %2, %77, %cst_30 {dimension_numbers = #tpu.dot_dimension_numbers<[1], [0], [0], [1], [0, 0, 1, 1], [], []>} : vector<16x16xbf16>, vector<16x16xbf16>, vector<16x16xf32> -> vector<16x16xf32>
    %79 = vector.extract_strided_slice %17 {offsets = [5, 0, 0], sizes = [1, 16, 16], strides = [1, 1, 1]} : vector<6x16x16xbf16> to vector<1x16x16xbf16>
    %80 = vector.shape_cast %79 : vector<1x16x16xbf16> to vector<16x16xbf16>
    %cst_31 = arith.constant dense<0.000000e+00> : vector<16x16xf32>
    %81 = tpu.matmul %3, %80, %cst_31 {dimension_numbers = #tpu.dot_dimension_numbers<[1], [0], [0], [1], [0, 0, 1, 1], [], []>} : vector<16x16xbf16>, vector<16x16xbf16>, vector<16x16xf32> -> vector<16x16xf32>
    %82 = arith.addf %78, %81 : vector<16x16xf32>
    %83 = vector.extract_strided_slice %20 {offsets = [5, 0, 0], sizes = [1, 16, 16], strides = [1, 1, 1]} : vector<6x16x16xbf16> to vector<1x16x16xbf16>
    %84 = vector.shape_cast %83 : vector<1x16x16xbf16> to vector<16x16xbf16>
    %cst_32 = arith.constant dense<0.000000e+00> : vector<16x16xf32>
    %85 = tpu.matmul %2, %84, %cst_32 {dimension_numbers = #tpu.dot_dimension_numbers<[1], [0], [0], [1], [0, 0, 1, 1], [], []>} : vector<16x16xbf16>, vector<16x16xbf16>, vector<16x16xf32> -> vector<16x16xf32>
    %86 = arith.addf %82, %85 : vector<16x16xf32>
    %87 = vector.shape_cast %31 : vector<16x16xf32> to vector<1x16x16xf32>
    %88 = vector.shape_cast %42 : vector<16x16xf32> to vector<1x16x16xf32>
    %89 = vector.shape_cast %53 : vector<16x16xf32> to vector<1x16x16xf32>
    %90 = vector.shape_cast %64 : vector<16x16xf32> to vector<1x16x16xf32>
    %91 = vector.shape_cast %75 : vector<16x16xf32> to vector<1x16x16xf32>
    %92 = vector.shape_cast %86 : vector<16x16xf32> to vector<1x16x16xf32>
    %93 = tpu.concatenate %87, %88, %89, %90, %91, %92 in 0 : vector<1x16x16xf32>, vector<1x16x16xf32>, vector<1x16x16xf32>, vector<1x16x16xf32>, vector<1x16x16xf32>, vector<1x16x16xf32> -> vector<6x16x16xf32>
    %94 = vector.shape_cast %1 : vector<6x16x16xf32> to vector<96x16xf32>
    %95 = arith.truncf %94 : vector<96x16xf32> to vector<96x16xbf16>
    %96 = arith.extf %95 : vector<96x16xbf16> to vector<96x16xf32>
    %97 = arith.subf %94, %96 : vector<96x16xf32>
    %98 = arith.truncf %97 : vector<96x16xf32> to vector<96x16xbf16>
    %cst_33 = arith.constant dense<0.000000e+00> : vector<96x16xf32>
    %99 = tpu.matmul %95, %4, %cst_33 {dimension_numbers = #tpu.dot_dimension_numbers<[1], [0], [0], [1], [0, 0, 1, 1], [], []>} : vector<96x16xbf16>, vector<16x16xbf16>, vector<96x16xf32> -> vector<96x16xf32>
    %cst_34 = arith.constant dense<0.000000e+00> : vector<96x16xf32>
    %100 = tpu.matmul %95, %5, %cst_34 {dimension_numbers = #tpu.dot_dimension_numbers<[1], [0], [0], [1], [0, 0, 1, 1], [], []>} : vector<96x16xbf16>, vector<16x16xbf16>, vector<96x16xf32> -> vector<96x16xf32>
    %101 = arith.addf %99, %100 : vector<96x16xf32>
    %cst_35 = arith.constant dense<0.000000e+00> : vector<96x16xf32>
    %102 = tpu.matmul %98, %4, %cst_35 {dimension_numbers = #tpu.dot_dimension_numbers<[1], [0], [0], [1], [0, 0, 1, 1], [], []>} : vector<96x16xbf16>, vector<16x16xbf16>, vector<96x16xf32> -> vector<96x16xf32>
    %103 = arith.addf %101, %102 : vector<96x16xf32>
    %104 = vector.shape_cast %103 : vector<96x16xf32> to vector<6x16x16xf32>
    %105 = arith.truncf %104 : vector<6x16x16xf32> to vector<6x16x16xbf16>
    %106 = arith.extf %105 : vector<6x16x16xbf16> to vector<6x16x16xf32>
    %107 = arith.subf %104, %106 : vector<6x16x16xf32>
    %108 = arith.truncf %107 : vector<6x16x16xf32> to vector<6x16x16xbf16>
    %109 = vector.extract_strided_slice %105 {offsets = [0, 0, 0], sizes = [1, 16, 16], strides = [1, 1, 1]} : vector<6x16x16xbf16> to vector<1x16x16xbf16>
    %110 = vector.shape_cast %109 : vector<1x16x16xbf16> to vector<16x16xbf16>
    %cst_36 = arith.constant dense<0.000000e+00> : vector<16x16xf32>
    %111 = tpu.matmul %2, %110, %cst_36 {dimension_numbers = #tpu.dot_dimension_numbers<[1], [0], [0], [1], [0, 0, 1, 1], [], []>} : vector<16x16xbf16>, vector<16x16xbf16>, vector<16x16xf32> -> vector<16x16xf32>
    %112 = vector.extract_strided_slice %105 {offsets = [0, 0, 0], sizes = [1, 16, 16], strides = [1, 1, 1]} : vector<6x16x16xbf16> to vector<1x16x16xbf16>
    %113 = vector.shape_cast %112 : vector<1x16x16xbf16> to vector<16x16xbf16>
    %cst_37 = arith.constant dense<0.000000e+00> : vector<16x16xf32>
    %114 = tpu.matmul %3, %113, %cst_37 {dimension_numbers = #tpu.dot_dimension_numbers<[1], [0], [0], [1], [0, 0, 1, 1], [], []>} : vector<16x16xbf16>, vector<16x16xbf16>, vector<16x16xf32> -> vector<16x16xf32>
    %115 = arith.addf %111, %114 : vector<16x16xf32>
    %116 = vector.extract_strided_slice %108 {offsets = [0, 0, 0], sizes = [1, 16, 16], strides = [1, 1, 1]} : vector<6x16x16xbf16> to vector<1x16x16xbf16>
    %117 = vector.shape_cast %116 : vector<1x16x16xbf16> to vector<16x16xbf16>
    %cst_38 = arith.constant dense<0.000000e+00> : vector<16x16xf32>
    %118 = tpu.matmul %2, %117, %cst_38 {dimension_numbers = #tpu.dot_dimension_numbers<[1], [0], [0], [1], [0, 0, 1, 1], [], []>} : vector<16x16xbf16>, vector<16x16xbf16>, vector<16x16xf32> -> vector<16x16xf32>
    %119 = arith.addf %115, %118 : vector<16x16xf32>
    %120 = vector.extract_strided_slice %105 {offsets = [1, 0, 0], sizes = [1, 16, 16], strides = [1, 1, 1]} : vector<6x16x16xbf16> to vector<1x16x16xbf16>
    %121 = vector.shape_cast %120 : vector<1x16x16xbf16> to vector<16x16xbf16>
    %cst_39 = arith.constant dense<0.000000e+00> : vector<16x16xf32>
    %122 = tpu.matmul %2, %121, %cst_39 {dimension_numbers = #tpu.dot_dimension_numbers<[1], [0], [0], [1], [0, 0, 1, 1], [], []>} : vector<16x16xbf16>, vector<16x16xbf16>, vector<16x16xf32> -> vector<16x16xf32>
    %123 = vector.extract_strided_slice %105 {offsets = [1, 0, 0], sizes = [1, 16, 16], strides = [1, 1, 1]} : vector<6x16x16xbf16> to vector<1x16x16xbf16>
    %124 = vector.shape_cast %123 : vector<1x16x16xbf16> to vector<16x16xbf16>
    %cst_40 = arith.constant dense<0.000000e+00> : vector<16x16xf32>
    %125 = tpu.matmul %3, %124, %cst_40 {dimension_numbers = #tpu.dot_dimension_numbers<[1], [0], [0], [1], [0, 0, 1, 1], [], []>} : vector<16x16xbf16>, vector<16x16xbf16>, vector<16x16xf32> -> vector<16x16xf32>
    %126 = arith.addf %122, %125 : vector<16x16xf32>
    %127 = vector.extract_strided_slice %108 {offsets = [1, 0, 0], sizes = [1, 16, 16], strides = [1, 1, 1]} : vector<6x16x16xbf16> to vector<1x16x16xbf16>
    %128 = vector.shape_cast %127 : vector<1x16x16xbf16> to vector<16x16xbf16>
    %cst_41 = arith.constant dense<0.000000e+00> : vector<16x16xf32>
    %129 = tpu.matmul %2, %128, %cst_41 {dimension_numbers = #tpu.dot_dimension_numbers<[1], [0], [0], [1], [0, 0, 1, 1], [], []>} : vector<16x16xbf16>, vector<16x16xbf16>, vector<16x16xf32> -> vector<16x16xf32>
    %130 = arith.addf %126, %129 : vector<16x16xf32>
    %131 = vector.extract_strided_slice %105 {offsets = [2, 0, 0], sizes = [1, 16, 16], strides = [1, 1, 1]} : vector<6x16x16xbf16> to vector<1x16x16xbf16>
    %132 = vector.shape_cast %131 : vector<1x16x16xbf16> to vector<16x16xbf16>
    %cst_42 = arith.constant dense<0.000000e+00> : vector<16x16xf32>
    %133 = tpu.matmul %2, %132, %cst_42 {dimension_numbers = #tpu.dot_dimension_numbers<[1], [0], [0], [1], [0, 0, 1, 1], [], []>} : vector<16x16xbf16>, vector<16x16xbf16>, vector<16x16xf32> -> vector<16x16xf32>
    %134 = vector.extract_strided_slice %105 {offsets = [2, 0, 0], sizes = [1, 16, 16], strides = [1, 1, 1]} : vector<6x16x16xbf16> to vector<1x16x16xbf16>
    %135 = vector.shape_cast %134 : vector<1x16x16xbf16> to vector<16x16xbf16>
    %cst_43 = arith.constant dense<0.000000e+00> : vector<16x16xf32>
    %136 = tpu.matmul %3, %135, %cst_43 {dimension_numbers = #tpu.dot_dimension_numbers<[1], [0], [0], [1], [0, 0, 1, 1], [], []>} : vector<16x16xbf16>, vector<16x16xbf16>, vector<16x16xf32> -> vector<16x16xf32>
    %137 = arith.addf %133, %136 : vector<16x16xf32>
    %138 = vector.extract_strided_slice %108 {offsets = [2, 0, 0], sizes = [1, 16, 16], strides = [1, 1, 1]} : vector<6x16x16xbf16> to vector<1x16x16xbf16>
    %139 = vector.shape_cast %138 : vector<1x16x16xbf16> to vector<16x16xbf16>
    %cst_44 = arith.constant dense<0.000000e+00> : vector<16x16xf32>
    %140 = tpu.matmul %2, %139, %cst_44 {dimension_numbers = #tpu.dot_dimension_numbers<[1], [0], [0], [1], [0, 0, 1, 1], [], []>} : vector<16x16xbf16>, vector<16x16xbf16>, vector<16x16xf32> -> vector<16x16xf32>
    %141 = arith.addf %137, %140 : vector<16x16xf32>
    %142 = vector.extract_strided_slice %105 {offsets = [3, 0, 0], sizes = [1, 16, 16], strides = [1, 1, 1]} : vector<6x16x16xbf16> to vector<1x16x16xbf16>
    %143 = vector.shape_cast %142 : vector<1x16x16xbf16> to vector<16x16xbf16>
    %cst_45 = arith.constant dense<0.000000e+00> : vector<16x16xf32>
    %144 = tpu.matmul %2, %143, %cst_45 {dimension_numbers = #tpu.dot_dimension_numbers<[1], [0], [0], [1], [0, 0, 1, 1], [], []>} : vector<16x16xbf16>, vector<16x16xbf16>, vector<16x16xf32> -> vector<16x16xf32>
    %145 = vector.extract_strided_slice %105 {offsets = [3, 0, 0], sizes = [1, 16, 16], strides = [1, 1, 1]} : vector<6x16x16xbf16> to vector<1x16x16xbf16>
    %146 = vector.shape_cast %145 : vector<1x16x16xbf16> to vector<16x16xbf16>
    %cst_46 = arith.constant dense<0.000000e+00> : vector<16x16xf32>
    %147 = tpu.matmul %3, %146, %cst_46 {dimension_numbers = #tpu.dot_dimension_numbers<[1], [0], [0], [1], [0, 0, 1, 1], [], []>} : vector<16x16xbf16>, vector<16x16xbf16>, vector<16x16xf32> -> vector<16x16xf32>
    %148 = arith.addf %144, %147 : vector<16x16xf32>
    %149 = vector.extract_strided_slice %108 {offsets = [3, 0, 0], sizes = [1, 16, 16], strides = [1, 1, 1]} : vector<6x16x16xbf16> to vector<1x16x16xbf16>
    %150 = vector.shape_cast %149 : vector<1x16x16xbf16> to vector<16x16xbf16>
    %cst_47 = arith.constant dense<0.000000e+00> : vector<16x16xf32>
    %151 = tpu.matmul %2, %150, %cst_47 {dimension_numbers = #tpu.dot_dimension_numbers<[1], [0], [0], [1], [0, 0, 1, 1], [], []>} : vector<16x16xbf16>, vector<16x16xbf16>, vector<16x16xf32> -> vector<16x16xf32>
    %152 = arith.addf %148, %151 : vector<16x16xf32>
    %153 = vector.extract_strided_slice %105 {offsets = [4, 0, 0], sizes = [1, 16, 16], strides = [1, 1, 1]} : vector<6x16x16xbf16> to vector<1x16x16xbf16>
    %154 = vector.shape_cast %153 : vector<1x16x16xbf16> to vector<16x16xbf16>
    %cst_48 = arith.constant dense<0.000000e+00> : vector<16x16xf32>
    %155 = tpu.matmul %2, %154, %cst_48 {dimension_numbers = #tpu.dot_dimension_numbers<[1], [0], [0], [1], [0, 0, 1, 1], [], []>} : vector<16x16xbf16>, vector<16x16xbf16>, vector<16x16xf32> -> vector<16x16xf32>
    %156 = vector.extract_strided_slice %105 {offsets = [4, 0, 0], sizes = [1, 16, 16], strides = [1, 1, 1]} : vector<6x16x16xbf16> to vector<1x16x16xbf16>
    %157 = vector.shape_cast %156 : vector<1x16x16xbf16> to vector<16x16xbf16>
    %cst_49 = arith.constant dense<0.000000e+00> : vector<16x16xf32>
    %158 = tpu.matmul %3, %157, %cst_49 {dimension_numbers = #tpu.dot_dimension_numbers<[1], [0], [0], [1], [0, 0, 1, 1], [], []>} : vector<16x16xbf16>, vector<16x16xbf16>, vector<16x16xf32> -> vector<16x16xf32>
    %159 = arith.addf %155, %158 : vector<16x16xf32>
    %160 = vector.extract_strided_slice %108 {offsets = [4, 0, 0], sizes = [1, 16, 16], strides = [1, 1, 1]} : vector<6x16x16xbf16> to vector<1x16x16xbf16>
    %161 = vector.shape_cast %160 : vector<1x16x16xbf16> to vector<16x16xbf16>
    %cst_50 = arith.constant dense<0.000000e+00> : vector<16x16xf32>
    %162 = tpu.matmul %2, %161, %cst_50 {dimension_numbers = #tpu.dot_dimension_numbers<[1], [0], [0], [1], [0, 0, 1, 1], [], []>} : vector<16x16xbf16>, vector<16x16xbf16>, vector<16x16xf32> -> vector<16x16xf32>
    %163 = arith.addf %159, %162 : vector<16x16xf32>
    %164 = vector.extract_strided_slice %105 {offsets = [5, 0, 0], sizes = [1, 16, 16], strides = [1, 1, 1]} : vector<6x16x16xbf16> to vector<1x16x16xbf16>
    %165 = vector.shape_cast %164 : vector<1x16x16xbf16> to vector<16x16xbf16>
    %cst_51 = arith.constant dense<0.000000e+00> : vector<16x16xf32>
    %166 = tpu.matmul %2, %165, %cst_51 {dimension_numbers = #tpu.dot_dimension_numbers<[1], [0], [0], [1], [0, 0, 1, 1], [], []>} : vector<16x16xbf16>, vector<16x16xbf16>, vector<16x16xf32> -> vector<16x16xf32>
    %167 = vector.extract_strided_slice %105 {offsets = [5, 0, 0], sizes = [1, 16, 16], strides = [1, 1, 1]} : vector<6x16x16xbf16> to vector<1x16x16xbf16>
    %168 = vector.shape_cast %167 : vector<1x16x16xbf16> to vector<16x16xbf16>
    %cst_52 = arith.constant dense<0.000000e+00> : vector<16x16xf32>
    %169 = tpu.matmul %3, %168, %cst_52 {dimension_numbers = #tpu.dot_dimension_numbers<[1], [0], [0], [1], [0, 0, 1, 1], [], []>} : vector<16x16xbf16>, vector<16x16xbf16>, vector<16x16xf32> -> vector<16x16xf32>
    %170 = arith.addf %166, %169 : vector<16x16xf32>
    %171 = vector.extract_strided_slice %108 {offsets = [5, 0, 0], sizes = [1, 16, 16], strides = [1, 1, 1]} : vector<6x16x16xbf16> to vector<1x16x16xbf16>
    %172 = vector.shape_cast %171 : vector<1x16x16xbf16> to vector<16x16xbf16>
    %cst_53 = arith.constant dense<0.000000e+00> : vector<16x16xf32>
    %173 = tpu.matmul %2, %172, %cst_53 {dimension_numbers = #tpu.dot_dimension_numbers<[1], [0], [0], [1], [0, 0, 1, 1], [], []>} : vector<16x16xbf16>, vector<16x16xbf16>, vector<16x16xf32> -> vector<16x16xf32>
    %174 = arith.addf %170, %173 : vector<16x16xf32>
    %175 = vector.shape_cast %119 : vector<16x16xf32> to vector<1x16x16xf32>
    %176 = vector.shape_cast %130 : vector<16x16xf32> to vector<1x16x16xf32>
    %177 = vector.shape_cast %141 : vector<16x16xf32> to vector<1x16x16xf32>
    %178 = vector.shape_cast %152 : vector<16x16xf32> to vector<1x16x16xf32>
    %179 = vector.shape_cast %163 : vector<16x16xf32> to vector<1x16x16xf32>
    %180 = vector.shape_cast %174 : vector<16x16xf32> to vector<1x16x16xf32>
    %181 = tpu.concatenate %175, %176, %177, %178, %179, %180 in 0 : vector<1x16x16xf32>, vector<1x16x16xf32>, vector<1x16x16xf32>, vector<1x16x16xf32>, vector<1x16x16xf32>, vector<1x16x16xf32> -> vector<6x16x16xf32>
    %182 = arith.mulf %0, %0 : vector<6x16x16xf32>
    %183 = vector.shape_cast %182 : vector<6x16x16xf32> to vector<96x16xf32>
    %184 = arith.truncf %183 : vector<96x16xf32> to vector<96x16xbf16>
    %185 = arith.extf %184 : vector<96x16xbf16> to vector<96x16xf32>
    %186 = arith.subf %183, %185 : vector<96x16xf32>
    %187 = arith.truncf %186 : vector<96x16xf32> to vector<96x16xbf16>
    %cst_54 = arith.constant dense<0.000000e+00> : vector<96x16xf32>
    %188 = tpu.matmul %184, %4, %cst_54 {dimension_numbers = #tpu.dot_dimension_numbers<[1], [0], [0], [1], [0, 0, 1, 1], [], []>} : vector<96x16xbf16>, vector<16x16xbf16>, vector<96x16xf32> -> vector<96x16xf32>
    %cst_55 = arith.constant dense<0.000000e+00> : vector<96x16xf32>
    %189 = tpu.matmul %184, %5, %cst_55 {dimension_numbers = #tpu.dot_dimension_numbers<[1], [0], [0], [1], [0, 0, 1, 1], [], []>} : vector<96x16xbf16>, vector<16x16xbf16>, vector<96x16xf32> -> vector<96x16xf32>
    %190 = arith.addf %188, %189 : vector<96x16xf32>
    %cst_56 = arith.constant dense<0.000000e+00> : vector<96x16xf32>
    %191 = tpu.matmul %187, %4, %cst_56 {dimension_numbers = #tpu.dot_dimension_numbers<[1], [0], [0], [1], [0, 0, 1, 1], [], []>} : vector<96x16xbf16>, vector<16x16xbf16>, vector<96x16xf32> -> vector<96x16xf32>
    %192 = arith.addf %190, %191 : vector<96x16xf32>
    %193 = vector.shape_cast %192 : vector<96x16xf32> to vector<6x16x16xf32>
    %194 = arith.truncf %193 : vector<6x16x16xf32> to vector<6x16x16xbf16>
    %195 = arith.extf %194 : vector<6x16x16xbf16> to vector<6x16x16xf32>
    %196 = arith.subf %193, %195 : vector<6x16x16xf32>
    %197 = arith.truncf %196 : vector<6x16x16xf32> to vector<6x16x16xbf16>
    %198 = vector.extract_strided_slice %194 {offsets = [0, 0, 0], sizes = [1, 16, 16], strides = [1, 1, 1]} : vector<6x16x16xbf16> to vector<1x16x16xbf16>
    %199 = vector.shape_cast %198 : vector<1x16x16xbf16> to vector<16x16xbf16>
    %cst_57 = arith.constant dense<0.000000e+00> : vector<16x16xf32>
    %200 = tpu.matmul %2, %199, %cst_57 {dimension_numbers = #tpu.dot_dimension_numbers<[1], [0], [0], [1], [0, 0, 1, 1], [], []>} : vector<16x16xbf16>, vector<16x16xbf16>, vector<16x16xf32> -> vector<16x16xf32>
    %201 = vector.extract_strided_slice %194 {offsets = [0, 0, 0], sizes = [1, 16, 16], strides = [1, 1, 1]} : vector<6x16x16xbf16> to vector<1x16x16xbf16>
    %202 = vector.shape_cast %201 : vector<1x16x16xbf16> to vector<16x16xbf16>
    %cst_58 = arith.constant dense<0.000000e+00> : vector<16x16xf32>
    %203 = tpu.matmul %3, %202, %cst_58 {dimension_numbers = #tpu.dot_dimension_numbers<[1], [0], [0], [1], [0, 0, 1, 1], [], []>} : vector<16x16xbf16>, vector<16x16xbf16>, vector<16x16xf32> -> vector<16x16xf32>
    %204 = arith.addf %200, %203 : vector<16x16xf32>
    %205 = vector.extract_strided_slice %197 {offsets = [0, 0, 0], sizes = [1, 16, 16], strides = [1, 1, 1]} : vector<6x16x16xbf16> to vector<1x16x16xbf16>
    %206 = vector.shape_cast %205 : vector<1x16x16xbf16> to vector<16x16xbf16>
    %cst_59 = arith.constant dense<0.000000e+00> : vector<16x16xf32>
    %207 = tpu.matmul %2, %206, %cst_59 {dimension_numbers = #tpu.dot_dimension_numbers<[1], [0], [0], [1], [0, 0, 1, 1], [], []>} : vector<16x16xbf16>, vector<16x16xbf16>, vector<16x16xf32> -> vector<16x16xf32>
    %208 = arith.addf %204, %207 : vector<16x16xf32>
    %209 = vector.extract_strided_slice %194 {offsets = [1, 0, 0], sizes = [1, 16, 16], strides = [1, 1, 1]} : vector<6x16x16xbf16> to vector<1x16x16xbf16>
    %210 = vector.shape_cast %209 : vector<1x16x16xbf16> to vector<16x16xbf16>
    %cst_60 = arith.constant dense<0.000000e+00> : vector<16x16xf32>
    %211 = tpu.matmul %2, %210, %cst_60 {dimension_numbers = #tpu.dot_dimension_numbers<[1], [0], [0], [1], [0, 0, 1, 1], [], []>} : vector<16x16xbf16>, vector<16x16xbf16>, vector<16x16xf32> -> vector<16x16xf32>
    %212 = vector.extract_strided_slice %194 {offsets = [1, 0, 0], sizes = [1, 16, 16], strides = [1, 1, 1]} : vector<6x16x16xbf16> to vector<1x16x16xbf16>
    %213 = vector.shape_cast %212 : vector<1x16x16xbf16> to vector<16x16xbf16>
    %cst_61 = arith.constant dense<0.000000e+00> : vector<16x16xf32>
    %214 = tpu.matmul %3, %213, %cst_61 {dimension_numbers = #tpu.dot_dimension_numbers<[1], [0], [0], [1], [0, 0, 1, 1], [], []>} : vector<16x16xbf16>, vector<16x16xbf16>, vector<16x16xf32> -> vector<16x16xf32>
    %215 = arith.addf %211, %214 : vector<16x16xf32>
    %216 = vector.extract_strided_slice %197 {offsets = [1, 0, 0], sizes = [1, 16, 16], strides = [1, 1, 1]} : vector<6x16x16xbf16> to vector<1x16x16xbf16>
    %217 = vector.shape_cast %216 : vector<1x16x16xbf16> to vector<16x16xbf16>
    %cst_62 = arith.constant dense<0.000000e+00> : vector<16x16xf32>
    %218 = tpu.matmul %2, %217, %cst_62 {dimension_numbers = #tpu.dot_dimension_numbers<[1], [0], [0], [1], [0, 0, 1, 1], [], []>} : vector<16x16xbf16>, vector<16x16xbf16>, vector<16x16xf32> -> vector<16x16xf32>
    %219 = arith.addf %215, %218 : vector<16x16xf32>
    %220 = vector.extract_strided_slice %194 {offsets = [2, 0, 0], sizes = [1, 16, 16], strides = [1, 1, 1]} : vector<6x16x16xbf16> to vector<1x16x16xbf16>
    %221 = vector.shape_cast %220 : vector<1x16x16xbf16> to vector<16x16xbf16>
    %cst_63 = arith.constant dense<0.000000e+00> : vector<16x16xf32>
    %222 = tpu.matmul %2, %221, %cst_63 {dimension_numbers = #tpu.dot_dimension_numbers<[1], [0], [0], [1], [0, 0, 1, 1], [], []>} : vector<16x16xbf16>, vector<16x16xbf16>, vector<16x16xf32> -> vector<16x16xf32>
    %223 = vector.extract_strided_slice %194 {offsets = [2, 0, 0], sizes = [1, 16, 16], strides = [1, 1, 1]} : vector<6x16x16xbf16> to vector<1x16x16xbf16>
    %224 = vector.shape_cast %223 : vector<1x16x16xbf16> to vector<16x16xbf16>
    %cst_64 = arith.constant dense<0.000000e+00> : vector<16x16xf32>
    %225 = tpu.matmul %3, %224, %cst_64 {dimension_numbers = #tpu.dot_dimension_numbers<[1], [0], [0], [1], [0, 0, 1, 1], [], []>} : vector<16x16xbf16>, vector<16x16xbf16>, vector<16x16xf32> -> vector<16x16xf32>
    %226 = arith.addf %222, %225 : vector<16x16xf32>
    %227 = vector.extract_strided_slice %197 {offsets = [2, 0, 0], sizes = [1, 16, 16], strides = [1, 1, 1]} : vector<6x16x16xbf16> to vector<1x16x16xbf16>
    %228 = vector.shape_cast %227 : vector<1x16x16xbf16> to vector<16x16xbf16>
    %cst_65 = arith.constant dense<0.000000e+00> : vector<16x16xf32>
    %229 = tpu.matmul %2, %228, %cst_65 {dimension_numbers = #tpu.dot_dimension_numbers<[1], [0], [0], [1], [0, 0, 1, 1], [], []>} : vector<16x16xbf16>, vector<16x16xbf16>, vector<16x16xf32> -> vector<16x16xf32>
    %230 = arith.addf %226, %229 : vector<16x16xf32>
    %231 = vector.extract_strided_slice %194 {offsets = [3, 0, 0], sizes = [1, 16, 16], strides = [1, 1, 1]} : vector<6x16x16xbf16> to vector<1x16x16xbf16>
    %232 = vector.shape_cast %231 : vector<1x16x16xbf16> to vector<16x16xbf16>
    %cst_66 = arith.constant dense<0.000000e+00> : vector<16x16xf32>
    %233 = tpu.matmul %2, %232, %cst_66 {dimension_numbers = #tpu.dot_dimension_numbers<[1], [0], [0], [1], [0, 0, 1, 1], [], []>} : vector<16x16xbf16>, vector<16x16xbf16>, vector<16x16xf32> -> vector<16x16xf32>
    %234 = vector.extract_strided_slice %194 {offsets = [3, 0, 0], sizes = [1, 16, 16], strides = [1, 1, 1]} : vector<6x16x16xbf16> to vector<1x16x16xbf16>
    %235 = vector.shape_cast %234 : vector<1x16x16xbf16> to vector<16x16xbf16>
    %cst_67 = arith.constant dense<0.000000e+00> : vector<16x16xf32>
    %236 = tpu.matmul %3, %235, %cst_67 {dimension_numbers = #tpu.dot_dimension_numbers<[1], [0], [0], [1], [0, 0, 1, 1], [], []>} : vector<16x16xbf16>, vector<16x16xbf16>, vector<16x16xf32> -> vector<16x16xf32>
    %237 = arith.addf %233, %236 : vector<16x16xf32>
    %238 = vector.extract_strided_slice %197 {offsets = [3, 0, 0], sizes = [1, 16, 16], strides = [1, 1, 1]} : vector<6x16x16xbf16> to vector<1x16x16xbf16>
    %239 = vector.shape_cast %238 : vector<1x16x16xbf16> to vector<16x16xbf16>
    %cst_68 = arith.constant dense<0.000000e+00> : vector<16x16xf32>
    %240 = tpu.matmul %2, %239, %cst_68 {dimension_numbers = #tpu.dot_dimension_numbers<[1], [0], [0], [1], [0, 0, 1, 1], [], []>} : vector<16x16xbf16>, vector<16x16xbf16>, vector<16x16xf32> -> vector<16x16xf32>
    %241 = arith.addf %237, %240 : vector<16x16xf32>
    %242 = vector.extract_strided_slice %194 {offsets = [4, 0, 0], sizes = [1, 16, 16], strides = [1, 1, 1]} : vector<6x16x16xbf16> to vector<1x16x16xbf16>
    %243 = vector.shape_cast %242 : vector<1x16x16xbf16> to vector<16x16xbf16>
    %cst_69 = arith.constant dense<0.000000e+00> : vector<16x16xf32>
    %244 = tpu.matmul %2, %243, %cst_69 {dimension_numbers = #tpu.dot_dimension_numbers<[1], [0], [0], [1], [0, 0, 1, 1], [], []>} : vector<16x16xbf16>, vector<16x16xbf16>, vector<16x16xf32> -> vector<16x16xf32>
    %245 = vector.extract_strided_slice %194 {offsets = [4, 0, 0], sizes = [1, 16, 16], strides = [1, 1, 1]} : vector<6x16x16xbf16> to vector<1x16x16xbf16>
    %246 = vector.shape_cast %245 : vector<1x16x16xbf16> to vector<16x16xbf16>
    %cst_70 = arith.constant dense<0.000000e+00> : vector<16x16xf32>
    %247 = tpu.matmul %3, %246, %cst_70 {dimension_numbers = #tpu.dot_dimension_numbers<[1], [0], [0], [1], [0, 0, 1, 1], [], []>} : vector<16x16xbf16>, vector<16x16xbf16>, vector<16x16xf32> -> vector<16x16xf32>
    %248 = arith.addf %244, %247 : vector<16x16xf32>
    %249 = vector.extract_strided_slice %197 {offsets = [4, 0, 0], sizes = [1, 16, 16], strides = [1, 1, 1]} : vector<6x16x16xbf16> to vector<1x16x16xbf16>
    %250 = vector.shape_cast %249 : vector<1x16x16xbf16> to vector<16x16xbf16>
    %cst_71 = arith.constant dense<0.000000e+00> : vector<16x16xf32>
    %251 = tpu.matmul %2, %250, %cst_71 {dimension_numbers = #tpu.dot_dimension_numbers<[1], [0], [0], [1], [0, 0, 1, 1], [], []>} : vector<16x16xbf16>, vector<16x16xbf16>, vector<16x16xf32> -> vector<16x16xf32>
    %252 = arith.addf %248, %251 : vector<16x16xf32>
    %253 = vector.extract_strided_slice %194 {offsets = [5, 0, 0], sizes = [1, 16, 16], strides = [1, 1, 1]} : vector<6x16x16xbf16> to vector<1x16x16xbf16>
    %254 = vector.shape_cast %253 : vector<1x16x16xbf16> to vector<16x16xbf16>
    %cst_72 = arith.constant dense<0.000000e+00> : vector<16x16xf32>
    %255 = tpu.matmul %2, %254, %cst_72 {dimension_numbers = #tpu.dot_dimension_numbers<[1], [0], [0], [1], [0, 0, 1, 1], [], []>} : vector<16x16xbf16>, vector<16x16xbf16>, vector<16x16xf32> -> vector<16x16xf32>
    %256 = vector.extract_strided_slice %194 {offsets = [5, 0, 0], sizes = [1, 16, 16], strides = [1, 1, 1]} : vector<6x16x16xbf16> to vector<1x16x16xbf16>
    %257 = vector.shape_cast %256 : vector<1x16x16xbf16> to vector<16x16xbf16>
    %cst_73 = arith.constant dense<0.000000e+00> : vector<16x16xf32>
    %258 = tpu.matmul %3, %257, %cst_73 {dimension_numbers = #tpu.dot_dimension_numbers<[1], [0], [0], [1], [0, 0, 1, 1], [], []>} : vector<16x16xbf16>, vector<16x16xbf16>, vector<16x16xf32> -> vector<16x16xf32>
    %259 = arith.addf %255, %258 : vector<16x16xf32>
    %260 = vector.extract_strided_slice %197 {offsets = [5, 0, 0], sizes = [1, 16, 16], strides = [1, 1, 1]} : vector<6x16x16xbf16> to vector<1x16x16xbf16>
    %261 = vector.shape_cast %260 : vector<1x16x16xbf16> to vector<16x16xbf16>
    %cst_74 = arith.constant dense<0.000000e+00> : vector<16x16xf32>
    %262 = tpu.matmul %2, %261, %cst_74 {dimension_numbers = #tpu.dot_dimension_numbers<[1], [0], [0], [1], [0, 0, 1, 1], [], []>} : vector<16x16xbf16>, vector<16x16xbf16>, vector<16x16xf32> -> vector<16x16xf32>
    %263 = arith.addf %259, %262 : vector<16x16xf32>
    %264 = vector.shape_cast %208 : vector<16x16xf32> to vector<1x16x16xf32>
    %265 = vector.shape_cast %219 : vector<16x16xf32> to vector<1x16x16xf32>
    %266 = vector.shape_cast %230 : vector<16x16xf32> to vector<1x16x16xf32>
    %267 = vector.shape_cast %241 : vector<16x16xf32> to vector<1x16x16xf32>
    %268 = vector.shape_cast %252 : vector<16x16xf32> to vector<1x16x16xf32>
    %269 = vector.shape_cast %263 : vector<16x16xf32> to vector<1x16x16xf32>
    %270 = tpu.concatenate %264, %265, %266, %267, %268, %269 in 0 : vector<1x16x16xf32>, vector<1x16x16xf32>, vector<1x16x16xf32>, vector<1x16x16xf32>, vector<1x16x16xf32>, vector<1x16x16xf32> -> vector<6x16x16xf32>
    %271 = arith.mulf %1, %1 : vector<6x16x16xf32>
    %272 = vector.shape_cast %271 : vector<6x16x16xf32> to vector<96x16xf32>
    %273 = arith.truncf %272 : vector<96x16xf32> to vector<96x16xbf16>
    %274 = arith.extf %273 : vector<96x16xbf16> to vector<96x16xf32>
    %275 = arith.subf %272, %274 : vector<96x16xf32>
    %276 = arith.truncf %275 : vector<96x16xf32> to vector<96x16xbf16>
    %cst_75 = arith.constant dense<0.000000e+00> : vector<96x16xf32>
    %277 = tpu.matmul %273, %4, %cst_75 {dimension_numbers = #tpu.dot_dimension_numbers<[1], [0], [0], [1], [0, 0, 1, 1], [], []>} : vector<96x16xbf16>, vector<16x16xbf16>, vector<96x16xf32> -> vector<96x16xf32>
    %cst_76 = arith.constant dense<0.000000e+00> : vector<96x16xf32>
    %278 = tpu.matmul %273, %5, %cst_76 {dimension_numbers = #tpu.dot_dimension_numbers<[1], [0], [0], [1], [0, 0, 1, 1], [], []>} : vector<96x16xbf16>, vector<16x16xbf16>, vector<96x16xf32> -> vector<96x16xf32>
    %279 = arith.addf %277, %278 : vector<96x16xf32>
    %cst_77 = arith.constant dense<0.000000e+00> : vector<96x16xf32>
    %280 = tpu.matmul %276, %4, %cst_77 {dimension_numbers = #tpu.dot_dimension_numbers<[1], [0], [0], [1], [0, 0, 1, 1], [], []>} : vector<96x16xbf16>, vector<16x16xbf16>, vector<96x16xf32> -> vector<96x16xf32>
    %281 = arith.addf %279, %280 : vector<96x16xf32>
    %282 = vector.shape_cast %281 : vector<96x16xf32> to vector<6x16x16xf32>
    %283 = arith.truncf %282 : vector<6x16x16xf32> to vector<6x16x16xbf16>
    %284 = arith.extf %283 : vector<6x16x16xbf16> to vector<6x16x16xf32>
    %285 = arith.subf %282, %284 : vector<6x16x16xf32>
    %286 = arith.truncf %285 : vector<6x16x16xf32> to vector<6x16x16xbf16>
    %287 = vector.extract_strided_slice %283 {offsets = [0, 0, 0], sizes = [1, 16, 16], strides = [1, 1, 1]} : vector<6x16x16xbf16> to vector<1x16x16xbf16>
    %288 = vector.shape_cast %287 : vector<1x16x16xbf16> to vector<16x16xbf16>
    %cst_78 = arith.constant dense<0.000000e+00> : vector<16x16xf32>
    %289 = tpu.matmul %2, %288, %cst_78 {dimension_numbers = #tpu.dot_dimension_numbers<[1], [0], [0], [1], [0, 0, 1, 1], [], []>} : vector<16x16xbf16>, vector<16x16xbf16>, vector<16x16xf32> -> vector<16x16xf32>
    %290 = vector.extract_strided_slice %283 {offsets = [0, 0, 0], sizes = [1, 16, 16], strides = [1, 1, 1]} : vector<6x16x16xbf16> to vector<1x16x16xbf16>
    %291 = vector.shape_cast %290 : vector<1x16x16xbf16> to vector<16x16xbf16>
    %cst_79 = arith.constant dense<0.000000e+00> : vector<16x16xf32>
    %292 = tpu.matmul %3, %291, %cst_79 {dimension_numbers = #tpu.dot_dimension_numbers<[1], [0], [0], [1], [0, 0, 1, 1], [], []>} : vector<16x16xbf16>, vector<16x16xbf16>, vector<16x16xf32> -> vector<16x16xf32>
    %293 = arith.addf %289, %292 : vector<16x16xf32>
    %294 = vector.extract_strided_slice %286 {offsets = [0, 0, 0], sizes = [1, 16, 16], strides = [1, 1, 1]} : vector<6x16x16xbf16> to vector<1x16x16xbf16>
    %295 = vector.shape_cast %294 : vector<1x16x16xbf16> to vector<16x16xbf16>
    %cst_80 = arith.constant dense<0.000000e+00> : vector<16x16xf32>
    %296 = tpu.matmul %2, %295, %cst_80 {dimension_numbers = #tpu.dot_dimension_numbers<[1], [0], [0], [1], [0, 0, 1, 1], [], []>} : vector<16x16xbf16>, vector<16x16xbf16>, vector<16x16xf32> -> vector<16x16xf32>
    %297 = arith.addf %293, %296 : vector<16x16xf32>
    %298 = vector.extract_strided_slice %283 {offsets = [1, 0, 0], sizes = [1, 16, 16], strides = [1, 1, 1]} : vector<6x16x16xbf16> to vector<1x16x16xbf16>
    %299 = vector.shape_cast %298 : vector<1x16x16xbf16> to vector<16x16xbf16>
    %cst_81 = arith.constant dense<0.000000e+00> : vector<16x16xf32>
    %300 = tpu.matmul %2, %299, %cst_81 {dimension_numbers = #tpu.dot_dimension_numbers<[1], [0], [0], [1], [0, 0, 1, 1], [], []>} : vector<16x16xbf16>, vector<16x16xbf16>, vector<16x16xf32> -> vector<16x16xf32>
    %301 = vector.extract_strided_slice %283 {offsets = [1, 0, 0], sizes = [1, 16, 16], strides = [1, 1, 1]} : vector<6x16x16xbf16> to vector<1x16x16xbf16>
    %302 = vector.shape_cast %301 : vector<1x16x16xbf16> to vector<16x16xbf16>
    %cst_82 = arith.constant dense<0.000000e+00> : vector<16x16xf32>
    %303 = tpu.matmul %3, %302, %cst_82 {dimension_numbers = #tpu.dot_dimension_numbers<[1], [0], [0], [1], [0, 0, 1, 1], [], []>} : vector<16x16xbf16>, vector<16x16xbf16>, vector<16x16xf32> -> vector<16x16xf32>
    %304 = arith.addf %300, %303 : vector<16x16xf32>
    %305 = vector.extract_strided_slice %286 {offsets = [1, 0, 0], sizes = [1, 16, 16], strides = [1, 1, 1]} : vector<6x16x16xbf16> to vector<1x16x16xbf16>
    %306 = vector.shape_cast %305 : vector<1x16x16xbf16> to vector<16x16xbf16>
    %cst_83 = arith.constant dense<0.000000e+00> : vector<16x16xf32>
    %307 = tpu.matmul %2, %306, %cst_83 {dimension_numbers = #tpu.dot_dimension_numbers<[1], [0], [0], [1], [0, 0, 1, 1], [], []>} : vector<16x16xbf16>, vector<16x16xbf16>, vector<16x16xf32> -> vector<16x16xf32>
    %308 = arith.addf %304, %307 : vector<16x16xf32>
    %309 = vector.extract_strided_slice %283 {offsets = [2, 0, 0], sizes = [1, 16, 16], strides = [1, 1, 1]} : vector<6x16x16xbf16> to vector<1x16x16xbf16>
    %310 = vector.shape_cast %309 : vector<1x16x16xbf16> to vector<16x16xbf16>
    %cst_84 = arith.constant dense<0.000000e+00> : vector<16x16xf32>
    %311 = tpu.matmul %2, %310, %cst_84 {dimension_numbers = #tpu.dot_dimension_numbers<[1], [0], [0], [1], [0, 0, 1, 1], [], []>} : vector<16x16xbf16>, vector<16x16xbf16>, vector<16x16xf32> -> vector<16x16xf32>
    %312 = vector.extract_strided_slice %283 {offsets = [2, 0, 0], sizes = [1, 16, 16], strides = [1, 1, 1]} : vector<6x16x16xbf16> to vector<1x16x16xbf16>
    %313 = vector.shape_cast %312 : vector<1x16x16xbf16> to vector<16x16xbf16>
    %cst_85 = arith.constant dense<0.000000e+00> : vector<16x16xf32>
    %314 = tpu.matmul %3, %313, %cst_85 {dimension_numbers = #tpu.dot_dimension_numbers<[1], [0], [0], [1], [0, 0, 1, 1], [], []>} : vector<16x16xbf16>, vector<16x16xbf16>, vector<16x16xf32> -> vector<16x16xf32>
    %315 = arith.addf %311, %314 : vector<16x16xf32>
    %316 = vector.extract_strided_slice %286 {offsets = [2, 0, 0], sizes = [1, 16, 16], strides = [1, 1, 1]} : vector<6x16x16xbf16> to vector<1x16x16xbf16>
    %317 = vector.shape_cast %316 : vector<1x16x16xbf16> to vector<16x16xbf16>
    %cst_86 = arith.constant dense<0.000000e+00> : vector<16x16xf32>
    %318 = tpu.matmul %2, %317, %cst_86 {dimension_numbers = #tpu.dot_dimension_numbers<[1], [0], [0], [1], [0, 0, 1, 1], [], []>} : vector<16x16xbf16>, vector<16x16xbf16>, vector<16x16xf32> -> vector<16x16xf32>
    %319 = arith.addf %315, %318 : vector<16x16xf32>
    %320 = vector.extract_strided_slice %283 {offsets = [3, 0, 0], sizes = [1, 16, 16], strides = [1, 1, 1]} : vector<6x16x16xbf16> to vector<1x16x16xbf16>
    %321 = vector.shape_cast %320 : vector<1x16x16xbf16> to vector<16x16xbf16>
    %cst_87 = arith.constant dense<0.000000e+00> : vector<16x16xf32>
    %322 = tpu.matmul %2, %321, %cst_87 {dimension_numbers = #tpu.dot_dimension_numbers<[1], [0], [0], [1], [0, 0, 1, 1], [], []>} : vector<16x16xbf16>, vector<16x16xbf16>, vector<16x16xf32> -> vector<16x16xf32>
    %323 = vector.extract_strided_slice %283 {offsets = [3, 0, 0], sizes = [1, 16, 16], strides = [1, 1, 1]} : vector<6x16x16xbf16> to vector<1x16x16xbf16>
    %324 = vector.shape_cast %323 : vector<1x16x16xbf16> to vector<16x16xbf16>
    %cst_88 = arith.constant dense<0.000000e+00> : vector<16x16xf32>
    %325 = tpu.matmul %3, %324, %cst_88 {dimension_numbers = #tpu.dot_dimension_numbers<[1], [0], [0], [1], [0, 0, 1, 1], [], []>} : vector<16x16xbf16>, vector<16x16xbf16>, vector<16x16xf32> -> vector<16x16xf32>
    %326 = arith.addf %322, %325 : vector<16x16xf32>
    %327 = vector.extract_strided_slice %286 {offsets = [3, 0, 0], sizes = [1, 16, 16], strides = [1, 1, 1]} : vector<6x16x16xbf16> to vector<1x16x16xbf16>
    %328 = vector.shape_cast %327 : vector<1x16x16xbf16> to vector<16x16xbf16>
    %cst_89 = arith.constant dense<0.000000e+00> : vector<16x16xf32>
    %329 = tpu.matmul %2, %328, %cst_89 {dimension_numbers = #tpu.dot_dimension_numbers<[1], [0], [0], [1], [0, 0, 1, 1], [], []>} : vector<16x16xbf16>, vector<16x16xbf16>, vector<16x16xf32> -> vector<16x16xf32>
    %330 = arith.addf %326, %329 : vector<16x16xf32>
    %331 = vector.extract_strided_slice %283 {offsets = [4, 0, 0], sizes = [1, 16, 16], strides = [1, 1, 1]} : vector<6x16x16xbf16> to vector<1x16x16xbf16>
    %332 = vector.shape_cast %331 : vector<1x16x16xbf16> to vector<16x16xbf16>
    %cst_90 = arith.constant dense<0.000000e+00> : vector<16x16xf32>
    %333 = tpu.matmul %2, %332, %cst_90 {dimension_numbers = #tpu.dot_dimension_numbers<[1], [0], [0], [1], [0, 0, 1, 1], [], []>} : vector<16x16xbf16>, vector<16x16xbf16>, vector<16x16xf32> -> vector<16x16xf32>
    %334 = vector.extract_strided_slice %283 {offsets = [4, 0, 0], sizes = [1, 16, 16], strides = [1, 1, 1]} : vector<6x16x16xbf16> to vector<1x16x16xbf16>
    %335 = vector.shape_cast %334 : vector<1x16x16xbf16> to vector<16x16xbf16>
    %cst_91 = arith.constant dense<0.000000e+00> : vector<16x16xf32>
    %336 = tpu.matmul %3, %335, %cst_91 {dimension_numbers = #tpu.dot_dimension_numbers<[1], [0], [0], [1], [0, 0, 1, 1], [], []>} : vector<16x16xbf16>, vector<16x16xbf16>, vector<16x16xf32> -> vector<16x16xf32>
    %337 = arith.addf %333, %336 : vector<16x16xf32>
    %338 = vector.extract_strided_slice %286 {offsets = [4, 0, 0], sizes = [1, 16, 16], strides = [1, 1, 1]} : vector<6x16x16xbf16> to vector<1x16x16xbf16>
    %339 = vector.shape_cast %338 : vector<1x16x16xbf16> to vector<16x16xbf16>
    %cst_92 = arith.constant dense<0.000000e+00> : vector<16x16xf32>
    %340 = tpu.matmul %2, %339, %cst_92 {dimension_numbers = #tpu.dot_dimension_numbers<[1], [0], [0], [1], [0, 0, 1, 1], [], []>} : vector<16x16xbf16>, vector<16x16xbf16>, vector<16x16xf32> -> vector<16x16xf32>
    %341 = arith.addf %337, %340 : vector<16x16xf32>
    %342 = vector.extract_strided_slice %283 {offsets = [5, 0, 0], sizes = [1, 16, 16], strides = [1, 1, 1]} : vector<6x16x16xbf16> to vector<1x16x16xbf16>
    %343 = vector.shape_cast %342 : vector<1x16x16xbf16> to vector<16x16xbf16>
    %cst_93 = arith.constant dense<0.000000e+00> : vector<16x16xf32>
    %344 = tpu.matmul %2, %343, %cst_93 {dimension_numbers = #tpu.dot_dimension_numbers<[1], [0], [0], [1], [0, 0, 1, 1], [], []>} : vector<16x16xbf16>, vector<16x16xbf16>, vector<16x16xf32> -> vector<16x16xf32>
    %345 = vector.extract_strided_slice %283 {offsets = [5, 0, 0], sizes = [1, 16, 16], strides = [1, 1, 1]} : vector<6x16x16xbf16> to vector<1x16x16xbf16>
    %346 = vector.shape_cast %345 : vector<1x16x16xbf16> to vector<16x16xbf16>
    %cst_94 = arith.constant dense<0.000000e+00> : vector<16x16xf32>
    %347 = tpu.matmul %3, %346, %cst_94 {dimension_numbers = #tpu.dot_dimension_numbers<[1], [0], [0], [1], [0, 0, 1, 1], [], []>} : vector<16x16xbf16>, vector<16x16xbf16>, vector<16x16xf32> -> vector<16x16xf32>
    %348 = arith.addf %344, %347 : vector<16x16xf32>
    %349 = vector.extract_strided_slice %286 {offsets = [5, 0, 0], sizes = [1, 16, 16], strides = [1, 1, 1]} : vector<6x16x16xbf16> to vector<1x16x16xbf16>
    %350 = vector.shape_cast %349 : vector<1x16x16xbf16> to vector<16x16xbf16>
    %cst_95 = arith.constant dense<0.000000e+00> : vector<16x16xf32>
    %351 = tpu.matmul %2, %350, %cst_95 {dimension_numbers = #tpu.dot_dimension_numbers<[1], [0], [0], [1], [0, 0, 1, 1], [], []>} : vector<16x16xbf16>, vector<16x16xbf16>, vector<16x16xf32> -> vector<16x16xf32>
    %352 = arith.addf %348, %351 : vector<16x16xf32>
    %353 = vector.shape_cast %297 : vector<16x16xf32> to vector<1x16x16xf32>
    %354 = vector.shape_cast %308 : vector<16x16xf32> to vector<1x16x16xf32>
    %355 = vector.shape_cast %319 : vector<16x16xf32> to vector<1x16x16xf32>
    %356 = vector.shape_cast %330 : vector<16x16xf32> to vector<1x16x16xf32>
    %357 = vector.shape_cast %341 : vector<16x16xf32> to vector<1x16x16xf32>
    %358 = vector.shape_cast %352 : vector<16x16xf32> to vector<1x16x16xf32>
    %359 = tpu.concatenate %353, %354, %355, %356, %357, %358 in 0 : vector<1x16x16xf32>, vector<1x16x16xf32>, vector<1x16x16xf32>, vector<1x16x16xf32>, vector<1x16x16xf32>, vector<1x16x16xf32> -> vector<6x16x16xf32>
    %360 = arith.mulf %0, %1 : vector<6x16x16xf32>
    %361 = vector.shape_cast %360 : vector<6x16x16xf32> to vector<96x16xf32>
    %362 = arith.truncf %361 : vector<96x16xf32> to vector<96x16xbf16>
    %363 = arith.extf %362 : vector<96x16xbf16> to vector<96x16xf32>
    %364 = arith.subf %361, %363 : vector<96x16xf32>
    %365 = arith.truncf %364 : vector<96x16xf32> to vector<96x16xbf16>
    %cst_96 = arith.constant dense<0.000000e+00> : vector<96x16xf32>
    %366 = tpu.matmul %362, %4, %cst_96 {dimension_numbers = #tpu.dot_dimension_numbers<[1], [0], [0], [1], [0, 0, 1, 1], [], []>} : vector<96x16xbf16>, vector<16x16xbf16>, vector<96x16xf32> -> vector<96x16xf32>
    %cst_97 = arith.constant dense<0.000000e+00> : vector<96x16xf32>
    %367 = tpu.matmul %362, %5, %cst_97 {dimension_numbers = #tpu.dot_dimension_numbers<[1], [0], [0], [1], [0, 0, 1, 1], [], []>} : vector<96x16xbf16>, vector<16x16xbf16>, vector<96x16xf32> -> vector<96x16xf32>
    %368 = arith.addf %366, %367 : vector<96x16xf32>
    %cst_98 = arith.constant dense<0.000000e+00> : vector<96x16xf32>
    %369 = tpu.matmul %365, %4, %cst_98 {dimension_numbers = #tpu.dot_dimension_numbers<[1], [0], [0], [1], [0, 0, 1, 1], [], []>} : vector<96x16xbf16>, vector<16x16xbf16>, vector<96x16xf32> -> vector<96x16xf32>
    %370 = arith.addf %368, %369 : vector<96x16xf32>
    %371 = vector.shape_cast %370 : vector<96x16xf32> to vector<6x16x16xf32>
    %372 = arith.truncf %371 : vector<6x16x16xf32> to vector<6x16x16xbf16>
    %373 = arith.extf %372 : vector<6x16x16xbf16> to vector<6x16x16xf32>
    %374 = arith.subf %371, %373 : vector<6x16x16xf32>
    %375 = arith.truncf %374 : vector<6x16x16xf32> to vector<6x16x16xbf16>
    %376 = vector.extract_strided_slice %372 {offsets = [0, 0, 0], sizes = [1, 16, 16], strides = [1, 1, 1]} : vector<6x16x16xbf16> to vector<1x16x16xbf16>
    %377 = vector.shape_cast %376 : vector<1x16x16xbf16> to vector<16x16xbf16>
    %cst_99 = arith.constant dense<0.000000e+00> : vector<16x16xf32>
    %378 = tpu.matmul %2, %377, %cst_99 {dimension_numbers = #tpu.dot_dimension_numbers<[1], [0], [0], [1], [0, 0, 1, 1], [], []>} : vector<16x16xbf16>, vector<16x16xbf16>, vector<16x16xf32> -> vector<16x16xf32>
    %379 = vector.extract_strided_slice %372 {offsets = [0, 0, 0], sizes = [1, 16, 16], strides = [1, 1, 1]} : vector<6x16x16xbf16> to vector<1x16x16xbf16>
    %380 = vector.shape_cast %379 : vector<1x16x16xbf16> to vector<16x16xbf16>
    %cst_100 = arith.constant dense<0.000000e+00> : vector<16x16xf32>
    %381 = tpu.matmul %3, %380, %cst_100 {dimension_numbers = #tpu.dot_dimension_numbers<[1], [0], [0], [1], [0, 0, 1, 1], [], []>} : vector<16x16xbf16>, vector<16x16xbf16>, vector<16x16xf32> -> vector<16x16xf32>
    %382 = arith.addf %378, %381 : vector<16x16xf32>
    %383 = vector.extract_strided_slice %375 {offsets = [0, 0, 0], sizes = [1, 16, 16], strides = [1, 1, 1]} : vector<6x16x16xbf16> to vector<1x16x16xbf16>
    %384 = vector.shape_cast %383 : vector<1x16x16xbf16> to vector<16x16xbf16>
    %cst_101 = arith.constant dense<0.000000e+00> : vector<16x16xf32>
    %385 = tpu.matmul %2, %384, %cst_101 {dimension_numbers = #tpu.dot_dimension_numbers<[1], [0], [0], [1], [0, 0, 1, 1], [], []>} : vector<16x16xbf16>, vector<16x16xbf16>, vector<16x16xf32> -> vector<16x16xf32>
    %386 = arith.addf %382, %385 : vector<16x16xf32>
    %387 = vector.extract_strided_slice %372 {offsets = [1, 0, 0], sizes = [1, 16, 16], strides = [1, 1, 1]} : vector<6x16x16xbf16> to vector<1x16x16xbf16>
    %388 = vector.shape_cast %387 : vector<1x16x16xbf16> to vector<16x16xbf16>
    %cst_102 = arith.constant dense<0.000000e+00> : vector<16x16xf32>
    %389 = tpu.matmul %2, %388, %cst_102 {dimension_numbers = #tpu.dot_dimension_numbers<[1], [0], [0], [1], [0, 0, 1, 1], [], []>} : vector<16x16xbf16>, vector<16x16xbf16>, vector<16x16xf32> -> vector<16x16xf32>
    %390 = vector.extract_strided_slice %372 {offsets = [1, 0, 0], sizes = [1, 16, 16], strides = [1, 1, 1]} : vector<6x16x16xbf16> to vector<1x16x16xbf16>
    %391 = vector.shape_cast %390 : vector<1x16x16xbf16> to vector<16x16xbf16>
    %cst_103 = arith.constant dense<0.000000e+00> : vector<16x16xf32>
    %392 = tpu.matmul %3, %391, %cst_103 {dimension_numbers = #tpu.dot_dimension_numbers<[1], [0], [0], [1], [0, 0, 1, 1], [], []>} : vector<16x16xbf16>, vector<16x16xbf16>, vector<16x16xf32> -> vector<16x16xf32>
    %393 = arith.addf %389, %392 : vector<16x16xf32>
    %394 = vector.extract_strided_slice %375 {offsets = [1, 0, 0], sizes = [1, 16, 16], strides = [1, 1, 1]} : vector<6x16x16xbf16> to vector<1x16x16xbf16>
    %395 = vector.shape_cast %394 : vector<1x16x16xbf16> to vector<16x16xbf16>
    %cst_104 = arith.constant dense<0.000000e+00> : vector<16x16xf32>
    %396 = tpu.matmul %2, %395, %cst_104 {dimension_numbers = #tpu.dot_dimension_numbers<[1], [0], [0], [1], [0, 0, 1, 1], [], []>} : vector<16x16xbf16>, vector<16x16xbf16>, vector<16x16xf32> -> vector<16x16xf32>
    %397 = arith.addf %393, %396 : vector<16x16xf32>
    %398 = vector.extract_strided_slice %372 {offsets = [2, 0, 0], sizes = [1, 16, 16], strides = [1, 1, 1]} : vector<6x16x16xbf16> to vector<1x16x16xbf16>
    %399 = vector.shape_cast %398 : vector<1x16x16xbf16> to vector<16x16xbf16>
    %cst_105 = arith.constant dense<0.000000e+00> : vector<16x16xf32>
    %400 = tpu.matmul %2, %399, %cst_105 {dimension_numbers = #tpu.dot_dimension_numbers<[1], [0], [0], [1], [0, 0, 1, 1], [], []>} : vector<16x16xbf16>, vector<16x16xbf16>, vector<16x16xf32> -> vector<16x16xf32>
    %401 = vector.extract_strided_slice %372 {offsets = [2, 0, 0], sizes = [1, 16, 16], strides = [1, 1, 1]} : vector<6x16x16xbf16> to vector<1x16x16xbf16>
    %402 = vector.shape_cast %401 : vector<1x16x16xbf16> to vector<16x16xbf16>
    %cst_106 = arith.constant dense<0.000000e+00> : vector<16x16xf32>
    %403 = tpu.matmul %3, %402, %cst_106 {dimension_numbers = #tpu.dot_dimension_numbers<[1], [0], [0], [1], [0, 0, 1, 1], [], []>} : vector<16x16xbf16>, vector<16x16xbf16>, vector<16x16xf32> -> vector<16x16xf32>
    %404 = arith.addf %400, %403 : vector<16x16xf32>
    %405 = vector.extract_strided_slice %375 {offsets = [2, 0, 0], sizes = [1, 16, 16], strides = [1, 1, 1]} : vector<6x16x16xbf16> to vector<1x16x16xbf16>
    %406 = vector.shape_cast %405 : vector<1x16x16xbf16> to vector<16x16xbf16>
    %cst_107 = arith.constant dense<0.000000e+00> : vector<16x16xf32>
    %407 = tpu.matmul %2, %406, %cst_107 {dimension_numbers = #tpu.dot_dimension_numbers<[1], [0], [0], [1], [0, 0, 1, 1], [], []>} : vector<16x16xbf16>, vector<16x16xbf16>, vector<16x16xf32> -> vector<16x16xf32>
    %408 = arith.addf %404, %407 : vector<16x16xf32>
    %409 = vector.extract_strided_slice %372 {offsets = [3, 0, 0], sizes = [1, 16, 16], strides = [1, 1, 1]} : vector<6x16x16xbf16> to vector<1x16x16xbf16>
    %410 = vector.shape_cast %409 : vector<1x16x16xbf16> to vector<16x16xbf16>
    %cst_108 = arith.constant dense<0.000000e+00> : vector<16x16xf32>
    %411 = tpu.matmul %2, %410, %cst_108 {dimension_numbers = #tpu.dot_dimension_numbers<[1], [0], [0], [1], [0, 0, 1, 1], [], []>} : vector<16x16xbf16>, vector<16x16xbf16>, vector<16x16xf32> -> vector<16x16xf32>
    %412 = vector.extract_strided_slice %372 {offsets = [3, 0, 0], sizes = [1, 16, 16], strides = [1, 1, 1]} : vector<6x16x16xbf16> to vector<1x16x16xbf16>
    %413 = vector.shape_cast %412 : vector<1x16x16xbf16> to vector<16x16xbf16>
    %cst_109 = arith.constant dense<0.000000e+00> : vector<16x16xf32>
    %414 = tpu.matmul %3, %413, %cst_109 {dimension_numbers = #tpu.dot_dimension_numbers<[1], [0], [0], [1], [0, 0, 1, 1], [], []>} : vector<16x16xbf16>, vector<16x16xbf16>, vector<16x16xf32> -> vector<16x16xf32>
    %415 = arith.addf %411, %414 : vector<16x16xf32>
    %416 = vector.extract_strided_slice %375 {offsets = [3, 0, 0], sizes = [1, 16, 16], strides = [1, 1, 1]} : vector<6x16x16xbf16> to vector<1x16x16xbf16>
    %417 = vector.shape_cast %416 : vector<1x16x16xbf16> to vector<16x16xbf16>
    %cst_110 = arith.constant dense<0.000000e+00> : vector<16x16xf32>
    %418 = tpu.matmul %2, %417, %cst_110 {dimension_numbers = #tpu.dot_dimension_numbers<[1], [0], [0], [1], [0, 0, 1, 1], [], []>} : vector<16x16xbf16>, vector<16x16xbf16>, vector<16x16xf32> -> vector<16x16xf32>
    %419 = arith.addf %415, %418 : vector<16x16xf32>
    %420 = vector.extract_strided_slice %372 {offsets = [4, 0, 0], sizes = [1, 16, 16], strides = [1, 1, 1]} : vector<6x16x16xbf16> to vector<1x16x16xbf16>
    %421 = vector.shape_cast %420 : vector<1x16x16xbf16> to vector<16x16xbf16>
    %cst_111 = arith.constant dense<0.000000e+00> : vector<16x16xf32>
    %422 = tpu.matmul %2, %421, %cst_111 {dimension_numbers = #tpu.dot_dimension_numbers<[1], [0], [0], [1], [0, 0, 1, 1], [], []>} : vector<16x16xbf16>, vector<16x16xbf16>, vector<16x16xf32> -> vector<16x16xf32>
    %423 = vector.extract_strided_slice %372 {offsets = [4, 0, 0], sizes = [1, 16, 16], strides = [1, 1, 1]} : vector<6x16x16xbf16> to vector<1x16x16xbf16>
    %424 = vector.shape_cast %423 : vector<1x16x16xbf16> to vector<16x16xbf16>
    %cst_112 = arith.constant dense<0.000000e+00> : vector<16x16xf32>
    %425 = tpu.matmul %3, %424, %cst_112 {dimension_numbers = #tpu.dot_dimension_numbers<[1], [0], [0], [1], [0, 0, 1, 1], [], []>} : vector<16x16xbf16>, vector<16x16xbf16>, vector<16x16xf32> -> vector<16x16xf32>
    %426 = arith.addf %422, %425 : vector<16x16xf32>
    %427 = vector.extract_strided_slice %375 {offsets = [4, 0, 0], sizes = [1, 16, 16], strides = [1, 1, 1]} : vector<6x16x16xbf16> to vector<1x16x16xbf16>
    %428 = vector.shape_cast %427 : vector<1x16x16xbf16> to vector<16x16xbf16>
    %cst_113 = arith.constant dense<0.000000e+00> : vector<16x16xf32>
    %429 = tpu.matmul %2, %428, %cst_113 {dimension_numbers = #tpu.dot_dimension_numbers<[1], [0], [0], [1], [0, 0, 1, 1], [], []>} : vector<16x16xbf16>, vector<16x16xbf16>, vector<16x16xf32> -> vector<16x16xf32>
    %430 = arith.addf %426, %429 : vector<16x16xf32>
    %431 = vector.extract_strided_slice %372 {offsets = [5, 0, 0], sizes = [1, 16, 16], strides = [1, 1, 1]} : vector<6x16x16xbf16> to vector<1x16x16xbf16>
    %432 = vector.shape_cast %431 : vector<1x16x16xbf16> to vector<16x16xbf16>
    %cst_114 = arith.constant dense<0.000000e+00> : vector<16x16xf32>
    %433 = tpu.matmul %2, %432, %cst_114 {dimension_numbers = #tpu.dot_dimension_numbers<[1], [0], [0], [1], [0, 0, 1, 1], [], []>} : vector<16x16xbf16>, vector<16x16xbf16>, vector<16x16xf32> -> vector<16x16xf32>
    %434 = vector.extract_strided_slice %372 {offsets = [5, 0, 0], sizes = [1, 16, 16], strides = [1, 1, 1]} : vector<6x16x16xbf16> to vector<1x16x16xbf16>
    %435 = vector.shape_cast %434 : vector<1x16x16xbf16> to vector<16x16xbf16>
    %cst_115 = arith.constant dense<0.000000e+00> : vector<16x16xf32>
    %436 = tpu.matmul %3, %435, %cst_115 {dimension_numbers = #tpu.dot_dimension_numbers<[1], [0], [0], [1], [0, 0, 1, 1], [], []>} : vector<16x16xbf16>, vector<16x16xbf16>, vector<16x16xf32> -> vector<16x16xf32>
    %437 = arith.addf %433, %436 : vector<16x16xf32>
    %438 = vector.extract_strided_slice %375 {offsets = [5, 0, 0], sizes = [1, 16, 16], strides = [1, 1, 1]} : vector<6x16x16xbf16> to vector<1x16x16xbf16>
    %439 = vector.shape_cast %438 : vector<1x16x16xbf16> to vector<16x16xbf16>
    %cst_116 = arith.constant dense<0.000000e+00> : vector<16x16xf32>
    %440 = tpu.matmul %2, %439, %cst_116 {dimension_numbers = #tpu.dot_dimension_numbers<[1], [0], [0], [1], [0, 0, 1, 1], [], []>} : vector<16x16xbf16>, vector<16x16xbf16>, vector<16x16xf32> -> vector<16x16xf32>
    %441 = arith.addf %437, %440 : vector<16x16xf32>
    %442 = vector.shape_cast %386 : vector<16x16xf32> to vector<1x16x16xf32>
    %443 = vector.shape_cast %397 : vector<16x16xf32> to vector<1x16x16xf32>
    %444 = vector.shape_cast %408 : vector<16x16xf32> to vector<1x16x16xf32>
    %445 = vector.shape_cast %419 : vector<16x16xf32> to vector<1x16x16xf32>
    %446 = vector.shape_cast %430 : vector<16x16xf32> to vector<1x16x16xf32>
    %447 = vector.shape_cast %441 : vector<16x16xf32> to vector<1x16x16xf32>
    %448 = tpu.concatenate %442, %443, %444, %445, %446, %447 in 0 : vector<1x16x16xf32>, vector<1x16x16xf32>, vector<1x16x16xf32>, vector<1x16x16xf32>, vector<1x16x16xf32>, vector<1x16x16xf32> -> vector<6x16x16xf32>
    %449 = arith.mulf %93, %93 : vector<6x16x16xf32>
    %450 = arith.mulf %181, %181 : vector<6x16x16xf32>
    %451 = arith.mulf %93, %181 : vector<6x16x16xf32>
    %452 = arith.subf %270, %449 : vector<6x16x16xf32>
    %453 = arith.subf %359, %450 : vector<6x16x16xf32>
    %454 = arith.subf %448, %451 : vector<6x16x16xf32>
    %cst_117 = arith.constant 2.000000e+00 : f32
    %455 = vector.broadcast %cst_117 : f32 to vector<6x16x16xf32>
    %456 = arith.mulf %455, %451 : vector<6x16x16xf32>
    %cst_118 = arith.constant 9.99999974E-5 : f32
    %457 = vector.broadcast %cst_118 : f32 to vector<6x16x16xf32>
    %458 = arith.addf %456, %457 : vector<6x16x16xf32>
    %cst_119 = arith.constant 2.000000e+00 : f32
    %459 = vector.broadcast %cst_119 : f32 to vector<6x16x16xf32>
    %460 = arith.mulf %459, %454 : vector<6x16x16xf32>
    %cst_120 = arith.constant 8.99999984E-4 : f32
    %461 = vector.broadcast %cst_120 : f32 to vector<6x16x16xf32>
    %462 = arith.addf %460, %461 : vector<6x16x16xf32>
    %463 = arith.mulf %458, %462 : vector<6x16x16xf32>
    %464 = arith.addf %449, %450 : vector<6x16x16xf32>
    %cst_121 = arith.constant 9.99999974E-5 : f32
    %465 = vector.broadcast %cst_121 : f32 to vector<6x16x16xf32>
    %466 = arith.addf %464, %465 : vector<6x16x16xf32>
    %467 = arith.addf %452, %453 : vector<6x16x16xf32>
    %cst_122 = arith.constant 8.99999984E-4 : f32
    %468 = vector.broadcast %cst_122 : f32 to vector<6x16x16xf32>
    %469 = arith.addf %467, %468 : vector<6x16x16xf32>
    %470 = arith.mulf %466, %469 : vector<6x16x16xf32>
    %471 = tpu.reciprocal %470 {approx = true} : vector<6x16x16xf32> -> vector<6x16x16xf32>
    %472 = arith.mulf %470, %471 : vector<6x16x16xf32>
    %cst_123 = arith.constant 2.000000e+00 : f32
    %473 = vector.broadcast %cst_123 : f32 to vector<6x16x16xf32>
    %474 = arith.subf %473, %472 : vector<6x16x16xf32>
    %475 = arith.mulf %471, %474 : vector<6x16x16xf32>
    %476 = arith.mulf %463, %475 : vector<6x16x16xf32>
    %cst_124 = arith.constant dense<0.000000e+00> : vector<6x16xf32>
    %477 = vector.multi_reduction <add>, %476, %cst_124 [1] : vector<6x16x16xf32> to vector<6x16xf32>
    %478 = vector.shape_cast %477 : vector<6x16xf32> to vector<1x6x16xf32>
    %c0_125 = arith.constant 0 : index
    %c0_126 = arith.constant 0 : index
    %c0_127 = arith.constant 0 : index
    %479 = vector.load %arg7[%c0_125, %c0_126, %c0_127] : memref<1x6x16xf32, #tpu.memory_space<vmem>>, vector<1x6x16xf32>
    tpu.vector_store %arg7[%c0_125, %c0_126, %c0_127], %478 {strides = array<i32>} : memref<1x6x16xf32, #tpu.memory_space<vmem>>, vector<1x6x16xf32>,
    return
  }
  func.func @transform_0(%arg0: i32) -> (i32, i32, i32) {
    %c0_i32 = arith.constant 0 : i32
    %c0_i32_0 = arith.constant 0 : i32
    %c0_i32_1 = arith.constant 0 : i32
    return %arg0, %c0_i32, %c0_i32_0 : i32, i32, i32
  }
  func.func @transform_1(%arg0: i32) -> (i32, i32, i32) {
    %c0_i32 = arith.constant 0 : i32
    %c0_i32_0 = arith.constant 0 : i32
    %c0_i32_1 = arith.constant 0 : i32
    return %arg0, %c0_i32, %c0_i32_0 : i32, i32, i32
  }
  func.func @transform_2(%arg0: i32) -> (i32, i32) {
    %c0_i32 = arith.constant 0 : i32
    %c0_i32_0 = arith.constant 0 : i32
    %c0_i32_1 = arith.constant 0 : i32
    return %c0_i32, %c0_i32_0 : i32, i32
  }
  func.func @transform_3(%arg0: i32) -> (i32, i32) {
    %c0_i32 = arith.constant 0 : i32
    %c0_i32_0 = arith.constant 0 : i32
    %c0_i32_1 = arith.constant 0 : i32
    return %c0_i32, %c0_i32_0 : i32, i32
  }
  func.func @transform_4(%arg0: i32) -> (i32, i32) {
    %c0_i32 = arith.constant 0 : i32
    %c0_i32_0 = arith.constant 0 : i32
    %c0_i32_1 = arith.constant 0 : i32
    return %c0_i32, %c0_i32_0 : i32, i32
  }
  func.func @transform_5(%arg0: i32) -> (i32, i32) {
    %c0_i32 = arith.constant 0 : i32
    %c0_i32_0 = arith.constant 0 : i32
    %c0_i32_1 = arith.constant 0 : i32
    return %c0_i32, %c0_i32_0 : i32, i32
  }
  func.func @transform_6(%arg0: i32) -> (i32, i32, i32) {
    %c0_i32 = arith.constant 0 : i32
    %c0_i32_0 = arith.constant 0 : i32
    %c0_i32_1 = arith.constant 0 : i32
    return %arg0, %c0_i32, %c0_i32_0 : i32, i32, i32
  }
}

</mosaic_0001>

<llo_original>
// kernel: tpu_custom_call.1
$region0: #{tpu_custom_call.1}
  #allocation0 [shape = 'u32[]', space=smem, size = 0x4, offset = 0x4, fixed_abs, tag = 'smem constant byte address 0x4 - core index']
  #allocation1 [shape = 'u32[144,128]{1,0:T(1,128)}', space=vmem, size = 0x12000, scoped, tag = 'internal scratch']
  %s0 = inlined_call_operand.hbm [shape: f32[6,16,16], index: 0, kind: input, shape index: {}]
  %s1 = inlined_call_operand.hbm [shape: f32[6,16,16], index: 1, kind: input, shape index: {}]
  %s2 = inlined_call_operand.hbm [shape: bf16[16,16], index: 2, kind: input, shape index: {}]
  %s3 = inlined_call_operand.vmem [shape: bf16[16,16], index: 3, kind: input, shape index: {}]
  %s4 = inlined_call_operand.hbm [shape: bf16[16,16], index: 4, kind: input, shape index: {}]
  %s5 = inlined_call_operand.vmem [shape: bf16[16,16], index: 5, kind: input, shape index: {}]
  %s6 = inlined_call_operand.vmem [shape: f32[1,6,16], index: 6, kind: output, shape index: {}]
  %s7 = sld [smem:[#allocation0]]
  $region50: #{tpu_custom_call.1} parent=0
    _
  %s9 = ssub.s32 1, %s7
  %s10 = scalar_select 0, %s9, %s7
  $region1: #{tpu_custom_call.1} parent=0
    #allocation2 [shape = 'u8[49152]{0}', space=vmem, size = 0xc000, scoped, tag = 'input window, operand 0, single buffered']
    #allocation3 [shape = 's32[1]{0}', space=sflag, size = 0x4, scoped, tag = 'scoped memory for tpu_custom_call.1']
    #allocation4 [shape = 'u8[49152]{0}', space=vmem, size = 0xc000, scoped, tag = 'input window, operand 1, single buffered']
    #allocation5 [shape = 's32[1]{0}', space=sflag, size = 0x4, scoped, tag = 'scoped memory for tpu_custom_call.1']
    #allocation6 [shape = 'u8[4096]{0}', space=vmem, size = 0x1000, scoped, tag = 'input window, operand 2, single buffered']
    #allocation7 [shape = 'u8[4096]{0}', space=vmem, size = 0x1000, scoped, tag = 'input window, operand 4, single buffered']
    #allocation8 [shape = 's32[1]{0}', space=sflag, size = 0x4, scoped, tag = 'scoped memory for tpu_custom_call.1']
    %11 = vsyncpa [#allocation3], 0
    %12 = vsyncpa [#allocation5], 0
    %13 = vsyncpa [#allocation8], 0
    // Predicated region
    $region2: #{tpu_custom_call.1} parent=1 // pred_check
      _
    $region3: #{tpu_custom_call.1} parent=1 // pred_check_branch
      %15 = sbr.rel (0) target = $region5
    $region4: #{tpu_custom_call.1} parent=1 // pred_region
      %s17 = ssub.s32 1536, 1536
      %18 = vsyncadd [#allocation3], %s17
      %s19 = sshll.u32 [#allocation2], 4
      %s20 = int_to_ptr.vmem [resolvable:$true] %s19
      %25 = dma.hbm_to_vmem [thread:$0]  %s0, 1536, %s20, [#allocation3], 128, 128, 8
    $region5: #{tpu_custom_call.1} parent=1 // pred_fallthru
      _
    // Predicated region
    $region6: #{tpu_custom_call.1} parent=1 // pred_check
      _
    $region7: #{tpu_custom_call.1} parent=1 // pred_check_branch
      %27 = sbr.rel (0) target = $region9
    $region8: #{tpu_custom_call.1} parent=1 // pred_region
      %s29 = ssub.s32 1536, 1536
      %30 = vsyncadd [#allocation5], %s29
      %s31 = sshll.u32 [#allocation4], 4
      %s32 = int_to_ptr.vmem [resolvable:$true] %s31
      %37 = dma.hbm_to_vmem [thread:$0]  %s1, 1536, %s32, [#allocation5], 128, 128, 8
    $region9: #{tpu_custom_call.1} parent=1 // pred_fallthru
      _
    // Predicated region
    $region10: #{tpu_custom_call.1} parent=1 // pred_check
      _
    $region11: #{tpu_custom_call.1} parent=1 // pred_check_branch
      %39 = sbr.rel (0) target = $region13
    $region12: #{tpu_custom_call.1} parent=1 // pred_region
      %s41 = ssub.s32 128, 128
      %42 = vsyncadd [#allocation5], %s41
      %s43 = sshll.u32 [#allocation6], 4
      %s44 = int_to_ptr.vmem [resolvable:$true] %s43
      %49 = dma.hbm_to_vmem [thread:$0]  %s2, 128, %s44, [#allocation5], 64, 64, 4
    $region13: #{tpu_custom_call.1} parent=1 // pred_fallthru
      _
    // Predicated region
    $region14: #{tpu_custom_call.1} parent=1 // pred_check
      _
    $region15: #{tpu_custom_call.1} parent=1 // pred_check_branch
      %51 = sbr.rel (0) target = $region17
    $region16: #{tpu_custom_call.1} parent=1 // pred_region
      _
    $region17: #{tpu_custom_call.1} parent=1 // pred_fallthru
      _
    // Predicated region
    $region18: #{tpu_custom_call.1} parent=1 // pred_check
      _
    $region19: #{tpu_custom_call.1} parent=1 // pred_check_branch
      %53 = sbr.rel (0) target = $region21
    $region20: #{tpu_custom_call.1} parent=1 // pred_region
      %s55 = ssub.s32 128, 128
      %56 = vsyncadd [#allocation8], %s55
      %s57 = sshll.u32 [#allocation7], 4
      %s58 = int_to_ptr.vmem [resolvable:$true] %s57
      %63 = dma.hbm_to_vmem [thread:$0]  %s4, 128, %s58, [#allocation8], 64, 64, 4
    $region21: #{tpu_custom_call.1} parent=1 // pred_fallthru
      _
    // Predicated region
    $region22: #{tpu_custom_call.1} parent=1 // pred_check
      _
    $region23: #{tpu_custom_call.1} parent=1 // pred_check_branch
      %65 = sbr.rel (0) target = $region25
    $region24: #{tpu_custom_call.1} parent=1 // pred_region
      _
    $region25: #{tpu_custom_call.1} parent=1 // pred_fallthru
      _
    // Predicated region
    $region26: #{tpu_custom_call.1} parent=1 // pred_check
      _
    $region27: #{tpu_custom_call.1} parent=1 // pred_check_branch
      %67 = sbr.rel (0) target = $region29
    $region28: #{tpu_custom_call.1} parent=1 // pred_region
      %68 = dma.done [#allocation3], 1536
    $region29: #{tpu_custom_call.1} parent=1 // pred_fallthru
      _
    // Predicated region
    $region30: #{tpu_custom_call.1} parent=1 // pred_check
      _
    $region31: #{tpu_custom_call.1} parent=1 // pred_check_branch
      %70 = sbr.rel (0) target = $region33
    $region32: #{tpu_custom_call.1} parent=1 // pred_region
      %71 = dma.done [#allocation5], 1536
    $region33: #{tpu_custom_call.1} parent=1 // pred_fallthru
      _
    // Predicated region
    $region34: #{tpu_custom_call.1} parent=1 // pred_check
      _
    $region35: #{tpu_custom_call.1} parent=1 // pred_check_branch
      %73 = sbr.rel (0) target = $region37
    $region36: #{tpu_custom_call.1} parent=1 // pred_region
      %74 = dma.done [#allocation5], 128
    $region37: #{tpu_custom_call.1} parent=1 // pred_fallthru
      _
    // Predicated region
    $region38: #{tpu_custom_call.1} parent=1 // pred_check
      _
    $region39: #{tpu_custom_call.1} parent=1 // pred_check_branch
      %76 = sbr.rel (0) target = $region41
    $region40: #{tpu_custom_call.1} parent=1 // pred_region
      %77 = dma.done [#allocation8], 128
    $region41: #{tpu_custom_call.1} parent=1 // pred_fallthru
      _
    %v79 = vld [vmem:[#allocation2] sm:$0xff]
    %v80 = vld [vmem:[#allocation2 + $0x8] sm:$0xff]
    %v81 = vld [vmem:[#allocation2 + $0x10] sm:$0xff]
    %v82 = vld [vmem:[#allocation2 + $0x18] sm:$0xff]
    %v83 = vld [vmem:[#allocation2 + $0x20] sm:$0xff]
    %v84 = vld [vmem:[#allocation2 + $0x28] sm:$0xff]
    %v85 = vld [vmem:[#allocation2 + $0x30] sm:$0xff]
    %v86 = vld [vmem:[#allocation2 + $0x38] sm:$0xff]
    %v87 = vld [vmem:[#allocation2 + $0x40] sm:$0xff]
    %v88 = vld [vmem:[#allocation2 + $0x48] sm:$0xff]
    %v89 = vld [vmem:[#allocation2 + $0x50] sm:$0xff]
    %v90 = vld [vmem:[#allocation2 + $0x58] sm:$0xff]
    %v91 = vld [vmem:[#allocation4] sm:$0xff]
    %v92 = vld [vmem:[#allocation4 + $0x8] sm:$0xff]
    %v93 = vld [vmem:[#allocation4 + $0x10] sm:$0xff]
    %v94 = vld [vmem:[#allocation4 + $0x18] sm:$0xff]
    %v95 = vld [vmem:[#allocation4 + $0x20] sm:$0xff]
    %v96 = vld [vmem:[#allocation4 + $0x28] sm:$0xff]
    %v97 = vld [vmem:[#allocation4 + $0x30] sm:$0xff]
    %v98 = vld [vmem:[#allocation4 + $0x38] sm:$0xff]
    %v99 = vld [vmem:[#allocation4 + $0x40] sm:$0xff]
    %v100 = vld [vmem:[#allocation4 + $0x48] sm:$0xff]
    %v101 = vld [vmem:[#allocation4 + $0x50] sm:$0xff]
    %v102 = vld [vmem:[#allocation4 + $0x58] sm:$0xff]
    %v103 = vld [vmem:[#allocation6] sm:$0xf]
    %v104 = vld [vmem:[#allocation6 + $0x4] sm:$0xf]
    %v105 = vld [vmem:[%s3] sm:$0xf]
    %v106 = vld [vmem:[%s3 + $0x4] sm:$0xf]
    %v107 = vld [vmem:[#allocation7] sm:$0xf]
    %v108 = vld [vmem:[#allocation7 + $0x4] sm:$0xf]
    %v109 = vld [vmem:[%s5] sm:$0xf]
    %v110 = vld [vmem:[%s5 + $0x4] sm:$0xf]
    %v111 = vpack.c.bf16 %v80, %v79
    %v112 = vpack.c.bf16 %v82, %v81
    %v113 = vpack.c.bf16 %v84, %v83
    %v114 = vpack.c.bf16 %v86, %v85
    %v115 = vpack.c.bf16 %v88, %v87
    %v116 = vpack.c.bf16 %v90, %v89
    %v117 = vunpack.c.l.bf16 %v111
    %v118 = vunpack.c.h.bf16 %v111
    %v119 = vunpack.c.l.bf16 %v112
    %v120 = vunpack.c.h.bf16 %v112
    %v121 = vunpack.c.l.bf16 %v113
    %v122 = vunpack.c.h.bf16 %v113
    %v123 = vunpack.c.l.bf16 %v114
    %v124 = vunpack.c.h.bf16 %v114
    %v125 = vunpack.c.l.bf16 %v115
    %v126 = vunpack.c.h.bf16 %v115
    %v127 = vunpack.c.l.bf16 %v116
    %v128 = vunpack.c.h.bf16 %v116
    %v129 = vsub.f32 %v79, %v117
    %v130 = vsub.f32 %v80, %v118
    %v131 = vsub.f32 %v81, %v119
    %v132 = vsub.f32 %v82, %v120
    %v133 = vsub.f32 %v83, %v121
    %v134 = vsub.f32 %v84, %v122
    %v135 = vsub.f32 %v85, %v123
    %v136 = vsub.f32 %v86, %v124
    %v137 = vsub.f32 %v87, %v125
    %v138 = vsub.f32 %v88, %v126
    %v139 = vsub.f32 %v89, %v127
    %v140 = vsub.f32 %v90, %v128
    %v141 = vpack.c.bf16 %v130, %v129
    %v142 = vpack.c.bf16 %v132, %v131
    %v143 = vpack.c.bf16 %v134, %v133
    %v144 = vpack.c.bf16 %v136, %v135
    %v145 = vpack.c.bf16 %v138, %v137
    %v146 = vpack.c.bf16 %v140, %v139
    %v149 = vunpack.c.l.b16 %v109
    %v150 = vunpack.c.l.b16 %v110
    %v151 = vpack.c.b16 %v150, %v149
    %vm153 = vcmask 130048
    %v155 = vsel %vm153, %v111, 0
    %v158 = vsel %vm153, %v112, 0
    %v161 = vsel %vm153, %v113, 0
    %v164 = vsel %vm153, %v114, 0
    %v167 = vsel %vm153, %v115, 0
    %v170 = vsel %vm153, %v116, 0
    %172 = vmatprep.subr.bf16.mxu0 0
    %173 = vmatpush1.bf16.msra.mxu0 %v151
    %174 = vmatprep.subr.bf16.mxu0 0
    %175 = vmatpush1.bf16.msra.mxu0 0
    %176 = vmatprep.subr.bf16.mxu0 0
    %177 = vmatpush1.bf16.msra.mxu0 0
    %178 = vmatprep.subr.bf16.mxu0 0
    %179 = vmatpush1.bf16.msra.mxu0 0
    %180 = vmatprep.subr.bf16.mxu0 0
    %181 = vmatpush1.bf16.msra.mxu0 0
    %182 = vmatprep.subr.bf16.mxu0 0
    %183 = vmatpush1.bf16.msra.mxu0 0
    %184 = vmatprep.subr.bf16.mxu0 0
    %185 = vmatpush1.bf16.msra.mxu0 0
    %186 = vmatprep.subr.bf16.mxu0 0
    %187 = vmatpush1.bf16.msra.mxu0 0
    %188 = vmatprep.subr.bf16.mxu0 0
    %189 = vmatpush1.bf16.msra.mxu0 0
    %190 = vmatprep.subr.bf16.mxu0 0
    %191 = vmatpush1.bf16.msra.mxu0 0
    %192 = vmatprep.subr.bf16.mxu0 0
    %193 = vmatpush1.bf16.msra.mxu0 0
    %194 = vmatprep.subr.bf16.mxu0 0
    %195 = vmatpush1.bf16.msra.mxu0 0
    %196 = vmatprep.subr.bf16.mxu0 0
    %197 = vmatpush1.bf16.msra.mxu0 0
    %198 = vmatprep.subr.bf16.mxu0 0
    %199 = vmatpush1.bf16.msra.mxu0 0
    %200 = vmatprep.subr.bf16.mxu0 0
    %201 = vmatpush1.bf16.msra.mxu0 0
    %202 = vmatprep.subr.bf16.mxu0 0
    %203 = vmatpush1.bf16.msra.mxu0 0
    %204 = vmatprep.mubr.bf16.mxu0 0
    %205 = vmatmul.mubr.bf16.gmra.mrb[0].mxu0 %v155
    %v206 = vpop.f32.mrb[0].mxu0
    %v207 = vadd.f32 0.0, %v206
    %v208 = vpop.f32.mrb[0].mxu0
    %v209 = vpop.f32.mrb[0].mxu0
    %v210 = vadd.f32 0.0, %v209
    %v211 = vpop.f32.mrb[0].mxu0
    %212 = vmatprep.mubr.bf16.mxu0 0
    %213 = vmatmul.mubr.bf16.gmra.mrb[0].mxu0 %v158
    %v214 = vpop.f32.mrb[0].mxu0
    %v215 = vadd.f32 0.0, %v214
    %v216 = vpop.f32.mrb[0].mxu0
    %v217 = vpop.f32.mrb[0].mxu0
    %v218 = vadd.f32 0.0, %v217
    %v219 = vpop.f32.mrb[0].mxu0
    %220 = vmatprep.mubr.bf16.mxu0 0
    %221 = vmatmul.mubr.bf16.gmra.mrb[0].mxu0 %v161
    %v222 = vpop.f32.mrb[0].mxu0
    %v223 = vadd.f32 0.0, %v222
    %v224 = vpop.f32.mrb[0].mxu0
    %v225 = vpop.f32.mrb[0].mxu0
    %v226 = vadd.f32 0.0, %v225
    %v227 = vpop.f32.mrb[0].mxu0
    %228 = vmatprep.mubr.bf16.mxu0 0
    %229 = vmatmul.mubr.bf16.gmra.mrb[0].mxu0 %v164
    %v230 = vpop.f32.mrb[0].mxu0
    %v231 = vadd.f32 0.0, %v230
    %v232 = vpop.f32.mrb[0].mxu0
    %v233 = vpop.f32.mrb[0].mxu0
    %v234 = vadd.f32 0.0, %v233
    %v235 = vpop.f32.mrb[0].mxu0
    %236 = vmatprep.mubr.bf16.mxu0 0
    %237 = vmatmul.mubr.bf16.gmra.mrb[0].mxu0 %v167
    %v238 = vpop.f32.mrb[0].mxu0
    %v239 = vadd.f32 0.0, %v238
    %v240 = vpop.f32.mrb[0].mxu0
    %v241 = vpop.f32.mrb[0].mxu0
    %v242 = vadd.f32 0.0, %v241
    %v243 = vpop.f32.mrb[0].mxu0
    %244 = vmatprep.mubr.bf16.mxu0 0
    %245 = vmatmul.mubr.bf16.gmra.mrb[0].mxu0 %v170
    %v246 = vpop.f32.mrb[0].mxu0
    %v247 = vadd.f32 0.0, %v246
    %v248 = vpop.f32.mrb[0].mxu0
    %v249 = vpop.f32.mrb[0].mxu0
    %v250 = vadd.f32 0.0, %v249
    %v251 = vpop.f32.mrb[0].mxu0
    %252 = vdwg.mxu0
    %v255 = vunpack.c.l.b16 %v107
    %v256 = vunpack.c.l.b16 %v108
    %v257 = vpack.c.b16 %v256, %v255
    %259 = vmatprep.subr.bf16.mxu0 0
    %260 = vmatpush1.bf16.msra.mxu0 %v257
    %261 = vmatprep.subr.bf16.mxu0 0
    %262 = vmatpush1.bf16.msra.mxu0 0
    %263 = vmatprep.subr.bf16.mxu0 0
    %264 = vmatpush1.bf16.msra.mxu0 0
    %265 = vmatprep.subr.bf16.mxu0 0
    %266 = vmatpush1.bf16.msra.mxu0 0
    %267 = vmatprep.subr.bf16.mxu0 0
    %268 = vmatpush1.bf16.msra.mxu0 0
    %269 = vmatprep.subr.bf16.mxu0 0
    %270 = vmatpush1.bf16.msra.mxu0 0
    %271 = vmatprep.subr.bf16.mxu0 0
    %272 = vmatpush1.bf16.msra.mxu0 0
    %273 = vmatprep.subr.bf16.mxu0 0
    %274 = vmatpush1.bf16.msra.mxu0 0
    %275 = vmatprep.subr.bf16.mxu0 0
    %276 = vmatpush1.bf16.msra.mxu0 0
    %277 = vmatprep.subr.bf16.mxu0 0
    %278 = vmatpush1.bf16.msra.mxu0 0
    %279 = vmatprep.subr.bf16.mxu0 0
    %280 = vmatpush1.bf16.msra.mxu0 0
    %281 = vmatprep.subr.bf16.mxu0 0
    %282 = vmatpush1.bf16.msra.mxu0 0
    %283 = vmatprep.subr.bf16.mxu0 0
    %284 = vmatpush1.bf16.msra.mxu0 0
    %285 = vmatprep.subr.bf16.mxu0 0
    %286 = vmatpush1.bf16.msra.mxu0 0
    %287 = vmatprep.subr.bf16.mxu0 0
    %288 = vmatpush1.bf16.msra.mxu0 0
    %289 = vmatprep.subr.bf16.mxu0 0
    %290 = vmatpush1.bf16.msra.mxu0 0
    %291 = vmatprep.mubr.bf16.mxu0 0
    %292 = vmatmul.mubr.bf16.gmra.mrb[0].mxu0 %v155
    %v293 = vpop.f32.mrb[0].mxu0
    %v294 = vadd.f32 %v207, %v293
    %v295 = vpop.f32.mrb[0].mxu0
    %v296 = vpop.f32.mrb[0].mxu0
    %v297 = vadd.f32 %v210, %v296
    %v298 = vpop.f32.mrb[0].mxu0
    %299 = vmatprep.mubr.bf16.mxu0 0
    %300 = vmatmul.mubr.bf16.gmra.mrb[0].mxu0 %v158
    %v301 = vpop.f32.mrb[0].mxu0
    %v302 = vadd.f32 %v215, %v301
    %v303 = vpop.f32.mrb[0].mxu0
    %v304 = vpop.f32.mrb[0].mxu0
    %v305 = vadd.f32 %v218, %v304
    %v306 = vpop.f32.mrb[0].mxu0
    %307 = vmatprep.mubr.bf16.mxu0 0
    %308 = vmatmul.mubr.bf16.gmra.mrb[0].mxu0 %v161
    %v309 = vpop.f32.mrb[0].mxu0
    %v310 = vadd.f32 %v223, %v309
    %v311 = vpop.f32.mrb[0].mxu0
    %v312 = vpop.f32.mrb[0].mxu0
    %v313 = vadd.f32 %v226, %v312
    %v314 = vpop.f32.mrb[0].mxu0
    %315 = vmatprep.mubr.bf16.mxu0 0
    %316 = vmatmul.mubr.bf16.gmra.mrb[0].mxu0 %v164
    %v317 = vpop.f32.mrb[0].mxu0
    %v318 = vadd.f32 %v231, %v317
    %v319 = vpop.f32.mrb[0].mxu0
    %v320 = vpop.f32.mrb[0].mxu0
    %v321 = vadd.f32 %v234, %v320
    %v322 = vpop.f32.mrb[0].mxu0
    %323 = vmatprep.mubr.bf16.mxu0 0
    %324 = vmatmul.mubr.bf16.gmra.mrb[0].mxu0 %v167
    %v325 = vpop.f32.mrb[0].mxu0
    %v326 = vadd.f32 %v239, %v325
    %v327 = vpop.f32.mrb[0].mxu0
    %v328 = vpop.f32.mrb[0].mxu0
    %v329 = vadd.f32 %v242, %v328
    %v330 = vpop.f32.mrb[0].mxu0
    %331 = vmatprep.mubr.bf16.mxu0 0
    %332 = vmatmul.mubr.bf16.gmra.mrb[0].mxu0 %v170
    %v333 = vpop.f32.mrb[0].mxu0
    %v334 = vadd.f32 %v247, %v333
    %v335 = vpop.f32.mrb[0].mxu0
    %v336 = vpop.f32.mrb[0].mxu0
    %v337 = vadd.f32 %v250, %v336
    %v338 = vpop.f32.mrb[0].mxu0
    %339 = vdwg.mxu0
    %v341 = vsel %vm153, %v141, 0
    %v344 = vsel %vm153, %v142, 0
    %v347 = vsel %vm153, %v143, 0
    %v350 = vsel %vm153, %v144, 0
    %v353 = vsel %vm153, %v145, 0
    %v356 = vsel %vm153, %v146, 0
    %358 = vmatprep.subr.bf16.mxu0 0
    %359 = vmatpush1.bf16.msra.mxu0 %v257
    %360 = vmatprep.subr.bf16.mxu0 0
    %361 = vmatpush1.bf16.msra.mxu0 0
    %362 = vmatprep.subr.bf16.mxu0 0
    %363 = vmatpush1.bf16.msra.mxu0 0
    %364 = vmatprep.subr.bf16.mxu0 0
    %365 = vmatpush1.bf16.msra.mxu0 0
    %366 = vmatprep.subr.bf16.mxu0 0
    %367 = vmatpush1.bf16.msra.mxu0 0
    %368 = vmatprep.subr.bf16.mxu0 0
    %369 = vmatpush1.bf16.msra.mxu0 0
    %370 = vmatprep.subr.bf16.mxu0 0
    %371 = vmatpush1.bf16.msra.mxu0 0
    %372 = vmatprep.subr.bf16.mxu0 0
    %373 = vmatpush1.bf16.msra.mxu0 0
    %374 = vmatprep.subr.bf16.mxu0 0
    %375 = vmatpush1.bf16.msra.mxu0 0
    %376 = vmatprep.subr.bf16.mxu0 0
    %377 = vmatpush1.bf16.msra.mxu0 0
    %378 = vmatprep.subr.bf16.mxu0 0
    %379 = vmatpush1.bf16.msra.mxu0 0
    %380 = vmatprep.subr.bf16.mxu0 0
    %381 = vmatpush1.bf16.msra.mxu0 0
    %382 = vmatprep.subr.bf16.mxu0 0
    %383 = vmatpush1.bf16.msra.mxu0 0
    %384 = vmatprep.subr.bf16.mxu0 0
    %385 = vmatpush1.bf16.msra.mxu0 0
    %386 = vmatprep.subr.bf16.mxu0 0
    %387 = vmatpush1.bf16.msra.mxu0 0
    %388 = vmatprep.subr.bf16.mxu0 0
    %389 = vmatpush1.bf16.msra.mxu0 0
    %390 = vmatprep.mubr.bf16.mxu0 0
    %391 = vmatmul.mubr.bf16.gmra.mrb[0].mxu0 %v341
    %v392 = vpop.f32.mrb[0].mxu0
    %v393 = vadd.f32 0.0, %v392
    %v394 = vpop.f32.mrb[0].mxu0
    %v395 = vpop.f32.mrb[0].mxu0
    %v396 = vadd.f32 0.0, %v395
    %v397 = vpop.f32.mrb[0].mxu0
    %398 = vmatprep.mubr.bf16.mxu0 0
    %399 = vmatmul.mubr.bf16.gmra.mrb[0].mxu0 %v344
    %v400 = vpop.f32.mrb[0].mxu0
    %v401 = vadd.f32 0.0, %v400
    %v402 = vpop.f32.mrb[0].mxu0
    %v403 = vpop.f32.mrb[0].mxu0
    %v404 = vadd.f32 0.0, %v403
    %v405 = vpop.f32.mrb[0].mxu0
    %406 = vmatprep.mubr.bf16.mxu0 0
    %407 = vmatmul.mubr.bf16.gmra.mrb[0].mxu0 %v347
    %v408 = vpop.f32.mrb[0].mxu0
    %v409 = vadd.f32 0.0, %v408
    %v410 = vpop.f32.mrb[0].mxu0
    %v411 = vpop.f32.mrb[0].mxu0
    %v412 = vadd.f32 0.0, %v411
    %v413 = vpop.f32.mrb[0].mxu0
    %414 = vmatprep.mubr.bf16.mxu0 0
    %415 = vmatmul.mubr.bf16.gmra.mrb[0].mxu0 %v350
    %v416 = vpop.f32.mrb[0].mxu0
    %v417 = vadd.f32 0.0, %v416
    %v418 = vpop.f32.mrb[0].mxu0
    %v419 = vpop.f32.mrb[0].mxu0
    %v420 = vadd.f32 0.0, %v419
    %v421 = vpop.f32.mrb[0].mxu0
    %422 = vmatprep.mubr.bf16.mxu0 0
    %423 = vmatmul.mubr.bf16.gmra.mrb[0].mxu0 %v353
    %v424 = vpop.f32.mrb[0].mxu0
    %v425 = vadd.f32 0.0, %v424
    %v426 = vpop.f32.mrb[0].mxu0
    %v427 = vpop.f32.mrb[0].mxu0
    %v428 = vadd.f32 0.0, %v427
    %v429 = vpop.f32.mrb[0].mxu0
    %430 = vmatprep.mubr.bf16.mxu0 0
    %431 = vmatmul.mubr.bf16.gmra.mrb[0].mxu0 %v356
    %v432 = vpop.f32.mrb[0].mxu0
    %v433 = vadd.f32 0.0, %v432
    %v434 = vpop.f32.mrb[0].mxu0
    %v435 = vpop.f32.mrb[0].mxu0
    %v436 = vadd.f32 0.0, %v435
    %v437 = vpop.f32.mrb[0].mxu0
    %438 = vdwg.mxu0
    %v439 = vadd.f32 %v294, %v393
    %v440 = vadd.f32 %v297, %v396
    %v441 = vadd.f32 %v302, %v401
    %v442 = vadd.f32 %v305, %v404
    %v443 = vadd.f32 %v310, %v409
    %v444 = vadd.f32 %v313, %v412
    %v445 = vadd.f32 %v318, %v417
    %v446 = vadd.f32 %v321, %v420
    %v447 = vadd.f32 %v326, %v425
    %v448 = vadd.f32 %v329, %v428
    %v449 = vadd.f32 %v334, %v433
    %v450 = vadd.f32 %v337, %v436
    %v451 = vpack.c.bf16 %v440, %v439
    %v452 = vpack.c.bf16 %v442, %v441
    %v453 = vpack.c.bf16 %v444, %v443
    %v454 = vpack.c.bf16 %v446, %v445
    %v455 = vpack.c.bf16 %v448, %v447
    %v456 = vpack.c.bf16 %v450, %v449
    %v457 = vunpack.c.l.bf16 %v451
    %v458 = vunpack.c.h.bf16 %v451
    %v459 = vunpack.c.l.bf16 %v452
    %v460 = vunpack.c.h.bf16 %v452
    %v461 = vunpack.c.l.bf16 %v453
    %v462 = vunpack.c.h.bf16 %v453
    %v463 = vunpack.c.l.bf16 %v454
    %v464 = vunpack.c.h.bf16 %v454
    %v465 = vunpack.c.l.bf16 %v455
    %v466 = vunpack.c.h.bf16 %v455
    %v467 = vunpack.c.l.bf16 %v456
    %v468 = vunpack.c.h.bf16 %v456
    %v469 = vsub.f32 %v439, %v457
    %v470 = vsub.f32 %v440, %v458
    %v471 = vsub.f32 %v441, %v459
    %v472 = vsub.f32 %v442, %v460
    %v473 = vsub.f32 %v443, %v461
    %v474 = vsub.f32 %v444, %v462
    %v475 = vsub.f32 %v445, %v463
    %v476 = vsub.f32 %v446, %v464
    %v477 = vsub.f32 %v447, %v465
    %v478 = vsub.f32 %v448, %v466
    %v479 = vsub.f32 %v449, %v467
    %v480 = vsub.f32 %v450, %v468
    %v481 = vpack.c.bf16 %v470, %v469
    %v482 = vpack.c.bf16 %v472, %v471
    %v483 = vpack.c.bf16 %v474, %v473
    %v484 = vpack.c.bf16 %v476, %v475
    %v485 = vpack.c.bf16 %v478, %v477
    %v486 = vpack.c.bf16 %v480, %v479
    %v489 = vunpack.c.l.b16 %v105
    %v490 = vunpack.c.l.b16 %v106
    %v491 = vpack.c.b16 %v490, %v489
    %v493 = vsel %vm153, %v491, 0
    %495 = vmatprep.subr.bf16.mxu0 0
    %496 = vmatpush1.bf16.msra.mxu0 %v451
    %497 = vmatprep.subr.bf16.mxu0 0
    %498 = vmatpush1.bf16.msra.mxu0 0
    %499 = vmatprep.subr.bf16.mxu0 0
    %500 = vmatpush1.bf16.msra.mxu0 0
    %501 = vmatprep.subr.bf16.mxu0 0
    %502 = vmatpush1.bf16.msra.mxu0 0
    %503 = vmatprep.subr.bf16.mxu0 0
    %504 = vmatpush1.bf16.msra.mxu0 0
    %505 = vmatprep.subr.bf16.mxu0 0
    %506 = vmatpush1.bf16.msra.mxu0 0
    %507 = vmatprep.subr.bf16.mxu0 0
    %508 = vmatpush1.bf16.msra.mxu0 0
    %509 = vmatprep.subr.bf16.mxu0 0
    %510 = vmatpush1.bf16.msra.mxu0 0
    %511 = vmatprep.subr.bf16.mxu0 0
    %512 = vmatpush1.bf16.msra.mxu0 0
    %513 = vmatprep.subr.bf16.mxu0 0
    %514 = vmatpush1.bf16.msra.mxu0 0
    %515 = vmatprep.subr.bf16.mxu0 0
    %516 = vmatpush1.bf16.msra.mxu0 0
    %517 = vmatprep.subr.bf16.mxu0 0
    %518 = vmatpush1.bf16.msra.mxu0 0
    %519 = vmatprep.subr.bf16.mxu0 0
    %520 = vmatpush1.bf16.msra.mxu0 0
    %521 = vmatprep.subr.bf16.mxu0 0
    %522 = vmatpush1.bf16.msra.mxu0 0
    %523 = vmatprep.subr.bf16.mxu0 0
    %524 = vmatpush1.bf16.msra.mxu0 0
    %525 = vmatprep.subr.bf16.mxu0 0
    %526 = vmatpush1.bf16.msra.mxu0 0
    %527 = vmatprep.mubr.bf16.mxu0 0
    %528 = vmatmul.mubr.bf16.gmra.mrb[0].mxu0 %v493
    %v529 = vpop.f32.mrb[0].mxu0
    %v530 = vadd.f32 0.0, %v529
    %v531 = vpop.f32.mrb[0].mxu0
    %v532 = vpop.f32.mrb[0].mxu0
    %v533 = vadd.f32 0.0, %v532
    %v534 = vpop.f32.mrb[0].mxu0
    %535 = vdwg.mxu0
    %v538 = vunpack.c.l.b16 %v103
    %v539 = vunpack.c.l.b16 %v104
    %v540 = vpack.c.b16 %v539, %v538
    %v542 = vsel %vm153, %v540, 0
    %544 = vmatprep.subr.bf16.mxu0 0
    %545 = vmatpush1.bf16.msra.mxu0 %v451
    %546 = vmatprep.subr.bf16.mxu0 0
    %547 = vmatpush1.bf16.msra.mxu0 0
    %548 = vmatprep.subr.bf16.mxu0 0
    %549 = vmatpush1.bf16.msra.mxu0 0
    %550 = vmatprep.subr.bf16.mxu0 0
    %551 = vmatpush1.bf16.msra.mxu0 0
    %552 = vmatprep.subr.bf16.mxu0 0
    %553 = vmatpush1.bf16.msra.mxu0 0
    %554 = vmatprep.subr.bf16.mxu0 0
    %555 = vmatpush1.bf16.msra.mxu0 0
    %556 = vmatprep.subr.bf16.mxu0 0
    %557 = vmatpush1.bf16.msra.mxu0 0
    %558 = vmatprep.subr.bf16.mxu0 0
    %559 = vmatpush1.bf16.msra.mxu0 0
    %560 = vmatprep.subr.bf16.mxu0 0
    %561 = vmatpush1.bf16.msra.mxu0 0
    %562 = vmatprep.subr.bf16.mxu0 0
    %563 = vmatpush1.bf16.msra.mxu0 0
    %564 = vmatprep.subr.bf16.mxu0 0
    %565 = vmatpush1.bf16.msra.mxu0 0
    %566 = vmatprep.subr.bf16.mxu0 0
    %567 = vmatpush1.bf16.msra.mxu0 0
    %568 = vmatprep.subr.bf16.mxu0 0
    %569 = vmatpush1.bf16.msra.mxu0 0
    %570 = vmatprep.subr.bf16.mxu0 0
    %571 = vmatpush1.bf16.msra.mxu0 0
    %572 = vmatprep.subr.bf16.mxu0 0
    %573 = vmatpush1.bf16.msra.mxu0 0
    %574 = vmatprep.subr.bf16.mxu0 0
    %575 = vmatpush1.bf16.msra.mxu0 0
    %576 = vmatprep.mubr.bf16.mxu0 0
    %577 = vmatmul.mubr.bf16.gmra.mrb[0].mxu0 %v542
    %v578 = vpop.f32.mrb[0].mxu0
    %v579 = vadd.f32 %v530, %v578
    %v580 = vpop.f32.mrb[0].mxu0
    %v581 = vpop.f32.mrb[0].mxu0
    %v582 = vadd.f32 %v533, %v581
    %v583 = vpop.f32.mrb[0].mxu0
    %584 = vdwg.mxu0
    %585 = vmatprep.subr.bf16.mxu0 0
    %586 = vmatpush1.bf16.msra.mxu0 %v481
    %587 = vmatprep.subr.bf16.mxu0 0
    %588 = vmatpush1.bf16.msra.mxu0 0
    %589 = vmatprep.subr.bf16.mxu0 0
    %590 = vmatpush1.bf16.msra.mxu0 0
    %591 = vmatprep.subr.bf16.mxu0 0
    %592 = vmatpush1.bf16.msra.mxu0 0
    %593 = vmatprep.subr.bf16.mxu0 0
    %594 = vmatpush1.bf16.msra.mxu0 0
    %595 = vmatprep.subr.bf16.mxu0 0
    %596 = vmatpush1.bf16.msra.mxu0 0
    %597 = vmatprep.subr.bf16.mxu0 0
    %598 = vmatpush1.bf16.msra.mxu0 0
    %599 = vmatprep.subr.bf16.mxu0 0
    %600 = vmatpush1.bf16.msra.mxu0 0
    %601 = vmatprep.subr.bf16.mxu0 0
    %602 = vmatpush1.bf16.msra.mxu0 0
    %603 = vmatprep.subr.bf16.mxu0 0
    %604 = vmatpush1.bf16.msra.mxu0 0
    %605 = vmatprep.subr.bf16.mxu0 0
    %606 = vmatpush1.bf16.msra.mxu0 0
    %607 = vmatprep.subr.bf16.mxu0 0
    %608 = vmatpush1.bf16.msra.mxu0 0
    %609 = vmatprep.subr.bf16.mxu0 0
    %610 = vmatpush1.bf16.msra.mxu0 0
    %611 = vmatprep.subr.bf16.mxu0 0
    %612 = vmatpush1.bf16.msra.mxu0 0
    %613 = vmatprep.subr.bf16.mxu0 0
    %614 = vmatpush1.bf16.msra.mxu0 0
    %615 = vmatprep.subr.bf16.mxu0 0
    %616 = vmatpush1.bf16.msra.mxu0 0
    %617 = vmatprep.mubr.bf16.mxu0 0
    %618 = vmatmul.mubr.bf16.gmra.mrb[0].mxu0 %v542
    %v619 = vpop.f32.mrb[0].mxu0
    %v620 = vadd.f32 0.0, %v619
    %v621 = vpop.f32.mrb[0].mxu0
    %v622 = vpop.f32.mrb[0].mxu0
    %v623 = vadd.f32 0.0, %v622
    %v624 = vpop.f32.mrb[0].mxu0
    %625 = vdwg.mxu0
    %v626 = vadd.f32 %v579, %v620
    %v627 = vadd.f32 %v582, %v623
    %628 = vmatprep.subr.bf16.mxu0 0
    %629 = vmatpush1.bf16.msra.mxu0 %v452
    %630 = vmatprep.subr.bf16.mxu0 0
    %631 = vmatpush1.bf16.msra.mxu0 0
    %632 = vmatprep.subr.bf16.mxu0 0
    %633 = vmatpush1.bf16.msra.mxu0 0
    %634 = vmatprep.subr.bf16.mxu0 0
    %635 = vmatpush1.bf16.msra.mxu0 0
    %636 = vmatprep.subr.bf16.mxu0 0
    %637 = vmatpush1.bf16.msra.mxu0 0
    %638 = vmatprep.subr.bf16.mxu0 0
    %639 = vmatpush1.bf16.msra.mxu0 0
    %640 = vmatprep.subr.bf16.mxu0 0
    %641 = vmatpush1.bf16.msra.mxu0 0
    %642 = vmatprep.subr.bf16.mxu0 0
    %643 = vmatpush1.bf16.msra.mxu0 0
    %644 = vmatprep.subr.bf16.mxu0 0
    %645 = vmatpush1.bf16.msra.mxu0 0
    %646 = vmatprep.subr.bf16.mxu0 0
    %647 = vmatpush1.bf16.msra.mxu0 0
    %648 = vmatprep.subr.bf16.mxu0 0
    %649 = vmatpush1.bf16.msra.mxu0 0
    %650 = vmatprep.subr.bf16.mxu0 0
    %651 = vmatpush1.bf16.msra.mxu0 0
    %652 = vmatprep.subr.bf16.mxu0 0
    %653 = vmatpush1.bf16.msra.mxu0 0
    %654 = vmatprep.subr.bf16.mxu0 0
    %655 = vmatpush1.bf16.msra.mxu0 0
    %656 = vmatprep.subr.bf16.mxu0 0
    %657 = vmatpush1.bf16.msra.mxu0 0
    %658 = vmatprep.subr.bf16.mxu0 0
    %659 = vmatpush1.bf16.msra.mxu0 0
    %660 = vmatprep.mubr.bf16.mxu0 0
    %661 = vmatmul.mubr.bf16.gmra.mrb[0].mxu0 %v493
    %v662 = vpop.f32.mrb[0].mxu0
    %v663 = vadd.f32 0.0, %v662
    %v664 = vpop.f32.mrb[0].mxu0
    %v665 = vpop.f32.mrb[0].mxu0
    %v666 = vadd.f32 0.0, %v665
    %v667 = vpop.f32.mrb[0].mxu0
    %668 = vdwg.mxu0
    %669 = vmatprep.subr.bf16.mxu0 0
    %670 = vmatpush1.bf16.msra.mxu0 %v452
    %671 = vmatprep.subr.bf16.mxu0 0
    %672 = vmatpush1.bf16.msra.mxu0 0
    %673 = vmatprep.subr.bf16.mxu0 0
    %674 = vmatpush1.bf16.msra.mxu0 0
    %675 = vmatprep.subr.bf16.mxu0 0
    %676 = vmatpush1.bf16.msra.mxu0 0
    %677 = vmatprep.subr.bf16.mxu0 0
    %678 = vmatpush1.bf16.msra.mxu0 0
    %679 = vmatprep.subr.bf16.mxu0 0
    %680 = vmatpush1.bf16.msra.mxu0 0
    %681 = vmatprep.subr.bf16.mxu0 0
    %682 = vmatpush1.bf16.msra.mxu0 0
    %683 = vmatprep.subr.bf16.mxu0 0
    %684 = vmatpush1.bf16.msra.mxu0 0
    %685 = vmatprep.subr.bf16.mxu0 0
    %686 = vmatpush1.bf16.msra.mxu0 0
    %687 = vmatprep.subr.bf16.mxu0 0
    %688 = vmatpush1.bf16.msra.mxu0 0
    %689 = vmatprep.subr.bf16.mxu0 0
    %690 = vmatpush1.bf16.msra.mxu0 0
    %691 = vmatprep.subr.bf16.mxu0 0
    %692 = vmatpush1.bf16.msra.mxu0 0
    %693 = vmatprep.subr.bf16.mxu0 0
    %694 = vmatpush1.bf16.msra.mxu0 0
    %695 = vmatprep.subr.bf16.mxu0 0
    %696 = vmatpush1.bf16.msra.mxu0 0
    %697 = vmatprep.subr.bf16.mxu0 0
    %698 = vmatpush1.bf16.msra.mxu0 0
    %699 = vmatprep.subr.bf16.mxu0 0
    %700 = vmatpush1.bf16.msra.mxu0 0
    %701 = vmatprep.mubr.bf16.mxu0 0
    %702 = vmatmul.mubr.bf16.gmra.mrb[0].mxu0 %v542
    %v703 = vpop.f32.mrb[0].mxu0
    %v704 = vadd.f32 %v663, %v703
    %v705 = vpop.f32.mrb[0].mxu0
    %v706 = vpop.f32.mrb[0].mxu0
    %v707 = vadd.f32 %v666, %v706
    %v708 = vpop.f32.mrb[0].mxu0
    %709 = vdwg.mxu0
    %710 = vmatprep.subr.bf16.mxu0 0
    %711 = vmatpush1.bf16.msra.mxu0 %v482
    %712 = vmatprep.subr.bf16.mxu0 0
    %713 = vmatpush1.bf16.msra.mxu0 0
    %714 = vmatprep.subr.bf16.mxu0 0
    %715 = vmatpush1.bf16.msra.mxu0 0
    %716 = vmatprep.subr.bf16.mxu0 0
    %717 = vmatpush1.bf16.msra.mxu0 0
    %718 = vmatprep.subr.bf16.mxu0 0
    %719 = vmatpush1.bf16.msra.mxu0 0
    %720 = vmatprep.subr.bf16.mxu0 0
    %721 = vmatpush1.bf16.msra.mxu0 0
    %722 = vmatprep.subr.bf16.mxu0 0
    %723 = vmatpush1.bf16.msra.mxu0 0
    %724 = vmatprep.subr.bf16.mxu0 0
    %725 = vmatpush1.bf16.msra.mxu0 0
    %726 = vmatprep.subr.bf16.mxu0 0
    %727 = vmatpush1.bf16.msra.mxu0 0
    %728 = vmatprep.subr.bf16.mxu0 0
    %729 = vmatpush1.bf16.msra.mxu0 0
    %730 = vmatprep.subr.bf16.mxu0 0
    %731 = vmatpush1.bf16.msra.mxu0 0
    %732 = vmatprep.subr.bf16.mxu0 0
    %733 = vmatpush1.bf16.msra.mxu0 0
    %734 = vmatprep.subr.bf16.mxu0 0
    %735 = vmatpush1.bf16.msra.mxu0 0
    %736 = vmatprep.subr.bf16.mxu0 0
    %737 = vmatpush1.bf16.msra.mxu0 0
    %738 = vmatprep.subr.bf16.mxu0 0
    %739 = vmatpush1.bf16.msra.mxu0 0
    %740 = vmatprep.subr.bf16.mxu0 0
    %741 = vmatpush1.bf16.msra.mxu0 0
    %742 = vmatprep.mubr.bf16.mxu0 0
    %743 = vmatmul.mubr.bf16.gmra.mrb[0].mxu0 %v542
    %v744 = vpop.f32.mrb[0].mxu0
    %v745 = vadd.f32 0.0, %v744
    %v746 = vpop.f32.mrb[0].mxu0
    %v747 = vpop.f32.mrb[0].mxu0
    %v748 = vadd.f32 0.0, %v747
    %v749 = vpop.f32.mrb[0].mxu0
    %750 = vdwg.mxu0
    %v751 = vadd.f32 %v704, %v745
    %v752 = vadd.f32 %v707, %v748
    %753 = vmatprep.subr.bf16.mxu0 0
    %754 = vmatpush1.bf16.msra.mxu0 %v453
    %755 = vmatprep.subr.bf16.mxu0 0
    %756 = vmatpush1.bf16.msra.mxu0 0
    %757 = vmatprep.subr.bf16.mxu0 0
    %758 = vmatpush1.bf16.msra.mxu0 0
    %759 = vmatprep.subr.bf16.mxu0 0
    %760 = vmatpush1.bf16.msra.mxu0 0
    %761 = vmatprep.subr.bf16.mxu0 0
    %762 = vmatpush1.bf16.msra.mxu0 0
    %763 = vmatprep.subr.bf16.mxu0 0
    %764 = vmatpush1.bf16.msra.mxu0 0
    %765 = vmatprep.subr.bf16.mxu0 0
    %766 = vmatpush1.bf16.msra.mxu0 0
    %767 = vmatprep.subr.bf16.mxu0 0
    %768 = vmatpush1.bf16.msra.mxu0 0
    %769 = vmatprep.subr.bf16.mxu0 0
    %770 = vmatpush1.bf16.msra.mxu0 0
    %771 = vmatprep.subr.bf16.mxu0 0
    %772 = vmatpush1.bf16.msra.mxu0 0
    %773 = vmatprep.subr.bf16.mxu0 0
    %774 = vmatpush1.bf16.msra.mxu0 0
    %775 = vmatprep.subr.bf16.mxu0 0
    %776 = vmatpush1.bf16.msra.mxu0 0
    %777 = vmatprep.subr.bf16.mxu0 0
    %778 = vmatpush1.bf16.msra.mxu0 0
    %779 = vmatprep.subr.bf16.mxu0 0
    %780 = vmatpush1.bf16.msra.mxu0 0
    %781 = vmatprep.subr.bf16.mxu0 0
    %782 = vmatpush1.bf16.msra.mxu0 0
    %783 = vmatprep.subr.bf16.mxu0 0
    %784 = vmatpush1.bf16.msra.mxu0 0
    %785 = vmatprep.mubr.bf16.mxu0 0
    %786 = vmatmul.mubr.bf16.gmra.mrb[0].mxu0 %v493
    %v787 = vpop.f32.mrb[0].mxu0
    %v788 = vadd.f32 0.0, %v787
    %v789 = vpop.f32.mrb[0].mxu0
    %v790 = vpop.f32.mrb[0].mxu0
    %v791 = vadd.f32 0.0, %v790
    %v792 = vpop.f32.mrb[0].mxu0
    %793 = vdwg.mxu0
    %794 = vmatprep.subr.bf16.mxu0 0
    %795 = vmatpush1.bf16.msra.mxu0 %v453
    %796 = vmatprep.subr.bf16.mxu0 0
    %797 = vmatpush1.bf16.msra.mxu0 0
    %798 = vmatprep.subr.bf16.mxu0 0
    %799 = vmatpush1.bf16.msra.mxu0 0
    %800 = vmatprep.subr.bf16.mxu0 0
    %801 = vmatpush1.bf16.msra.mxu0 0
    %802 = vmatprep.subr.bf16.mxu0 0
    %803 = vmatpush1.bf16.msra.mxu0 0
    %804 = vmatprep.subr.bf16.mxu0 0
    %805 = vmatpush1.bf16.msra.mxu0 0
    %806 = vmatprep.subr.bf16.mxu0 0
    %807 = vmatpush1.bf16.msra.mxu0 0
    %808 = vmatprep.subr.bf16.mxu0 0
    %809 = vmatpush1.bf16.msra.mxu0 0
    %810 = vmatprep.subr.bf16.mxu0 0
    %811 = vmatpush1.bf16.msra.mxu0 0
    %812 = vmatprep.subr.bf16.mxu0 0
    %813 = vmatpush1.bf16.msra.mxu0 0
    %814 = vmatprep.subr.bf16.mxu0 0
    %815 = vmatpush1.bf16.msra.mxu0 0
    %816 = vmatprep.subr.bf16.mxu0 0
    %817 = vmatpush1.bf16.msra.mxu0 0
    %818 = vmatprep.subr.bf16.mxu0 0
    %819 = vmatpush1.bf16.msra.mxu0 0
    %820 = vmatprep.subr.bf16.mxu0 0
    %821 = vmatpush1.bf16.msra.mxu0 0
    %822 = vmatprep.subr.bf16.mxu0 0
    %823 = vmatpush1.bf16.msra.mxu0 0
    %824 = vmatprep.subr.bf16.mxu0 0
    %825 = vmatpush1.bf16.msra.mxu0 0
    %826 = vmatprep.mubr.bf16.mxu0 0
    %827 = vmatmul.mubr.bf16.gmra.mrb[0].mxu0 %v542
    %v828 = vpop.f32.mrb[0].mxu0
    %v829 = vadd.f32 %v788, %v828
    %v830 = vpop.f32.mrb[0].mxu0
    %v831 = vpop.f32.mrb[0].mxu0
    %v832 = vadd.f32 %v791, %v831
    %v833 = vpop.f32.mrb[0].mxu0
    %834 = vdwg.mxu0
    %835 = vmatprep.subr.bf16.mxu0 0
    %836 = vmatpush1.bf16.msra.mxu0 %v483
    %837 = vmatprep.subr.bf16.mxu0 0
    %838 = vmatpush1.bf16.msra.mxu0 0
    %839 = vmatprep.subr.bf16.mxu0 0
    %840 = vmatpush1.bf16.msra.mxu0 0
    %841 = vmatprep.subr.bf16.mxu0 0
    %842 = vmatpush1.bf16.msra.mxu0 0
    %843 = vmatprep.subr.bf16.mxu0 0
    %844 = vmatpush1.bf16.msra.mxu0 0
    %845 = vmatprep.subr.bf16.mxu0 0
    %846 = vmatpush1.bf16.msra.mxu0 0
    %847 = vmatprep.subr.bf16.mxu0 0
    %848 = vmatpush1.bf16.msra.mxu0 0
    %849 = vmatprep.subr.bf16.mxu0 0
    %850 = vmatpush1.bf16.msra.mxu0 0
    %851 = vmatprep.subr.bf16.mxu0 0
    %852 = vmatpush1.bf16.msra.mxu0 0
    %853 = vmatprep.subr.bf16.mxu0 0
    %854 = vmatpush1.bf16.msra.mxu0 0
    %855 = vmatprep.subr.bf16.mxu0 0
    %856 = vmatpush1.bf16.msra.mxu0 0
    %857 = vmatprep.subr.bf16.mxu0 0
    %858 = vmatpush1.bf16.msra.mxu0 0
    %859 = vmatprep.subr.bf16.mxu0 0
    %860 = vmatpush1.bf16.msra.mxu0 0
    %861 = vmatprep.subr.bf16.mxu0 0
    %862 = vmatpush1.bf16.msra.mxu0 0
    %863 = vmatprep.subr.bf16.mxu0 0
    %864 = vmatpush1.bf16.msra.mxu0 0
    %865 = vmatprep.subr.bf16.mxu0 0
    %866 = vmatpush1.bf16.msra.mxu0 0
    %867 = vmatprep.mubr.bf16.mxu0 0
    %868 = vmatmul.mubr.bf16.gmra.mrb[0].mxu0 %v542
    %v869 = vpop.f32.mrb[0].mxu0
    %v870 = vadd.f32 0.0, %v869
    %v871 = vpop.f32.mrb[0].mxu0
    %v872 = vpop.f32.mrb[0].mxu0
    %v873 = vadd.f32 0.0, %v872
    %v874 = vpop.f32.mrb[0].mxu0
    %875 = vdwg.mxu0
    %v876 = vadd.f32 %v829, %v870
    %v877 = vadd.f32 %v832, %v873
    %878 = vmatprep.subr.bf16.mxu0 0
    %879 = vmatpush1.bf16.msra.mxu0 %v454
    %880 = vmatprep.subr.bf16.mxu0 0
    %881 = vmatpush1.bf16.msra.mxu0 0
    %882 = vmatprep.subr.bf16.mxu0 0
    %883 = vmatpush1.bf16.msra.mxu0 0
    %884 = vmatprep.subr.bf16.mxu0 0
    %885 = vmatpush1.bf16.msra.mxu0 0
    %886 = vmatprep.subr.bf16.mxu0 0
    %887 = vmatpush1.bf16.msra.mxu0 0
    %888 = vmatprep.subr.bf16.mxu0 0
    %889 = vmatpush1.bf16.msra.mxu0 0
    %890 = vmatprep.subr.bf16.mxu0 0
    %891 = vmatpush1.bf16.msra.mxu0 0
    %892 = vmatprep.subr.bf16.mxu0 0
    %893 = vmatpush1.bf16.msra.mxu0 0
    %894 = vmatprep.subr.bf16.mxu0 0
    %895 = vmatpush1.bf16.msra.mxu0 0
    %896 = vmatprep.subr.bf16.mxu0 0
    %897 = vmatpush1.bf16.msra.mxu0 0
    %898 = vmatprep.subr.bf16.mxu0 0
    %899 = vmatpush1.bf16.msra.mxu0 0
    %900 = vmatprep.subr.bf16.mxu0 0
    %901 = vmatpush1.bf16.msra.mxu0 0
    %902 = vmatprep.subr.bf16.mxu0 0
    %903 = vmatpush1.bf16.msra.mxu0 0
    %904 = vmatprep.subr.bf16.mxu0 0
    %905 = vmatpush1.bf16.msra.mxu0 0
    %906 = vmatprep.subr.bf16.mxu0 0
    %907 = vmatpush1.bf16.msra.mxu0 0
    %908 = vmatprep.subr.bf16.mxu0 0
    %909 = vmatpush1.bf16.msra.mxu0 0
    %910 = vmatprep.mubr.bf16.mxu0 0
    %911 = vmatmul.mubr.bf16.gmra.mrb[0].mxu0 %v493
    %v912 = vpop.f32.mrb[0].mxu0
    %v913 = vadd.f32 0.0, %v912
    %v914 = vpop.f32.mrb[0].mxu0
    %v915 = vpop.f32.mrb[0].mxu0
    %v916 = vadd.f32 0.0, %v915
    %v917 = vpop.f32.mrb[0].mxu0
    %918 = vdwg.mxu0
    %919 = vmatprep.subr.bf16.mxu0 0
    %920 = vmatpush1.bf16.msra.mxu0 %v454
    %921 = vmatprep.subr.bf16.mxu0 0
    %922 = vmatpush1.bf16.msra.mxu0 0
    %923 = vmatprep.subr.bf16.mxu0 0
    %924 = vmatpush1.bf16.msra.mxu0 0
    %925 = vmatprep.subr.bf16.mxu0 0
    %926 = vmatpush1.bf16.msra.mxu0 0
    %927 = vmatprep.subr.bf16.mxu0 0
    %928 = vmatpush1.bf16.msra.mxu0 0
    %929 = vmatprep.subr.bf16.mxu0 0
    %930 = vmatpush1.bf16.msra.mxu0 0
    %931 = vmatprep.subr.bf16.mxu0 0
    %932 = vmatpush1.bf16.msra.mxu0 0
    %933 = vmatprep.subr.bf16.mxu0 0
    %934 = vmatpush1.bf16.msra.mxu0 0
    %935 = vmatprep.subr.bf16.mxu0 0
    %936 = vmatpush1.bf16.msra.mxu0 0
    %937 = vmatprep.subr.bf16.mxu0 0
    %938 = vmatpush1.bf16.msra.mxu0 0
    %939 = vmatprep.subr.bf16.mxu0 0
    %940 = vmatpush1.bf16.msra.mxu0 0
    %941 = vmatprep.subr.bf16.mxu0 0
    %942 = vmatpush1.bf16.msra.mxu0 0
    %943 = vmatprep.subr.bf16.mxu0 0
    %944 = vmatpush1.bf16.msra.mxu0 0
    %945 = vmatprep.subr.bf16.mxu0 0
    %946 = vmatpush1.bf16.msra.mxu0 0
    %947 = vmatprep.subr.bf16.mxu0 0
    %948 = vmatpush1.bf16.msra.mxu0 0
    %949 = vmatprep.subr.bf16.mxu0 0
    %950 = vmatpush1.bf16.msra.mxu0 0
    %951 = vmatprep.mubr.bf16.mxu0 0
    %952 = vmatmul.mubr.bf16.gmra.mrb[0].mxu0 %v542
    %v953 = vpop.f32.mrb[0].mxu0
    %v954 = vadd.f32 %v913, %v953
    %v955 = vpop.f32.mrb[0].mxu0
    %v956 = vpop.f32.mrb[0].mxu0
    %v957 = vadd.f32 %v916, %v956
    %v958 = vpop.f32.mrb[0].mxu0
    %959 = vdwg.mxu0
    %960 = vmatprep.subr.bf16.mxu0 0
    %961 = vmatpush1.bf16.msra.mxu0 %v484
    %962 = vmatprep.subr.bf16.mxu0 0
    %963 = vmatpush1.bf16.msra.mxu0 0
    %964 = vmatprep.subr.bf16.mxu0 0
    %965 = vmatpush1.bf16.msra.mxu0 0
    %966 = vmatprep.subr.bf16.mxu0 0
    %967 = vmatpush1.bf16.msra.mxu0 0
    %968 = vmatprep.subr.bf16.mxu0 0
    %969 = vmatpush1.bf16.msra.mxu0 0
    %970 = vmatprep.subr.bf16.mxu0 0
    %971 = vmatpush1.bf16.msra.mxu0 0
    %972 = vmatprep.subr.bf16.mxu0 0
    %973 = vmatpush1.bf16.msra.mxu0 0
    %974 = vmatprep.subr.bf16.mxu0 0
    %975 = vmatpush1.bf16.msra.mxu0 0
    %976 = vmatprep.subr.bf16.mxu0 0
    %977 = vmatpush1.bf16.msra.mxu0 0
    %978 = vmatprep.subr.bf16.mxu0 0
    %979 = vmatpush1.bf16.msra.mxu0 0
    %980 = vmatprep.subr.bf16.mxu0 0
    %981 = vmatpush1.bf16.msra.mxu0 0
    %982 = vmatprep.subr.bf16.mxu0 0
    %983 = vmatpush1.bf16.msra.mxu0 0
    %984 = vmatprep.subr.bf16.mxu0 0
    %985 = vmatpush1.bf16.msra.mxu0 0
    %986 = vmatprep.subr.bf16.mxu0 0
    %987 = vmatpush1.bf16.msra.mxu0 0
    %988 = vmatprep.subr.bf16.mxu0 0
    %989 = vmatpush1.bf16.msra.mxu0 0
    %990 = vmatprep.subr.bf16.mxu0 0
    %991 = vmatpush1.bf16.msra.mxu0 0
    %992 = vmatprep.mubr.bf16.mxu0 0
    %993 = vmatmul.mubr.bf16.gmra.mrb[0].mxu0 %v542
    %v994 = vpop.f32.mrb[0].mxu0
    %v995 = vadd.f32 0.0, %v994
    %v996 = vpop.f32.mrb[0].mxu0
    %v997 = vpop.f32.mrb[0].mxu0
    %v998 = vadd.f32 0.0, %v997
    %v999 = vpop.f32.mrb[0].mxu0
    %1000 = vdwg.mxu0
    %v1001 = vadd.f32 %v954, %v995
    %v1002 = vadd.f32 %v957, %v998
    %1003 = vmatprep.subr.bf16.mxu0 0
    %1004 = vmatpush1.bf16.msra.mxu0 %v455
    %1005 = vmatprep.subr.bf16.mxu0 0
    %1006 = vmatpush1.bf16.msra.mxu0 0
    %1007 = vmatprep.subr.bf16.mxu0 0
    %1008 = vmatpush1.bf16.msra.mxu0 0
    %1009 = vmatprep.subr.bf16.mxu0 0
    %1010 = vmatpush1.bf16.msra.mxu0 0
    %1011 = vmatprep.subr.bf16.mxu0 0
    %1012 = vmatpush1.bf16.msra.mxu0 0
    %1013 = vmatprep.subr.bf16.mxu0 0
    %1014 = vmatpush1.bf16.msra.mxu0 0
    %1015 = vmatprep.subr.bf16.mxu0 0
    %1016 = vmatpush1.bf16.msra.mxu0 0
    %1017 = vmatprep.subr.bf16.mxu0 0
    %1018 = vmatpush1.bf16.msra.mxu0 0
    %1019 = vmatprep.subr.bf16.mxu0 0
    %1020 = vmatpush1.bf16.msra.mxu0 0
    %1021 = vmatprep.subr.bf16.mxu0 0
    %1022 = vmatpush1.bf16.msra.mxu0 0
    %1023 = vmatprep.subr.bf16.mxu0 0
    %1024 = vmatpush1.bf16.msra.mxu0 0
    %1025 = vmatprep.subr.bf16.mxu0 0
    %1026 = vmatpush1.bf16.msra.mxu0 0
    %1027 = vmatprep.subr.bf16.mxu0 0
    %1028 = vmatpush1.bf16.msra.mxu0 0
    %1029 = vmatprep.subr.bf16.mxu0 0
    %1030 = vmatpush1.bf16.msra.mxu0 0
    %1031 = vmatprep.subr.bf16.mxu0 0
    %1032 = vmatpush1.bf16.msra.mxu0 0
    %1033 = vmatprep.subr.bf16.mxu0 0
    %1034 = vmatpush1.bf16.msra.mxu0 0
    %1035 = vmatprep.mubr.bf16.mxu0 0
    %1036 = vmatmul.mubr.bf16.gmra.mrb[0].mxu0 %v493
    %v1037 = vpop.f32.mrb[0].mxu0
    %v1038 = vadd.f32 0.0, %v1037
    %v1039 = vpop.f32.mrb[0].mxu0
    %v1040 = vpop.f32.mrb[0].mxu0
    %v1041 = vadd.f32 0.0, %v1040
    %v1042 = vpop.f32.mrb[0].mxu0
    %1043 = vdwg.mxu0
    %1044 = vmatprep.subr.bf16.mxu0 0
    %1045 = vmatpush1.bf16.msra.mxu0 %v455
    %1046 = vmatprep.subr.bf16.mxu0 0
    %1047 = vmatpush1.bf16.msra.mxu0 0
    %1048 = vmatprep.subr.bf16.mxu0 0
    %1049 = vmatpush1.bf16.msra.mxu0 0
    %1050 = vmatprep.subr.bf16.mxu0 0
    %1051 = vmatpush1.bf16.msra.mxu0 0
    %1052 = vmatprep.subr.bf16.mxu0 0
    %1053 = vmatpush1.bf16.msra.mxu0 0
    %1054 = vmatprep.subr.bf16.mxu0 0
    %1055 = vmatpush1.bf16.msra.mxu0 0
    %1056 = vmatprep.subr.bf16.mxu0 0
    %1057 = vmatpush1.bf16.msra.mxu0 0
    %1058 = vmatprep.subr.bf16.mxu0 0
    %1059 = vmatpush1.bf16.msra.mxu0 0
    %1060 = vmatprep.subr.bf16.mxu0 0
    %1061 = vmatpush1.bf16.msra.mxu0 0
    %1062 = vmatprep.subr.bf16.mxu0 0
    %1063 = vmatpush1.bf16.msra.mxu0 0
    %1064 = vmatprep.subr.bf16.mxu0 0
    %1065 = vmatpush1.bf16.msra.mxu0 0
    %1066 = vmatprep.subr.bf16.mxu0 0
    %1067 = vmatpush1.bf16.msra.mxu0 0
    %1068 = vmatprep.subr.bf16.mxu0 0
    %1069 = vmatpush1.bf16.msra.mxu0 0
    %1070 = vmatprep.subr.bf16.mxu0 0
    %1071 = vmatpush1.bf16.msra.mxu0 0
    %1072 = vmatprep.subr.bf16.mxu0 0
    %1073 = vmatpush1.bf16.msra.mxu0 0
    %1074 = vmatprep.subr.bf16.mxu0 0
    %1075 = vmatpush1.bf16.msra.mxu0 0
    %1076 = vmatprep.mubr.bf16.mxu0 0
    %1077 = vmatmul.mubr.bf16.gmra.mrb[0].mxu0 %v542
    %v1078 = vpop.f32.mrb[0].mxu0
    %v1079 = vadd.f32 %v1038, %v1078
    %v1080 = vpop.f32.mrb[0].mxu0
    %v1081 = vpop.f32.mrb[0].mxu0
    %v1082 = vadd.f32 %v1041, %v1081
    %v1083 = vpop.f32.mrb[0].mxu0
    %1084 = vdwg.mxu0
    %1085 = vmatprep.subr.bf16.mxu0 0
    %1086 = vmatpush1.bf16.msra.mxu0 %v485
    %1087 = vmatprep.subr.bf16.mxu0 0
    %1088 = vmatpush1.bf16.msra.mxu0 0
    %1089 = vmatprep.subr.bf16.mxu0 0
    %1090 = vmatpush1.bf16.msra.mxu0 0
    %1091 = vmatprep.subr.bf16.mxu0 0
    %1092 = vmatpush1.bf16.msra.mxu0 0
    %1093 = vmatprep.subr.bf16.mxu0 0
    %1094 = vmatpush1.bf16.msra.mxu0 0
    %1095 = vmatprep.subr.bf16.mxu0 0
    %1096 = vmatpush1.bf16.msra.mxu0 0
    %1097 = vmatprep.subr.bf16.mxu0 0
    %1098 = vmatpush1.bf16.msra.mxu0 0
    %1099 = vmatprep.subr.bf16.mxu0 0
    %1100 = vmatpush1.bf16.msra.mxu0 0
    %1101 = vmatprep.subr.bf16.mxu0 0
    %1102 = vmatpush1.bf16.msra.mxu0 0
    %1103 = vmatprep.subr.bf16.mxu0 0
    %1104 = vmatpush1.bf16.msra.mxu0 0
    %1105 = vmatprep.subr.bf16.mxu0 0
    %1106 = vmatpush1.bf16.msra.mxu0 0
    %1107 = vmatprep.subr.bf16.mxu0 0
    %1108 = vmatpush1.bf16.msra.mxu0 0
    %1109 = vmatprep.subr.bf16.mxu0 0
    %1110 = vmatpush1.bf16.msra.mxu0 0
    %1111 = vmatprep.subr.bf16.mxu0 0
    %1112 = vmatpush1.bf16.msra.mxu0 0
    %1113 = vmatprep.subr.bf16.mxu0 0
    %1114 = vmatpush1.bf16.msra.mxu0 0
    %1115 = vmatprep.subr.bf16.mxu0 0
    %1116 = vmatpush1.bf16.msra.mxu0 0
    %1117 = vmatprep.mubr.bf16.mxu0 0
    %1118 = vmatmul.mubr.bf16.gmra.mrb[0].mxu0 %v542
    %v1119 = vpop.f32.mrb[0].mxu0
    %v1120 = vadd.f32 0.0, %v1119
    %v1121 = vpop.f32.mrb[0].mxu0
    %v1122 = vpop.f32.mrb[0].mxu0
    %v1123 = vadd.f32 0.0, %v1122
    %v1124 = vpop.f32.mrb[0].mxu0
    %1125 = vdwg.mxu0
    %v1126 = vadd.f32 %v1079, %v1120
    %v1127 = vadd.f32 %v1082, %v1123
    %1128 = vmatprep.subr.bf16.mxu0 0
    %1129 = vmatpush1.bf16.msra.mxu0 %v456
    %1130 = vmatprep.subr.bf16.mxu0 0
    %1131 = vmatpush1.bf16.msra.mxu0 0
    %1132 = vmatprep.subr.bf16.mxu0 0
    %1133 = vmatpush1.bf16.msra.mxu0 0
    %1134 = vmatprep.subr.bf16.mxu0 0
    %1135 = vmatpush1.bf16.msra.mxu0 0
    %1136 = vmatprep.subr.bf16.mxu0 0
    %1137 = vmatpush1.bf16.msra.mxu0 0
    %1138 = vmatprep.subr.bf16.mxu0 0
    %1139 = vmatpush1.bf16.msra.mxu0 0
    %1140 = vmatprep.subr.bf16.mxu0 0
    %1141 = vmatpush1.bf16.msra.mxu0 0
    %1142 = vmatprep.subr.bf16.mxu0 0
    %1143 = vmatpush1.bf16.msra.mxu0 0
    %1144 = vmatprep.subr.bf16.mxu0 0
    %1145 = vmatpush1.bf16.msra.mxu0 0
    %1146 = vmatprep.subr.bf16.mxu0 0
    %1147 = vmatpush1.bf16.msra.mxu0 0
    %1148 = vmatprep.subr.bf16.mxu0 0
    %1149 = vmatpush1.bf16.msra.mxu0 0
    %1150 = vmatprep.subr.bf16.mxu0 0
    %1151 = vmatpush1.bf16.msra.mxu0 0
    %1152 = vmatprep.subr.bf16.mxu0 0
    %1153 = vmatpush1.bf16.msra.mxu0 0
    %1154 = vmatprep.subr.bf16.mxu0 0
    %1155 = vmatpush1.bf16.msra.mxu0 0
    %1156 = vmatprep.subr.bf16.mxu0 0
    %1157 = vmatpush1.bf16.msra.mxu0 0
    %1158 = vmatprep.subr.bf16.mxu0 0
    %1159 = vmatpush1.bf16.msra.mxu0 0
    %1160 = vmatprep.mubr.bf16.mxu0 0
    %1161 = vmatmul.mubr.bf16.gmra.mrb[0].mxu0 %v493
    %v1162 = vpop.f32.mrb[0].mxu0
    %v1163 = vadd.f32 0.0, %v1162
    %v1164 = vpop.f32.mrb[0].mxu0
    %v1165 = vpop.f32.mrb[0].mxu0
    %v1166 = vadd.f32 0.0, %v1165
    %v1167 = vpop.f32.mrb[0].mxu0
    %1168 = vdwg.mxu0
    %1169 = vmatprep.subr.bf16.mxu0 0
    %1170 = vmatpush1.bf16.msra.mxu0 %v456
    %1171 = vmatprep.subr.bf16.mxu0 0
    %1172 = vmatpush1.bf16.msra.mxu0 0
    %1173 = vmatprep.subr.bf16.mxu0 0
    %1174 = vmatpush1.bf16.msra.mxu0 0
    %1175 = vmatprep.subr.bf16.mxu0 0
    %1176 = vmatpush1.bf16.msra.mxu0 0
    %1177 = vmatprep.subr.bf16.mxu0 0
    %1178 = vmatpush1.bf16.msra.mxu0 0
    %1179 = vmatprep.subr.bf16.mxu0 0
    %1180 = vmatpush1.bf16.msra.mxu0 0
    %1181 = vmatprep.subr.bf16.mxu0 0
    %1182 = vmatpush1.bf16.msra.mxu0 0
    %1183 = vmatprep.subr.bf16.mxu0 0
    %1184 = vmatpush1.bf16.msra.mxu0 0
    %1185 = vmatprep.subr.bf16.mxu0 0
    %1186 = vmatpush1.bf16.msra.mxu0 0
    %1187 = vmatprep.subr.bf16.mxu0 0
    %1188 = vmatpush1.bf16.msra.mxu0 0
    %1189 = vmatprep.subr.bf16.mxu0 0
    %1190 = vmatpush1.bf16.msra.mxu0 0
    %1191 = vmatprep.subr.bf16.mxu0 0
    %1192 = vmatpush1.bf16.msra.mxu0 0
    %1193 = vmatprep.subr.bf16.mxu0 0
    %1194 = vmatpush1.bf16.msra.mxu0 0
    %1195 = vmatprep.subr.bf16.mxu0 0
    %1196 = vmatpush1.bf16.msra.mxu0 0
    %1197 = vmatprep.subr.bf16.mxu0 0
    %1198 = vmatpush1.bf16.msra.mxu0 0
    %1199 = vmatprep.subr.bf16.mxu0 0
    %1200 = vmatpush1.bf16.msra.mxu0 0
    %1201 = vmatprep.mubr.bf16.mxu0 0
    %1202 = vmatmul.mubr.bf16.gmra.mrb[0].mxu0 %v542
    %v1203 = vpop.f32.mrb[0].mxu0
    %v1204 = vadd.f32 %v1163, %v1203
    %v1205 = vpop.f32.mrb[0].mxu0
    %v1206 = vpop.f32.mrb[0].mxu0
    %v1207 = vadd.f32 %v1166, %v1206
    %v1208 = vpop.f32.mrb[0].mxu0
    %1209 = vdwg.mxu0
    %1210 = vmatprep.subr.bf16.mxu0 0
    %1211 = vmatpush1.bf16.msra.mxu0 %v486
    %1212 = vmatprep.subr.bf16.mxu0 0
    %1213 = vmatpush1.bf16.msra.mxu0 0
    %1214 = vmatprep.subr.bf16.mxu0 0
    %1215 = vmatpush1.bf16.msra.mxu0 0
    %1216 = vmatprep.subr.bf16.mxu0 0
    %1217 = vmatpush1.bf16.msra.mxu0 0
    %1218 = vmatprep.subr.bf16.mxu0 0
    %1219 = vmatpush1.bf16.msra.mxu0 0
    %1220 = vmatprep.subr.bf16.mxu0 0
    %1221 = vmatpush1.bf16.msra.mxu0 0
    %1222 = vmatprep.subr.bf16.mxu0 0
    %1223 = vmatpush1.bf16.msra.mxu0 0
    %1224 = vmatprep.subr.bf16.mxu0 0
    %1225 = vmatpush1.bf16.msra.mxu0 0
    %1226 = vmatprep.subr.bf16.mxu0 0
    %1227 = vmatpush1.bf16.msra.mxu0 0
    %1228 = vmatprep.subr.bf16.mxu0 0
    %1229 = vmatpush1.bf16.msra.mxu0 0
    %1230 = vmatprep.subr.bf16.mxu0 0
    %1231 = vmatpush1.bf16.msra.mxu0 0
    %1232 = vmatprep.subr.bf16.mxu0 0
    %1233 = vmatpush1.bf16.msra.mxu0 0
    %1234 = vmatprep.subr.bf16.mxu0 0
    %1235 = vmatpush1.bf16.msra.mxu0 0
    %1236 = vmatprep.subr.bf16.mxu0 0
    %1237 = vmatpush1.bf16.msra.mxu0 0
    %1238 = vmatprep.subr.bf16.mxu0 0
    %1239 = vmatpush1.bf16.msra.mxu0 0
    %1240 = vmatprep.subr.bf16.mxu0 0
    %1241 = vmatpush1.bf16.msra.mxu0 0
    %1242 = vmatprep.mubr.bf16.mxu0 0
    %1243 = vmatmul.mubr.bf16.gmra.mrb[0].mxu0 %v542
    %v1244 = vpop.f32.mrb[0].mxu0
    %v1245 = vadd.f32 0.0, %v1244
    %v1246 = vpop.f32.mrb[0].mxu0
    %v1247 = vpop.f32.mrb[0].mxu0
    %v1248 = vadd.f32 0.0, %v1247
    %v1249 = vpop.f32.mrb[0].mxu0
    %1250 = vdwg.mxu0
    %v1251 = vadd.f32 %v1204, %v1245
    %v1252 = vadd.f32 %v1207, %v1248
    %v1253 = vpack.c.bf16 %v92, %v91
    %v1254 = vpack.c.bf16 %v94, %v93
    %v1255 = vpack.c.bf16 %v96, %v95
    %v1256 = vpack.c.bf16 %v98, %v97
    %v1257 = vpack.c.bf16 %v100, %v99
    %v1258 = vpack.c.bf16 %v102, %v101
    %v1259 = vunpack.c.l.bf16 %v1253
    %v1260 = vunpack.c.h.bf16 %v1253
    %v1261 = vunpack.c.l.bf16 %v1254
    %v1262 = vunpack.c.h.bf16 %v1254
    %v1263 = vunpack.c.l.bf16 %v1255
    %v1264 = vunpack.c.h.bf16 %v1255
    %v1265 = vunpack.c.l.bf16 %v1256
    %v1266 = vunpack.c.h.bf16 %v1256
    %v1267 = vunpack.c.l.bf16 %v1257
    %v1268 = vunpack.c.h.bf16 %v1257
    %v1269 = vunpack.c.l.bf16 %v1258
    %v1270 = vunpack.c.h.bf16 %v1258
    %v1271 = vsub.f32 %v91, %v1259
    %v1272 = vsub.f32 %v92, %v1260
    %v1273 = vsub.f32 %v93, %v1261
    %v1274 = vsub.f32 %v94, %v1262
    %v1275 = vsub.f32 %v95, %v1263
    %v1276 = vsub.f32 %v96, %v1264
    %v1277 = vsub.f32 %v97, %v1265
    %v1278 = vsub.f32 %v98, %v1266
    %v1279 = vsub.f32 %v99, %v1267
    %v1280 = vsub.f32 %v100, %v1268
    %v1281 = vsub.f32 %v101, %v1269
    %v1282 = vsub.f32 %v102, %v1270
    %v1283 = vpack.c.bf16 %v1272, %v1271
    %v1284 = vpack.c.bf16 %v1274, %v1273
    %v1285 = vpack.c.bf16 %v1276, %v1275
    %v1286 = vpack.c.bf16 %v1278, %v1277
    %v1287 = vpack.c.bf16 %v1280, %v1279
    %v1288 = vpack.c.bf16 %v1282, %v1281
    %v1290 = vsel %vm153, %v1253, 0
    %v1293 = vsel %vm153, %v1254, 0
    %v1296 = vsel %vm153, %v1255, 0
    %v1299 = vsel %vm153, %v1256, 0
    %v1302 = vsel %vm153, %v1257, 0
    %v1305 = vsel %vm153, %v1258, 0
    %1307 = vmatprep.subr.bf16.mxu0 0
    %1308 = vmatpush1.bf16.msra.mxu0 %v151
    %1309 = vmatprep.subr.bf16.mxu0 0
    %1310 = vmatpush1.bf16.msra.mxu0 0
    %1311 = vmatprep.subr.bf16.mxu0 0
    %1312 = vmatpush1.bf16.msra.mxu0 0
    %1313 = vmatprep.subr.bf16.mxu0 0
    %1314 = vmatpush1.bf16.msra.mxu0 0
    %1315 = vmatprep.subr.bf16.mxu0 0
    %1316 = vmatpush1.bf16.msra.mxu0 0
    %1317 = vmatprep.subr.bf16.mxu0 0
    %1318 = vmatpush1.bf16.msra.mxu0 0
    %1319 = vmatprep.subr.bf16.mxu0 0
    %1320 = vmatpush1.bf16.msra.mxu0 0
    %1321 = vmatprep.subr.bf16.mxu0 0
    %1322 = vmatpush1.bf16.msra.mxu0 0
    %1323 = vmatprep.subr.bf16.mxu0 0
    %1324 = vmatpush1.bf16.msra.mxu0 0
    %1325 = vmatprep.subr.bf16.mxu0 0
    %1326 = vmatpush1.bf16.msra.mxu0 0
    %1327 = vmatprep.subr.bf16.mxu0 0
    %1328 = vmatpush1.bf16.msra.mxu0 0
    %1329 = vmatprep.subr.bf16.mxu0 0
    %1330 = vmatpush1.bf16.msra.mxu0 0
    %1331 = vmatprep.subr.bf16.mxu0 0
    %1332 = vmatpush1.bf16.msra.mxu0 0
    %1333 = vmatprep.subr.bf16.mxu0 0
    %1334 = vmatpush1.bf16.msra.mxu0 0
    %1335 = vmatprep.subr.bf16.mxu0 0
    %1336 = vmatpush1.bf16.msra.mxu0 0
    %1337 = vmatprep.subr.bf16.mxu0 0
    %1338 = vmatpush1.bf16.msra.mxu0 0
    %1339 = vmatprep.mubr.bf16.mxu0 0
    %1340 = vmatmul.mubr.bf16.gmra.mrb[0].mxu0 %v1290
    %v1341 = vpop.f32.mrb[0].mxu0
    %v1342 = vadd.f32 0.0, %v1341
    %v1343 = vpop.f32.mrb[0].mxu0
    %v1344 = vpop.f32.mrb[0].mxu0
    %v1345 = vadd.f32 0.0, %v1344
    %v1346 = vpop.f32.mrb[0].mxu0
    %1347 = vmatprep.mubr.bf16.mxu0 0
    %1348 = vmatmul.mubr.bf16.gmra.mrb[0].mxu0 %v1293
    %v1349 = vpop.f32.mrb[0].mxu0
    %v1350 = vadd.f32 0.0, %v1349
    %v1351 = vpop.f32.mrb[0].mxu0
    %v1352 = vpop.f32.mrb[0].mxu0
    %v1353 = vadd.f32 0.0, %v1352
    %v1354 = vpop.f32.mrb[0].mxu0
    %1355 = vmatprep.mubr.bf16.mxu0 0
    %1356 = vmatmul.mubr.bf16.gmra.mrb[0].mxu0 %v1296
    %v1357 = vpop.f32.mrb[0].mxu0
    %v1358 = vadd.f32 0.0, %v1357
    %v1359 = vpop.f32.mrb[0].mxu0
    %v1360 = vpop.f32.mrb[0].mxu0
    %v1361 = vadd.f32 0.0, %v1360
    %v1362 = vpop.f32.mrb[0].mxu0
    %1363 = vmatprep.mubr.bf16.mxu0 0
    %1364 = vmatmul.mubr.bf16.gmra.mrb[0].mxu0 %v1299
    %v1365 = vpop.f32.mrb[0].mxu0
    %v1366 = vadd.f32 0.0, %v1365
    %v1367 = vpop.f32.mrb[0].mxu0
    %v1368 = vpop.f32.mrb[0].mxu0
    %v1369 = vadd.f32 0.0, %v1368
    %v1370 = vpop.f32.mrb[0].mxu0
    %1371 = vmatprep.mubr.bf16.mxu0 0
    %1372 = vmatmul.mubr.bf16.gmra.mrb[0].mxu0 %v1302
    %v1373 = vpop.f32.mrb[0].mxu0
    %v1374 = vadd.f32 0.0, %v1373
    %v1375 = vpop.f32.mrb[0].mxu0
    %v1376 = vpop.f32.mrb[0].mxu0
    %v1377 = vadd.f32 0.0, %v1376
    %v1378 = vpop.f32.mrb[0].mxu0
    %1379 = vmatprep.mubr.bf16.mxu0 0
    %1380 = vmatmul.mubr.bf16.gmra.mrb[0].mxu0 %v1305
    %v1381 = vpop.f32.mrb[0].mxu0
    %v1382 = vadd.f32 0.0, %v1381
    %v1383 = vpop.f32.mrb[0].mxu0
    %v1384 = vpop.f32.mrb[0].mxu0
    %v1385 = vadd.f32 0.0, %v1384
    %v1386 = vpop.f32.mrb[0].mxu0
    %1387 = vdwg.mxu0
    %1388 = vmatprep.subr.bf16.mxu0 0
    %1389 = vmatpush1.bf16.msra.mxu0 %v257
    %1390 = vmatprep.subr.bf16.mxu0 0
    %1391 = vmatpush1.bf16.msra.mxu0 0
    %1392 = vmatprep.subr.bf16.mxu0 0
    %1393 = vmatpush1.bf16.msra.mxu0 0
    %1394 = vmatprep.subr.bf16.mxu0 0
    %1395 = vmatpush1.bf16.msra.mxu0 0
    %1396 = vmatprep.subr.bf16.mxu0 0
    %1397 = vmatpush1.bf16.msra.mxu0 0
    %1398 = vmatprep.subr.bf16.mxu0 0
    %1399 = vmatpush1.bf16.msra.mxu0 0
    %1400 = vmatprep.subr.bf16.mxu0 0
    %1401 = vmatpush1.bf16.msra.mxu0 0
    %1402 = vmatprep.subr.bf16.mxu0 0
    %1403 = vmatpush1.bf16.msra.mxu0 0
    %1404 = vmatprep.subr.bf16.mxu0 0
    %1405 = vmatpush1.bf16.msra.mxu0 0
    %1406 = vmatprep.subr.bf16.mxu0 0
    %1407 = vmatpush1.bf16.msra.mxu0 0
    %1408 = vmatprep.subr.bf16.mxu0 0
    %1409 = vmatpush1.bf16.msra.mxu0 0
    %1410 = vmatprep.subr.bf16.mxu0 0
    %1411 = vmatpush1.bf16.msra.mxu0 0
    %1412 = vmatprep.subr.bf16.mxu0 0
    %1413 = vmatpush1.bf16.msra.mxu0 0
    %1414 = vmatprep.subr.bf16.mxu0 0
    %1415 = vmatpush1.bf16.msra.mxu0 0
    %1416 = vmatprep.subr.bf16.mxu0 0
    %1417 = vmatpush1.bf16.msra.mxu0 0
    %1418 = vmatprep.subr.bf16.mxu0 0
    %1419 = vmatpush1.bf16.msra.mxu0 0
    %1420 = vmatprep.mubr.bf16.mxu0 0
    %1421 = vmatmul.mubr.bf16.gmra.mrb[0].mxu0 %v1290
    %v1422 = vpop.f32.mrb[0].mxu0
    %v1423 = vadd.f32 %v1342, %v1422
    %v1424 = vpop.f32.mrb[0].mxu0
    %v1425 = vpop.f32.mrb[0].mxu0
    %v1426 = vadd.f32 %v1345, %v1425
    %v1427 = vpop.f32.mrb[0].mxu0
    %1428 = vmatprep.mubr.bf16.mxu0 0
    %1429 = vmatmul.mubr.bf16.gmra.mrb[0].mxu0 %v1293
    %v1430 = vpop.f32.mrb[0].mxu0
    %v1431 = vadd.f32 %v1350, %v1430
    %v1432 = vpop.f32.mrb[0].mxu0
    %v1433 = vpop.f32.mrb[0].mxu0
    %v1434 = vadd.f32 %v1353, %v1433
    %v1435 = vpop.f32.mrb[0].mxu0
    %1436 = vmatprep.mubr.bf16.mxu0 0
    %1437 = vmatmul.mubr.bf16.gmra.mrb[0].mxu0 %v1296
    %v1438 = vpop.f32.mrb[0].mxu0
    %v1439 = vadd.f32 %v1358, %v1438
    %v1440 = vpop.f32.mrb[0].mxu0
    %v1441 = vpop.f32.mrb[0].mxu0
    %v1442 = vadd.f32 %v1361, %v1441
    %v1443 = vpop.f32.mrb[0].mxu0
    %1444 = vmatprep.mubr.bf16.mxu0 0
    %1445 = vmatmul.mubr.bf16.gmra.mrb[0].mxu0 %v1299
    %v1446 = vpop.f32.mrb[0].mxu0
    %v1447 = vadd.f32 %v1366, %v1446
    %v1448 = vpop.f32.mrb[0].mxu0
    %v1449 = vpop.f32.mrb[0].mxu0
    %v1450 = vadd.f32 %v1369, %v1449
    %v1451 = vpop.f32.mrb[0].mxu0
    %1452 = vmatprep.mubr.bf16.mxu0 0
    %1453 = vmatmul.mubr.bf16.gmra.mrb[0].mxu0 %v1302
    %v1454 = vpop.f32.mrb[0].mxu0
    %v1455 = vadd.f32 %v1374, %v1454
    %v1456 = vpop.f32.mrb[0].mxu0
    %v1457 = vpop.f32.mrb[0].mxu0
    %v1458 = vadd.f32 %v1377, %v1457
    %v1459 = vpop.f32.mrb[0].mxu0
    %1460 = vmatprep.mubr.bf16.mxu0 0
    %1461 = vmatmul.mubr.bf16.gmra.mrb[0].mxu0 %v1305
    %v1462 = vpop.f32.mrb[0].mxu0
    %v1463 = vadd.f32 %v1382, %v1462
    %v1464 = vpop.f32.mrb[0].mxu0
    %v1465 = vpop.f32.mrb[0].mxu0
    %v1466 = vadd.f32 %v1385, %v1465
    %v1467 = vpop.f32.mrb[0].mxu0
    %1468 = vdwg.mxu0
    %v1470 = vsel %vm153, %v1283, 0
    %v1473 = vsel %vm153, %v1284, 0
    %v1476 = vsel %vm153, %v1285, 0
    %v1479 = vsel %vm153, %v1286, 0
    %v1482 = vsel %vm153, %v1287, 0
    %v1485 = vsel %vm153, %v1288, 0
    %1487 = vmatprep.subr.bf16.mxu0 0
    %1488 = vmatpush1.bf16.msra.mxu0 %v257
    %1489 = vmatprep.subr.bf16.mxu0 0
    %1490 = vmatpush1.bf16.msra.mxu0 0
    %1491 = vmatprep.subr.bf16.mxu0 0
    %1492 = vmatpush1.bf16.msra.mxu0 0
    %1493 = vmatprep.subr.bf16.mxu0 0
    %1494 = vmatpush1.bf16.msra.mxu0 0
    %1495 = vmatprep.subr.bf16.mxu0 0
    %1496 = vmatpush1.bf16.msra.mxu0 0
    %1497 = vmatprep.subr.bf16.mxu0 0
    %1498 = vmatpush1.bf16.msra.mxu0 0
    %1499 = vmatprep.subr.bf16.mxu0 0
    %1500 = vmatpush1.bf16.msra.mxu0 0
    %1501 = vmatprep.subr.bf16.mxu0 0
    %1502 = vmatpush1.bf16.msra.mxu0 0
    %1503 = vmatprep.subr.bf16.mxu0 0
    %1504 = vmatpush1.bf16.msra.mxu0 0
    %1505 = vmatprep.subr.bf16.mxu0 0
    %1506 = vmatpush1.bf16.msra.mxu0 0
    %1507 = vmatprep.subr.bf16.mxu0 0
    %1508 = vmatpush1.bf16.msra.mxu0 0
    %1509 = vmatprep.subr.bf16.mxu0 0
    %1510 = vmatpush1.bf16.msra.mxu0 0
    %1511 = vmatprep.subr.bf16.mxu0 0
    %1512 = vmatpush1.bf16.msra.mxu0 0
    %1513 = vmatprep.subr.bf16.mxu0 0
    %1514 = vmatpush1.bf16.msra.mxu0 0
    %1515 = vmatprep.subr.bf16.mxu0 0
    %1516 = vmatpush1.bf16.msra.mxu0 0
    %1517 = vmatprep.subr.bf16.mxu0 0
    %1518 = vmatpush1.bf16.msra.mxu0 0
    %1519 = vmatprep.mubr.bf16.mxu0 0
    %1520 = vmatmul.mubr.bf16.gmra.mrb[0].mxu0 %v1470
    %v1521 = vpop.f32.mrb[0].mxu0
    %v1522 = vadd.f32 0.0, %v1521
    %v1523 = vpop.f32.mrb[0].mxu0
    %v1524 = vpop.f32.mrb[0].mxu0
    %v1525 = vadd.f32 0.0, %v1524
    %v1526 = vpop.f32.mrb[0].mxu0
    %1527 = vmatprep.mubr.bf16.mxu0 0
    %1528 = vmatmul.mubr.bf16.gmra.mrb[0].mxu0 %v1473
    %v1529 = vpop.f32.mrb[0].mxu0
    %v1530 = vadd.f32 0.0, %v1529
    %v1531 = vpop.f32.mrb[0].mxu0
    %v1532 = vpop.f32.mrb[0].mxu0
    %v1533 = vadd.f32 0.0, %v1532
    %v1534 = vpop.f32.mrb[0].mxu0
    %1535 = vmatprep.mubr.bf16.mxu0 0
    %1536 = vmatmul.mubr.bf16.gmra.mrb[0].mxu0 %v1476
    %v1537 = vpop.f32.mrb[0].mxu0
    %v1538 = vadd.f32 0.0, %v1537
    %v1539 = vpop.f32.mrb[0].mxu0
    %v1540 = vpop.f32.mrb[0].mxu0
    %v1541 = vadd.f32 0.0, %v1540
    %v1542 = vpop.f32.mrb[0].mxu0
    %1543 = vmatprep.mubr.bf16.mxu0 0
    %1544 = vmatmul.mubr.bf16.gmra.mrb[0].mxu0 %v1479
    %v1545 = vpop.f32.mrb[0].mxu0
    %v1546 = vadd.f32 0.0, %v1545
    %v1547 = vpop.f32.mrb[0].mxu0
    %v1548 = vpop.f32.mrb[0].mxu0
    %v1549 = vadd.f32 0.0, %v1548
    %v1550 = vpop.f32.mrb[0].mxu0
    %1551 = vmatprep.mubr.bf16.mxu0 0
    %1552 = vmatmul.mubr.bf16.gmra.mrb[0].mxu0 %v1482
    %v1553 = vpop.f32.mrb[0].mxu0
    %v1554 = vadd.f32 0.0, %v1553
    %v1555 = vpop.f32.mrb[0].mxu0
    %v1556 = vpop.f32.mrb[0].mxu0
    %v1557 = vadd.f32 0.0, %v1556
    %v1558 = vpop.f32.mrb[0].mxu0
    %1559 = vmatprep.mubr.bf16.mxu0 0
    %1560 = vmatmul.mubr.bf16.gmra.mrb[0].mxu0 %v1485
    %v1561 = vpop.f32.mrb[0].mxu0
    %v1562 = vadd.f32 0.0, %v1561
    %v1563 = vpop.f32.mrb[0].mxu0
    %v1564 = vpop.f32.mrb[0].mxu0
    %v1565 = vadd.f32 0.0, %v1564
    %v1566 = vpop.f32.mrb[0].mxu0
    %1567 = vdwg.mxu0
    %v1568 = vadd.f32 %v1423, %v1522
    %v1569 = vadd.f32 %v1426, %v1525
    %v1570 = vadd.f32 %v1431, %v1530
    %v1571 = vadd.f32 %v1434, %v1533
    %v1572 = vadd.f32 %v1439, %v1538
    %v1573 = vadd.f32 %v1442, %v1541
    %v1574 = vadd.f32 %v1447, %v1546
    %v1575 = vadd.f32 %v1450, %v1549
    %v1576 = vadd.f32 %v1455, %v1554
    %v1577 = vadd.f32 %v1458, %v1557
    %v1578 = vadd.f32 %v1463, %v1562
    %v1579 = vadd.f32 %v1466, %v1565
    %v1580 = vpack.c.bf16 %v1569, %v1568
    %v1581 = vpack.c.bf16 %v1571, %v1570
    %v1582 = vpack.c.bf16 %v1573, %v1572
    %v1583 = vpack.c.bf16 %v1575, %v1574
    %v1584 = vpack.c.bf16 %v1577, %v1576
    %v1585 = vpack.c.bf16 %v1579, %v1578
    %v1586 = vunpack.c.l.bf16 %v1580
    %v1587 = vunpack.c.h.bf16 %v1580
    %v1588 = vunpack.c.l.bf16 %v1581
    %v1589 = vunpack.c.h.bf16 %v1581
    %v1590 = vunpack.c.l.bf16 %v1582
    %v1591 = vunpack.c.h.bf16 %v1582
    %v1592 = vunpack.c.l.bf16 %v1583
    %v1593 = vunpack.c.h.bf16 %v1583
    %v1594 = vunpack.c.l.bf16 %v1584
    %v1595 = vunpack.c.h.bf16 %v1584
    %v1596 = vunpack.c.l.bf16 %v1585
    %v1597 = vunpack.c.h.bf16 %v1585
    %v1598 = vsub.f32 %v1568, %v1586
    %v1599 = vsub.f32 %v1569, %v1587
    %v1600 = vsub.f32 %v1570, %v1588
    %v1601 = vsub.f32 %v1571, %v1589
    %v1602 = vsub.f32 %v1572, %v1590
    %v1603 = vsub.f32 %v1573, %v1591
    %v1604 = vsub.f32 %v1574, %v1592
    %v1605 = vsub.f32 %v1575, %v1593
    %v1606 = vsub.f32 %v1576, %v1594
    %v1607 = vsub.f32 %v1577, %v1595
    %v1608 = vsub.f32 %v1578, %v1596
    %v1609 = vsub.f32 %v1579, %v1597
    %v1610 = vpack.c.bf16 %v1599, %v1598
    %v1611 = vpack.c.bf16 %v1601, %v1600
    %v1612 = vpack.c.bf16 %v1603, %v1602
    %v1613 = vpack.c.bf16 %v1605, %v1604
    %v1614 = vpack.c.bf16 %v1607, %v1606
    %v1615 = vpack.c.bf16 %v1609, %v1608
    %1616 = vmatprep.subr.bf16.mxu0 0
    %1617 = vmatpush1.bf16.msra.mxu0 %v1580
    %1618 = vmatprep.subr.bf16.mxu0 0
    %1619 = vmatpush1.bf16.msra.mxu0 0
    %1620 = vmatprep.subr.bf16.mxu0 0
    %1621 = vmatpush1.bf16.msra.mxu0 0
    %1622 = vmatprep.subr.bf16.mxu0 0
    %1623 = vmatpush1.bf16.msra.mxu0 0
    %1624 = vmatprep.subr.bf16.mxu0 0
    %1625 = vmatpush1.bf16.msra.mxu0 0
    %1626 = vmatprep.subr.bf16.mxu0 0
    %1627 = vmatpush1.bf16.msra.mxu0 0
    %1628 = vmatprep.subr.bf16.mxu0 0
    %1629 = vmatpush1.bf16.msra.mxu0 0
    %1630 = vmatprep.subr.bf16.mxu0 0
    %1631 = vmatpush1.bf16.msra.mxu0 0
    %1632 = vmatprep.subr.bf16.mxu0 0
    %1633 = vmatpush1.bf16.msra.mxu0 0
    %1634 = vmatprep.subr.bf16.mxu0 0
    %1635 = vmatpush1.bf16.msra.mxu0 0
    %1636 = vmatprep.subr.bf16.mxu0 0
    %1637 = vmatpush1.bf16.msra.mxu0 0
    %1638 = vmatprep.subr.bf16.mxu0 0
    %1639 = vmatpush1.bf16.msra.mxu0 0
    %1640 = vmatprep.subr.bf16.mxu0 0
    %1641 = vmatpush1.bf16.msra.mxu0 0
    %1642 = vmatprep.subr.bf16.mxu0 0
    %1643 = vmatpush1.bf16.msra.mxu0 0
    %1644 = vmatprep.subr.bf16.mxu0 0
    %1645 = vmatpush1.bf16.msra.mxu0 0
    %1646 = vmatprep.subr.bf16.mxu0 0
    %1647 = vmatpush1.bf16.msra.mxu0 0
    %1648 = vmatprep.mubr.bf16.mxu0 0
    %1649 = vmatmul.mubr.bf16.gmra.mrb[0].mxu0 %v493
    %v1650 = vpop.f32.mrb[0].mxu0
    %v1651 = vadd.f32 0.0, %v1650
    %v1652 = vpop.f32.mrb[0].mxu0
    %v1653 = vpop.f32.mrb[0].mxu0
    %v1654 = vadd.f32 0.0, %v1653
    %v1655 = vpop.f32.mrb[0].mxu0
    %1656 = vdwg.mxu0
    %1657 = vmatprep.subr.bf16.mxu0 0
    %1658 = vmatpush1.bf16.msra.mxu0 %v1580
    %1659 = vmatprep.subr.bf16.mxu0 0
    %1660 = vmatpush1.bf16.msra.mxu0 0
    %1661 = vmatprep.subr.bf16.mxu0 0
    %1662 = vmatpush1.bf16.msra.mxu0 0
    %1663 = vmatprep.subr.bf16.mxu0 0
    %1664 = vmatpush1.bf16.msra.mxu0 0
    %1665 = vmatprep.subr.bf16.mxu0 0
    %1666 = vmatpush1.bf16.msra.mxu0 0
    %1667 = vmatprep.subr.bf16.mxu0 0
    %1668 = vmatpush1.bf16.msra.mxu0 0
    %1669 = vmatprep.subr.bf16.mxu0 0
    %1670 = vmatpush1.bf16.msra.mxu0 0
    %1671 = vmatprep.subr.bf16.mxu0 0
    %1672 = vmatpush1.bf16.msra.mxu0 0
    %1673 = vmatprep.subr.bf16.mxu0 0
    %1674 = vmatpush1.bf16.msra.mxu0 0
    %1675 = vmatprep.subr.bf16.mxu0 0
    %1676 = vmatpush1.bf16.msra.mxu0 0
    %1677 = vmatprep.subr.bf16.mxu0 0
    %1678 = vmatpush1.bf16.msra.mxu0 0
    %1679 = vmatprep.subr.bf16.mxu0 0
    %1680 = vmatpush1.bf16.msra.mxu0 0
    %1681 = vmatprep.subr.bf16.mxu0 0
    %1682 = vmatpush1.bf16.msra.mxu0 0
    %1683 = vmatprep.subr.bf16.mxu0 0
    %1684 = vmatpush1.bf16.msra.mxu0 0
    %1685 = vmatprep.subr.bf16.mxu0 0
    %1686 = vmatpush1.bf16.msra.mxu0 0
    %1687 = vmatprep.subr.bf16.mxu0 0
    %1688 = vmatpush1.bf16.msra.mxu0 0
    %1689 = vmatprep.mubr.bf16.mxu0 0
    %1690 = vmatmul.mubr.bf16.gmra.mrb[0].mxu0 %v542
    %v1691 = vpop.f32.mrb[0].mxu0
    %v1692 = vadd.f32 %v1651, %v1691
    %v1693 = vpop.f32.mrb[0].mxu0
    %v1694 = vpop.f32.mrb[0].mxu0
    %v1695 = vadd.f32 %v1654, %v1694
    %v1696 = vpop.f32.mrb[0].mxu0
    %1697 = vdwg.mxu0
    %1698 = vmatprep.subr.bf16.mxu0 0
    %1699 = vmatpush1.bf16.msra.mxu0 %v1610
    %1700 = vmatprep.subr.bf16.mxu0 0
    %1701 = vmatpush1.bf16.msra.mxu0 0
    %1702 = vmatprep.subr.bf16.mxu0 0
    %1703 = vmatpush1.bf16.msra.mxu0 0
    %1704 = vmatprep.subr.bf16.mxu0 0
    %1705 = vmatpush1.bf16.msra.mxu0 0
    %1706 = vmatprep.subr.bf16.mxu0 0
    %1707 = vmatpush1.bf16.msra.mxu0 0
    %1708 = vmatprep.subr.bf16.mxu0 0
    %1709 = vmatpush1.bf16.msra.mxu0 0
    %1710 = vmatprep.subr.bf16.mxu0 0
    %1711 = vmatpush1.bf16.msra.mxu0 0
    %1712 = vmatprep.subr.bf16.mxu0 0
    %1713 = vmatpush1.bf16.msra.mxu0 0
    %1714 = vmatprep.subr.bf16.mxu0 0
    %1715 = vmatpush1.bf16.msra.mxu0 0
    %1716 = vmatprep.subr.bf16.mxu0 0
    %1717 = vmatpush1.bf16.msra.mxu0 0
    %1718 = vmatprep.subr.bf16.mxu0 0
    %1719 = vmatpush1.bf16.msra.mxu0 0
    %1720 = vmatprep.subr.bf16.mxu0 0
    %1721 = vmatpush1.bf16.msra.mxu0 0
    %1722 = vmatprep.subr.bf16.mxu0 0
    %1723 = vmatpush1.bf16.msra.mxu0 0
    %1724 = vmatprep.subr.bf16.mxu0 0
    %1725 = vmatpush1.bf16.msra.mxu0 0
    %1726 = vmatprep.subr.bf16.mxu0 0
    %1727 = vmatpush1.bf16.msra.mxu0 0
    %1728 = vmatprep.subr.bf16.mxu0 0
    %1729 = vmatpush1.bf16.msra.mxu0 0
    %1730 = vmatprep.mubr.bf16.mxu0 0
    %1731 = vmatmul.mubr.bf16.gmra.mrb[0].mxu0 %v542
    %v1732 = vpop.f32.mrb[0].mxu0
    %v1733 = vadd.f32 0.0, %v1732
    %v1734 = vpop.f32.mrb[0].mxu0
    %v1735 = vpop.f32.mrb[0].mxu0
    %v1736 = vadd.f32 0.0, %v1735
    %v1737 = vpop.f32.mrb[0].mxu0
    %1738 = vdwg.mxu0
    %v1739 = vadd.f32 %v1692, %v1733
    %v1740 = vadd.f32 %v1695, %v1736
    %1741 = vmatprep.subr.bf16.mxu0 0
    %1742 = vmatpush1.bf16.msra.mxu0 %v1581
    %1743 = vmatprep.subr.bf16.mxu0 0
    %1744 = vmatpush1.bf16.msra.mxu0 0
    %1745 = vmatprep.subr.bf16.mxu0 0
    %1746 = vmatpush1.bf16.msra.mxu0 0
    %1747 = vmatprep.subr.bf16.mxu0 0
    %1748 = vmatpush1.bf16.msra.mxu0 0
    %1749 = vmatprep.subr.bf16.mxu0 0
    %1750 = vmatpush1.bf16.msra.mxu0 0
    %1751 = vmatprep.subr.bf16.mxu0 0
    %1752 = vmatpush1.bf16.msra.mxu0 0
    %1753 = vmatprep.subr.bf16.mxu0 0
    %1754 = vmatpush1.bf16.msra.mxu0 0
    %1755 = vmatprep.subr.bf16.mxu0 0
    %1756 = vmatpush1.bf16.msra.mxu0 0
    %1757 = vmatprep.subr.bf16.mxu0 0
    %1758 = vmatpush1.bf16.msra.mxu0 0
    %1759 = vmatprep.subr.bf16.mxu0 0
    %1760 = vmatpush1.bf16.msra.mxu0 0
    %1761 = vmatprep.subr.bf16.mxu0 0
    %1762 = vmatpush1.bf16.msra.mxu0 0
    %1763 = vmatprep.subr.bf16.mxu0 0
    %1764 = vmatpush1.bf16.msra.mxu0 0
    %1765 = vmatprep.subr.bf16.mxu0 0
    %1766 = vmatpush1.bf16.msra.mxu0 0
    %1767 = vmatprep.subr.bf16.mxu0 0
    %1768 = vmatpush1.bf16.msra.mxu0 0
    %1769 = vmatprep.subr.bf16.mxu0 0
    %1770 = vmatpush1.bf16.msra.mxu0 0
    %1771 = vmatprep.subr.bf16.mxu0 0
    %1772 = vmatpush1.bf16.msra.mxu0 0
    %1773 = vmatprep.mubr.bf16.mxu0 0
    %1774 = vmatmul.mubr.bf16.gmra.mrb[0].mxu0 %v493
    %v1775 = vpop.f32.mrb[0].mxu0
    %v1776 = vadd.f32 0.0, %v1775
    %v1777 = vpop.f32.mrb[0].mxu0
    %v1778 = vpop.f32.mrb[0].mxu0
    %v1779 = vadd.f32 0.0, %v1778
    %v1780 = vpop.f32.mrb[0].mxu0
    %1781 = vdwg.mxu0
    %1782 = vmatprep.subr.bf16.mxu0 0
    %1783 = vmatpush1.bf16.msra.mxu0 %v1581
    %1784 = vmatprep.subr.bf16.mxu0 0
    %1785 = vmatpush1.bf16.msra.mxu0 0
    %1786 = vmatprep.subr.bf16.mxu0 0
    %1787 = vmatpush1.bf16.msra.mxu0 0
    %1788 = vmatprep.subr.bf16.mxu0 0
    %1789 = vmatpush1.bf16.msra.mxu0 0
    %1790 = vmatprep.subr.bf16.mxu0 0
    %1791 = vmatpush1.bf16.msra.mxu0 0
    %1792 = vmatprep.subr.bf16.mxu0 0
    %1793 = vmatpush1.bf16.msra.mxu0 0
    %1794 = vmatprep.subr.bf16.mxu0 0
    %1795 = vmatpush1.bf16.msra.mxu0 0
    %1796 = vmatprep.subr.bf16.mxu0 0
    %1797 = vmatpush1.bf16.msra.mxu0 0
    %1798 = vmatprep.subr.bf16.mxu0 0
    %1799 = vmatpush1.bf16.msra.mxu0 0
    %1800 = vmatprep.subr.bf16.mxu0 0
    %1801 = vmatpush1.bf16.msra.mxu0 0
    %1802 = vmatprep.subr.bf16.mxu0 0
    %1803 = vmatpush1.bf16.msra.mxu0 0
    %1804 = vmatprep.subr.bf16.mxu0 0
    %1805 = vmatpush1.bf16.msra.mxu0 0
    %1806 = vmatprep.subr.bf16.mxu0 0
    %1807 = vmatpush1.bf16.msra.mxu0 0
    %1808 = vmatprep.subr.bf16.mxu0 0
    %1809 = vmatpush1.bf16.msra.mxu0 0
    %1810 = vmatprep.subr.bf16.mxu0 0
    %1811 = vmatpush1.bf16.msra.mxu0 0
    %1812 = vmatprep.subr.bf16.mxu0 0
    %1813 = vmatpush1.bf16.msra.mxu0 0
    %1814 = vmatprep.mubr.bf16.mxu0 0
    %1815 = vmatmul.mubr.bf16.gmra.mrb[0].mxu0 %v542
    %v1816 = vpop.f32.mrb[0].mxu0
    %v1817 = vadd.f32 %v1776, %v1816
    %v1818 = vpop.f32.mrb[0].mxu0
    %v1819 = vpop.f32.mrb[0].mxu0
    %v1820 = vadd.f32 %v1779, %v1819
    %v1821 = vpop.f32.mrb[0].mxu0
    %1822 = vdwg.mxu0
    %1823 = vmatprep.subr.bf16.mxu0 0
    %1824 = vmatpush1.bf16.msra.mxu0 %v1611
    %1825 = vmatprep.subr.bf16.mxu0 0
    %1826 = vmatpush1.bf16.msra.mxu0 0
    %1827 = vmatprep.subr.bf16.mxu0 0
    %1828 = vmatpush1.bf16.msra.mxu0 0
    %1829 = vmatprep.subr.bf16.mxu0 0
    %1830 = vmatpush1.bf16.msra.mxu0 0
    %1831 = vmatprep.subr.bf16.mxu0 0
    %1832 = vmatpush1.bf16.msra.mxu0 0
    %1833 = vmatprep.subr.bf16.mxu0 0
    %1834 = vmatpush1.bf16.msra.mxu0 0
    %1835 = vmatprep.subr.bf16.mxu0 0
    %1836 = vmatpush1.bf16.msra.mxu0 0
    %1837 = vmatprep.subr.bf16.mxu0 0
    %1838 = vmatpush1.bf16.msra.mxu0 0
    %1839 = vmatprep.subr.bf16.mxu0 0
    %1840 = vmatpush1.bf16.msra.mxu0 0
    %1841 = vmatprep.subr.bf16.mxu0 0
    %1842 = vmatpush1.bf16.msra.mxu0 0
    %1843 = vmatprep.subr.bf16.mxu0 0
    %1844 = vmatpush1.bf16.msra.mxu0 0
    %1845 = vmatprep.subr.bf16.mxu0 0
    %1846 = vmatpush1.bf16.msra.mxu0 0
    %1847 = vmatprep.subr.bf16.mxu0 0
    %1848 = vmatpush1.bf16.msra.mxu0 0
    %1849 = vmatprep.subr.bf16.mxu0 0
    %1850 = vmatpush1.bf16.msra.mxu0 0
    %1851 = vmatprep.subr.bf16.mxu0 0
    %1852 = vmatpush1.bf16.msra.mxu0 0
    %1853 = vmatprep.subr.bf16.mxu0 0
    %1854 = vmatpush1.bf16.msra.mxu0 0
    %1855 = vmatprep.mubr.bf16.mxu0 0
    %1856 = vmatmul.mubr.bf16.gmra.mrb[0].mxu0 %v542
    %v1857 = vpop.f32.mrb[0].mxu0
    %v1858 = vadd.f32 0.0, %v1857
    %v1859 = vpop.f32.mrb[0].mxu0
    %v1860 = vpop.f32.mrb[0].mxu0
    %v1861 = vadd.f32 0.0, %v1860
    %v1862 = vpop.f32.mrb[0].mxu0
    %1863 = vdwg.mxu0
    %v1864 = vadd.f32 %v1817, %v1858
    %v1865 = vadd.f32 %v1820, %v1861
    %1866 = vmatprep.subr.bf16.mxu0 0
    %1867 = vmatpush1.bf16.msra.mxu0 %v1582
    %1868 = vmatprep.subr.bf16.mxu0 0
    %1869 = vmatpush1.bf16.msra.mxu0 0
    %1870 = vmatprep.subr.bf16.mxu0 0
    %1871 = vmatpush1.bf16.msra.mxu0 0
    %1872 = vmatprep.subr.bf16.mxu0 0
    %1873 = vmatpush1.bf16.msra.mxu0 0
    %1874 = vmatprep.subr.bf16.mxu0 0
    %1875 = vmatpush1.bf16.msra.mxu0 0
    %1876 = vmatprep.subr.bf16.mxu0 0
    %1877 = vmatpush1.bf16.msra.mxu0 0
    %1878 = vmatprep.subr.bf16.mxu0 0
    %1879 = vmatpush1.bf16.msra.mxu0 0
    %1880 = vmatprep.subr.bf16.mxu0 0
    %1881 = vmatpush1.bf16.msra.mxu0 0
    %1882 = vmatprep.subr.bf16.mxu0 0
    %1883 = vmatpush1.bf16.msra.mxu0 0
    %1884 = vmatprep.subr.bf16.mxu0 0
    %1885 = vmatpush1.bf16.msra.mxu0 0
    %1886 = vmatprep.subr.bf16.mxu0 0
    %1887 = vmatpush1.bf16.msra.mxu0 0
    %1888 = vmatprep.subr.bf16.mxu0 0
    %1889 = vmatpush1.bf16.msra.mxu0 0
    %1890 = vmatprep.subr.bf16.mxu0 0
    %1891 = vmatpush1.bf16.msra.mxu0 0
    %1892 = vmatprep.subr.bf16.mxu0 0
    %1893 = vmatpush1.bf16.msra.mxu0 0
    %1894 = vmatprep.subr.bf16.mxu0 0
    %1895 = vmatpush1.bf16.msra.mxu0 0
    %1896 = vmatprep.subr.bf16.mxu0 0
    %1897 = vmatpush1.bf16.msra.mxu0 0
    %1898 = vmatprep.mubr.bf16.mxu0 0
    %1899 = vmatmul.mubr.bf16.gmra.mrb[0].mxu0 %v493
    %v1900 = vpop.f32.mrb[0].mxu0
    %v1901 = vadd.f32 0.0, %v1900
    %v1902 = vpop.f32.mrb[0].mxu0
    %v1903 = vpop.f32.mrb[0].mxu0
    %v1904 = vadd.f32 0.0, %v1903
    %v1905 = vpop.f32.mrb[0].mxu0
    %1906 = vdwg.mxu0
    %1907 = vmatprep.subr.bf16.mxu0 0
    %1908 = vmatpush1.bf16.msra.mxu0 %v1582
    %1909 = vmatprep.subr.bf16.mxu0 0
    %1910 = vmatpush1.bf16.msra.mxu0 0
    %1911 = vmatprep.subr.bf16.mxu0 0
    %1912 = vmatpush1.bf16.msra.mxu0 0
    %1913 = vmatprep.subr.bf16.mxu0 0
    %1914 = vmatpush1.bf16.msra.mxu0 0
    %1915 = vmatprep.subr.bf16.mxu0 0
    %1916 = vmatpush1.bf16.msra.mxu0 0
    %1917 = vmatprep.subr.bf16.mxu0 0
    %1918 = vmatpush1.bf16.msra.mxu0 0
    %1919 = vmatprep.subr.bf16.mxu0 0
    %1920 = vmatpush1.bf16.msra.mxu0 0
    %1921 = vmatprep.subr.bf16.mxu0 0
    %1922 = vmatpush1.bf16.msra.mxu0 0
    %1923 = vmatprep.subr.bf16.mxu0 0
    %1924 = vmatpush1.bf16.msra.mxu0 0
    %1925 = vmatprep.subr.bf16.mxu0 0
    %1926 = vmatpush1.bf16.msra.mxu0 0
    %1927 = vmatprep.subr.bf16.mxu0 0
    %1928 = vmatpush1.bf16.msra.mxu0 0
    %1929 = vmatprep.subr.bf16.mxu0 0
    %1930 = vmatpush1.bf16.msra.mxu0 0
    %1931 = vmatprep.subr.bf16.mxu0 0
    %1932 = vmatpush1.bf16.msra.mxu0 0
    %1933 = vmatprep.subr.bf16.mxu0 0
    %1934 = vmatpush1.bf16.msra.mxu0 0
    %1935 = vmatprep.subr.bf16.mxu0 0
    %1936 = vmatpush1.bf16.msra.mxu0 0
    %1937 = vmatprep.subr.bf16.mxu0 0
    %1938 = vmatpush1.bf16.msra.mxu0 0
    %1939 = vmatprep.mubr.bf16.mxu0 0
    %1940 = vmatmul.mubr.bf16.gmra.mrb[0].mxu0 %v542
    %v1941 = vpop.f32.mrb[0].mxu0
    %v1942 = vadd.f32 %v1901, %v1941
    %v1943 = vpop.f32.mrb[0].mxu0
    %v1944 = vpop.f32.mrb[0].mxu0
    %v1945 = vadd.f32 %v1904, %v1944
    %v1946 = vpop.f32.mrb[0].mxu0
    %1947 = vdwg.mxu0
    %1948 = vmatprep.subr.bf16.mxu0 0
    %1949 = vmatpush1.bf16.msra.mxu0 %v1612
    %1950 = vmatprep.subr.bf16.mxu0 0
    %1951 = vmatpush1.bf16.msra.mxu0 0
    %1952 = vmatprep.subr.bf16.mxu0 0
    %1953 = vmatpush1.bf16.msra.mxu0 0
    %1954 = vmatprep.subr.bf16.mxu0 0
    %1955 = vmatpush1.bf16.msra.mxu0 0
    %1956 = vmatprep.subr.bf16.mxu0 0
    %1957 = vmatpush1.bf16.msra.mxu0 0
    %1958 = vmatprep.subr.bf16.mxu0 0
    %1959 = vmatpush1.bf16.msra.mxu0 0
    %1960 = vmatprep.subr.bf16.mxu0 0
    %1961 = vmatpush1.bf16.msra.mxu0 0
    %1962 = vmatprep.subr.bf16.mxu0 0
    %1963 = vmatpush1.bf16.msra.mxu0 0
    %1964 = vmatprep.subr.bf16.mxu0 0
    %1965 = vmatpush1.bf16.msra.mxu0 0
    %1966 = vmatprep.subr.bf16.mxu0 0
    %1967 = vmatpush1.bf16.msra.mxu0 0
    %1968 = vmatprep.subr.bf16.mxu0 0
    %1969 = vmatpush1.bf16.msra.mxu0 0
    %1970 = vmatprep.subr.bf16.mxu0 0
    %1971 = vmatpush1.bf16.msra.mxu0 0
    %1972 = vmatprep.subr.bf16.mxu0 0
    %1973 = vmatpush1.bf16.msra.mxu0 0
    %1974 = vmatprep.subr.bf16.mxu0 0
    %1975 = vmatpush1.bf16.msra.mxu0 0
    %1976 = vmatprep.subr.bf16.mxu0 0
    %1977 = vmatpush1.bf16.msra.mxu0 0
    %1978 = vmatprep.subr.bf16.mxu0 0
    %1979 = vmatpush1.bf16.msra.mxu0 0
    %1980 = vmatprep.mubr.bf16.mxu0 0
    %1981 = vmatmul.mubr.bf16.gmra.mrb[0].mxu0 %v542
    %v1982 = vpop.f32.mrb[0].mxu0
    %v1983 = vadd.f32 0.0, %v1982
    %v1984 = vpop.f32.mrb[0].mxu0
    %v1985 = vpop.f32.mrb[0].mxu0
    %v1986 = vadd.f32 0.0, %v1985
    %v1987 = vpop.f32.mrb[0].mxu0
    %1988 = vdwg.mxu0
    %v1989 = vadd.f32 %v1942, %v1983
    %v1990 = vadd.f32 %v1945, %v1986
    %1991 = vmatprep.subr.bf16.mxu0 0
    %1992 = vmatpush1.bf16.msra.mxu0 %v1583
    %1993 = vmatprep.subr.bf16.mxu0 0
    %1994 = vmatpush1.bf16.msra.mxu0 0
    %1995 = vmatprep.subr.bf16.mxu0 0
    %1996 = vmatpush1.bf16.msra.mxu0 0
    %1997 = vmatprep.subr.bf16.mxu0 0
    %1998 = vmatpush1.bf16.msra.mxu0 0
    %1999 = vmatprep.subr.bf16.mxu0 0
    %2000 = vmatpush1.bf16.msra.mxu0 0
    %2001 = vmatprep.subr.bf16.mxu0 0
    %2002 = vmatpush1.bf16.msra.mxu0 0
    %2003 = vmatprep.subr.bf16.mxu0 0
    %2004 = vmatpush1.bf16.msra.mxu0 0
    %2005 = vmatprep.subr.bf16.mxu0 0
    %2006 = vmatpush1.bf16.msra.mxu0 0
    %2007 = vmatprep.subr.bf16.mxu0 0
    %2008 = vmatpush1.bf16.msra.mxu0 0
    %2009 = vmatprep.subr.bf16.mxu0 0
    %2010 = vmatpush1.bf16.msra.mxu0 0
    %2011 = vmatprep.subr.bf16.mxu0 0
    %2012 = vmatpush1.bf16.msra.mxu0 0
    %2013 = vmatprep.subr.bf16.mxu0 0
    %2014 = vmatpush1.bf16.msra.mxu0 0
    %2015 = vmatprep.subr.bf16.mxu0 0
    %2016 = vmatpush1.bf16.msra.mxu0 0
    %2017 = vmatprep.subr.bf16.mxu0 0
    %2018 = vmatpush1.bf16.msra.mxu0 0
    %2019 = vmatprep.subr.bf16.mxu0 0
    %2020 = vmatpush1.bf16.msra.mxu0 0
    %2021 = vmatprep.subr.bf16.mxu0 0
    %2022 = vmatpush1.bf16.msra.mxu0 0
    %2023 = vmatprep.mubr.bf16.mxu0 0
    %2024 = vmatmul.mubr.bf16.gmra.mrb[0].mxu0 %v493
    %v2025 = vpop.f32.mrb[0].mxu0
    %v2026 = vadd.f32 0.0, %v2025
    %v2027 = vpop.f32.mrb[0].mxu0
    %v2028 = vpop.f32.mrb[0].mxu0
    %v2029 = vadd.f32 0.0, %v2028
    %v2030 = vpop.f32.mrb[0].mxu0
    %2031 = vdwg.mxu0
    %2032 = vmatprep.subr.bf16.mxu0 0
    %2033 = vmatpush1.bf16.msra.mxu0 %v1583
    %2034 = vmatprep.subr.bf16.mxu0 0
    %2035 = vmatpush1.bf16.msra.mxu0 0
    %2036 = vmatprep.subr.bf16.mxu0 0
    %2037 = vmatpush1.bf16.msra.mxu0 0
    %2038 = vmatprep.subr.bf16.mxu0 0
    %2039 = vmatpush1.bf16.msra.mxu0 0
    %2040 = vmatprep.subr.bf16.mxu0 0
    %2041 = vmatpush1.bf16.msra.mxu0 0
    %2042 = vmatprep.subr.bf16.mxu0 0
    %2043 = vmatpush1.bf16.msra.mxu0 0
    %2044 = vmatprep.subr.bf16.mxu0 0
    %2045 = vmatpush1.bf16.msra.mxu0 0
    %2046 = vmatprep.subr.bf16.mxu0 0
    %2047 = vmatpush1.bf16.msra.mxu0 0
    %2048 = vmatprep.subr.bf16.mxu0 0
    %2049 = vmatpush1.bf16.msra.mxu0 0
    %2050 = vmatprep.subr.bf16.mxu0 0
    %2051 = vmatpush1.bf16.msra.mxu0 0
    %2052 = vmatprep.subr.bf16.mxu0 0
    %2053 = vmatpush1.bf16.msra.mxu0 0
    %2054 = vmatprep.subr.bf16.mxu0 0
    %2055 = vmatpush1.bf16.msra.mxu0 0
    %2056 = vmatprep.subr.bf16.mxu0 0
    %2057 = vmatpush1.bf16.msra.mxu0 0
    %2058 = vmatprep.subr.bf16.mxu0 0
    %2059 = vmatpush1.bf16.msra.mxu0 0
    %2060 = vmatprep.subr.bf16.mxu0 0
    %2061 = vmatpush1.bf16.msra.mxu0 0
    %2062 = vmatprep.subr.bf16.mxu0 0
    %2063 = vmatpush1.bf16.msra.mxu0 0
    %2064 = vmatprep.mubr.bf16.mxu0 0
    %2065 = vmatmul.mubr.bf16.gmra.mrb[0].mxu0 %v542
    %v2066 = vpop.f32.mrb[0].mxu0
    %v2067 = vadd.f32 %v2026, %v2066
    %v2068 = vpop.f32.mrb[0].mxu0
    %v2069 = vpop.f32.mrb[0].mxu0
    %v2070 = vadd.f32 %v2029, %v2069
    %v2071 = vpop.f32.mrb[0].mxu0
    %2072 = vdwg.mxu0
    %2073 = vmatprep.subr.bf16.mxu0 0
    %2074 = vmatpush1.bf16.msra.mxu0 %v1613
    %2075 = vmatprep.subr.bf16.mxu0 0
    %2076 = vmatpush1.bf16.msra.mxu0 0
    %2077 = vmatprep.subr.bf16.mxu0 0
    %2078 = vmatpush1.bf16.msra.mxu0 0
    %2079 = vmatprep.subr.bf16.mxu0 0
    %2080 = vmatpush1.bf16.msra.mxu0 0
    %2081 = vmatprep.subr.bf16.mxu0 0
    %2082 = vmatpush1.bf16.msra.mxu0 0
    %2083 = vmatprep.subr.bf16.mxu0 0
    %2084 = vmatpush1.bf16.msra.mxu0 0
    %2085 = vmatprep.subr.bf16.mxu0 0
    %2086 = vmatpush1.bf16.msra.mxu0 0
    %2087 = vmatprep.subr.bf16.mxu0 0
    %2088 = vmatpush1.bf16.msra.mxu0 0
    %2089 = vmatprep.subr.bf16.mxu0 0
    %2090 = vmatpush1.bf16.msra.mxu0 0
    %2091 = vmatprep.subr.bf16.mxu0 0
    %2092 = vmatpush1.bf16.msra.mxu0 0
    %2093 = vmatprep.subr.bf16.mxu0 0
    %2094 = vmatpush1.bf16.msra.mxu0 0
    %2095 = vmatprep.subr.bf16.mxu0 0
    %2096 = vmatpush1.bf16.msra.mxu0 0
    %2097 = vmatprep.subr.bf16.mxu0 0
    %2098 = vmatpush1.bf16.msra.mxu0 0
    %2099 = vmatprep.subr.bf16.mxu0 0
    %2100 = vmatpush1.bf16.msra.mxu0 0
    %2101 = vmatprep.subr.bf16.mxu0 0
    %2102 = vmatpush1.bf16.msra.mxu0 0
    %2103 = vmatprep.subr.bf16.mxu0 0
    %2104 = vmatpush1.bf16.msra.mxu0 0
    %2105 = vmatprep.mubr.bf16.mxu0 0
    %2106 = vmatmul.mubr.bf16.gmra.mrb[0].mxu0 %v542
    %v2107 = vpop.f32.mrb[0].mxu0
    %v2108 = vadd.f32 0.0, %v2107
    %v2109 = vpop.f32.mrb[0].mxu0
    %v2110 = vpop.f32.mrb[0].mxu0
    %v2111 = vadd.f32 0.0, %v2110
    %v2112 = vpop.f32.mrb[0].mxu0
    %2113 = vdwg.mxu0
    %v2114 = vadd.f32 %v2067, %v2108
    %v2115 = vadd.f32 %v2070, %v2111
    %2116 = vmatprep.subr.bf16.mxu0 0
    %2117 = vmatpush1.bf16.msra.mxu0 %v1584
    %2118 = vmatprep.subr.bf16.mxu0 0
    %2119 = vmatpush1.bf16.msra.mxu0 0
    %2120 = vmatprep.subr.bf16.mxu0 0
    %2121 = vmatpush1.bf16.msra.mxu0 0
    %2122 = vmatprep.subr.bf16.mxu0 0
    %2123 = vmatpush1.bf16.msra.mxu0 0
    %2124 = vmatprep.subr.bf16.mxu0 0
    %2125 = vmatpush1.bf16.msra.mxu0 0
    %2126 = vmatprep.subr.bf16.mxu0 0
    %2127 = vmatpush1.bf16.msra.mxu0 0
    %2128 = vmatprep.subr.bf16.mxu0 0
    %2129 = vmatpush1.bf16.msra.mxu0 0
    %2130 = vmatprep.subr.bf16.mxu0 0
    %2131 = vmatpush1.bf16.msra.mxu0 0
    %2132 = vmatprep.subr.bf16.mxu0 0
    %2133 = vmatpush1.bf16.msra.mxu0 0
    %2134 = vmatprep.subr.bf16.mxu0 0
    %2135 = vmatpush1.bf16.msra.mxu0 0
    %2136 = vmatprep.subr.bf16.mxu0 0
    %2137 = vmatpush1.bf16.msra.mxu0 0
    %2138 = vmatprep.subr.bf16.mxu0 0
    %2139 = vmatpush1.bf16.msra.mxu0 0
    %2140 = vmatprep.subr.bf16.mxu0 0
    %2141 = vmatpush1.bf16.msra.mxu0 0
    %2142 = vmatprep.subr.bf16.mxu0 0
    %2143 = vmatpush1.bf16.msra.mxu0 0
    %2144 = vmatprep.subr.bf16.mxu0 0
    %2145 = vmatpush1.bf16.msra.mxu0 0
    %2146 = vmatprep.subr.bf16.mxu0 0
    %2147 = vmatpush1.bf16.msra.mxu0 0
    %2148 = vmatprep.mubr.bf16.mxu0 0
    %2149 = vmatmul.mubr.bf16.gmra.mrb[0].mxu0 %v493
    %v2150 = vpop.f32.mrb[0].mxu0
    %v2151 = vadd.f32 0.0, %v2150
    %v2152 = vpop.f32.mrb[0].mxu0
    %v2153 = vpop.f32.mrb[0].mxu0
    %v2154 = vadd.f32 0.0, %v2153
    %v2155 = vpop.f32.mrb[0].mxu0
    %2156 = vdwg.mxu0
    %2157 = vmatprep.subr.bf16.mxu0 0
    %2158 = vmatpush1.bf16.msra.mxu0 %v1584
    %2159 = vmatprep.subr.bf16.mxu0 0
    %2160 = vmatpush1.bf16.msra.mxu0 0
    %2161 = vmatprep.subr.bf16.mxu0 0
    %2162 = vmatpush1.bf16.msra.mxu0 0
    %2163 = vmatprep.subr.bf16.mxu0 0
    %2164 = vmatpush1.bf16.msra.mxu0 0
    %2165 = vmatprep.subr.bf16.mxu0 0
    %2166 = vmatpush1.bf16.msra.mxu0 0
    %2167 = vmatprep.subr.bf16.mxu0 0
    %2168 = vmatpush1.bf16.msra.mxu0 0
    %2169 = vmatprep.subr.bf16.mxu0 0
    %2170 = vmatpush1.bf16.msra.mxu0 0
    %2171 = vmatprep.subr.bf16.mxu0 0
    %2172 = vmatpush1.bf16.msra.mxu0 0
    %2173 = vmatprep.subr.bf16.mxu0 0
    %2174 = vmatpush1.bf16.msra.mxu0 0
    %2175 = vmatprep.subr.bf16.mxu0 0
    %2176 = vmatpush1.bf16.msra.mxu0 0
    %2177 = vmatprep.subr.bf16.mxu0 0
    %2178 = vmatpush1.bf16.msra.mxu0 0
    %2179 = vmatprep.subr.bf16.mxu0 0
    %2180 = vmatpush1.bf16.msra.mxu0 0
    %2181 = vmatprep.subr.bf16.mxu0 0
    %2182 = vmatpush1.bf16.msra.mxu0 0
    %2183 = vmatprep.subr.bf16.mxu0 0
    %2184 = vmatpush1.bf16.msra.mxu0 0
    %2185 = vmatprep.subr.bf16.mxu0 0
    %2186 = vmatpush1.bf16.msra.mxu0 0
    %2187 = vmatprep.subr.bf16.mxu0 0
    %2188 = vmatpush1.bf16.msra.mxu0 0
    %2189 = vmatprep.mubr.bf16.mxu0 0
    %2190 = vmatmul.mubr.bf16.gmra.mrb[0].mxu0 %v542
    %v2191 = vpop.f32.mrb[0].mxu0
    %v2192 = vadd.f32 %v2151, %v2191
    %v2193 = vpop.f32.mrb[0].mxu0
    %v2194 = vpop.f32.mrb[0].mxu0
    %v2195 = vadd.f32 %v2154, %v2194
    %v2196 = vpop.f32.mrb[0].mxu0
    %2197 = vdwg.mxu0
    %2198 = vmatprep.subr.bf16.mxu0 0
    %2199 = vmatpush1.bf16.msra.mxu0 %v1614
    %2200 = vmatprep.subr.bf16.mxu0 0
    %2201 = vmatpush1.bf16.msra.mxu0 0
    %2202 = vmatprep.subr.bf16.mxu0 0
    %2203 = vmatpush1.bf16.msra.mxu0 0
    %2204 = vmatprep.subr.bf16.mxu0 0
    %2205 = vmatpush1.bf16.msra.mxu0 0
    %2206 = vmatprep.subr.bf16.mxu0 0
    %2207 = vmatpush1.bf16.msra.mxu0 0
    %2208 = vmatprep.subr.bf16.mxu0 0
    %2209 = vmatpush1.bf16.msra.mxu0 0
    %2210 = vmatprep.subr.bf16.mxu0 0
    %2211 = vmatpush1.bf16.msra.mxu0 0
    %2212 = vmatprep.subr.bf16.mxu0 0
    %2213 = vmatpush1.bf16.msra.mxu0 0
    %2214 = vmatprep.subr.bf16.mxu0 0
    %2215 = vmatpush1.bf16.msra.mxu0 0
    %2216 = vmatprep.subr.bf16.mxu0 0
    %2217 = vmatpush1.bf16.msra.mxu0 0
    %2218 = vmatprep.subr.bf16.mxu0 0
    %2219 = vmatpush1.bf16.msra.mxu0 0
    %2220 = vmatprep.subr.bf16.mxu0 0
    %2221 = vmatpush1.bf16.msra.mxu0 0
    %2222 = vmatprep.subr.bf16.mxu0 0
    %2223 = vmatpush1.bf16.msra.mxu0 0
    %2224 = vmatprep.subr.bf16.mxu0 0
    %2225 = vmatpush1.bf16.msra.mxu0 0
    %2226 = vmatprep.subr.bf16.mxu0 0
    %2227 = vmatpush1.bf16.msra.mxu0 0
    %2228 = vmatprep.subr.bf16.mxu0 0
    %2229 = vmatpush1.bf16.msra.mxu0 0
    %2230 = vmatprep.mubr.bf16.mxu0 0
    %2231 = vmatmul.mubr.bf16.gmra.mrb[0].mxu0 %v542
    %v2232 = vpop.f32.mrb[0].mxu0
    %v2233 = vadd.f32 0.0, %v2232
    %v2234 = vpop.f32.mrb[0].mxu0
    %v2235 = vpop.f32.mrb[0].mxu0
    %v2236 = vadd.f32 0.0, %v2235
    %v2237 = vpop.f32.mrb[0].mxu0
    %2238 = vdwg.mxu0
    %v2239 = vadd.f32 %v2192, %v2233
    %v2240 = vadd.f32 %v2195, %v2236
    %2241 = vmatprep.subr.bf16.mxu0 0
    %2242 = vmatpush1.bf16.msra.mxu0 %v1585
    %2243 = vmatprep.subr.bf16.mxu0 0
    %2244 = vmatpush1.bf16.msra.mxu0 0
    %2245 = vmatprep.subr.bf16.mxu0 0
    %2246 = vmatpush1.bf16.msra.mxu0 0
    %2247 = vmatprep.subr.bf16.mxu0 0
    %2248 = vmatpush1.bf16.msra.mxu0 0
    %2249 = vmatprep.subr.bf16.mxu0 0
    %2250 = vmatpush1.bf16.msra.mxu0 0
    %2251 = vmatprep.subr.bf16.mxu0 0
    %2252 = vmatpush1.bf16.msra.mxu0 0
    %2253 = vmatprep.subr.bf16.mxu0 0
    %2254 = vmatpush1.bf16.msra.mxu0 0
    %2255 = vmatprep.subr.bf16.mxu0 0
    %2256 = vmatpush1.bf16.msra.mxu0 0
    %2257 = vmatprep.subr.bf16.mxu0 0
    %2258 = vmatpush1.bf16.msra.mxu0 0
    %2259 = vmatprep.subr.bf16.mxu0 0
    %2260 = vmatpush1.bf16.msra.mxu0 0
    %2261 = vmatprep.subr.bf16.mxu0 0
    %2262 = vmatpush1.bf16.msra.mxu0 0
    %2263 = vmatprep.subr.bf16.mxu0 0
    %2264 = vmatpush1.bf16.msra.mxu0 0
    %2265 = vmatprep.subr.bf16.mxu0 0
    %2266 = vmatpush1.bf16.msra.mxu0 0
    %2267 = vmatprep.subr.bf16.mxu0 0
    %2268 = vmatpush1.bf16.msra.mxu0 0
    %2269 = vmatprep.subr.bf16.mxu0 0
    %2270 = vmatpush1.bf16.msra.mxu0 0
    %2271 = vmatprep.subr.bf16.mxu0 0
    %2272 = vmatpush1.bf16.msra.mxu0 0
    %2273 = vmatprep.mubr.bf16.mxu0 0
    %2274 = vmatmul.mubr.bf16.gmra.mrb[0].mxu0 %v493
    %v2275 = vpop.f32.mrb[0].mxu0
    %v2276 = vadd.f32 0.0, %v2275
    %v2277 = vpop.f32.mrb[0].mxu0
    %v2278 = vpop.f32.mrb[0].mxu0
    %v2279 = vadd.f32 0.0, %v2278
    %v2280 = vpop.f32.mrb[0].mxu0
    %2281 = vdwg.mxu0
    %2282 = vmatprep.subr.bf16.mxu0 0
    %2283 = vmatpush1.bf16.msra.mxu0 %v1585
    %2284 = vmatprep.subr.bf16.mxu0 0
    %2285 = vmatpush1.bf16.msra.mxu0 0
    %2286 = vmatprep.subr.bf16.mxu0 0
    %2287 = vmatpush1.bf16.msra.mxu0 0
    %2288 = vmatprep.subr.bf16.mxu0 0
    %2289 = vmatpush1.bf16.msra.mxu0 0
    %2290 = vmatprep.subr.bf16.mxu0 0
    %2291 = vmatpush1.bf16.msra.mxu0 0
    %2292 = vmatprep.subr.bf16.mxu0 0
    %2293 = vmatpush1.bf16.msra.mxu0 0
    %2294 = vmatprep.subr.bf16.mxu0 0
    %2295 = vmatpush1.bf16.msra.mxu0 0
    %2296 = vmatprep.subr.bf16.mxu0 0
    %2297 = vmatpush1.bf16.msra.mxu0 0
    %2298 = vmatprep.subr.bf16.mxu0 0
    %2299 = vmatpush1.bf16.msra.mxu0 0
    %2300 = vmatprep.subr.bf16.mxu0 0
    %2301 = vmatpush1.bf16.msra.mxu0 0
    %2302 = vmatprep.subr.bf16.mxu0 0
    %2303 = vmatpush1.bf16.msra.mxu0 0
    %2304 = vmatprep.subr.bf16.mxu0 0
    %2305 = vmatpush1.bf16.msra.mxu0 0
    %2306 = vmatprep.subr.bf16.mxu0 0
    %2307 = vmatpush1.bf16.msra.mxu0 0
    %2308 = vmatprep.subr.bf16.mxu0 0
    %2309 = vmatpush1.bf16.msra.mxu0 0
    %2310 = vmatprep.subr.bf16.mxu0 0
    %2311 = vmatpush1.bf16.msra.mxu0 0
    %2312 = vmatprep.subr.bf16.mxu0 0
    %2313 = vmatpush1.bf16.msra.mxu0 0
    %2314 = vmatprep.mubr.bf16.mxu0 0
    %2315 = vmatmul.mubr.bf16.gmra.mrb[0].mxu0 %v542
    %v2316 = vpop.f32.mrb[0].mxu0
    %v2317 = vadd.f32 %v2276, %v2316
    %v2318 = vpop.f32.mrb[0].mxu0
    %v2319 = vpop.f32.mrb[0].mxu0
    %v2320 = vadd.f32 %v2279, %v2319
    %v2321 = vpop.f32.mrb[0].mxu0
    %2322 = vdwg.mxu0
    %2323 = vmatprep.subr.bf16.mxu0 0
    %2324 = vmatpush1.bf16.msra.mxu0 %v1615
    %2325 = vmatprep.subr.bf16.mxu0 0
    %2326 = vmatpush1.bf16.msra.mxu0 0
    %2327 = vmatprep.subr.bf16.mxu0 0
    %2328 = vmatpush1.bf16.msra.mxu0 0
    %2329 = vmatprep.subr.bf16.mxu0 0
    %2330 = vmatpush1.bf16.msra.mxu0 0
    %2331 = vmatprep.subr.bf16.mxu0 0
    %2332 = vmatpush1.bf16.msra.mxu0 0
    %2333 = vmatprep.subr.bf16.mxu0 0
    %2334 = vmatpush1.bf16.msra.mxu0 0
    %2335 = vmatprep.subr.bf16.mxu0 0
    %2336 = vmatpush1.bf16.msra.mxu0 0
    %2337 = vmatprep.subr.bf16.mxu0 0
    %2338 = vmatpush1.bf16.msra.mxu0 0
    %2339 = vmatprep.subr.bf16.mxu0 0
    %2340 = vmatpush1.bf16.msra.mxu0 0
    %2341 = vmatprep.subr.bf16.mxu0 0
    %2342 = vmatpush1.bf16.msra.mxu0 0
    %2343 = vmatprep.subr.bf16.mxu0 0
    %2344 = vmatpush1.bf16.msra.mxu0 0
    %2345 = vmatprep.subr.bf16.mxu0 0
    %2346 = vmatpush1.bf16.msra.mxu0 0
    %2347 = vmatprep.subr.bf16.mxu0 0
    %2348 = vmatpush1.bf16.msra.mxu0 0
    %2349 = vmatprep.subr.bf16.mxu0 0
    %2350 = vmatpush1.bf16.msra.mxu0 0
    %2351 = vmatprep.subr.bf16.mxu0 0
    %2352 = vmatpush1.bf16.msra.mxu0 0
    %2353 = vmatprep.subr.bf16.mxu0 0
    %2354 = vmatpush1.bf16.msra.mxu0 0
    %2355 = vmatprep.mubr.bf16.mxu0 0
    %2356 = vmatmul.mubr.bf16.gmra.mrb[0].mxu0 %v542
    %v2357 = vpop.f32.mrb[0].mxu0
    %v2358 = vadd.f32 0.0, %v2357
    %v2359 = vpop.f32.mrb[0].mxu0
    %v2360 = vpop.f32.mrb[0].mxu0
    %v2361 = vadd.f32 0.0, %v2360
    %v2362 = vpop.f32.mrb[0].mxu0
    %2363 = vdwg.mxu0
    %v2364 = vadd.f32 %v2317, %v2358
    %v2365 = vadd.f32 %v2320, %v2361
    %v2366 = vmul.f32 %v79, %v79
    %v2367 = vmul.f32 %v80, %v80
    %v2368 = vmul.f32 %v81, %v81
    %v2369 = vmul.f32 %v82, %v82
    %v2370 = vmul.f32 %v83, %v83
    %v2371 = vmul.f32 %v84, %v84
    %v2372 = vmul.f32 %v85, %v85
    %v2373 = vmul.f32 %v86, %v86
    %v2374 = vmul.f32 %v87, %v87
    %v2375 = vmul.f32 %v88, %v88
    %v2376 = vmul.f32 %v89, %v89
    %v2377 = vmul.f32 %v90, %v90
    %v2378 = vpack.c.bf16 %v2367, %v2366
    %v2379 = vpack.c.bf16 %v2369, %v2368
    %v2380 = vpack.c.bf16 %v2371, %v2370
    %v2381 = vpack.c.bf16 %v2373, %v2372
    %v2382 = vpack.c.bf16 %v2375, %v2374
    %v2383 = vpack.c.bf16 %v2377, %v2376
    %v2384 = vunpack.c.l.bf16 %v2378
    %v2385 = vunpack.c.h.bf16 %v2378
    %v2386 = vunpack.c.l.bf16 %v2379
    %v2387 = vunpack.c.h.bf16 %v2379
    %v2388 = vunpack.c.l.bf16 %v2380
    %v2389 = vunpack.c.h.bf16 %v2380
    %v2390 = vunpack.c.l.bf16 %v2381
    %v2391 = vunpack.c.h.bf16 %v2381
    %v2392 = vunpack.c.l.bf16 %v2382
    %v2393 = vunpack.c.h.bf16 %v2382
    %v2394 = vunpack.c.l.bf16 %v2383
    %v2395 = vunpack.c.h.bf16 %v2383
    %v2396 = vsub.f32 %v2366, %v2384
    %v2397 = vsub.f32 %v2367, %v2385
    %v2398 = vsub.f32 %v2368, %v2386
    %v2399 = vsub.f32 %v2369, %v2387
    %v2400 = vsub.f32 %v2370, %v2388
    %v2401 = vsub.f32 %v2371, %v2389
    %v2402 = vsub.f32 %v2372, %v2390
    %v2403 = vsub.f32 %v2373, %v2391
    %v2404 = vsub.f32 %v2374, %v2392
    %v2405 = vsub.f32 %v2375, %v2393
    %v2406 = vsub.f32 %v2376, %v2394
    %v2407 = vsub.f32 %v2377, %v2395
    %v2408 = vpack.c.bf16 %v2397, %v2396
    %v2409 = vpack.c.bf16 %v2399, %v2398
    %v2410 = vpack.c.bf16 %v2401, %v2400
    %v2411 = vpack.c.bf16 %v2403, %v2402
    %v2412 = vpack.c.bf16 %v2405, %v2404
    %v2413 = vpack.c.bf16 %v2407, %v2406
    %v2415 = vsel %vm153, %v2378, 0
    %v2418 = vsel %vm153, %v2379, 0
    %v2421 = vsel %vm153, %v2380, 0
    %v2424 = vsel %vm153, %v2381, 0
    %v2427 = vsel %vm153, %v2382, 0
    %v2430 = vsel %vm153, %v2383, 0
    %2432 = vmatprep.subr.bf16.mxu0 0
    %2433 = vmatpush1.bf16.msra.mxu0 %v151
    %2434 = vmatprep.subr.bf16.mxu0 0
    %2435 = vmatpush1.bf16.msra.mxu0 0
    %2436 = vmatprep.subr.bf16.mxu0 0
    %2437 = vmatpush1.bf16.msra.mxu0 0
    %2438 = vmatprep.subr.bf16.mxu0 0
    %2439 = vmatpush1.bf16.msra.mxu0 0
    %2440 = vmatprep.subr.bf16.mxu0 0
    %2441 = vmatpush1.bf16.msra.mxu0 0
    %2442 = vmatprep.subr.bf16.mxu0 0
    %2443 = vmatpush1.bf16.msra.mxu0 0
    %2444 = vmatprep.subr.bf16.mxu0 0
    %2445 = vmatpush1.bf16.msra.mxu0 0
    %2446 = vmatprep.subr.bf16.mxu0 0
    %2447 = vmatpush1.bf16.msra.mxu0 0
    %2448 = vmatprep.subr.bf16.mxu0 0
    %2449 = vmatpush1.bf16.msra.mxu0 0
    %2450 = vmatprep.subr.bf16.mxu0 0
    %2451 = vmatpush1.bf16.msra.mxu0 0
    %2452 = vmatprep.subr.bf16.mxu0 0
    %2453 = vmatpush1.bf16.msra.mxu0 0
    %2454 = vmatprep.subr.bf16.mxu0 0
    %2455 = vmatpush1.bf16.msra.mxu0 0
    %2456 = vmatprep.subr.bf16.mxu0 0
    %2457 = vmatpush1.bf16.msra.mxu0 0
    %2458 = vmatprep.subr.bf16.mxu0 0
    %2459 = vmatpush1.bf16.msra.mxu0 0
    %2460 = vmatprep.subr.bf16.mxu0 0
    %2461 = vmatpush1.bf16.msra.mxu0 0
    %2462 = vmatprep.subr.bf16.mxu0 0
    %2463 = vmatpush1.bf16.msra.mxu0 0
    %2464 = vmatprep.mubr.bf16.mxu0 0
    %2465 = vmatmul.mubr.bf16.gmra.mrb[0].mxu0 %v2415
    %v2466 = vpop.f32.mrb[0].mxu0
    %v2467 = vadd.f32 0.0, %v2466
    %v2468 = vpop.f32.mrb[0].mxu0
    %v2469 = vpop.f32.mrb[0].mxu0
    %v2470 = vadd.f32 0.0, %v2469
    %v2471 = vpop.f32.mrb[0].mxu0
    %2472 = vmatprep.mubr.bf16.mxu0 0
    %2473 = vmatmul.mubr.bf16.gmra.mrb[0].mxu0 %v2418
    %v2474 = vpop.f32.mrb[0].mxu0
    %v2475 = vadd.f32 0.0, %v2474
    %v2476 = vpop.f32.mrb[0].mxu0
    %v2477 = vpop.f32.mrb[0].mxu0
    %v2478 = vadd.f32 0.0, %v2477
    %v2479 = vpop.f32.mrb[0].mxu0
    %2480 = vmatprep.mubr.bf16.mxu0 0
    %2481 = vmatmul.mubr.bf16.gmra.mrb[0].mxu0 %v2421
    %v2482 = vpop.f32.mrb[0].mxu0
    %v2483 = vadd.f32 0.0, %v2482
    %v2484 = vpop.f32.mrb[0].mxu0
    %v2485 = vpop.f32.mrb[0].mxu0
    %v2486 = vadd.f32 0.0, %v2485
    %v2487 = vpop.f32.mrb[0].mxu0
    %2488 = vmatprep.mubr.bf16.mxu0 0
    %2489 = vmatmul.mubr.bf16.gmra.mrb[0].mxu0 %v2424
    %v2490 = vpop.f32.mrb[0].mxu0
    %v2491 = vadd.f32 0.0, %v2490
    %v2492 = vpop.f32.mrb[0].mxu0
    %v2493 = vpop.f32.mrb[0].mxu0
    %v2494 = vadd.f32 0.0, %v2493
    %v2495 = vpop.f32.mrb[0].mxu0
    %2496 = vmatprep.mubr.bf16.mxu0 0
    %2497 = vmatmul.mubr.bf16.gmra.mrb[0].mxu0 %v2427
    %v2498 = vpop.f32.mrb[0].mxu0
    %v2499 = vadd.f32 0.0, %v2498
    %v2500 = vpop.f32.mrb[0].mxu0
    %v2501 = vpop.f32.mrb[0].mxu0
    %v2502 = vadd.f32 0.0, %v2501
    %v2503 = vpop.f32.mrb[0].mxu0
    %2504 = vmatprep.mubr.bf16.mxu0 0
    %2505 = vmatmul.mubr.bf16.gmra.mrb[0].mxu0 %v2430
    %v2506 = vpop.f32.mrb[0].mxu0
    %v2507 = vadd.f32 0.0, %v2506
    %v2508 = vpop.f32.mrb[0].mxu0
    %v2509 = vpop.f32.mrb[0].mxu0
    %v2510 = vadd.f32 0.0, %v2509
    %v2511 = vpop.f32.mrb[0].mxu0
    %2512 = vdwg.mxu0
    %2513 = vmatprep.subr.bf16.mxu0 0
    %2514 = vmatpush1.bf16.msra.mxu0 %v257
    %2515 = vmatprep.subr.bf16.mxu0 0
    %2516 = vmatpush1.bf16.msra.mxu0 0
    %2517 = vmatprep.subr.bf16.mxu0 0
    %2518 = vmatpush1.bf16.msra.mxu0 0
    %2519 = vmatprep.subr.bf16.mxu0 0
    %2520 = vmatpush1.bf16.msra.mxu0 0
    %2521 = vmatprep.subr.bf16.mxu0 0
    %2522 = vmatpush1.bf16.msra.mxu0 0
    %2523 = vmatprep.subr.bf16.mxu0 0
    %2524 = vmatpush1.bf16.msra.mxu0 0
    %2525 = vmatprep.subr.bf16.mxu0 0
    %2526 = vmatpush1.bf16.msra.mxu0 0
    %2527 = vmatprep.subr.bf16.mxu0 0
    %2528 = vmatpush1.bf16.msra.mxu0 0
    %2529 = vmatprep.subr.bf16.mxu0 0
    %2530 = vmatpush1.bf16.msra.mxu0 0
    %2531 = vmatprep.subr.bf16.mxu0 0
    %2532 = vmatpush1.bf16.msra.mxu0 0
    %2533 = vmatprep.subr.bf16.mxu0 0
    %2534 = vmatpush1.bf16.msra.mxu0 0
    %2535 = vmatprep.subr.bf16.mxu0 0
    %2536 = vmatpush1.bf16.msra.mxu0 0
    %2537 = vmatprep.subr.bf16.mxu0 0
    %2538 = vmatpush1.bf16.msra.mxu0 0
    %2539 = vmatprep.subr.bf16.mxu0 0
    %2540 = vmatpush1.bf16.msra.mxu0 0
    %2541 = vmatprep.subr.bf16.mxu0 0
    %2542 = vmatpush1.bf16.msra.mxu0 0
    %2543 = vmatprep.subr.bf16.mxu0 0
    %2544 = vmatpush1.bf16.msra.mxu0 0
    %2545 = vmatprep.mubr.bf16.mxu0 0
    %2546 = vmatmul.mubr.bf16.gmra.mrb[0].mxu0 %v2415
    %v2547 = vpop.f32.mrb[0].mxu0
    %v2548 = vadd.f32 %v2467, %v2547
    %v2549 = vpop.f32.mrb[0].mxu0
    %v2550 = vpop.f32.mrb[0].mxu0
    %v2551 = vadd.f32 %v2470, %v2550
    %v2552 = vpop.f32.mrb[0].mxu0
    %2553 = vmatprep.mubr.bf16.mxu0 0
    %2554 = vmatmul.mubr.bf16.gmra.mrb[0].mxu0 %v2418
    %v2555 = vpop.f32.mrb[0].mxu0
    %v2556 = vadd.f32 %v2475, %v2555
    %v2557 = vpop.f32.mrb[0].mxu0
    %v2558 = vpop.f32.mrb[0].mxu0
    %v2559 = vadd.f32 %v2478, %v2558
    %v2560 = vpop.f32.mrb[0].mxu0
    %2561 = vmatprep.mubr.bf16.mxu0 0
    %2562 = vmatmul.mubr.bf16.gmra.mrb[0].mxu0 %v2421
    %v2563 = vpop.f32.mrb[0].mxu0
    %v2564 = vadd.f32 %v2483, %v2563
    %v2565 = vpop.f32.mrb[0].mxu0
    %v2566 = vpop.f32.mrb[0].mxu0
    %v2567 = vadd.f32 %v2486, %v2566
    %v2568 = vpop.f32.mrb[0].mxu0
    %2569 = vmatprep.mubr.bf16.mxu0 0
    %2570 = vmatmul.mubr.bf16.gmra.mrb[0].mxu0 %v2424
    %v2571 = vpop.f32.mrb[0].mxu0
    %v2572 = vadd.f32 %v2491, %v2571
    %v2573 = vpop.f32.mrb[0].mxu0
    %v2574 = vpop.f32.mrb[0].mxu0
    %v2575 = vadd.f32 %v2494, %v2574
    %v2576 = vpop.f32.mrb[0].mxu0
    %2577 = vmatprep.mubr.bf16.mxu0 0
    %2578 = vmatmul.mubr.bf16.gmra.mrb[0].mxu0 %v2427
    %v2579 = vpop.f32.mrb[0].mxu0
    %v2580 = vadd.f32 %v2499, %v2579
    %v2581 = vpop.f32.mrb[0].mxu0
    %v2582 = vpop.f32.mrb[0].mxu0
    %v2583 = vadd.f32 %v2502, %v2582
    %v2584 = vpop.f32.mrb[0].mxu0
    %2585 = vmatprep.mubr.bf16.mxu0 0
    %2586 = vmatmul.mubr.bf16.gmra.mrb[0].mxu0 %v2430
    %v2587 = vpop.f32.mrb[0].mxu0
    %v2588 = vadd.f32 %v2507, %v2587
    %v2589 = vpop.f32.mrb[0].mxu0
    %v2590 = vpop.f32.mrb[0].mxu0
    %v2591 = vadd.f32 %v2510, %v2590
    %v2592 = vpop.f32.mrb[0].mxu0
    %2593 = vdwg.mxu0
    %v2595 = vsel %vm153, %v2408, 0
    %v2598 = vsel %vm153, %v2409, 0
    %v2601 = vsel %vm153, %v2410, 0
    %v2604 = vsel %vm153, %v2411, 0
    %v2607 = vsel %vm153, %v2412, 0
    %v2610 = vsel %vm153, %v2413, 0
    %2612 = vmatprep.subr.bf16.mxu0 0
    %2613 = vmatpush1.bf16.msra.mxu0 %v257
    %2614 = vmatprep.subr.bf16.mxu0 0
    %2615 = vmatpush1.bf16.msra.mxu0 0
    %2616 = vmatprep.subr.bf16.mxu0 0
    %2617 = vmatpush1.bf16.msra.mxu0 0
    %2618 = vmatprep.subr.bf16.mxu0 0
    %2619 = vmatpush1.bf16.msra.mxu0 0
    %2620 = vmatprep.subr.bf16.mxu0 0
    %2621 = vmatpush1.bf16.msra.mxu0 0
    %2622 = vmatprep.subr.bf16.mxu0 0
    %2623 = vmatpush1.bf16.msra.mxu0 0
    %2624 = vmatprep.subr.bf16.mxu0 0
    %2625 = vmatpush1.bf16.msra.mxu0 0
    %2626 = vmatprep.subr.bf16.mxu0 0
    %2627 = vmatpush1.bf16.msra.mxu0 0
    %2628 = vmatprep.subr.bf16.mxu0 0
    %2629 = vmatpush1.bf16.msra.mxu0 0
    %2630 = vmatprep.subr.bf16.mxu0 0
    %2631 = vmatpush1.bf16.msra.mxu0 0
    %2632 = vmatprep.subr.bf16.mxu0 0
    %2633 = vmatpush1.bf16.msra.mxu0 0
    %2634 = vmatprep.subr.bf16.mxu0 0
    %2635 = vmatpush1.bf16.msra.mxu0 0
    %2636 = vmatprep.subr.bf16.mxu0 0
    %2637 = vmatpush1.bf16.msra.mxu0 0
    %2638 = vmatprep.subr.bf16.mxu0 0
    %2639 = vmatpush1.bf16.msra.mxu0 0
    %2640 = vmatprep.subr.bf16.mxu0 0
    %2641 = vmatpush1.bf16.msra.mxu0 0
    %2642 = vmatprep.subr.bf16.mxu0 0
    %2643 = vmatpush1.bf16.msra.mxu0 0
    %2644 = vmatprep.mubr.bf16.mxu0 0
    %2645 = vmatmul.mubr.bf16.gmra.mrb[0].mxu0 %v2595
    %v2646 = vpop.f32.mrb[0].mxu0
    %v2647 = vadd.f32 0.0, %v2646
    %v2648 = vpop.f32.mrb[0].mxu0
    %v2649 = vpop.f32.mrb[0].mxu0
    %v2650 = vadd.f32 0.0, %v2649
    %v2651 = vpop.f32.mrb[0].mxu0
    %2652 = vmatprep.mubr.bf16.mxu0 0
    %2653 = vmatmul.mubr.bf16.gmra.mrb[0].mxu0 %v2598
    %v2654 = vpop.f32.mrb[0].mxu0
    %v2655 = vadd.f32 0.0, %v2654
    %v2656 = vpop.f32.mrb[0].mxu0
    %v2657 = vpop.f32.mrb[0].mxu0
    %v2658 = vadd.f32 0.0, %v2657
    %v2659 = vpop.f32.mrb[0].mxu0
    %2660 = vmatprep.mubr.bf16.mxu0 0
    %2661 = vmatmul.mubr.bf16.gmra.mrb[0].mxu0 %v2601
    %v2662 = vpop.f32.mrb[0].mxu0
    %v2663 = vadd.f32 0.0, %v2662
    %v2664 = vpop.f32.mrb[0].mxu0
    %v2665 = vpop.f32.mrb[0].mxu0
    %v2666 = vadd.f32 0.0, %v2665
    %v2667 = vpop.f32.mrb[0].mxu0
    %2668 = vmatprep.mubr.bf16.mxu0 0
    %2669 = vmatmul.mubr.bf16.gmra.mrb[0].mxu0 %v2604
    %v2670 = vpop.f32.mrb[0].mxu0
    %v2671 = vadd.f32 0.0, %v2670
    %v2672 = vpop.f32.mrb[0].mxu0
    %v2673 = vpop.f32.mrb[0].mxu0
    %v2674 = vadd.f32 0.0, %v2673
    %v2675 = vpop.f32.mrb[0].mxu0
    %2676 = vmatprep.mubr.bf16.mxu0 0
    %2677 = vmatmul.mubr.bf16.gmra.mrb[0].mxu0 %v2607
    %v2678 = vpop.f32.mrb[0].mxu0
    %v2679 = vadd.f32 0.0, %v2678
    %v2680 = vpop.f32.mrb[0].mxu0
    %v2681 = vpop.f32.mrb[0].mxu0
    %v2682 = vadd.f32 0.0, %v2681
    %v2683 = vpop.f32.mrb[0].mxu0
    %2684 = vmatprep.mubr.bf16.mxu0 0
    %2685 = vmatmul.mubr.bf16.gmra.mrb[0].mxu0 %v2610
    %v2686 = vpop.f32.mrb[0].mxu0
    %v2687 = vadd.f32 0.0, %v2686
    %v2688 = vpop.f32.mrb[0].mxu0
    %v2689 = vpop.f32.mrb[0].mxu0
    %v2690 = vadd.f32 0.0, %v2689
    %v2691 = vpop.f32.mrb[0].mxu0
    %2692 = vdwg.mxu0
    %v2693 = vadd.f32 %v2548, %v2647
    %v2694 = vadd.f32 %v2551, %v2650
    %v2695 = vadd.f32 %v2556, %v2655
    %v2696 = vadd.f32 %v2559, %v2658
    %v2697 = vadd.f32 %v2564, %v2663
    %v2698 = vadd.f32 %v2567, %v2666
    %v2699 = vadd.f32 %v2572, %v2671
    %v2700 = vadd.f32 %v2575, %v2674
    %v2701 = vadd.f32 %v2580, %v2679
    %v2702 = vadd.f32 %v2583, %v2682
    %v2703 = vadd.f32 %v2588, %v2687
    %v2704 = vadd.f32 %v2591, %v2690
    %v2705 = vpack.c.bf16 %v2694, %v2693
    %v2706 = vpack.c.bf16 %v2696, %v2695
    %v2707 = vpack.c.bf16 %v2698, %v2697
    %v2708 = vpack.c.bf16 %v2700, %v2699
    %v2709 = vpack.c.bf16 %v2702, %v2701
    %v2710 = vpack.c.bf16 %v2704, %v2703
    %v2711 = vunpack.c.l.bf16 %v2705
    %v2712 = vunpack.c.h.bf16 %v2705
    %v2713 = vunpack.c.l.bf16 %v2706
    %v2714 = vunpack.c.h.bf16 %v2706
    %v2715 = vunpack.c.l.bf16 %v2707
    %v2716 = vunpack.c.h.bf16 %v2707
    %v2717 = vunpack.c.l.bf16 %v2708
    %v2718 = vunpack.c.h.bf16 %v2708
    %v2719 = vunpack.c.l.bf16 %v2709
    %v2720 = vunpack.c.h.bf16 %v2709
    %v2721 = vunpack.c.l.bf16 %v2710
    %v2722 = vunpack.c.h.bf16 %v2710
    %v2723 = vsub.f32 %v2693, %v2711
    %v2724 = vsub.f32 %v2694, %v2712
    %v2725 = vsub.f32 %v2695, %v2713
    %v2726 = vsub.f32 %v2696, %v2714
    %v2727 = vsub.f32 %v2697, %v2715
    %v2728 = vsub.f32 %v2698, %v2716
    %v2729 = vsub.f32 %v2699, %v2717
    %v2730 = vsub.f32 %v2700, %v2718
    %v2731 = vsub.f32 %v2701, %v2719
    %v2732 = vsub.f32 %v2702, %v2720
    %v2733 = vsub.f32 %v2703, %v2721
    %v2734 = vsub.f32 %v2704, %v2722
    %v2735 = vpack.c.bf16 %v2724, %v2723
    %v2736 = vpack.c.bf16 %v2726, %v2725
    %v2737 = vpack.c.bf16 %v2728, %v2727
    %v2738 = vpack.c.bf16 %v2730, %v2729
    %v2739 = vpack.c.bf16 %v2732, %v2731
    %v2740 = vpack.c.bf16 %v2734, %v2733
    %2741 = vmatprep.subr.bf16.mxu0 0
    %2742 = vmatpush1.bf16.msra.mxu0 %v2705
    %2743 = vmatprep.subr.bf16.mxu0 0
    %2744 = vmatpush1.bf16.msra.mxu0 0
    %2745 = vmatprep.subr.bf16.mxu0 0
    %2746 = vmatpush1.bf16.msra.mxu0 0
    %2747 = vmatprep.subr.bf16.mxu0 0
    %2748 = vmatpush1.bf16.msra.mxu0 0
    %2749 = vmatprep.subr.bf16.mxu0 0
    %2750 = vmatpush1.bf16.msra.mxu0 0
    %2751 = vmatprep.subr.bf16.mxu0 0
    %2752 = vmatpush1.bf16.msra.mxu0 0
    %2753 = vmatprep.subr.bf16.mxu0 0
    %2754 = vmatpush1.bf16.msra.mxu0 0
    %2755 = vmatprep.subr.bf16.mxu0 0
    %2756 = vmatpush1.bf16.msra.mxu0 0
    %2757 = vmatprep.subr.bf16.mxu0 0
    %2758 = vmatpush1.bf16.msra.mxu0 0
    %2759 = vmatprep.subr.bf16.mxu0 0
    %2760 = vmatpush1.bf16.msra.mxu0 0
    %2761 = vmatprep.subr.bf16.mxu0 0
    %2762 = vmatpush1.bf16.msra.mxu0 0
    %2763 = vmatprep.subr.bf16.mxu0 0
    %2764 = vmatpush1.bf16.msra.mxu0 0
    %2765 = vmatprep.subr.bf16.mxu0 0
    %2766 = vmatpush1.bf16.msra.mxu0 0
    %2767 = vmatprep.subr.bf16.mxu0 0
    %2768 = vmatpush1.bf16.msra.mxu0 0
    %2769 = vmatprep.subr.bf16.mxu0 0
    %2770 = vmatpush1.bf16.msra.mxu0 0
    %2771 = vmatprep.subr.bf16.mxu0 0
    %2772 = vmatpush1.bf16.msra.mxu0 0
    %2773 = vmatprep.mubr.bf16.mxu0 0
    %2774 = vmatmul.mubr.bf16.gmra.mrb[0].mxu0 %v493
    %v2775 = vpop.f32.mrb[0].mxu0
    %v2776 = vadd.f32 0.0, %v2775
    %v2777 = vpop.f32.mrb[0].mxu0
    %v2778 = vpop.f32.mrb[0].mxu0
    %v2779 = vadd.f32 0.0, %v2778
    %v2780 = vpop.f32.mrb[0].mxu0
    %2781 = vdwg.mxu0
    %2782 = vmatprep.subr.bf16.mxu0 0
    %2783 = vmatpush1.bf16.msra.mxu0 %v2705
    %2784 = vmatprep.subr.bf16.mxu0 0
    %2785 = vmatpush1.bf16.msra.mxu0 0
    %2786 = vmatprep.subr.bf16.mxu0 0
    %2787 = vmatpush1.bf16.msra.mxu0 0
    %2788 = vmatprep.subr.bf16.mxu0 0
    %2789 = vmatpush1.bf16.msra.mxu0 0
    %2790 = vmatprep.subr.bf16.mxu0 0
    %2791 = vmatpush1.bf16.msra.mxu0 0
    %2792 = vmatprep.subr.bf16.mxu0 0
    %2793 = vmatpush1.bf16.msra.mxu0 0
    %2794 = vmatprep.subr.bf16.mxu0 0
    %2795 = vmatpush1.bf16.msra.mxu0 0
    %2796 = vmatprep.subr.bf16.mxu0 0
    %2797 = vmatpush1.bf16.msra.mxu0 0
    %2798 = vmatprep.subr.bf16.mxu0 0
    %2799 = vmatpush1.bf16.msra.mxu0 0
    %2800 = vmatprep.subr.bf16.mxu0 0
    %2801 = vmatpush1.bf16.msra.mxu0 0
    %2802 = vmatprep.subr.bf16.mxu0 0
    %2803 = vmatpush1.bf16.msra.mxu0 0
    %2804 = vmatprep.subr.bf16.mxu0 0
    %2805 = vmatpush1.bf16.msra.mxu0 0
    %2806 = vmatprep.subr.bf16.mxu0 0
    %2807 = vmatpush1.bf16.msra.mxu0 0
    %2808 = vmatprep.subr.bf16.mxu0 0
    %2809 = vmatpush1.bf16.msra.mxu0 0
    %2810 = vmatprep.subr.bf16.mxu0 0
    %2811 = vmatpush1.bf16.msra.mxu0 0
    %2812 = vmatprep.subr.bf16.mxu0 0
    %2813 = vmatpush1.bf16.msra.mxu0 0
    %2814 = vmatprep.mubr.bf16.mxu0 0
    %2815 = vmatmul.mubr.bf16.gmra.mrb[0].mxu0 %v542
    %v2816 = vpop.f32.mrb[0].mxu0
    %v2817 = vadd.f32 %v2776, %v2816
    %v2818 = vpop.f32.mrb[0].mxu0
    %v2819 = vpop.f32.mrb[0].mxu0
    %v2820 = vadd.f32 %v2779, %v2819
    %v2821 = vpop.f32.mrb[0].mxu0
    %2822 = vdwg.mxu0
    %2823 = vmatprep.subr.bf16.mxu0 0
    %2824 = vmatpush1.bf16.msra.mxu0 %v2735
    %2825 = vmatprep.subr.bf16.mxu0 0
    %2826 = vmatpush1.bf16.msra.mxu0 0
    %2827 = vmatprep.subr.bf16.mxu0 0
    %2828 = vmatpush1.bf16.msra.mxu0 0
    %2829 = vmatprep.subr.bf16.mxu0 0
    %2830 = vmatpush1.bf16.msra.mxu0 0
    %2831 = vmatprep.subr.bf16.mxu0 0
    %2832 = vmatpush1.bf16.msra.mxu0 0
    %2833 = vmatprep.subr.bf16.mxu0 0
    %2834 = vmatpush1.bf16.msra.mxu0 0
    %2835 = vmatprep.subr.bf16.mxu0 0
    %2836 = vmatpush1.bf16.msra.mxu0 0
    %2837 = vmatprep.subr.bf16.mxu0 0
    %2838 = vmatpush1.bf16.msra.mxu0 0
    %2839 = vmatprep.subr.bf16.mxu0 0
    %2840 = vmatpush1.bf16.msra.mxu0 0
    %2841 = vmatprep.subr.bf16.mxu0 0
    %2842 = vmatpush1.bf16.msra.mxu0 0
    %2843 = vmatprep.subr.bf16.mxu0 0
    %2844 = vmatpush1.bf16.msra.mxu0 0
    %2845 = vmatprep.subr.bf16.mxu0 0
    %2846 = vmatpush1.bf16.msra.mxu0 0
    %2847 = vmatprep.subr.bf16.mxu0 0
    %2848 = vmatpush1.bf16.msra.mxu0 0
    %2849 = vmatprep.subr.bf16.mxu0 0
    %2850 = vmatpush1.bf16.msra.mxu0 0
    %2851 = vmatprep.subr.bf16.mxu0 0
    %2852 = vmatpush1.bf16.msra.mxu0 0
    %2853 = vmatprep.subr.bf16.mxu0 0
    %2854 = vmatpush1.bf16.msra.mxu0 0
    %2855 = vmatprep.mubr.bf16.mxu0 0
    %2856 = vmatmul.mubr.bf16.gmra.mrb[0].mxu0 %v542
    %v2857 = vpop.f32.mrb[0].mxu0
    %v2858 = vadd.f32 0.0, %v2857
    %v2859 = vpop.f32.mrb[0].mxu0
    %v2860 = vpop.f32.mrb[0].mxu0
    %v2861 = vadd.f32 0.0, %v2860
    %v2862 = vpop.f32.mrb[0].mxu0
    %2863 = vdwg.mxu0
    %v2864 = vadd.f32 %v2817, %v2858
    %v2865 = vadd.f32 %v2820, %v2861
    %2866 = vmatprep.subr.bf16.mxu0 0
    %2867 = vmatpush1.bf16.msra.mxu0 %v2706
    %2868 = vmatprep.subr.bf16.mxu0 0
    %2869 = vmatpush1.bf16.msra.mxu0 0
    %2870 = vmatprep.subr.bf16.mxu0 0
    %2871 = vmatpush1.bf16.msra.mxu0 0
    %2872 = vmatprep.subr.bf16.mxu0 0
    %2873 = vmatpush1.bf16.msra.mxu0 0
    %2874 = vmatprep.subr.bf16.mxu0 0
    %2875 = vmatpush1.bf16.msra.mxu0 0
    %2876 = vmatprep.subr.bf16.mxu0 0
    %2877 = vmatpush1.bf16.msra.mxu0 0
    %2878 = vmatprep.subr.bf16.mxu0 0
    %2879 = vmatpush1.bf16.msra.mxu0 0
    %2880 = vmatprep.subr.bf16.mxu0 0
    %2881 = vmatpush1.bf16.msra.mxu0 0
    %2882 = vmatprep.subr.bf16.mxu0 0
    %2883 = vmatpush1.bf16.msra.mxu0 0
    %2884 = vmatprep.subr.bf16.mxu0 0
    %2885 = vmatpush1.bf16.msra.mxu0 0
    %2886 = vmatprep.subr.bf16.mxu0 0
    %2887 = vmatpush1.bf16.msra.mxu0 0
    %2888 = vmatprep.subr.bf16.mxu0 0
    %2889 = vmatpush1.bf16.msra.mxu0 0
    %2890 = vmatprep.subr.bf16.mxu0 0
    %2891 = vmatpush1.bf16.msra.mxu0 0
    %2892 = vmatprep.subr.bf16.mxu0 0
    %2893 = vmatpush1.bf16.msra.mxu0 0
    %2894 = vmatprep.subr.bf16.mxu0 0
    %2895 = vmatpush1.bf16.msra.mxu0 0
    %2896 = vmatprep.subr.bf16.mxu0 0
    %2897 = vmatpush1.bf16.msra.mxu0 0
    %2898 = vmatprep.mubr.bf16.mxu0 0
    %2899 = vmatmul.mubr.bf16.gmra.mrb[0].mxu0 %v493
    %v2900 = vpop.f32.mrb[0].mxu0
    %v2901 = vadd.f32 0.0, %v2900
    %v2902 = vpop.f32.mrb[0].mxu0
    %v2903 = vpop.f32.mrb[0].mxu0
    %v2904 = vadd.f32 0.0, %v2903
    %v2905 = vpop.f32.mrb[0].mxu0
    %2906 = vdwg.mxu0
    %2907 = vmatprep.subr.bf16.mxu0 0
    %2908 = vmatpush1.bf16.msra.mxu0 %v2706
    %2909 = vmatprep.subr.bf16.mxu0 0
    %2910 = vmatpush1.bf16.msra.mxu0 0
    %2911 = vmatprep.subr.bf16.mxu0 0
    %2912 = vmatpush1.bf16.msra.mxu0 0
    %2913 = vmatprep.subr.bf16.mxu0 0
    %2914 = vmatpush1.bf16.msra.mxu0 0
    %2915 = vmatprep.subr.bf16.mxu0 0
    %2916 = vmatpush1.bf16.msra.mxu0 0
    %2917 = vmatprep.subr.bf16.mxu0 0
    %2918 = vmatpush1.bf16.msra.mxu0 0
    %2919 = vmatprep.subr.bf16.mxu0 0
    %2920 = vmatpush1.bf16.msra.mxu0 0
    %2921 = vmatprep.subr.bf16.mxu0 0
    %2922 = vmatpush1.bf16.msra.mxu0 0
    %2923 = vmatprep.subr.bf16.mxu0 0
    %2924 = vmatpush1.bf16.msra.mxu0 0
    %2925 = vmatprep.subr.bf16.mxu0 0
    %2926 = vmatpush1.bf16.msra.mxu0 0
    %2927 = vmatprep.subr.bf16.mxu0 0
    %2928 = vmatpush1.bf16.msra.mxu0 0
    %2929 = vmatprep.subr.bf16.mxu0 0
    %2930 = vmatpush1.bf16.msra.mxu0 0
    %2931 = vmatprep.subr.bf16.mxu0 0
    %2932 = vmatpush1.bf16.msra.mxu0 0
    %2933 = vmatprep.subr.bf16.mxu0 0
    %2934 = vmatpush1.bf16.msra.mxu0 0
    %2935 = vmatprep.subr.bf16.mxu0 0
    %2936 = vmatpush1.bf16.msra.mxu0 0
    %2937 = vmatprep.subr.bf16.mxu0 0
    %2938 = vmatpush1.bf16.msra.mxu0 0
    %2939 = vmatprep.mubr.bf16.mxu0 0
    %2940 = vmatmul.mubr.bf16.gmra.mrb[0].mxu0 %v542
    %v2941 = vpop.f32.mrb[0].mxu0
    %v2942 = vadd.f32 %v2901, %v2941
    %v2943 = vpop.f32.mrb[0].mxu0
    %v2944 = vpop.f32.mrb[0].mxu0
    %v2945 = vadd.f32 %v2904, %v2944
    %v2946 = vpop.f32.mrb[0].mxu0
    %2947 = vdwg.mxu0
    %2948 = vmatprep.subr.bf16.mxu0 0
    %2949 = vmatpush1.bf16.msra.mxu0 %v2736
    %2950 = vmatprep.subr.bf16.mxu0 0
    %2951 = vmatpush1.bf16.msra.mxu0 0
    %2952 = vmatprep.subr.bf16.mxu0 0
    %2953 = vmatpush1.bf16.msra.mxu0 0
    %2954 = vmatprep.subr.bf16.mxu0 0
    %2955 = vmatpush1.bf16.msra.mxu0 0
    %2956 = vmatprep.subr.bf16.mxu0 0
    %2957 = vmatpush1.bf16.msra.mxu0 0
    %2958 = vmatprep.subr.bf16.mxu0 0
    %2959 = vmatpush1.bf16.msra.mxu0 0
    %2960 = vmatprep.subr.bf16.mxu0 0
    %2961 = vmatpush1.bf16.msra.mxu0 0
    %2962 = vmatprep.subr.bf16.mxu0 0
    %2963 = vmatpush1.bf16.msra.mxu0 0
    %2964 = vmatprep.subr.bf16.mxu0 0
    %2965 = vmatpush1.bf16.msra.mxu0 0
    %2966 = vmatprep.subr.bf16.mxu0 0
    %2967 = vmatpush1.bf16.msra.mxu0 0
    %2968 = vmatprep.subr.bf16.mxu0 0
    %2969 = vmatpush1.bf16.msra.mxu0 0
    %2970 = vmatprep.subr.bf16.mxu0 0
    %2971 = vmatpush1.bf16.msra.mxu0 0
    %2972 = vmatprep.subr.bf16.mxu0 0
    %2973 = vmatpush1.bf16.msra.mxu0 0
    %2974 = vmatprep.subr.bf16.mxu0 0
    %2975 = vmatpush1.bf16.msra.mxu0 0
    %2976 = vmatprep.subr.bf16.mxu0 0
    %2977 = vmatpush1.bf16.msra.mxu0 0
    %2978 = vmatprep.subr.bf16.mxu0 0
    %2979 = vmatpush1.bf16.msra.mxu0 0
    %2980 = vmatprep.mubr.bf16.mxu0 0
    %2981 = vmatmul.mubr.bf16.gmra.mrb[0].mxu0 %v542
    %v2982 = vpop.f32.mrb[0].mxu0
    %v2983 = vadd.f32 0.0, %v2982
    %v2984 = vpop.f32.mrb[0].mxu0
    %v2985 = vpop.f32.mrb[0].mxu0
    %v2986 = vadd.f32 0.0, %v2985
    %v2987 = vpop.f32.mrb[0].mxu0
    %2988 = vdwg.mxu0
    %v2989 = vadd.f32 %v2942, %v2983
    %v2990 = vadd.f32 %v2945, %v2986
    %2991 = vmatprep.subr.bf16.mxu0 0
    %2992 = vmatpush1.bf16.msra.mxu0 %v2707
    %2993 = vmatprep.subr.bf16.mxu0 0
    %2994 = vmatpush1.bf16.msra.mxu0 0
    %2995 = vmatprep.subr.bf16.mxu0 0
    %2996 = vmatpush1.bf16.msra.mxu0 0
    %2997 = vmatprep.subr.bf16.mxu0 0
    %2998 = vmatpush1.bf16.msra.mxu0 0
    %2999 = vmatprep.subr.bf16.mxu0 0
    %3000 = vmatpush1.bf16.msra.mxu0 0
    %3001 = vmatprep.subr.bf16.mxu0 0
    %3002 = vmatpush1.bf16.msra.mxu0 0
    %3003 = vmatprep.subr.bf16.mxu0 0
    %3004 = vmatpush1.bf16.msra.mxu0 0
    %3005 = vmatprep.subr.bf16.mxu0 0
    %3006 = vmatpush1.bf16.msra.mxu0 0
    %3007 = vmatprep.subr.bf16.mxu0 0
    %3008 = vmatpush1.bf16.msra.mxu0 0
    %3009 = vmatprep.subr.bf16.mxu0 0
    %3010 = vmatpush1.bf16.msra.mxu0 0
    %3011 = vmatprep.subr.bf16.mxu0 0
    %3012 = vmatpush1.bf16.msra.mxu0 0
    %3013 = vmatprep.subr.bf16.mxu0 0
    %3014 = vmatpush1.bf16.msra.mxu0 0
    %3015 = vmatprep.subr.bf16.mxu0 0
    %3016 = vmatpush1.bf16.msra.mxu0 0
    %3017 = vmatprep.subr.bf16.mxu0 0
    %3018 = vmatpush1.bf16.msra.mxu0 0
    %3019 = vmatprep.subr.bf16.mxu0 0
    %3020 = vmatpush1.bf16.msra.mxu0 0
    %3021 = vmatprep.subr.bf16.mxu0 0
    %3022 = vmatpush1.bf16.msra.mxu0 0
    %3023 = vmatprep.mubr.bf16.mxu0 0
    %3024 = vmatmul.mubr.bf16.gmra.mrb[0].mxu0 %v493
    %v3025 = vpop.f32.mrb[0].mxu0
    %v3026 = vadd.f32 0.0, %v3025
    %v3027 = vpop.f32.mrb[0].mxu0
    %v3028 = vpop.f32.mrb[0].mxu0
    %v3029 = vadd.f32 0.0, %v3028
    %v3030 = vpop.f32.mrb[0].mxu0
    %3031 = vdwg.mxu0
    %3032 = vmatprep.subr.bf16.mxu0 0
    %3033 = vmatpush1.bf16.msra.mxu0 %v2707
    %3034 = vmatprep.subr.bf16.mxu0 0
    %3035 = vmatpush1.bf16.msra.mxu0 0
    %3036 = vmatprep.subr.bf16.mxu0 0
    %3037 = vmatpush1.bf16.msra.mxu0 0
    %3038 = vmatprep.subr.bf16.mxu0 0
    %3039 = vmatpush1.bf16.msra.mxu0 0
    %3040 = vmatprep.subr.bf16.mxu0 0
    %3041 = vmatpush1.bf16.msra.mxu0 0
    %3042 = vmatprep.subr.bf16.mxu0 0
    %3043 = vmatpush1.bf16.msra.mxu0 0
    %3044 = vmatprep.subr.bf16.mxu0 0
    %3045 = vmatpush1.bf16.msra.mxu0 0
    %3046 = vmatprep.subr.bf16.mxu0 0
    %3047 = vmatpush1.bf16.msra.mxu0 0
    %3048 = vmatprep.subr.bf16.mxu0 0
    %3049 = vmatpush1.bf16.msra.mxu0 0
    %3050 = vmatprep.subr.bf16.mxu0 0
    %3051 = vmatpush1.bf16.msra.mxu0 0
    %3052 = vmatprep.subr.bf16.mxu0 0
    %3053 = vmatpush1.bf16.msra.mxu0 0
    %3054 = vmatprep.subr.bf16.mxu0 0
    %3055 = vmatpush1.bf16.msra.mxu0 0
    %3056 = vmatprep.subr.bf16.mxu0 0
    %3057 = vmatpush1.bf16.msra.mxu0 0
    %3058 = vmatprep.subr.bf16.mxu0 0
    %3059 = vmatpush1.bf16.msra.mxu0 0
    %3060 = vmatprep.subr.bf16.mxu0 0
    %3061 = vmatpush1.bf16.msra.mxu0 0
    %3062 = vmatprep.subr.bf16.mxu0 0
    %3063 = vmatpush1.bf16.msra.mxu0 0
    %3064 = vmatprep.mubr.bf16.mxu0 0
    %3065 = vmatmul.mubr.bf16.gmra.mrb[0].mxu0 %v542
    %v3066 = vpop.f32.mrb[0].mxu0
    %v3067 = vadd.f32 %v3026, %v3066
    %v3068 = vpop.f32.mrb[0].mxu0
    %v3069 = vpop.f32.mrb[0].mxu0
    %v3070 = vadd.f32 %v3029, %v3069
    %v3071 = vpop.f32.mrb[0].mxu0
    %3072 = vdwg.mxu0
    %3073 = vmatprep.subr.bf16.mxu0 0
    %3074 = vmatpush1.bf16.msra.mxu0 %v2737
    %3075 = vmatprep.subr.bf16.mxu0 0
    %3076 = vmatpush1.bf16.msra.mxu0 0
    %3077 = vmatprep.subr.bf16.mxu0 0
    %3078 = vmatpush1.bf16.msra.mxu0 0
    %3079 = vmatprep.subr.bf16.mxu0 0
    %3080 = vmatpush1.bf16.msra.mxu0 0
    %3081 = vmatprep.subr.bf16.mxu0 0
    %3082 = vmatpush1.bf16.msra.mxu0 0
    %3083 = vmatprep.subr.bf16.mxu0 0
    %3084 = vmatpush1.bf16.msra.mxu0 0
    %3085 = vmatprep.subr.bf16.mxu0 0
    %3086 = vmatpush1.bf16.msra.mxu0 0
    %3087 = vmatprep.subr.bf16.mxu0 0
    %3088 = vmatpush1.bf16.msra.mxu0 0
    %3089 = vmatprep.subr.bf16.mxu0 0
    %3090 = vmatpush1.bf16.msra.mxu0 0
    %3091 = vmatprep.subr.bf16.mxu0 0
    %3092 = vmatpush1.bf16.msra.mxu0 0
    %3093 = vmatprep.subr.bf16.mxu0 0
    %3094 = vmatpush1.bf16.msra.mxu0 0
    %3095 = vmatprep.subr.bf16.mxu0 0
    %3096 = vmatpush1.bf16.msra.mxu0 0
    %3097 = vmatprep.subr.bf16.mxu0 0
    %3098 = vmatpush1.bf16.msra.mxu0 0
    %3099 = vmatprep.subr.bf16.mxu0 0
    %3100 = vmatpush1.bf16.msra.mxu0 0
    %3101 = vmatprep.subr.bf16.mxu0 0
    %3102 = vmatpush1.bf16.msra.mxu0 0
    %3103 = vmatprep.subr.bf16.mxu0 0
    %3104 = vmatpush1.bf16.msra.mxu0 0
    %3105 = vmatprep.mubr.bf16.mxu0 0
    %3106 = vmatmul.mubr.bf16.gmra.mrb[0].mxu0 %v542
    %v3107 = vpop.f32.mrb[0].mxu0
    %v3108 = vadd.f32 0.0, %v3107
    %v3109 = vpop.f32.mrb[0].mxu0
    %v3110 = vpop.f32.mrb[0].mxu0
    %v3111 = vadd.f32 0.0, %v3110
    %v3112 = vpop.f32.mrb[0].mxu0
    %3113 = vdwg.mxu0
    %v3114 = vadd.f32 %v3067, %v3108
    %v3115 = vadd.f32 %v3070, %v3111
    %3116 = vmatprep.subr.bf16.mxu0 0
    %3117 = vmatpush1.bf16.msra.mxu0 %v2708
    %3118 = vmatprep.subr.bf16.mxu0 0
    %3119 = vmatpush1.bf16.msra.mxu0 0
    %3120 = vmatprep.subr.bf16.mxu0 0
    %3121 = vmatpush1.bf16.msra.mxu0 0
    %3122 = vmatprep.subr.bf16.mxu0 0
    %3123 = vmatpush1.bf16.msra.mxu0 0
    %3124 = vmatprep.subr.bf16.mxu0 0
    %3125 = vmatpush1.bf16.msra.mxu0 0
    %3126 = vmatprep.subr.bf16.mxu0 0
    %3127 = vmatpush1.bf16.msra.mxu0 0
    %3128 = vmatprep.subr.bf16.mxu0 0
    %3129 = vmatpush1.bf16.msra.mxu0 0
    %3130 = vmatprep.subr.bf16.mxu0 0
    %3131 = vmatpush1.bf16.msra.mxu0 0
    %3132 = vmatprep.subr.bf16.mxu0 0
    %3133 = vmatpush1.bf16.msra.mxu0 0
    %3134 = vmatprep.subr.bf16.mxu0 0
    %3135 = vmatpush1.bf16.msra.mxu0 0
    %3136 = vmatprep.subr.bf16.mxu0 0
    %3137 = vmatpush1.bf16.msra.mxu0 0
    %3138 = vmatprep.subr.bf16.mxu0 0
    %3139 = vmatpush1.bf16.msra.mxu0 0
    %3140 = vmatprep.subr.bf16.mxu0 0
    %3141 = vmatpush1.bf16.msra.mxu0 0
    %3142 = vmatprep.subr.bf16.mxu0 0
    %3143 = vmatpush1.bf16.msra.mxu0 0
    %3144 = vmatprep.subr.bf16.mxu0 0
    %3145 = vmatpush1.bf16.msra.mxu0 0
    %3146 = vmatprep.subr.bf16.mxu0 0
    %3147 = vmatpush1.bf16.msra.mxu0 0
    %3148 = vmatprep.mubr.bf16.mxu0 0
    %3149 = vmatmul.mubr.bf16.gmra.mrb[0].mxu0 %v493
    %v3150 = vpop.f32.mrb[0].mxu0
    %v3151 = vadd.f32 0.0, %v3150
    %v3152 = vpop.f32.mrb[0].mxu0
    %v3153 = vpop.f32.mrb[0].mxu0
    %v3154 = vadd.f32 0.0, %v3153
    %v3155 = vpop.f32.mrb[0].mxu0
    %3156 = vdwg.mxu0
    %3157 = vmatprep.subr.bf16.mxu0 0
    %3158 = vmatpush1.bf16.msra.mxu0 %v2708
    %3159 = vmatprep.subr.bf16.mxu0 0
    %3160 = vmatpush1.bf16.msra.mxu0 0
    %3161 = vmatprep.subr.bf16.mxu0 0
    %3162 = vmatpush1.bf16.msra.mxu0 0
    %3163 = vmatprep.subr.bf16.mxu0 0
    %3164 = vmatpush1.bf16.msra.mxu0 0
    %3165 = vmatprep.subr.bf16.mxu0 0
    %3166 = vmatpush1.bf16.msra.mxu0 0
    %3167 = vmatprep.subr.bf16.mxu0 0
    %3168 = vmatpush1.bf16.msra.mxu0 0
    %3169 = vmatprep.subr.bf16.mxu0 0
    %3170 = vmatpush1.bf16.msra.mxu0 0
    %3171 = vmatprep.subr.bf16.mxu0 0
    %3172 = vmatpush1.bf16.msra.mxu0 0
    %3173 = vmatprep.subr.bf16.mxu0 0
    %3174 = vmatpush1.bf16.msra.mxu0 0
    %3175 = vmatprep.subr.bf16.mxu0 0
    %3176 = vmatpush1.bf16.msra.mxu0 0
    %3177 = vmatprep.subr.bf16.mxu0 0
    %3178 = vmatpush1.bf16.msra.mxu0 0
    %3179 = vmatprep.subr.bf16.mxu0 0
    %3180 = vmatpush1.bf16.msra.mxu0 0
    %3181 = vmatprep.subr.bf16.mxu0 0
    %3182 = vmatpush1.bf16.msra.mxu0 0
    %3183 = vmatprep.subr.bf16.mxu0 0
    %3184 = vmatpush1.bf16.msra.mxu0 0
    %3185 = vmatprep.subr.bf16.mxu0 0
    %3186 = vmatpush1.bf16.msra.mxu0 0
    %3187 = vmatprep.subr.bf16.mxu0 0
    %3188 = vmatpush1.bf16.msra.mxu0 0
    %3189 = vmatprep.mubr.bf16.mxu0 0
    %3190 = vmatmul.mubr.bf16.gmra.mrb[0].mxu0 %v542
    %v3191 = vpop.f32.mrb[0].mxu0
    %v3192 = vadd.f32 %v3151, %v3191
    %v3193 = vpop.f32.mrb[0].mxu0
    %v3194 = vpop.f32.mrb[0].mxu0
    %v3195 = vadd.f32 %v3154, %v3194
    %v3196 = vpop.f32.mrb[0].mxu0
    %3197 = vdwg.mxu0
    %3198 = vmatprep.subr.bf16.mxu0 0
    %3199 = vmatpush1.bf16.msra.mxu0 %v2738
    %3200 = vmatprep.subr.bf16.mxu0 0
    %3201 = vmatpush1.bf16.msra.mxu0 0
    %3202 = vmatprep.subr.bf16.mxu0 0
    %3203 = vmatpush1.bf16.msra.mxu0 0
    %3204 = vmatprep.subr.bf16.mxu0 0
    %3205 = vmatpush1.bf16.msra.mxu0 0
    %3206 = vmatprep.subr.bf16.mxu0 0
    %3207 = vmatpush1.bf16.msra.mxu0 0
    %3208 = vmatprep.subr.bf16.mxu0 0
    %3209 = vmatpush1.bf16.msra.mxu0 0
    %3210 = vmatprep.subr.bf16.mxu0 0
    %3211 = vmatpush1.bf16.msra.mxu0 0
    %3212 = vmatprep.subr.bf16.mxu0 0
    %3213 = vmatpush1.bf16.msra.mxu0 0
    %3214 = vmatprep.subr.bf16.mxu0 0
    %3215 = vmatpush1.bf16.msra.mxu0 0
    %3216 = vmatprep.subr.bf16.mxu0 0
    %3217 = vmatpush1.bf16.msra.mxu0 0
    %3218 = vmatprep.subr.bf16.mxu0 0
    %3219 = vmatpush1.bf16.msra.mxu0 0
    %3220 = vmatprep.subr.bf16.mxu0 0
    %3221 = vmatpush1.bf16.msra.mxu0 0
    %3222 = vmatprep.subr.bf16.mxu0 0
    %3223 = vmatpush1.bf16.msra.mxu0 0
    %3224 = vmatprep.subr.bf16.mxu0 0
    %3225 = vmatpush1.bf16.msra.mxu0 0
    %3226 = vmatprep.subr.bf16.mxu0 0
    %3227 = vmatpush1.bf16.msra.mxu0 0
    %3228 = vmatprep.subr.bf16.mxu0 0
    %3229 = vmatpush1.bf16.msra.mxu0 0
    %3230 = vmatprep.mubr.bf16.mxu0 0
    %3231 = vmatmul.mubr.bf16.gmra.mrb[0].mxu0 %v542
    %v3232 = vpop.f32.mrb[0].mxu0
    %v3233 = vadd.f32 0.0, %v3232
    %v3234 = vpop.f32.mrb[0].mxu0
    %v3235 = vpop.f32.mrb[0].mxu0
    %v3236 = vadd.f32 0.0, %v3235
    %v3237 = vpop.f32.mrb[0].mxu0
    %3238 = vdwg.mxu0
    %v3239 = vadd.f32 %v3192, %v3233
    %v3240 = vadd.f32 %v3195, %v3236
    %3241 = vmatprep.subr.bf16.mxu0 0
    %3242 = vmatpush1.bf16.msra.mxu0 %v2709
    %3243 = vmatprep.subr.bf16.mxu0 0
    %3244 = vmatpush1.bf16.msra.mxu0 0
    %3245 = vmatprep.subr.bf16.mxu0 0
    %3246 = vmatpush1.bf16.msra.mxu0 0
    %3247 = vmatprep.subr.bf16.mxu0 0
    %3248 = vmatpush1.bf16.msra.mxu0 0
    %3249 = vmatprep.subr.bf16.mxu0 0
    %3250 = vmatpush1.bf16.msra.mxu0 0
    %3251 = vmatprep.subr.bf16.mxu0 0
    %3252 = vmatpush1.bf16.msra.mxu0 0
    %3253 = vmatprep.subr.bf16.mxu0 0
    %3254 = vmatpush1.bf16.msra.mxu0 0
    %3255 = vmatprep.subr.bf16.mxu0 0
    %3256 = vmatpush1.bf16.msra.mxu0 0
    %3257 = vmatprep.subr.bf16.mxu0 0
    %3258 = vmatpush1.bf16.msra.mxu0 0
    %3259 = vmatprep.subr.bf16.mxu0 0
    %3260 = vmatpush1.bf16.msra.mxu0 0
    %3261 = vmatprep.subr.bf16.mxu0 0
    %3262 = vmatpush1.bf16.msra.mxu0 0
    %3263 = vmatprep.subr.bf16.mxu0 0
    %3264 = vmatpush1.bf16.msra.mxu0 0
    %3265 = vmatprep.subr.bf16.mxu0 0
    %3266 = vmatpush1.bf16.msra.mxu0 0
    %3267 = vmatprep.subr.bf16.mxu0 0
    %3268 = vmatpush1.bf16.msra.mxu0 0
    %3269 = vmatprep.subr.bf16.mxu0 0
    %3270 = vmatpush1.bf16.msra.mxu0 0
    %3271 = vmatprep.subr.bf16.mxu0 0
    %3272 = vmatpush1.bf16.msra.mxu0 0
    %3273 = vmatprep.mubr.bf16.mxu0 0
    %3274 = vmatmul.mubr.bf16.gmra.mrb[0].mxu0 %v493
    %v3275 = vpop.f32.mrb[0].mxu0
    %v3276 = vadd.f32 0.0, %v3275
    %v3277 = vpop.f32.mrb[0].mxu0
    %v3278 = vpop.f32.mrb[0].mxu0
    %v3279 = vadd.f32 0.0, %v3278
    %v3280 = vpop.f32.mrb[0].mxu0
    %3281 = vdwg.mxu0
    %3282 = vmatprep.subr.bf16.mxu0 0
    %3283 = vmatpush1.bf16.msra.mxu0 %v2709
    %3284 = vmatprep.subr.bf16.mxu0 0
    %3285 = vmatpush1.bf16.msra.mxu0 0
    %3286 = vmatprep.subr.bf16.mxu0 0
    %3287 = vmatpush1.bf16.msra.mxu0 0
    %3288 = vmatprep.subr.bf16.mxu0 0
    %3289 = vmatpush1.bf16.msra.mxu0 0
    %3290 = vmatprep.subr.bf16.mxu0 0
    %3291 = vmatpush1.bf16.msra.mxu0 0
    %3292 = vmatprep.subr.bf16.mxu0 0
    %3293 = vmatpush1.bf16.msra.mxu0 0
    %3294 = vmatprep.subr.bf16.mxu0 0
    %3295 = vmatpush1.bf16.msra.mxu0 0
    %3296 = vmatprep.subr.bf16.mxu0 0
    %3297 = vmatpush1.bf16.msra.mxu0 0
    %3298 = vmatprep.subr.bf16.mxu0 0
    %3299 = vmatpush1.bf16.msra.mxu0 0
    %3300 = vmatprep.subr.bf16.mxu0 0
    %3301 = vmatpush1.bf16.msra.mxu0 0
    %3302 = vmatprep.subr.bf16.mxu0 0
    %3303 = vmatpush1.bf16.msra.mxu0 0
    %3304 = vmatprep.subr.bf16.mxu0 0
    %3305 = vmatpush1.bf16.msra.mxu0 0
    %3306 = vmatprep.subr.bf16.mxu0 0
    %3307 = vmatpush1.bf16.msra.mxu0 0
    %3308 = vmatprep.subr.bf16.mxu0 0
    %3309 = vmatpush1.bf16.msra.mxu0 0
    %3310 = vmatprep.subr.bf16.mxu0 0
    %3311 = vmatpush1.bf16.msra.mxu0 0
    %3312 = vmatprep.subr.bf16.mxu0 0
    %3313 = vmatpush1.bf16.msra.mxu0 0
    %3314 = vmatprep.mubr.bf16.mxu0 0
    %3315 = vmatmul.mubr.bf16.gmra.mrb[0].mxu0 %v542
    %v3316 = vpop.f32.mrb[0].mxu0
    %v3317 = vadd.f32 %v3276, %v3316
    %v3318 = vpop.f32.mrb[0].mxu0
    %v3319 = vpop.f32.mrb[0].mxu0
    %v3320 = vadd.f32 %v3279, %v3319
    %v3321 = vpop.f32.mrb[0].mxu0
    %3322 = vdwg.mxu0
    %3323 = vmatprep.subr.bf16.mxu0 0
    %3324 = vmatpush1.bf16.msra.mxu0 %v2739
    %3325 = vmatprep.subr.bf16.mxu0 0
    %3326 = vmatpush1.bf16.msra.mxu0 0
    %3327 = vmatprep.subr.bf16.mxu0 0
    %3328 = vmatpush1.bf16.msra.mxu0 0
    %3329 = vmatprep.subr.bf16.mxu0 0
    %3330 = vmatpush1.bf16.msra.mxu0 0
    %3331 = vmatprep.subr.bf16.mxu0 0
    %3332 = vmatpush1.bf16.msra.mxu0 0
    %3333 = vmatprep.subr.bf16.mxu0 0
    %3334 = vmatpush1.bf16.msra.mxu0 0
    %3335 = vmatprep.subr.bf16.mxu0 0
    %3336 = vmatpush1.bf16.msra.mxu0 0
    %3337 = vmatprep.subr.bf16.mxu0 0
    %3338 = vmatpush1.bf16.msra.mxu0 0
    %3339 = vmatprep.subr.bf16.mxu0 0
    %3340 = vmatpush1.bf16.msra.mxu0 0
    %3341 = vmatprep.subr.bf16.mxu0 0
    %3342 = vmatpush1.bf16.msra.mxu0 0
    %3343 = vmatprep.subr.bf16.mxu0 0
    %3344 = vmatpush1.bf16.msra.mxu0 0
    %3345 = vmatprep.subr.bf16.mxu0 0
    %3346 = vmatpush1.bf16.msra.mxu0 0
    %3347 = vmatprep.subr.bf16.mxu0 0
    %3348 = vmatpush1.bf16.msra.mxu0 0
    %3349 = vmatprep.subr.bf16.mxu0 0
    %3350 = vmatpush1.bf16.msra.mxu0 0
    %3351 = vmatprep.subr.bf16.mxu0 0
    %3352 = vmatpush1.bf16.msra.mxu0 0
    %3353 = vmatprep.subr.bf16.mxu0 0
    %3354 = vmatpush1.bf16.msra.mxu0 0
    %3355 = vmatprep.mubr.bf16.mxu0 0
    %3356 = vmatmul.mubr.bf16.gmra.mrb[0].mxu0 %v542
    %v3357 = vpop.f32.mrb[0].mxu0
    %v3358 = vadd.f32 0.0, %v3357
    %v3359 = vpop.f32.mrb[0].mxu0
    %v3360 = vpop.f32.mrb[0].mxu0
    %v3361 = vadd.f32 0.0, %v3360
    %v3362 = vpop.f32.mrb[0].mxu0
    %3363 = vdwg.mxu0
    %v3364 = vadd.f32 %v3317, %v3358
    %v3365 = vadd.f32 %v3320, %v3361
    %3366 = vmatprep.subr.bf16.mxu0 0
    %3367 = vmatpush1.bf16.msra.mxu0 %v2710
    %3368 = vmatprep.subr.bf16.mxu0 0
    %3369 = vmatpush1.bf16.msra.mxu0 0
    %3370 = vmatprep.subr.bf16.mxu0 0
    %3371 = vmatpush1.bf16.msra.mxu0 0
    %3372 = vmatprep.subr.bf16.mxu0 0
    %3373 = vmatpush1.bf16.msra.mxu0 0
    %3374 = vmatprep.subr.bf16.mxu0 0
    %3375 = vmatpush1.bf16.msra.mxu0 0
    %3376 = vmatprep.subr.bf16.mxu0 0
    %3377 = vmatpush1.bf16.msra.mxu0 0
    %3378 = vmatprep.subr.bf16.mxu0 0
    %3379 = vmatpush1.bf16.msra.mxu0 0
    %3380 = vmatprep.subr.bf16.mxu0 0
    %3381 = vmatpush1.bf16.msra.mxu0 0
    %3382 = vmatprep.subr.bf16.mxu0 0
    %3383 = vmatpush1.bf16.msra.mxu0 0
    %3384 = vmatprep.subr.bf16.mxu0 0
    %3385 = vmatpush1.bf16.msra.mxu0 0
    %3386 = vmatprep.subr.bf16.mxu0 0
    %3387 = vmatpush1.bf16.msra.mxu0 0
    %3388 = vmatprep.subr.bf16.mxu0 0
    %3389 = vmatpush1.bf16.msra.mxu0 0
    %3390 = vmatprep.subr.bf16.mxu0 0
    %3391 = vmatpush1.bf16.msra.mxu0 0
    %3392 = vmatprep.subr.bf16.mxu0 0
    %3393 = vmatpush1.bf16.msra.mxu0 0
    %3394 = vmatprep.subr.bf16.mxu0 0
    %3395 = vmatpush1.bf16.msra.mxu0 0
    %3396 = vmatprep.subr.bf16.mxu0 0
    %3397 = vmatpush1.bf16.msra.mxu0 0
    %3398 = vmatprep.mubr.bf16.mxu0 0
    %3399 = vmatmul.mubr.bf16.gmra.mrb[0].mxu0 %v493
    %v3400 = vpop.f32.mrb[0].mxu0
    %v3401 = vadd.f32 0.0, %v3400
    %v3402 = vpop.f32.mrb[0].mxu0
    %v3403 = vpop.f32.mrb[0].mxu0
    %v3404 = vadd.f32 0.0, %v3403
    %v3405 = vpop.f32.mrb[0].mxu0
    %3406 = vdwg.mxu0
    %3407 = vmatprep.subr.bf16.mxu0 0
    %3408 = vmatpush1.bf16.msra.mxu0 %v2710
    %3409 = vmatprep.subr.bf16.mxu0 0
    %3410 = vmatpush1.bf16.msra.mxu0 0
    %3411 = vmatprep.subr.bf16.mxu0 0
    %3412 = vmatpush1.bf16.msra.mxu0 0
    %3413 = vmatprep.subr.bf16.mxu0 0
    %3414 = vmatpush1.bf16.msra.mxu0 0
    %3415 = vmatprep.subr.bf16.mxu0 0
    %3416 = vmatpush1.bf16.msra.mxu0 0
    %3417 = vmatprep.subr.bf16.mxu0 0
    %3418 = vmatpush1.bf16.msra.mxu0 0
    %3419 = vmatprep.subr.bf16.mxu0 0
    %3420 = vmatpush1.bf16.msra.mxu0 0
    %3421 = vmatprep.subr.bf16.mxu0 0
    %3422 = vmatpush1.bf16.msra.mxu0 0
    %3423 = vmatprep.subr.bf16.mxu0 0
    %3424 = vmatpush1.bf16.msra.mxu0 0
    %3425 = vmatprep.subr.bf16.mxu0 0
    %3426 = vmatpush1.bf16.msra.mxu0 0
    %3427 = vmatprep.subr.bf16.mxu0 0
    %3428 = vmatpush1.bf16.msra.mxu0 0
    %3429 = vmatprep.subr.bf16.mxu0 0
    %3430 = vmatpush1.bf16.msra.mxu0 0
    %3431 = vmatprep.subr.bf16.mxu0 0
    %3432 = vmatpush1.bf16.msra.mxu0 0
    %3433 = vmatprep.subr.bf16.mxu0 0
    %3434 = vmatpush1.bf16.msra.mxu0 0
    %3435 = vmatprep.subr.bf16.mxu0 0
    %3436 = vmatpush1.bf16.msra.mxu0 0
    %3437 = vmatprep.subr.bf16.mxu0 0
    %3438 = vmatpush1.bf16.msra.mxu0 0
    %3439 = vmatprep.mubr.bf16.mxu0 0
    %3440 = vmatmul.mubr.bf16.gmra.mrb[0].mxu0 %v542
    %v3441 = vpop.f32.mrb[0].mxu0
    %v3442 = vadd.f32 %v3401, %v3441
    %v3443 = vpop.f32.mrb[0].mxu0
    %v3444 = vpop.f32.mrb[0].mxu0
    %v3445 = vadd.f32 %v3404, %v3444
    %v3446 = vpop.f32.mrb[0].mxu0
    %3447 = vdwg.mxu0
    %3448 = vmatprep.subr.bf16.mxu0 0
    %3449 = vmatpush1.bf16.msra.mxu0 %v2740
    %3450 = vmatprep.subr.bf16.mxu0 0
    %3451 = vmatpush1.bf16.msra.mxu0 0
    %3452 = vmatprep.subr.bf16.mxu0 0
    %3453 = vmatpush1.bf16.msra.mxu0 0
    %3454 = vmatprep.subr.bf16.mxu0 0
    %3455 = vmatpush1.bf16.msra.mxu0 0
    %3456 = vmatprep.subr.bf16.mxu0 0
    %3457 = vmatpush1.bf16.msra.mxu0 0
    %3458 = vmatprep.subr.bf16.mxu0 0
    %3459 = vmatpush1.bf16.msra.mxu0 0
    %3460 = vmatprep.subr.bf16.mxu0 0
    %3461 = vmatpush1.bf16.msra.mxu0 0
    %3462 = vmatprep.subr.bf16.mxu0 0
    %3463 = vmatpush1.bf16.msra.mxu0 0
    %3464 = vmatprep.subr.bf16.mxu0 0
    %3465 = vmatpush1.bf16.msra.mxu0 0
    %3466 = vmatprep.subr.bf16.mxu0 0
    %3467 = vmatpush1.bf16.msra.mxu0 0
    %3468 = vmatprep.subr.bf16.mxu0 0
    %3469 = vmatpush1.bf16.msra.mxu0 0
    %3470 = vmatprep.subr.bf16.mxu0 0
    %3471 = vmatpush1.bf16.msra.mxu0 0
    %3472 = vmatprep.subr.bf16.mxu0 0
    %3473 = vmatpush1.bf16.msra.mxu0 0
    %3474 = vmatprep.subr.bf16.mxu0 0
    %3475 = vmatpush1.bf16.msra.mxu0 0
    %3476 = vmatprep.subr.bf16.mxu0 0
    %3477 = vmatpush1.bf16.msra.mxu0 0
    %3478 = vmatprep.subr.bf16.mxu0 0
    %3479 = vmatpush1.bf16.msra.mxu0 0
    %3480 = vmatprep.mubr.bf16.mxu0 0
    %3481 = vmatmul.mubr.bf16.gmra.mrb[0].mxu0 %v542
    %v3482 = vpop.f32.mrb[0].mxu0
    %v3483 = vadd.f32 0.0, %v3482
    %v3484 = vpop.f32.mrb[0].mxu0
    %v3485 = vpop.f32.mrb[0].mxu0
    %v3486 = vadd.f32 0.0, %v3485
    %v3487 = vpop.f32.mrb[0].mxu0
    %3488 = vdwg.mxu0
    %v3489 = vadd.f32 %v3442, %v3483
    %v3490 = vadd.f32 %v3445, %v3486
    %v3491 = vmul.f32 %v91, %v91
    %v3492 = vmul.f32 %v92, %v92
    %v3493 = vmul.f32 %v93, %v93
    %v3494 = vmul.f32 %v94, %v94
    %v3495 = vmul.f32 %v95, %v95
    %v3496 = vmul.f32 %v96, %v96
    %v3497 = vmul.f32 %v97, %v97
    %v3498 = vmul.f32 %v98, %v98
    %v3499 = vmul.f32 %v99, %v99
    %v3500 = vmul.f32 %v100, %v100
    %v3501 = vmul.f32 %v101, %v101
    %v3502 = vmul.f32 %v102, %v102
    %v3503 = vpack.c.bf16 %v3492, %v3491
    %v3504 = vpack.c.bf16 %v3494, %v3493
    %v3505 = vpack.c.bf16 %v3496, %v3495
    %v3506 = vpack.c.bf16 %v3498, %v3497
    %v3507 = vpack.c.bf16 %v3500, %v3499
    %v3508 = vpack.c.bf16 %v3502, %v3501
    %v3509 = vunpack.c.l.bf16 %v3503
    %v3510 = vunpack.c.h.bf16 %v3503
    %v3511 = vunpack.c.l.bf16 %v3504
    %v3512 = vunpack.c.h.bf16 %v3504
    %v3513 = vunpack.c.l.bf16 %v3505
    %v3514 = vunpack.c.h.bf16 %v3505
    %v3515 = vunpack.c.l.bf16 %v3506
    %v3516 = vunpack.c.h.bf16 %v3506
    %v3517 = vunpack.c.l.bf16 %v3507
    %v3518 = vunpack.c.h.bf16 %v3507
    %v3519 = vunpack.c.l.bf16 %v3508
    %v3520 = vunpack.c.h.bf16 %v3508
    %v3521 = vsub.f32 %v3491, %v3509
    %v3522 = vsub.f32 %v3492, %v3510
    %v3523 = vsub.f32 %v3493, %v3511
    %v3524 = vsub.f32 %v3494, %v3512
    %v3525 = vsub.f32 %v3495, %v3513
    %v3526 = vsub.f32 %v3496, %v3514
    %v3527 = vsub.f32 %v3497, %v3515
    %v3528 = vsub.f32 %v3498, %v3516
    %v3529 = vsub.f32 %v3499, %v3517
    %v3530 = vsub.f32 %v3500, %v3518
    %v3531 = vsub.f32 %v3501, %v3519
    %v3532 = vsub.f32 %v3502, %v3520
    %v3533 = vpack.c.bf16 %v3522, %v3521
    %v3534 = vpack.c.bf16 %v3524, %v3523
    %v3535 = vpack.c.bf16 %v3526, %v3525
    %v3536 = vpack.c.bf16 %v3528, %v3527
    %v3537 = vpack.c.bf16 %v3530, %v3529
    %v3538 = vpack.c.bf16 %v3532, %v3531
    %v3540 = vsel %vm153, %v3503, 0
    %v3543 = vsel %vm153, %v3504, 0
    %v3546 = vsel %vm153, %v3505, 0
    %v3549 = vsel %vm153, %v3506, 0
    %v3552 = vsel %vm153, %v3507, 0
    %v3555 = vsel %vm153, %v3508, 0
    %3557 = vmatprep.subr.bf16.mxu0 0
    %3558 = vmatpush1.bf16.msra.mxu0 %v151
    %3559 = vmatprep.subr.bf16.mxu0 0
    %3560 = vmatpush1.bf16.msra.mxu0 0
    %3561 = vmatprep.subr.bf16.mxu0 0
    %3562 = vmatpush1.bf16.msra.mxu0 0
    %3563 = vmatprep.subr.bf16.mxu0 0
    %3564 = vmatpush1.bf16.msra.mxu0 0
    %3565 = vmatprep.subr.bf16.mxu0 0
    %3566 = vmatpush1.bf16.msra.mxu0 0
    %3567 = vmatprep.subr.bf16.mxu0 0
    %3568 = vmatpush1.bf16.msra.mxu0 0
    %3569 = vmatprep.subr.bf16.mxu0 0
    %3570 = vmatpush1.bf16.msra.mxu0 0
    %3571 = vmatprep.subr.bf16.mxu0 0
    %3572 = vmatpush1.bf16.msra.mxu0 0
    %3573 = vmatprep.subr.bf16.mxu0 0
    %3574 = vmatpush1.bf16.msra.mxu0 0
    %3575 = vmatprep.subr.bf16.mxu0 0
    %3576 = vmatpush1.bf16.msra.mxu0 0
    %3577 = vmatprep.subr.bf16.mxu0 0
    %3578 = vmatpush1.bf16.msra.mxu0 0
    %3579 = vmatprep.subr.bf16.mxu0 0
    %3580 = vmatpush1.bf16.msra.mxu0 0
    %3581 = vmatprep.subr.bf16.mxu0 0
    %3582 = vmatpush1.bf16.msra.mxu0 0
    %3583 = vmatprep.subr.bf16.mxu0 0
    %3584 = vmatpush1.bf16.msra.mxu0 0
    %3585 = vmatprep.subr.bf16.mxu0 0
    %3586 = vmatpush1.bf16.msra.mxu0 0
    %3587 = vmatprep.subr.bf16.mxu0 0
    %3588 = vmatpush1.bf16.msra.mxu0 0
    %3589 = vmatprep.mubr.bf16.mxu0 0
    %3590 = vmatmul.mubr.bf16.gmra.mrb[0].mxu0 %v3540
    %v3591 = vpop.f32.mrb[0].mxu0
    %v3592 = vadd.f32 0.0, %v3591
    %v3593 = vpop.f32.mrb[0].mxu0
    %v3594 = vpop.f32.mrb[0].mxu0
    %v3595 = vadd.f32 0.0, %v3594
    %v3596 = vpop.f32.mrb[0].mxu0
    %3597 = vmatprep.mubr.bf16.mxu0 0
    %3598 = vmatmul.mubr.bf16.gmra.mrb[0].mxu0 %v3543
    %v3599 = vpop.f32.mrb[0].mxu0
    %v3600 = vadd.f32 0.0, %v3599
    %v3601 = vpop.f32.mrb[0].mxu0
    %v3602 = vpop.f32.mrb[0].mxu0
    %v3603 = vadd.f32 0.0, %v3602
    %v3604 = vpop.f32.mrb[0].mxu0
    %3605 = vmatprep.mubr.bf16.mxu0 0
    %3606 = vmatmul.mubr.bf16.gmra.mrb[0].mxu0 %v3546
    %v3607 = vpop.f32.mrb[0].mxu0
    %v3608 = vadd.f32 0.0, %v3607
    %v3609 = vpop.f32.mrb[0].mxu0
    %v3610 = vpop.f32.mrb[0].mxu0
    %v3611 = vadd.f32 0.0, %v3610
    %v3612 = vpop.f32.mrb[0].mxu0
    %3613 = vmatprep.mubr.bf16.mxu0 0
    %3614 = vmatmul.mubr.bf16.gmra.mrb[0].mxu0 %v3549
    %v3615 = vpop.f32.mrb[0].mxu0
    %v3616 = vadd.f32 0.0, %v3615
    %v3617 = vpop.f32.mrb[0].mxu0
    %v3618 = vpop.f32.mrb[0].mxu0
    %v3619 = vadd.f32 0.0, %v3618
    %v3620 = vpop.f32.mrb[0].mxu0
    %3621 = vmatprep.mubr.bf16.mxu0 0
    %3622 = vmatmul.mubr.bf16.gmra.mrb[0].mxu0 %v3552
    %v3623 = vpop.f32.mrb[0].mxu0
    %v3624 = vadd.f32 0.0, %v3623
    %v3625 = vpop.f32.mrb[0].mxu0
    %v3626 = vpop.f32.mrb[0].mxu0
    %v3627 = vadd.f32 0.0, %v3626
    %v3628 = vpop.f32.mrb[0].mxu0
    %3629 = vmatprep.mubr.bf16.mxu0 0
    %3630 = vmatmul.mubr.bf16.gmra.mrb[0].mxu0 %v3555
    %v3631 = vpop.f32.mrb[0].mxu0
    %v3632 = vadd.f32 0.0, %v3631
    %v3633 = vpop.f32.mrb[0].mxu0
    %v3634 = vpop.f32.mrb[0].mxu0
    %v3635 = vadd.f32 0.0, %v3634
    %v3636 = vpop.f32.mrb[0].mxu0
    %3637 = vdwg.mxu0
    %3638 = vmatprep.subr.bf16.mxu0 0
    %3639 = vmatpush1.bf16.msra.mxu0 %v257
    %3640 = vmatprep.subr.bf16.mxu0 0
    %3641 = vmatpush1.bf16.msra.mxu0 0
    %3642 = vmatprep.subr.bf16.mxu0 0
    %3643 = vmatpush1.bf16.msra.mxu0 0
    %3644 = vmatprep.subr.bf16.mxu0 0
    %3645 = vmatpush1.bf16.msra.mxu0 0
    %3646 = vmatprep.subr.bf16.mxu0 0
    %3647 = vmatpush1.bf16.msra.mxu0 0
    %3648 = vmatprep.subr.bf16.mxu0 0
    %3649 = vmatpush1.bf16.msra.mxu0 0
    %3650 = vmatprep.subr.bf16.mxu0 0
    %3651 = vmatpush1.bf16.msra.mxu0 0
    %3652 = vmatprep.subr.bf16.mxu0 0
    %3653 = vmatpush1.bf16.msra.mxu0 0
    %3654 = vmatprep.subr.bf16.mxu0 0
    %3655 = vmatpush1.bf16.msra.mxu0 0
    %3656 = vmatprep.subr.bf16.mxu0 0
    %3657 = vmatpush1.bf16.msra.mxu0 0
    %3658 = vmatprep.subr.bf16.mxu0 0
    %3659 = vmatpush1.bf16.msra.mxu0 0
    %3660 = vmatprep.subr.bf16.mxu0 0
    %3661 = vmatpush1.bf16.msra.mxu0 0
    %3662 = vmatprep.subr.bf16.mxu0 0
    %3663 = vmatpush1.bf16.msra.mxu0 0
    %3664 = vmatprep.subr.bf16.mxu0 0
    %3665 = vmatpush1.bf16.msra.mxu0 0
    %3666 = vmatprep.subr.bf16.mxu0 0
    %3667 = vmatpush1.bf16.msra.mxu0 0
    %3668 = vmatprep.subr.bf16.mxu0 0
    %3669 = vmatpush1.bf16.msra.mxu0 0
    %3670 = vmatprep.mubr.bf16.mxu0 0
    %3671 = vmatmul.mubr.bf16.gmra.mrb[0].mxu0 %v3540
    %v3672 = vpop.f32.mrb[0].mxu0
    %v3673 = vadd.f32 %v3592, %v3672
    %v3674 = vpop.f32.mrb[0].mxu0
    %v3675 = vpop.f32.mrb[0].mxu0
    %v3676 = vadd.f32 %v3595, %v3675
    %v3677 = vpop.f32.mrb[0].mxu0
    %3678 = vmatprep.mubr.bf16.mxu0 0
    %3679 = vmatmul.mubr.bf16.gmra.mrb[0].mxu0 %v3543
    %v3680 = vpop.f32.mrb[0].mxu0
    %v3681 = vadd.f32 %v3600, %v3680
    %v3682 = vpop.f32.mrb[0].mxu0
    %v3683 = vpop.f32.mrb[0].mxu0
    %v3684 = vadd.f32 %v3603, %v3683
    %v3685 = vpop.f32.mrb[0].mxu0
    %3686 = vmatprep.mubr.bf16.mxu0 0
    %3687 = vmatmul.mubr.bf16.gmra.mrb[0].mxu0 %v3546
    %v3688 = vpop.f32.mrb[0].mxu0
    %v3689 = vadd.f32 %v3608, %v3688
    %v3690 = vpop.f32.mrb[0].mxu0
    %v3691 = vpop.f32.mrb[0].mxu0
    %v3692 = vadd.f32 %v3611, %v3691
    %v3693 = vpop.f32.mrb[0].mxu0
    %3694 = vmatprep.mubr.bf16.mxu0 0
    %3695 = vmatmul.mubr.bf16.gmra.mrb[0].mxu0 %v3549
    %v3696 = vpop.f32.mrb[0].mxu0
    %v3697 = vadd.f32 %v3616, %v3696
    %v3698 = vpop.f32.mrb[0].mxu0
    %v3699 = vpop.f32.mrb[0].mxu0
    %v3700 = vadd.f32 %v3619, %v3699
    %v3701 = vpop.f32.mrb[0].mxu0
    %3702 = vmatprep.mubr.bf16.mxu0 0
    %3703 = vmatmul.mubr.bf16.gmra.mrb[0].mxu0 %v3552
    %v3704 = vpop.f32.mrb[0].mxu0
    %v3705 = vadd.f32 %v3624, %v3704
    %v3706 = vpop.f32.mrb[0].mxu0
    %v3707 = vpop.f32.mrb[0].mxu0
    %v3708 = vadd.f32 %v3627, %v3707
    %v3709 = vpop.f32.mrb[0].mxu0
    %3710 = vmatprep.mubr.bf16.mxu0 0
    %3711 = vmatmul.mubr.bf16.gmra.mrb[0].mxu0 %v3555
    %v3712 = vpop.f32.mrb[0].mxu0
    %v3713 = vadd.f32 %v3632, %v3712
    %v3714 = vpop.f32.mrb[0].mxu0
    %v3715 = vpop.f32.mrb[0].mxu0
    %v3716 = vadd.f32 %v3635, %v3715
    %v3717 = vpop.f32.mrb[0].mxu0
    %3718 = vdwg.mxu0
    %v3720 = vsel %vm153, %v3533, 0
    %v3723 = vsel %vm153, %v3534, 0
    %v3726 = vsel %vm153, %v3535, 0
    %v3729 = vsel %vm153, %v3536, 0
    %v3732 = vsel %vm153, %v3537, 0
    %v3735 = vsel %vm153, %v3538, 0
    %3737 = vmatprep.subr.bf16.mxu0 0
    %3738 = vmatpush1.bf16.msra.mxu0 %v257
    %3739 = vmatprep.subr.bf16.mxu0 0
    %3740 = vmatpush1.bf16.msra.mxu0 0
    %3741 = vmatprep.subr.bf16.mxu0 0
    %3742 = vmatpush1.bf16.msra.mxu0 0
    %3743 = vmatprep.subr.bf16.mxu0 0
    %3744 = vmatpush1.bf16.msra.mxu0 0
    %3745 = vmatprep.subr.bf16.mxu0 0
    %3746 = vmatpush1.bf16.msra.mxu0 0
    %3747 = vmatprep.subr.bf16.mxu0 0
    %3748 = vmatpush1.bf16.msra.mxu0 0
    %3749 = vmatprep.subr.bf16.mxu0 0
    %3750 = vmatpush1.bf16.msra.mxu0 0
    %3751 = vmatprep.subr.bf16.mxu0 0
    %3752 = vmatpush1.bf16.msra.mxu0 0
    %3753 = vmatprep.subr.bf16.mxu0 0
    %3754 = vmatpush1.bf16.msra.mxu0 0
    %3755 = vmatprep.subr.bf16.mxu0 0
    %3756 = vmatpush1.bf16.msra.mxu0 0
    %3757 = vmatprep.subr.bf16.mxu0 0
    %3758 = vmatpush1.bf16.msra.mxu0 0
    %3759 = vmatprep.subr.bf16.mxu0 0
    %3760 = vmatpush1.bf16.msra.mxu0 0
    %3761 = vmatprep.subr.bf16.mxu0 0
    %3762 = vmatpush1.bf16.msra.mxu0 0
    %3763 = vmatprep.subr.bf16.mxu0 0
    %3764 = vmatpush1.bf16.msra.mxu0 0
    %3765 = vmatprep.subr.bf16.mxu0 0
    %3766 = vmatpush1.bf16.msra.mxu0 0
    %3767 = vmatprep.subr.bf16.mxu0 0
    %3768 = vmatpush1.bf16.msra.mxu0 0
    %3769 = vmatprep.mubr.bf16.mxu0 0
    %3770 = vmatmul.mubr.bf16.gmra.mrb[0].mxu0 %v3720
    %v3771 = vpop.f32.mrb[0].mxu0
    %v3772 = vadd.f32 0.0, %v3771
    %v3773 = vpop.f32.mrb[0].mxu0
    %v3774 = vpop.f32.mrb[0].mxu0
    %v3775 = vadd.f32 0.0, %v3774
    %v3776 = vpop.f32.mrb[0].mxu0
    %3777 = vmatprep.mubr.bf16.mxu0 0
    %3778 = vmatmul.mubr.bf16.gmra.mrb[0].mxu0 %v3723
    %v3779 = vpop.f32.mrb[0].mxu0
    %v3780 = vadd.f32 0.0, %v3779
    %v3781 = vpop.f32.mrb[0].mxu0
    %v3782 = vpop.f32.mrb[0].mxu0
    %v3783 = vadd.f32 0.0, %v3782
    %v3784 = vpop.f32.mrb[0].mxu0
    %3785 = vmatprep.mubr.bf16.mxu0 0
    %3786 = vmatmul.mubr.bf16.gmra.mrb[0].mxu0 %v3726
    %v3787 = vpop.f32.mrb[0].mxu0
    %v3788 = vadd.f32 0.0, %v3787
    %v3789 = vpop.f32.mrb[0].mxu0
    %v3790 = vpop.f32.mrb[0].mxu0
    %v3791 = vadd.f32 0.0, %v3790
    %v3792 = vpop.f32.mrb[0].mxu0
    %3793 = vmatprep.mubr.bf16.mxu0 0
    %3794 = vmatmul.mubr.bf16.gmra.mrb[0].mxu0 %v3729
    %v3795 = vpop.f32.mrb[0].mxu0
    %v3796 = vadd.f32 0.0, %v3795
    %v3797 = vpop.f32.mrb[0].mxu0
    %v3798 = vpop.f32.mrb[0].mxu0
    %v3799 = vadd.f32 0.0, %v3798
    %v3800 = vpop.f32.mrb[0].mxu0
    %3801 = vmatprep.mubr.bf16.mxu0 0
    %3802 = vmatmul.mubr.bf16.gmra.mrb[0].mxu0 %v3732
    %v3803 = vpop.f32.mrb[0].mxu0
    %v3804 = vadd.f32 0.0, %v3803
    %v3805 = vpop.f32.mrb[0].mxu0
    %v3806 = vpop.f32.mrb[0].mxu0
    %v3807 = vadd.f32 0.0, %v3806
    %v3808 = vpop.f32.mrb[0].mxu0
    %3809 = vmatprep.mubr.bf16.mxu0 0
    %3810 = vmatmul.mubr.bf16.gmra.mrb[0].mxu0 %v3735
    %v3811 = vpop.f32.mrb[0].mxu0
    %v3812 = vadd.f32 0.0, %v3811
    %v3813 = vpop.f32.mrb[0].mxu0
    %v3814 = vpop.f32.mrb[0].mxu0
    %v3815 = vadd.f32 0.0, %v3814
    %v3816 = vpop.f32.mrb[0].mxu0
    %3817 = vdwg.mxu0
    %v3818 = vadd.f32 %v3673, %v3772
    %v3819 = vadd.f32 %v3676, %v3775
    %v3820 = vadd.f32 %v3681, %v3780
    %v3821 = vadd.f32 %v3684, %v3783
    %v3822 = vadd.f32 %v3689, %v3788
    %v3823 = vadd.f32 %v3692, %v3791
    %v3824 = vadd.f32 %v3697, %v3796
    %v3825 = vadd.f32 %v3700, %v3799
    %v3826 = vadd.f32 %v3705, %v3804
    %v3827 = vadd.f32 %v3708, %v3807
    %v3828 = vadd.f32 %v3713, %v3812
    %v3829 = vadd.f32 %v3716, %v3815
    %v3830 = vpack.c.bf16 %v3819, %v3818
    %v3831 = vpack.c.bf16 %v3821, %v3820
    %v3832 = vpack.c.bf16 %v3823, %v3822
    %v3833 = vpack.c.bf16 %v3825, %v3824
    %v3834 = vpack.c.bf16 %v3827, %v3826
    %v3835 = vpack.c.bf16 %v3829, %v3828
    %v3836 = vunpack.c.l.bf16 %v3830
    %v3837 = vunpack.c.h.bf16 %v3830
    %v3838 = vunpack.c.l.bf16 %v3831
    %v3839 = vunpack.c.h.bf16 %v3831
    %v3840 = vunpack.c.l.bf16 %v3832
    %v3841 = vunpack.c.h.bf16 %v3832
    %v3842 = vunpack.c.l.bf16 %v3833
    %v3843 = vunpack.c.h.bf16 %v3833
    %v3844 = vunpack.c.l.bf16 %v3834
    %v3845 = vunpack.c.h.bf16 %v3834
    %v3846 = vunpack.c.l.bf16 %v3835
    %v3847 = vunpack.c.h.bf16 %v3835
    %v3848 = vsub.f32 %v3818, %v3836
    %v3849 = vsub.f32 %v3819, %v3837
    %v3850 = vsub.f32 %v3820, %v3838
    %v3851 = vsub.f32 %v3821, %v3839
    %v3852 = vsub.f32 %v3822, %v3840
    %v3853 = vsub.f32 %v3823, %v3841
    %v3854 = vsub.f32 %v3824, %v3842
    %v3855 = vsub.f32 %v3825, %v3843
    %v3856 = vsub.f32 %v3826, %v3844
    %v3857 = vsub.f32 %v3827, %v3845
    %v3858 = vsub.f32 %v3828, %v3846
    %v3859 = vsub.f32 %v3829, %v3847
    %v3860 = vpack.c.bf16 %v3849, %v3848
    %v3861 = vpack.c.bf16 %v3851, %v3850
    %v3862 = vpack.c.bf16 %v3853, %v3852
    %v3863 = vpack.c.bf16 %v3855, %v3854
    %v3864 = vpack.c.bf16 %v3857, %v3856
    %v3865 = vpack.c.bf16 %v3859, %v3858
    %3866 = vmatprep.subr.bf16.mxu0 0
    %3867 = vmatpush1.bf16.msra.mxu0 %v3830
    %3868 = vmatprep.subr.bf16.mxu0 0
    %3869 = vmatpush1.bf16.msra.mxu0 0
    %3870 = vmatprep.subr.bf16.mxu0 0
    %3871 = vmatpush1.bf16.msra.mxu0 0
    %3872 = vmatprep.subr.bf16.mxu0 0
    %3873 = vmatpush1.bf16.msra.mxu0 0
    %3874 = vmatprep.subr.bf16.mxu0 0
    %3875 = vmatpush1.bf16.msra.mxu0 0
    %3876 = vmatprep.subr.bf16.mxu0 0
    %3877 = vmatpush1.bf16.msra.mxu0 0
    %3878 = vmatprep.subr.bf16.mxu0 0
    %3879 = vmatpush1.bf16.msra.mxu0 0
    %3880 = vmatprep.subr.bf16.mxu0 0
    %3881 = vmatpush1.bf16.msra.mxu0 0
    %3882 = vmatprep.subr.bf16.mxu0 0
    %3883 = vmatpush1.bf16.msra.mxu0 0
    %3884 = vmatprep.subr.bf16.mxu0 0
    %3885 = vmatpush1.bf16.msra.mxu0 0
    %3886 = vmatprep.subr.bf16.mxu0 0
    %3887 = vmatpush1.bf16.msra.mxu0 0
    %3888 = vmatprep.subr.bf16.mxu0 0
    %3889 = vmatpush1.bf16.msra.mxu0 0
    %3890 = vmatprep.subr.bf16.mxu0 0
    %3891 = vmatpush1.bf16.msra.mxu0 0
    %3892 = vmatprep.subr.bf16.mxu0 0
    %3893 = vmatpush1.bf16.msra.mxu0 0
    %3894 = vmatprep.subr.bf16.mxu0 0
    %3895 = vmatpush1.bf16.msra.mxu0 0
    %3896 = vmatprep.subr.bf16.mxu0 0
    %3897 = vmatpush1.bf16.msra.mxu0 0
    %3898 = vmatprep.mubr.bf16.mxu0 0
    %3899 = vmatmul.mubr.bf16.gmra.mrb[0].mxu0 %v493
    %v3900 = vpop.f32.mrb[0].mxu0
    %v3901 = vadd.f32 0.0, %v3900
    %v3902 = vpop.f32.mrb[0].mxu0
    %v3903 = vpop.f32.mrb[0].mxu0
    %v3904 = vadd.f32 0.0, %v3903
    %v3905 = vpop.f32.mrb[0].mxu0
    %3906 = vdwg.mxu0
    %3907 = vmatprep.subr.bf16.mxu0 0
    %3908 = vmatpush1.bf16.msra.mxu0 %v3830
    %3909 = vmatprep.subr.bf16.mxu0 0
    %3910 = vmatpush1.bf16.msra.mxu0 0
    %3911 = vmatprep.subr.bf16.mxu0 0
    %3912 = vmatpush1.bf16.msra.mxu0 0
    %3913 = vmatprep.subr.bf16.mxu0 0
    %3914 = vmatpush1.bf16.msra.mxu0 0
    %3915 = vmatprep.subr.bf16.mxu0 0
    %3916 = vmatpush1.bf16.msra.mxu0 0
    %3917 = vmatprep.subr.bf16.mxu0 0
    %3918 = vmatpush1.bf16.msra.mxu0 0
    %3919 = vmatprep.subr.bf16.mxu0 0
    %3920 = vmatpush1.bf16.msra.mxu0 0
    %3921 = vmatprep.subr.bf16.mxu0 0
    %3922 = vmatpush1.bf16.msra.mxu0 0
    %3923 = vmatprep.subr.bf16.mxu0 0
    %3924 = vmatpush1.bf16.msra.mxu0 0
    %3925 = vmatprep.subr.bf16.mxu0 0
    %3926 = vmatpush1.bf16.msra.mxu0 0
    %3927 = vmatprep.subr.bf16.mxu0 0
    %3928 = vmatpush1.bf16.msra.mxu0 0
    %3929 = vmatprep.subr.bf16.mxu0 0
    %3930 = vmatpush1.bf16.msra.mxu0 0
    %3931 = vmatprep.subr.bf16.mxu0 0
    %3932 = vmatpush1.bf16.msra.mxu0 0
    %3933 = vmatprep.subr.bf16.mxu0 0
    %3934 = vmatpush1.bf16.msra.mxu0 0
    %3935 = vmatprep.subr.bf16.mxu0 0
    %3936 = vmatpush1.bf16.msra.mxu0 0
    %3937 = vmatprep.subr.bf16.mxu0 0
    %3938 = vmatpush1.bf16.msra.mxu0 0
    %3939 = vmatprep.mubr.bf16.mxu0 0
    %3940 = vmatmul.mubr.bf16.gmra.mrb[0].mxu0 %v542
    %v3941 = vpop.f32.mrb[0].mxu0
    %v3942 = vadd.f32 %v3901, %v3941
    %v3943 = vpop.f32.mrb[0].mxu0
    %v3944 = vpop.f32.mrb[0].mxu0
    %v3945 = vadd.f32 %v3904, %v3944
    %v3946 = vpop.f32.mrb[0].mxu0
    %3947 = vdwg.mxu0
    %3948 = vmatprep.subr.bf16.mxu0 0
    %3949 = vmatpush1.bf16.msra.mxu0 %v3860
    %3950 = vmatprep.subr.bf16.mxu0 0
    %3951 = vmatpush1.bf16.msra.mxu0 0
    %3952 = vmatprep.subr.bf16.mxu0 0
    %3953 = vmatpush1.bf16.msra.mxu0 0
    %3954 = vmatprep.subr.bf16.mxu0 0
    %3955 = vmatpush1.bf16.msra.mxu0 0
    %3956 = vmatprep.subr.bf16.mxu0 0
    %3957 = vmatpush1.bf16.msra.mxu0 0
    %3958 = vmatprep.subr.bf16.mxu0 0
    %3959 = vmatpush1.bf16.msra.mxu0 0
    %3960 = vmatprep.subr.bf16.mxu0 0
    %3961 = vmatpush1.bf16.msra.mxu0 0
    %3962 = vmatprep.subr.bf16.mxu0 0
    %3963 = vmatpush1.bf16.msra.mxu0 0
    %3964 = vmatprep.subr.bf16.mxu0 0
    %3965 = vmatpush1.bf16.msra.mxu0 0
    %3966 = vmatprep.subr.bf16.mxu0 0
    %3967 = vmatpush1.bf16.msra.mxu0 0
    %3968 = vmatprep.subr.bf16.mxu0 0
    %3969 = vmatpush1.bf16.msra.mxu0 0
    %3970 = vmatprep.subr.bf16.mxu0 0
    %3971 = vmatpush1.bf16.msra.mxu0 0
    %3972 = vmatprep.subr.bf16.mxu0 0
    %3973 = vmatpush1.bf16.msra.mxu0 0
    %3974 = vmatprep.subr.bf16.mxu0 0
    %3975 = vmatpush1.bf16.msra.mxu0 0
    %3976 = vmatprep.subr.bf16.mxu0 0
    %3977 = vmatpush1.bf16.msra.mxu0 0
    %3978 = vmatprep.subr.bf16.mxu0 0
    %3979 = vmatpush1.bf16.msra.mxu0 0
    %3980 = vmatprep.mubr.bf16.mxu0 0
    %3981 = vmatmul.mubr.bf16.gmra.mrb[0].mxu0 %v542
    %v3982 = vpop.f32.mrb[0].mxu0
    %v3983 = vadd.f32 0.0, %v3982
    %v3984 = vpop.f32.mrb[0].mxu0
    %v3985 = vpop.f32.mrb[0].mxu0
    %v3986 = vadd.f32 0.0, %v3985
    %v3987 = vpop.f32.mrb[0].mxu0
    %3988 = vdwg.mxu0
    %v3989 = vadd.f32 %v3942, %v3983
    %v3990 = vadd.f32 %v3945, %v3986
    %3991 = vmatprep.subr.bf16.mxu0 0
    %3992 = vmatpush1.bf16.msra.mxu0 %v3831
    %3993 = vmatprep.subr.bf16.mxu0 0
    %3994 = vmatpush1.bf16.msra.mxu0 0
    %3995 = vmatprep.subr.bf16.mxu0 0
    %3996 = vmatpush1.bf16.msra.mxu0 0
    %3997 = vmatprep.subr.bf16.mxu0 0
    %3998 = vmatpush1.bf16.msra.mxu0 0
    %3999 = vmatprep.subr.bf16.mxu0 0
    %4000 = vmatpush1.bf16.msra.mxu0 0
    %4001 = vmatprep.subr.bf16.mxu0 0
    %4002 = vmatpush1.bf16.msra.mxu0 0
    %4003 = vmatprep.subr.bf16.mxu0 0
    %4004 = vmatpush1.bf16.msra.mxu0 0
    %4005 = vmatprep.subr.bf16.mxu0 0
    %4006 = vmatpush1.bf16.msra.mxu0 0
    %4007 = vmatprep.subr.bf16.mxu0 0
    %4008 = vmatpush1.bf16.msra.mxu0 0
    %4009 = vmatprep.subr.bf16.mxu0 0
    %4010 = vmatpush1.bf16.msra.mxu0 0
    %4011 = vmatprep.subr.bf16.mxu0 0
    %4012 = vmatpush1.bf16.msra.mxu0 0
    %4013 = vmatprep.subr.bf16.mxu0 0
    %4014 = vmatpush1.bf16.msra.mxu0 0
    %4015 = vmatprep.subr.bf16.mxu0 0
    %4016 = vmatpush1.bf16.msra.mxu0 0
    %4017 = vmatprep.subr.bf16.mxu0 0
    %4018 = vmatpush1.bf16.msra.mxu0 0
    %4019 = vmatprep.subr.bf16.mxu0 0
    %4020 = vmatpush1.bf16.msra.mxu0 0
    %4021 = vmatprep.subr.bf16.mxu0 0
    %4022 = vmatpush1.bf16.msra.mxu0 0
    %4023 = vmatprep.mubr.bf16.mxu0 0
    %4024 = vmatmul.mubr.bf16.gmra.mrb[0].mxu0 %v493
    %v4025 = vpop.f32.mrb[0].mxu0
    %v4026 = vadd.f32 0.0, %v4025
    %v4027 = vpop.f32.mrb[0].mxu0
    %v4028 = vpop.f32.mrb[0].mxu0
    %v4029 = vadd.f32 0.0, %v4028
    %v4030 = vpop.f32.mrb[0].mxu0
    %4031 = vdwg.mxu0
    %4032 = vmatprep.subr.bf16.mxu0 0
    %4033 = vmatpush1.bf16.msra.mxu0 %v3831
    %4034 = vmatprep.subr.bf16.mxu0 0
    %4035 = vmatpush1.bf16.msra.mxu0 0
    %4036 = vmatprep.subr.bf16.mxu0 0
    %4037 = vmatpush1.bf16.msra.mxu0 0
    %4038 = vmatprep.subr.bf16.mxu0 0
    %4039 = vmatpush1.bf16.msra.mxu0 0
    %4040 = vmatprep.subr.bf16.mxu0 0
    %4041 = vmatpush1.bf16.msra.mxu0 0
    %4042 = vmatprep.subr.bf16.mxu0 0
    %4043 = vmatpush1.bf16.msra.mxu0 0
    %4044 = vmatprep.subr.bf16.mxu0 0
    %4045 = vmatpush1.bf16.msra.mxu0 0
    %4046 = vmatprep.subr.bf16.mxu0 0
    %4047 = vmatpush1.bf16.msra.mxu0 0
    %4048 = vmatprep.subr.bf16.mxu0 0
    %4049 = vmatpush1.bf16.msra.mxu0 0
    %4050 = vmatprep.subr.bf16.mxu0 0
    %4051 = vmatpush1.bf16.msra.mxu0 0
    %4052 = vmatprep.subr.bf16.mxu0 0
    %4053 = vmatpush1.bf16.msra.mxu0 0
    %4054 = vmatprep.subr.bf16.mxu0 0
    %4055 = vmatpush1.bf16.msra.mxu0 0
    %4056 = vmatprep.subr.bf16.mxu0 0
    %4057 = vmatpush1.bf16.msra.mxu0 0
    %4058 = vmatprep.subr.bf16.mxu0 0
    %4059 = vmatpush1.bf16.msra.mxu0 0
    %4060 = vmatprep.subr.bf16.mxu0 0
    %4061 = vmatpush1.bf16.msra.mxu0 0
    %4062 = vmatprep.subr.bf16.mxu0 0
    %4063 = vmatpush1.bf16.msra.mxu0 0
    %4064 = vmatprep.mubr.bf16.mxu0 0
    %4065 = vmatmul.mubr.bf16.gmra.mrb[0].mxu0 %v542
    %v4066 = vpop.f32.mrb[0].mxu0
    %v4067 = vadd.f32 %v4026, %v4066
    %v4068 = vpop.f32.mrb[0].mxu0
    %v4069 = vpop.f32.mrb[0].mxu0
    %v4070 = vadd.f32 %v4029, %v4069
    %v4071 = vpop.f32.mrb[0].mxu0
    %4072 = vdwg.mxu0
    %4073 = vmatprep.subr.bf16.mxu0 0
    %4074 = vmatpush1.bf16.msra.mxu0 %v3861
    %4075 = vmatprep.subr.bf16.mxu0 0
    %4076 = vmatpush1.bf16.msra.mxu0 0
    %4077 = vmatprep.subr.bf16.mxu0 0
    %4078 = vmatpush1.bf16.msra.mxu0 0
    %4079 = vmatprep.subr.bf16.mxu0 0
    %4080 = vmatpush1.bf16.msra.mxu0 0
    %4081 = vmatprep.subr.bf16.mxu0 0
    %4082 = vmatpush1.bf16.msra.mxu0 0
    %4083 = vmatprep.subr.bf16.mxu0 0
    %4084 = vmatpush1.bf16.msra.mxu0 0
    %4085 = vmatprep.subr.bf16.mxu0 0
    %4086 = vmatpush1.bf16.msra.mxu0 0
    %4087 = vmatprep.subr.bf16.mxu0 0
    %4088 = vmatpush1.bf16.msra.mxu0 0
    %4089 = vmatprep.subr.bf16.mxu0 0
    %4090 = vmatpush1.bf16.msra.mxu0 0
    %4091 = vmatprep.subr.bf16.mxu0 0
    %4092 = vmatpush1.bf16.msra.mxu0 0
    %4093 = vmatprep.subr.bf16.mxu0 0
    %4094 = vmatpush1.bf16.msra.mxu0 0
    %4095 = vmatprep.subr.bf16.mxu0 0
    %4096 = vmatpush1.bf16.msra.mxu0 0
    %4097 = vmatprep.subr.bf16.mxu0 0
    %4098 = vmatpush1.bf16.msra.mxu0 0
    %4099 = vmatprep.subr.bf16.mxu0 0
    %4100 = vmatpush1.bf16.msra.mxu0 0
    %4101 = vmatprep.subr.bf16.mxu0 0
    %4102 = vmatpush1.bf16.msra.mxu0 0
    %4103 = vmatprep.subr.bf16.mxu0 0
    %4104 = vmatpush1.bf16.msra.mxu0 0
    %4105 = vmatprep.mubr.bf16.mxu0 0
    %4106 = vmatmul.mubr.bf16.gmra.mrb[0].mxu0 %v542
    %v4107 = vpop.f32.mrb[0].mxu0
    %v4108 = vadd.f32 0.0, %v4107
    %v4109 = vpop.f32.mrb[0].mxu0
    %v4110 = vpop.f32.mrb[0].mxu0
    %v4111 = vadd.f32 0.0, %v4110
    %v4112 = vpop.f32.mrb[0].mxu0
    %4113 = vdwg.mxu0
    %v4114 = vadd.f32 %v4067, %v4108
    %v4115 = vadd.f32 %v4070, %v4111
    %4116 = vmatprep.subr.bf16.mxu0 0
    %4117 = vmatpush1.bf16.msra.mxu0 %v3832
    %4118 = vmatprep.subr.bf16.mxu0 0
    %4119 = vmatpush1.bf16.msra.mxu0 0
    %4120 = vmatprep.subr.bf16.mxu0 0
    %4121 = vmatpush1.bf16.msra.mxu0 0
    %4122 = vmatprep.subr.bf16.mxu0 0
    %4123 = vmatpush1.bf16.msra.mxu0 0
    %4124 = vmatprep.subr.bf16.mxu0 0
    %4125 = vmatpush1.bf16.msra.mxu0 0
    %4126 = vmatprep.subr.bf16.mxu0 0
    %4127 = vmatpush1.bf16.msra.mxu0 0
    %4128 = vmatprep.subr.bf16.mxu0 0
    %4129 = vmatpush1.bf16.msra.mxu0 0
    %4130 = vmatprep.subr.bf16.mxu0 0
    %4131 = vmatpush1.bf16.msra.mxu0 0
    %4132 = vmatprep.subr.bf16.mxu0 0
    %4133 = vmatpush1.bf16.msra.mxu0 0
    %4134 = vmatprep.subr.bf16.mxu0 0
    %4135 = vmatpush1.bf16.msra.mxu0 0
    %4136 = vmatprep.subr.bf16.mxu0 0
    %4137 = vmatpush1.bf16.msra.mxu0 0
    %4138 = vmatprep.subr.bf16.mxu0 0
    %4139 = vmatpush1.bf16.msra.mxu0 0
    %4140 = vmatprep.subr.bf16.mxu0 0
    %4141 = vmatpush1.bf16.msra.mxu0 0
    %4142 = vmatprep.subr.bf16.mxu0 0
    %4143 = vmatpush1.bf16.msra.mxu0 0
    %4144 = vmatprep.subr.bf16.mxu0 0
    %4145 = vmatpush1.bf16.msra.mxu0 0
    %4146 = vmatprep.subr.bf16.mxu0 0
    %4147 = vmatpush1.bf16.msra.mxu0 0
    %4148 = vmatprep.mubr.bf16.mxu0 0
    %4149 = vmatmul.mubr.bf16.gmra.mrb[0].mxu0 %v493
    %v4150 = vpop.f32.mrb[0].mxu0
    %v4151 = vadd.f32 0.0, %v4150
    %v4152 = vpop.f32.mrb[0].mxu0
    %v4153 = vpop.f32.mrb[0].mxu0
    %v4154 = vadd.f32 0.0, %v4153
    %v4155 = vpop.f32.mrb[0].mxu0
    %4156 = vdwg.mxu0
    %4157 = vmatprep.subr.bf16.mxu0 0
    %4158 = vmatpush1.bf16.msra.mxu0 %v3832
    %4159 = vmatprep.subr.bf16.mxu0 0
    %4160 = vmatpush1.bf16.msra.mxu0 0
    %4161 = vmatprep.subr.bf16.mxu0 0
    %4162 = vmatpush1.bf16.msra.mxu0 0
    %4163 = vmatprep.subr.bf16.mxu0 0
    %4164 = vmatpush1.bf16.msra.mxu0 0
    %4165 = vmatprep.subr.bf16.mxu0 0
    %4166 = vmatpush1.bf16.msra.mxu0 0
    %4167 = vmatprep.subr.bf16.mxu0 0
    %4168 = vmatpush1.bf16.msra.mxu0 0
    %4169 = vmatprep.subr.bf16.mxu0 0
    %4170 = vmatpush1.bf16.msra.mxu0 0
    %4171 = vmatprep.subr.bf16.mxu0 0
    %4172 = vmatpush1.bf16.msra.mxu0 0
    %4173 = vmatprep.subr.bf16.mxu0 0
    %4174 = vmatpush1.bf16.msra.mxu0 0
    %4175 = vmatprep.subr.bf16.mxu0 0
    %4176 = vmatpush1.bf16.msra.mxu0 0
    %4177 = vmatprep.subr.bf16.mxu0 0
    %4178 = vmatpush1.bf16.msra.mxu0 0
    %4179 = vmatprep.subr.bf16.mxu0 0
    %4180 = vmatpush1.bf16.msra.mxu0 0
    %4181 = vmatprep.subr.bf16.mxu0 0
    %4182 = vmatpush1.bf16.msra.mxu0 0
    %4183 = vmatprep.subr.bf16.mxu0 0
    %4184 = vmatpush1.bf16.msra.mxu0 0
    %4185 = vmatprep.subr.bf16.mxu0 0
    %4186 = vmatpush1.bf16.msra.mxu0 0
    %4187 = vmatprep.subr.bf16.mxu0 0
    %4188 = vmatpush1.bf16.msra.mxu0 0
    %4189 = vmatprep.mubr.bf16.mxu0 0
    %4190 = vmatmul.mubr.bf16.gmra.mrb[0].mxu0 %v542
    %v4191 = vpop.f32.mrb[0].mxu0
    %v4192 = vadd.f32 %v4151, %v4191
    %v4193 = vpop.f32.mrb[0].mxu0
    %v4194 = vpop.f32.mrb[0].mxu0
    %v4195 = vadd.f32 %v4154, %v4194
    %v4196 = vpop.f32.mrb[0].mxu0
    %4197 = vdwg.mxu0
    %4198 = vmatprep.subr.bf16.mxu0 0
    %4199 = vmatpush1.bf16.msra.mxu0 %v3862
    %4200 = vmatprep.subr.bf16.mxu0 0
    %4201 = vmatpush1.bf16.msra.mxu0 0
    %4202 = vmatprep.subr.bf16.mxu0 0
    %4203 = vmatpush1.bf16.msra.mxu0 0
    %4204 = vmatprep.subr.bf16.mxu0 0
    %4205 = vmatpush1.bf16.msra.mxu0 0
    %4206 = vmatprep.subr.bf16.mxu0 0
    %4207 = vmatpush1.bf16.msra.mxu0 0
    %4208 = vmatprep.subr.bf16.mxu0 0
    %4209 = vmatpush1.bf16.msra.mxu0 0
    %4210 = vmatprep.subr.bf16.mxu0 0
    %4211 = vmatpush1.bf16.msra.mxu0 0
    %4212 = vmatprep.subr.bf16.mxu0 0
    %4213 = vmatpush1.bf16.msra.mxu0 0
    %4214 = vmatprep.subr.bf16.mxu0 0
    %4215 = vmatpush1.bf16.msra.mxu0 0
    %4216 = vmatprep.subr.bf16.mxu0 0
    %4217 = vmatpush1.bf16.msra.mxu0 0
    %4218 = vmatprep.subr.bf16.mxu0 0
    %4219 = vmatpush1.bf16.msra.mxu0 0
    %4220 = vmatprep.subr.bf16.mxu0 0
    %4221 = vmatpush1.bf16.msra.mxu0 0
    %4222 = vmatprep.subr.bf16.mxu0 0
    %4223 = vmatpush1.bf16.msra.mxu0 0
    %4224 = vmatprep.subr.bf16.mxu0 0
    %4225 = vmatpush1.bf16.msra.mxu0 0
    %4226 = vmatprep.subr.bf16.mxu0 0
    %4227 = vmatpush1.bf16.msra.mxu0 0
    %4228 = vmatprep.subr.bf16.mxu0 0
    %4229 = vmatpush1.bf16.msra.mxu0 0
    %4230 = vmatprep.mubr.bf16.mxu0 0
    %4231 = vmatmul.mubr.bf16.gmra.mrb[0].mxu0 %v542
    %v4232 = vpop.f32.mrb[0].mxu0
    %v4233 = vadd.f32 0.0, %v4232
    %v4234 = vpop.f32.mrb[0].mxu0
    %v4235 = vpop.f32.mrb[0].mxu0
    %v4236 = vadd.f32 0.0, %v4235
    %v4237 = vpop.f32.mrb[0].mxu0
    %4238 = vdwg.mxu0
    %v4239 = vadd.f32 %v4192, %v4233
    %v4240 = vadd.f32 %v4195, %v4236
    %4241 = vmatprep.subr.bf16.mxu0 0
    %4242 = vmatpush1.bf16.msra.mxu0 %v3833
    %4243 = vmatprep.subr.bf16.mxu0 0
    %4244 = vmatpush1.bf16.msra.mxu0 0
    %4245 = vmatprep.subr.bf16.mxu0 0
    %4246 = vmatpush1.bf16.msra.mxu0 0
    %4247 = vmatprep.subr.bf16.mxu0 0
    %4248 = vmatpush1.bf16.msra.mxu0 0
    %4249 = vmatprep.subr.bf16.mxu0 0
    %4250 = vmatpush1.bf16.msra.mxu0 0
    %4251 = vmatprep.subr.bf16.mxu0 0
    %4252 = vmatpush1.bf16.msra.mxu0 0
    %4253 = vmatprep.subr.bf16.mxu0 0
    %4254 = vmatpush1.bf16.msra.mxu0 0
    %4255 = vmatprep.subr.bf16.mxu0 0
    %4256 = vmatpush1.bf16.msra.mxu0 0
    %4257 = vmatprep.subr.bf16.mxu0 0
    %4258 = vmatpush1.bf16.msra.mxu0 0
    %4259 = vmatprep.subr.bf16.mxu0 0
    %4260 = vmatpush1.bf16.msra.mxu0 0
    %4261 = vmatprep.subr.bf16.mxu0 0
    %4262 = vmatpush1.bf16.msra.mxu0 0
    %4263 = vmatprep.subr.bf16.mxu0 0
    %4264 = vmatpush1.bf16.msra.mxu0 0
    %4265 = vmatprep.subr.bf16.mxu0 0
    %4266 = vmatpush1.bf16.msra.mxu0 0
    %4267 = vmatprep.subr.bf16.mxu0 0
    %4268 = vmatpush1.bf16.msra.mxu0 0
    %4269 = vmatprep.subr.bf16.mxu0 0
    %4270 = vmatpush1.bf16.msra.mxu0 0
    %4271 = vmatprep.subr.bf16.mxu0 0
    %4272 = vmatpush1.bf16.msra.mxu0 0
    %4273 = vmatprep.mubr.bf16.mxu0 0
    %4274 = vmatmul.mubr.bf16.gmra.mrb[0].mxu0 %v493
    %v4275 = vpop.f32.mrb[0].mxu0
    %v4276 = vadd.f32 0.0, %v4275
    %v4277 = vpop.f32.mrb[0].mxu0
    %v4278 = vpop.f32.mrb[0].mxu0
    %v4279 = vadd.f32 0.0, %v4278
    %v4280 = vpop.f32.mrb[0].mxu0
    %4281 = vdwg.mxu0
    %4282 = vmatprep.subr.bf16.mxu0 0
    %4283 = vmatpush1.bf16.msra.mxu0 %v3833
    %4284 = vmatprep.subr.bf16.mxu0 0
    %4285 = vmatpush1.bf16.msra.mxu0 0
    %4286 = vmatprep.subr.bf16.mxu0 0
    %4287 = vmatpush1.bf16.msra.mxu0 0
    %4288 = vmatprep.subr.bf16.mxu0 0
    %4289 = vmatpush1.bf16.msra.mxu0 0
    %4290 = vmatprep.subr.bf16.mxu0 0
    %4291 = vmatpush1.bf16.msra.mxu0 0
    %4292 = vmatprep.subr.bf16.mxu0 0
    %4293 = vmatpush1.bf16.msra.mxu0 0
    %4294 = vmatprep.subr.bf16.mxu0 0
    %4295 = vmatpush1.bf16.msra.mxu0 0
    %4296 = vmatprep.subr.bf16.mxu0 0
    %4297 = vmatpush1.bf16.msra.mxu0 0
    %4298 = vmatprep.subr.bf16.mxu0 0
    %4299 = vmatpush1.bf16.msra.mxu0 0
    %4300 = vmatprep.subr.bf16.mxu0 0
    %4301 = vmatpush1.bf16.msra.mxu0 0
    %4302 = vmatprep.subr.bf16.mxu0 0
    %4303 = vmatpush1.bf16.msra.mxu0 0
    %4304 = vmatprep.subr.bf16.mxu0 0
    %4305 = vmatpush1.bf16.msra.mxu0 0
    %4306 = vmatprep.subr.bf16.mxu0 0
    %4307 = vmatpush1.bf16.msra.mxu0 0
    %4308 = vmatprep.subr.bf16.mxu0 0
    %4309 = vmatpush1.bf16.msra.mxu0 0
    %4310 = vmatprep.subr.bf16.mxu0 0
    %4311 = vmatpush1.bf16.msra.mxu0 0
    %4312 = vmatprep.subr.bf16.mxu0 0
    %4313 = vmatpush1.bf16.msra.mxu0 0
    %4314 = vmatprep.mubr.bf16.mxu0 0
    %4315 = vmatmul.mubr.bf16.gmra.mrb[0].mxu0 %v542
    %v4316 = vpop.f32.mrb[0].mxu0
    %v4317 = vadd.f32 %v4276, %v4316
    %v4318 = vpop.f32.mrb[0].mxu0
    %v4319 = vpop.f32.mrb[0].mxu0
    %v4320 = vadd.f32 %v4279, %v4319
    %v4321 = vpop.f32.mrb[0].mxu0
    %4322 = vdwg.mxu0
    %4323 = vmatprep.subr.bf16.mxu0 0
    %4324 = vmatpush1.bf16.msra.mxu0 %v3863
    %4325 = vmatprep.subr.bf16.mxu0 0
    %4326 = vmatpush1.bf16.msra.mxu0 0
    %4327 = vmatprep.subr.bf16.mxu0 0
    %4328 = vmatpush1.bf16.msra.mxu0 0
    %4329 = vmatprep.subr.bf16.mxu0 0
    %4330 = vmatpush1.bf16.msra.mxu0 0
    %4331 = vmatprep.subr.bf16.mxu0 0
    %4332 = vmatpush1.bf16.msra.mxu0 0
    %4333 = vmatprep.subr.bf16.mxu0 0
    %4334 = vmatpush1.bf16.msra.mxu0 0
    %4335 = vmatprep.subr.bf16.mxu0 0
    %4336 = vmatpush1.bf16.msra.mxu0 0
    %4337 = vmatprep.subr.bf16.mxu0 0
    %4338 = vmatpush1.bf16.msra.mxu0 0
    %4339 = vmatprep.subr.bf16.mxu0 0
    %4340 = vmatpush1.bf16.msra.mxu0 0
    %4341 = vmatprep.subr.bf16.mxu0 0
    %4342 = vmatpush1.bf16.msra.mxu0 0
    %4343 = vmatprep.subr.bf16.mxu0 0
    %4344 = vmatpush1.bf16.msra.mxu0 0
    %4345 = vmatprep.subr.bf16.mxu0 0
    %4346 = vmatpush1.bf16.msra.mxu0 0
    %4347 = vmatprep.subr.bf16.mxu0 0
    %4348 = vmatpush1.bf16.msra.mxu0 0
    %4349 = vmatprep.subr.bf16.mxu0 0
    %4350 = vmatpush1.bf16.msra.mxu0 0
    %4351 = vmatprep.subr.bf16.mxu0 0
    %4352 = vmatpush1.bf16.msra.mxu0 0
    %4353 = vmatprep.subr.bf16.mxu0 0
    %4354 = vmatpush1.bf16.msra.mxu0 0
    %4355 = vmatprep.mubr.bf16.mxu0 0
    %4356 = vmatmul.mubr.bf16.gmra.mrb[0].mxu0 %v542
    %v4357 = vpop.f32.mrb[0].mxu0
    %v4358 = vadd.f32 0.0, %v4357
    %v4359 = vpop.f32.mrb[0].mxu0
    %v4360 = vpop.f32.mrb[0].mxu0
    %v4361 = vadd.f32 0.0, %v4360
    %v4362 = vpop.f32.mrb[0].mxu0
    %4363 = vdwg.mxu0
    %v4364 = vadd.f32 %v4317, %v4358
    %v4365 = vadd.f32 %v4320, %v4361
    %4366 = vmatprep.subr.bf16.mxu0 0
    %4367 = vmatpush1.bf16.msra.mxu0 %v3834
    %4368 = vmatprep.subr.bf16.mxu0 0
    %4369 = vmatpush1.bf16.msra.mxu0 0
    %4370 = vmatprep.subr.bf16.mxu0 0
    %4371 = vmatpush1.bf16.msra.mxu0 0
    %4372 = vmatprep.subr.bf16.mxu0 0
    %4373 = vmatpush1.bf16.msra.mxu0 0
    %4374 = vmatprep.subr.bf16.mxu0 0
    %4375 = vmatpush1.bf16.msra.mxu0 0
    %4376 = vmatprep.subr.bf16.mxu0 0
    %4377 = vmatpush1.bf16.msra.mxu0 0
    %4378 = vmatprep.subr.bf16.mxu0 0
    %4379 = vmatpush1.bf16.msra.mxu0 0
    %4380 = vmatprep.subr.bf16.mxu0 0
    %4381 = vmatpush1.bf16.msra.mxu0 0
    %4382 = vmatprep.subr.bf16.mxu0 0
    %4383 = vmatpush1.bf16.msra.mxu0 0
    %4384 = vmatprep.subr.bf16.mxu0 0
    %4385 = vmatpush1.bf16.msra.mxu0 0
    %4386 = vmatprep.subr.bf16.mxu0 0
    %4387 = vmatpush1.bf16.msra.mxu0 0
    %4388 = vmatprep.subr.bf16.mxu0 0
    %4389 = vmatpush1.bf16.msra.mxu0 0
    %4390 = vmatprep.subr.bf16.mxu0 0
    %4391 = vmatpush1.bf16.msra.mxu0 0
    %4392 = vmatprep.subr.bf16.mxu0 0
    %4393 = vmatpush1.bf16.msra.mxu0 0
    %4394 = vmatprep.subr.bf16.mxu0 0
    %4395 = vmatpush1.bf16.msra.mxu0 0
    %4396 = vmatprep.subr.bf16.mxu0 0
    %4397 = vmatpush1.bf16.msra.mxu0 0
    %4398 = vmatprep.mubr.bf16.mxu0 0
    %4399 = vmatmul.mubr.bf16.gmra.mrb[0].mxu0 %v493
    %v4400 = vpop.f32.mrb[0].mxu0
    %v4401 = vadd.f32 0.0, %v4400
    %v4402 = vpop.f32.mrb[0].mxu0
    %v4403 = vpop.f32.mrb[0].mxu0
    %v4404 = vadd.f32 0.0, %v4403
    %v4405 = vpop.f32.mrb[0].mxu0
    %4406 = vdwg.mxu0
    %4407 = vmatprep.subr.bf16.mxu0 0
    %4408 = vmatpush1.bf16.msra.mxu0 %v3834
    %4409 = vmatprep.subr.bf16.mxu0 0
    %4410 = vmatpush1.bf16.msra.mxu0 0
    %4411 = vmatprep.subr.bf16.mxu0 0
    %4412 = vmatpush1.bf16.msra.mxu0 0
    %4413 = vmatprep.subr.bf16.mxu0 0
    %4414 = vmatpush1.bf16.msra.mxu0 0
    %4415 = vmatprep.subr.bf16.mxu0 0
    %4416 = vmatpush1.bf16.msra.mxu0 0
    %4417 = vmatprep.subr.bf16.mxu0 0
    %4418 = vmatpush1.bf16.msra.mxu0 0
    %4419 = vmatprep.subr.bf16.mxu0 0
    %4420 = vmatpush1.bf16.msra.mxu0 0
    %4421 = vmatprep.subr.bf16.mxu0 0
    %4422 = vmatpush1.bf16.msra.mxu0 0
    %4423 = vmatprep.subr.bf16.mxu0 0
    %4424 = vmatpush1.bf16.msra.mxu0 0
    %4425 = vmatprep.subr.bf16.mxu0 0
    %4426 = vmatpush1.bf16.msra.mxu0 0
    %4427 = vmatprep.subr.bf16.mxu0 0
    %4428 = vmatpush1.bf16.msra.mxu0 0
    %4429 = vmatprep.subr.bf16.mxu0 0
    %4430 = vmatpush1.bf16.msra.mxu0 0
    %4431 = vmatprep.subr.bf16.mxu0 0
    %4432 = vmatpush1.bf16.msra.mxu0 0
    %4433 = vmatprep.subr.bf16.mxu0 0
    %4434 = vmatpush1.bf16.msra.mxu0 0
    %4435 = vmatprep.subr.bf16.mxu0 0
    %4436 = vmatpush1.bf16.msra.mxu0 0
    %4437 = vmatprep.subr.bf16.mxu0 0
    %4438 = vmatpush1.bf16.msra.mxu0 0
    %4439 = vmatprep.mubr.bf16.mxu0 0
    %4440 = vmatmul.mubr.bf16.gmra.mrb[0].mxu0 %v542
    %v4441 = vpop.f32.mrb[0].mxu0
    %v4442 = vadd.f32 %v4401, %v4441
    %v4443 = vpop.f32.mrb[0].mxu0
    %v4444 = vpop.f32.mrb[0].mxu0
    %v4445 = vadd.f32 %v4404, %v4444
    %v4446 = vpop.f32.mrb[0].mxu0
    %4447 = vdwg.mxu0
    %4448 = vmatprep.subr.bf16.mxu0 0
    %4449 = vmatpush1.bf16.msra.mxu0 %v3864
    %4450 = vmatprep.subr.bf16.mxu0 0
    %4451 = vmatpush1.bf16.msra.mxu0 0
    %4452 = vmatprep.subr.bf16.mxu0 0
    %4453 = vmatpush1.bf16.msra.mxu0 0
    %4454 = vmatprep.subr.bf16.mxu0 0
    %4455 = vmatpush1.bf16.msra.mxu0 0
    %4456 = vmatprep.subr.bf16.mxu0 0
    %4457 = vmatpush1.bf16.msra.mxu0 0
    %4458 = vmatprep.subr.bf16.mxu0 0
    %4459 = vmatpush1.bf16.msra.mxu0 0
    %4460 = vmatprep.subr.bf16.mxu0 0
    %4461 = vmatpush1.bf16.msra.mxu0 0
    %4462 = vmatprep.subr.bf16.mxu0 0
    %4463 = vmatpush1.bf16.msra.mxu0 0
    %4464 = vmatprep.subr.bf16.mxu0 0
    %4465 = vmatpush1.bf16.msra.mxu0 0
    %4466 = vmatprep.subr.bf16.mxu0 0
    %4467 = vmatpush1.bf16.msra.mxu0 0
    %4468 = vmatprep.subr.bf16.mxu0 0
    %4469 = vmatpush1.bf16.msra.mxu0 0
    %4470 = vmatprep.subr.bf16.mxu0 0
    %4471 = vmatpush1.bf16.msra.mxu0 0
    %4472 = vmatprep.subr.bf16.mxu0 0
    %4473 = vmatpush1.bf16.msra.mxu0 0
    %4474 = vmatprep.subr.bf16.mxu0 0
    %4475 = vmatpush1.bf16.msra.mxu0 0
    %4476 = vmatprep.subr.bf16.mxu0 0
    %4477 = vmatpush1.bf16.msra.mxu0 0
    %4478 = vmatprep.subr.bf16.mxu0 0
    %4479 = vmatpush1.bf16.msra.mxu0 0
    %4480 = vmatprep.mubr.bf16.mxu0 0
    %4481 = vmatmul.mubr.bf16.gmra.mrb[0].mxu0 %v542
    %v4482 = vpop.f32.mrb[0].mxu0
    %v4483 = vadd.f32 0.0, %v4482
    %v4484 = vpop.f32.mrb[0].mxu0
    %v4485 = vpop.f32.mrb[0].mxu0
    %v4486 = vadd.f32 0.0, %v4485
    %v4487 = vpop.f32.mrb[0].mxu0
    %4488 = vdwg.mxu0
    %v4489 = vadd.f32 %v4442, %v4483
    %v4490 = vadd.f32 %v4445, %v4486
    %4491 = vmatprep.subr.bf16.mxu0 0
    %4492 = vmatpush1.bf16.msra.mxu0 %v3835
    %4493 = vmatprep.subr.bf16.mxu0 0
    %4494 = vmatpush1.bf16.msra.mxu0 0
    %4495 = vmatprep.subr.bf16.mxu0 0
    %4496 = vmatpush1.bf16.msra.mxu0 0
    %4497 = vmatprep.subr.bf16.mxu0 0
    %4498 = vmatpush1.bf16.msra.mxu0 0
    %4499 = vmatprep.subr.bf16.mxu0 0
    %4500 = vmatpush1.bf16.msra.mxu0 0
    %4501 = vmatprep.subr.bf16.mxu0 0
    %4502 = vmatpush1.bf16.msra.mxu0 0
    %4503 = vmatprep.subr.bf16.mxu0 0
    %4504 = vmatpush1.bf16.msra.mxu0 0
    %4505 = vmatprep.subr.bf16.mxu0 0
    %4506 = vmatpush1.bf16.msra.mxu0 0
    %4507 = vmatprep.subr.bf16.mxu0 0
    %4508 = vmatpush1.bf16.msra.mxu0 0
    %4509 = vmatprep.subr.bf16.mxu0 0
    %4510 = vmatpush1.bf16.msra.mxu0 0
    %4511 = vmatprep.subr.bf16.mxu0 0
    %4512 = vmatpush1.bf16.msra.mxu0 0
    %4513 = vmatprep.subr.bf16.mxu0 0
    %4514 = vmatpush1.bf16.msra.mxu0 0
    %4515 = vmatprep.subr.bf16.mxu0 0
    %4516 = vmatpush1.bf16.msra.mxu0 0
    %4517 = vmatprep.subr.bf16.mxu0 0
    %4518 = vmatpush1.bf16.msra.mxu0 0
    %4519 = vmatprep.subr.bf16.mxu0 0
    %4520 = vmatpush1.bf16.msra.mxu0 0
    %4521 = vmatprep.subr.bf16.mxu0 0
    %4522 = vmatpush1.bf16.msra.mxu0 0
    %4523 = vmatprep.mubr.bf16.mxu0 0
    %4524 = vmatmul.mubr.bf16.gmra.mrb[0].mxu0 %v493
    %v4525 = vpop.f32.mrb[0].mxu0
    %v4526 = vadd.f32 0.0, %v4525
    %v4527 = vpop.f32.mrb[0].mxu0
    %v4528 = vpop.f32.mrb[0].mxu0
    %v4529 = vadd.f32 0.0, %v4528
    %v4530 = vpop.f32.mrb[0].mxu0
    %4531 = vdwg.mxu0
    %4532 = vmatprep.subr.bf16.mxu0 0
    %4533 = vmatpush1.bf16.msra.mxu0 %v3835
    %4534 = vmatprep.subr.bf16.mxu0 0
    %4535 = vmatpush1.bf16.msra.mxu0 0
    %4536 = vmatprep.subr.bf16.mxu0 0
    %4537 = vmatpush1.bf16.msra.mxu0 0
    %4538 = vmatprep.subr.bf16.mxu0 0
    %4539 = vmatpush1.bf16.msra.mxu0 0
    %4540 = vmatprep.subr.bf16.mxu0 0
    %4541 = vmatpush1.bf16.msra.mxu0 0
    %4542 = vmatprep.subr.bf16.mxu0 0
    %4543 = vmatpush1.bf16.msra.mxu0 0
    %4544 = vmatprep.subr.bf16.mxu0 0
    %4545 = vmatpush1.bf16.msra.mxu0 0
    %4546 = vmatprep.subr.bf16.mxu0 0
    %4547 = vmatpush1.bf16.msra.mxu0 0
    %4548 = vmatprep.subr.bf16.mxu0 0
    %4549 = vmatpush1.bf16.msra.mxu0 0
    %4550 = vmatprep.subr.bf16.mxu0 0
    %4551 = vmatpush1.bf16.msra.mxu0 0
    %4552 = vmatprep.subr.bf16.mxu0 0
    %4553 = vmatpush1.bf16.msra.mxu0 0
    %4554 = vmatprep.subr.bf16.mxu0 0
    %4555 = vmatpush1.bf16.msra.mxu0 0
    %4556 = vmatprep.subr.bf16.mxu0 0
    %4557 = vmatpush1.bf16.msra.mxu0 0
    %4558 = vmatprep.subr.bf16.mxu0 0
    %4559 = vmatpush1.bf16.msra.mxu0 0
    %4560 = vmatprep.subr.bf16.mxu0 0
    %4561 = vmatpush1.bf16.msra.mxu0 0
    %4562 = vmatprep.subr.bf16.mxu0 0
    %4563 = vmatpush1.bf16.msra.mxu0 0
    %4564 = vmatprep.mubr.bf16.mxu0 0
    %4565 = vmatmul.mubr.bf16.gmra.mrb[0].mxu0 %v542
    %v4566 = vpop.f32.mrb[0].mxu0
    %v4567 = vadd.f32 %v4526, %v4566
    %v4568 = vpop.f32.mrb[0].mxu0
    %v4569 = vpop.f32.mrb[0].mxu0
    %v4570 = vadd.f32 %v4529, %v4569
    %v4571 = vpop.f32.mrb[0].mxu0
    %4572 = vdwg.mxu0
    %4573 = vmatprep.subr.bf16.mxu0 0
    %4574 = vmatpush1.bf16.msra.mxu0 %v3865
    %4575 = vmatprep.subr.bf16.mxu0 0
    %4576 = vmatpush1.bf16.msra.mxu0 0
    %4577 = vmatprep.subr.bf16.mxu0 0
    %4578 = vmatpush1.bf16.msra.mxu0 0
    %4579 = vmatprep.subr.bf16.mxu0 0
    %4580 = vmatpush1.bf16.msra.mxu0 0
    %4581 = vmatprep.subr.bf16.mxu0 0
    %4582 = vmatpush1.bf16.msra.mxu0 0
    %4583 = vmatprep.subr.bf16.mxu0 0
    %4584 = vmatpush1.bf16.msra.mxu0 0
    %4585 = vmatprep.subr.bf16.mxu0 0
    %4586 = vmatpush1.bf16.msra.mxu0 0
    %4587 = vmatprep.subr.bf16.mxu0 0
    %4588 = vmatpush1.bf16.msra.mxu0 0
    %4589 = vmatprep.subr.bf16.mxu0 0
    %4590 = vmatpush1.bf16.msra.mxu0 0
    %4591 = vmatprep.subr.bf16.mxu0 0
    %4592 = vmatpush1.bf16.msra.mxu0 0
    %4593 = vmatprep.subr.bf16.mxu0 0
    %4594 = vmatpush1.bf16.msra.mxu0 0
    %4595 = vmatprep.subr.bf16.mxu0 0
    %4596 = vmatpush1.bf16.msra.mxu0 0
    %4597 = vmatprep.subr.bf16.mxu0 0
    %4598 = vmatpush1.bf16.msra.mxu0 0
    %4599 = vmatprep.subr.bf16.mxu0 0
    %4600 = vmatpush1.bf16.msra.mxu0 0
    %4601 = vmatprep.subr.bf16.mxu0 0
    %4602 = vmatpush1.bf16.msra.mxu0 0
    %4603 = vmatprep.subr.bf16.mxu0 0
    %4604 = vmatpush1.bf16.msra.mxu0 0
    %4605 = vmatprep.mubr.bf16.mxu0 0
    %4606 = vmatmul.mubr.bf16.gmra.mrb[0].mxu0 %v542
    %v4607 = vpop.f32.mrb[0].mxu0
    %v4608 = vadd.f32 0.0, %v4607
    %v4609 = vpop.f32.mrb[0].mxu0
    %v4610 = vpop.f32.mrb[0].mxu0
    %v4611 = vadd.f32 0.0, %v4610
    %v4612 = vpop.f32.mrb[0].mxu0
    %4613 = vdwg.mxu0
    %v4614 = vadd.f32 %v4567, %v4608
    %v4615 = vadd.f32 %v4570, %v4611
    %v4616 = vmul.f32 %v79, %v91
    %v4617 = vmul.f32 %v80, %v92
    %v4618 = vmul.f32 %v81, %v93
    %v4619 = vmul.f32 %v82, %v94
    %v4620 = vmul.f32 %v83, %v95
    %v4621 = vmul.f32 %v84, %v96
    %v4622 = vmul.f32 %v85, %v97
    %v4623 = vmul.f32 %v86, %v98
    %v4624 = vmul.f32 %v87, %v99
    %v4625 = vmul.f32 %v88, %v100
    %v4626 = vmul.f32 %v89, %v101
    %v4627 = vmul.f32 %v90, %v102
    %v4628 = vpack.c.bf16 %v4617, %v4616
    %v4629 = vpack.c.bf16 %v4619, %v4618
    %v4630 = vpack.c.bf16 %v4621, %v4620
    %v4631 = vpack.c.bf16 %v4623, %v4622
    %v4632 = vpack.c.bf16 %v4625, %v4624
    %v4633 = vpack.c.bf16 %v4627, %v4626
    %v4634 = vunpack.c.l.bf16 %v4628
    %v4635 = vunpack.c.h.bf16 %v4628
    %v4636 = vunpack.c.l.bf16 %v4629
    %v4637 = vunpack.c.h.bf16 %v4629
    %v4638 = vunpack.c.l.bf16 %v4630
    %v4639 = vunpack.c.h.bf16 %v4630
    %v4640 = vunpack.c.l.bf16 %v4631
    %v4641 = vunpack.c.h.bf16 %v4631
    %v4642 = vunpack.c.l.bf16 %v4632
    %v4643 = vunpack.c.h.bf16 %v4632
    %v4644 = vunpack.c.l.bf16 %v4633
    %v4645 = vunpack.c.h.bf16 %v4633
    %v4646 = vsub.f32 %v4616, %v4634
    %v4647 = vsub.f32 %v4617, %v4635
    %v4648 = vsub.f32 %v4618, %v4636
    %v4649 = vsub.f32 %v4619, %v4637
    %v4650 = vsub.f32 %v4620, %v4638
    %v4651 = vsub.f32 %v4621, %v4639
    %v4652 = vsub.f32 %v4622, %v4640
    %v4653 = vsub.f32 %v4623, %v4641
    %v4654 = vsub.f32 %v4624, %v4642
    %v4655 = vsub.f32 %v4625, %v4643
    %v4656 = vsub.f32 %v4626, %v4644
    %v4657 = vsub.f32 %v4627, %v4645
    %v4658 = vpack.c.bf16 %v4647, %v4646
    %v4659 = vpack.c.bf16 %v4649, %v4648
    %v4660 = vpack.c.bf16 %v4651, %v4650
    %v4661 = vpack.c.bf16 %v4653, %v4652
    %v4662 = vpack.c.bf16 %v4655, %v4654
    %v4663 = vpack.c.bf16 %v4657, %v4656
    %v4665 = vsel %vm153, %v4628, 0
    %v4668 = vsel %vm153, %v4629, 0
    %v4671 = vsel %vm153, %v4630, 0
    %v4674 = vsel %vm153, %v4631, 0
    %v4677 = vsel %vm153, %v4632, 0
    %v4680 = vsel %vm153, %v4633, 0
    %4682 = vmatprep.subr.bf16.mxu0 0
    %4683 = vmatpush1.bf16.msra.mxu0 %v151
    %4684 = vmatprep.subr.bf16.mxu0 0
    %4685 = vmatpush1.bf16.msra.mxu0 0
    %4686 = vmatprep.subr.bf16.mxu0 0
    %4687 = vmatpush1.bf16.msra.mxu0 0
    %4688 = vmatprep.subr.bf16.mxu0 0
    %4689 = vmatpush1.bf16.msra.mxu0 0
    %4690 = vmatprep.subr.bf16.mxu0 0
    %4691 = vmatpush1.bf16.msra.mxu0 0
    %4692 = vmatprep.subr.bf16.mxu0 0
    %4693 = vmatpush1.bf16.msra.mxu0 0
    %4694 = vmatprep.subr.bf16.mxu0 0
    %4695 = vmatpush1.bf16.msra.mxu0 0
    %4696 = vmatprep.subr.bf16.mxu0 0
    %4697 = vmatpush1.bf16.msra.mxu0 0
    %4698 = vmatprep.subr.bf16.mxu0 0
    %4699 = vmatpush1.bf16.msra.mxu0 0
    %4700 = vmatprep.subr.bf16.mxu0 0
    %4701 = vmatpush1.bf16.msra.mxu0 0
    %4702 = vmatprep.subr.bf16.mxu0 0
    %4703 = vmatpush1.bf16.msra.mxu0 0
    %4704 = vmatprep.subr.bf16.mxu0 0
    %4705 = vmatpush1.bf16.msra.mxu0 0
    %4706 = vmatprep.subr.bf16.mxu0 0
    %4707 = vmatpush1.bf16.msra.mxu0 0
    %4708 = vmatprep.subr.bf16.mxu0 0
    %4709 = vmatpush1.bf16.msra.mxu0 0
    %4710 = vmatprep.subr.bf16.mxu0 0
    %4711 = vmatpush1.bf16.msra.mxu0 0
    %4712 = vmatprep.subr.bf16.mxu0 0
    %4713 = vmatpush1.bf16.msra.mxu0 0
    %4714 = vmatprep.mubr.bf16.mxu0 0
    %4715 = vmatmul.mubr.bf16.gmra.mrb[0].mxu0 %v4665
    %v4716 = vpop.f32.mrb[0].mxu0
    %v4717 = vadd.f32 0.0, %v4716
    %v4718 = vpop.f32.mrb[0].mxu0
    %v4719 = vpop.f32.mrb[0].mxu0
    %v4720 = vadd.f32 0.0, %v4719
    %v4721 = vpop.f32.mrb[0].mxu0
    %4722 = vmatprep.mubr.bf16.mxu0 0
    %4723 = vmatmul.mubr.bf16.gmra.mrb[0].mxu0 %v4668
    %v4724 = vpop.f32.mrb[0].mxu0
    %v4725 = vadd.f32 0.0, %v4724
    %v4726 = vpop.f32.mrb[0].mxu0
    %v4727 = vpop.f32.mrb[0].mxu0
    %v4728 = vadd.f32 0.0, %v4727
    %v4729 = vpop.f32.mrb[0].mxu0
    %4730 = vmatprep.mubr.bf16.mxu0 0
    %4731 = vmatmul.mubr.bf16.gmra.mrb[0].mxu0 %v4671
    %v4732 = vpop.f32.mrb[0].mxu0
    %v4733 = vadd.f32 0.0, %v4732
    %v4734 = vpop.f32.mrb[0].mxu0
    %v4735 = vpop.f32.mrb[0].mxu0
    %v4736 = vadd.f32 0.0, %v4735
    %v4737 = vpop.f32.mrb[0].mxu0
    %4738 = vmatprep.mubr.bf16.mxu0 0
    %4739 = vmatmul.mubr.bf16.gmra.mrb[0].mxu0 %v4674
    %v4740 = vpop.f32.mrb[0].mxu0
    %v4741 = vadd.f32 0.0, %v4740
    %v4742 = vpop.f32.mrb[0].mxu0
    %v4743 = vpop.f32.mrb[0].mxu0
    %v4744 = vadd.f32 0.0, %v4743
    %v4745 = vpop.f32.mrb[0].mxu0
    %4746 = vmatprep.mubr.bf16.mxu0 0
    %4747 = vmatmul.mubr.bf16.gmra.mrb[0].mxu0 %v4677
    %v4748 = vpop.f32.mrb[0].mxu0
    %v4749 = vadd.f32 0.0, %v4748
    %v4750 = vpop.f32.mrb[0].mxu0
    %v4751 = vpop.f32.mrb[0].mxu0
    %v4752 = vadd.f32 0.0, %v4751
    %v4753 = vpop.f32.mrb[0].mxu0
    %4754 = vmatprep.mubr.bf16.mxu0 0
    %4755 = vmatmul.mubr.bf16.gmra.mrb[0].mxu0 %v4680
    %v4756 = vpop.f32.mrb[0].mxu0
    %v4757 = vadd.f32 0.0, %v4756
    %v4758 = vpop.f32.mrb[0].mxu0
    %v4759 = vpop.f32.mrb[0].mxu0
    %v4760 = vadd.f32 0.0, %v4759
    %v4761 = vpop.f32.mrb[0].mxu0
    %4762 = vdwg.mxu0
    %4763 = vmatprep.subr.bf16.mxu0 0
    %4764 = vmatpush1.bf16.msra.mxu0 %v257
    %4765 = vmatprep.subr.bf16.mxu0 0
    %4766 = vmatpush1.bf16.msra.mxu0 0
    %4767 = vmatprep.subr.bf16.mxu0 0
    %4768 = vmatpush1.bf16.msra.mxu0 0
    %4769 = vmatprep.subr.bf16.mxu0 0
    %4770 = vmatpush1.bf16.msra.mxu0 0
    %4771 = vmatprep.subr.bf16.mxu0 0
    %4772 = vmatpush1.bf16.msra.mxu0 0
    %4773 = vmatprep.subr.bf16.mxu0 0
    %4774 = vmatpush1.bf16.msra.mxu0 0
    %4775 = vmatprep.subr.bf16.mxu0 0
    %4776 = vmatpush1.bf16.msra.mxu0 0
    %4777 = vmatprep.subr.bf16.mxu0 0
    %4778 = vmatpush1.bf16.msra.mxu0 0
    %4779 = vmatprep.subr.bf16.mxu0 0
    %4780 = vmatpush1.bf16.msra.mxu0 0
    %4781 = vmatprep.subr.bf16.mxu0 0
    %4782 = vmatpush1.bf16.msra.mxu0 0
    %4783 = vmatprep.subr.bf16.mxu0 0
    %4784 = vmatpush1.bf16.msra.mxu0 0
    %4785 = vmatprep.subr.bf16.mxu0 0
    %4786 = vmatpush1.bf16.msra.mxu0 0
    %4787 = vmatprep.subr.bf16.mxu0 0
    %4788 = vmatpush1.bf16.msra.mxu0 0
    %4789 = vmatprep.subr.bf16.mxu0 0
    %4790 = vmatpush1.bf16.msra.mxu0 0
    %4791 = vmatprep.subr.bf16.mxu0 0
    %4792 = vmatpush1.bf16.msra.mxu0 0
    %4793 = vmatprep.subr.bf16.mxu0 0
    %4794 = vmatpush1.bf16.msra.mxu0 0
    %4795 = vmatprep.mubr.bf16.mxu0 0
    %4796 = vmatmul.mubr.bf16.gmra.mrb[0].mxu0 %v4665
    %v4797 = vpop.f32.mrb[0].mxu0
    %v4798 = vadd.f32 %v4717, %v4797
    %v4799 = vpop.f32.mrb[0].mxu0
    %v4800 = vpop.f32.mrb[0].mxu0
    %v4801 = vadd.f32 %v4720, %v4800
    %v4802 = vpop.f32.mrb[0].mxu0
    %4803 = vmatprep.mubr.bf16.mxu0 0
    %4804 = vmatmul.mubr.bf16.gmra.mrb[0].mxu0 %v4668
    %v4805 = vpop.f32.mrb[0].mxu0
    %v4806 = vadd.f32 %v4725, %v4805
    %v4807 = vpop.f32.mrb[0].mxu0
    %v4808 = vpop.f32.mrb[0].mxu0
    %v4809 = vadd.f32 %v4728, %v4808
    %v4810 = vpop.f32.mrb[0].mxu0
    %4811 = vmatprep.mubr.bf16.mxu0 0
    %4812 = vmatmul.mubr.bf16.gmra.mrb[0].mxu0 %v4671
    %v4813 = vpop.f32.mrb[0].mxu0
    %v4814 = vadd.f32 %v4733, %v4813
    %v4815 = vpop.f32.mrb[0].mxu0
    %v4816 = vpop.f32.mrb[0].mxu0
    %v4817 = vadd.f32 %v4736, %v4816
    %v4818 = vpop.f32.mrb[0].mxu0
    %4819 = vmatprep.mubr.bf16.mxu0 0
    %4820 = vmatmul.mubr.bf16.gmra.mrb[0].mxu0 %v4674
    %v4821 = vpop.f32.mrb[0].mxu0
    %v4822 = vadd.f32 %v4741, %v4821
    %v4823 = vpop.f32.mrb[0].mxu0
    %v4824 = vpop.f32.mrb[0].mxu0
    %v4825 = vadd.f32 %v4744, %v4824
    %v4826 = vpop.f32.mrb[0].mxu0
    %4827 = vmatprep.mubr.bf16.mxu0 0
    %4828 = vmatmul.mubr.bf16.gmra.mrb[0].mxu0 %v4677
    %v4829 = vpop.f32.mrb[0].mxu0
    %v4830 = vadd.f32 %v4749, %v4829
    %v4831 = vpop.f32.mrb[0].mxu0
    %v4832 = vpop.f32.mrb[0].mxu0
    %v4833 = vadd.f32 %v4752, %v4832
    %v4834 = vpop.f32.mrb[0].mxu0
    %4835 = vmatprep.mubr.bf16.mxu0 0
    %4836 = vmatmul.mubr.bf16.gmra.mrb[0].mxu0 %v4680
    %v4837 = vpop.f32.mrb[0].mxu0
    %v4838 = vadd.f32 %v4757, %v4837
    %v4839 = vpop.f32.mrb[0].mxu0
    %v4840 = vpop.f32.mrb[0].mxu0
    %v4841 = vadd.f32 %v4760, %v4840
    %v4842 = vpop.f32.mrb[0].mxu0
    %4843 = vdwg.mxu0
    %v4845 = vsel %vm153, %v4658, 0
    %v4848 = vsel %vm153, %v4659, 0
    %v4851 = vsel %vm153, %v4660, 0
    %v4854 = vsel %vm153, %v4661, 0
    %v4857 = vsel %vm153, %v4662, 0
    %v4860 = vsel %vm153, %v4663, 0
    %4862 = vmatprep.subr.bf16.mxu0 0
    %4863 = vmatpush1.bf16.msra.mxu0 %v257
    %4864 = vmatprep.subr.bf16.mxu0 0
    %4865 = vmatpush1.bf16.msra.mxu0 0
    %4866 = vmatprep.subr.bf16.mxu0 0
    %4867 = vmatpush1.bf16.msra.mxu0 0
    %4868 = vmatprep.subr.bf16.mxu0 0
    %4869 = vmatpush1.bf16.msra.mxu0 0
    %4870 = vmatprep.subr.bf16.mxu0 0
    %4871 = vmatpush1.bf16.msra.mxu0 0
    %4872 = vmatprep.subr.bf16.mxu0 0
    %4873 = vmatpush1.bf16.msra.mxu0 0
    %4874 = vmatprep.subr.bf16.mxu0 0
    %4875 = vmatpush1.bf16.msra.mxu0 0
    %4876 = vmatprep.subr.bf16.mxu0 0
    %4877 = vmatpush1.bf16.msra.mxu0 0
    %4878 = vmatprep.subr.bf16.mxu0 0
    %4879 = vmatpush1.bf16.msra.mxu0 0
    %4880 = vmatprep.subr.bf16.mxu0 0
    %4881 = vmatpush1.bf16.msra.mxu0 0
    %4882 = vmatprep.subr.bf16.mxu0 0
    %4883 = vmatpush1.bf16.msra.mxu0 0
    %4884 = vmatprep.subr.bf16.mxu0 0
    %4885 = vmatpush1.bf16.msra.mxu0 0
    %4886 = vmatprep.subr.bf16.mxu0 0
    %4887 = vmatpush1.bf16.msra.mxu0 0
    %4888 = vmatprep.subr.bf16.mxu0 0
    %4889 = vmatpush1.bf16.msra.mxu0 0
    %4890 = vmatprep.subr.bf16.mxu0 0
    %4891 = vmatpush1.bf16.msra.mxu0 0
    %4892 = vmatprep.subr.bf16.mxu0 0
    %4893 = vmatpush1.bf16.msra.mxu0 0
    %4894 = vmatprep.mubr.bf16.mxu0 0
    %4895 = vmatmul.mubr.bf16.gmra.mrb[0].mxu0 %v4845
    %v4896 = vpop.f32.mrb[0].mxu0
    %v4897 = vadd.f32 0.0, %v4896
    %v4898 = vpop.f32.mrb[0].mxu0
    %v4899 = vpop.f32.mrb[0].mxu0
    %v4900 = vadd.f32 0.0, %v4899
    %v4901 = vpop.f32.mrb[0].mxu0
    %4902 = vmatprep.mubr.bf16.mxu0 0
    %4903 = vmatmul.mubr.bf16.gmra.mrb[0].mxu0 %v4848
    %v4904 = vpop.f32.mrb[0].mxu0
    %v4905 = vadd.f32 0.0, %v4904
    %v4906 = vpop.f32.mrb[0].mxu0
    %v4907 = vpop.f32.mrb[0].mxu0
    %v4908 = vadd.f32 0.0, %v4907
    %v4909 = vpop.f32.mrb[0].mxu0
    %4910 = vmatprep.mubr.bf16.mxu0 0
    %4911 = vmatmul.mubr.bf16.gmra.mrb[0].mxu0 %v4851
    %v4912 = vpop.f32.mrb[0].mxu0
    %v4913 = vadd.f32 0.0, %v4912
    %v4914 = vpop.f32.mrb[0].mxu0
    %v4915 = vpop.f32.mrb[0].mxu0
    %v4916 = vadd.f32 0.0, %v4915
    %v4917 = vpop.f32.mrb[0].mxu0
    %4918 = vmatprep.mubr.bf16.mxu0 0
    %4919 = vmatmul.mubr.bf16.gmra.mrb[0].mxu0 %v4854
    %v4920 = vpop.f32.mrb[0].mxu0
    %v4921 = vadd.f32 0.0, %v4920
    %v4922 = vpop.f32.mrb[0].mxu0
    %v4923 = vpop.f32.mrb[0].mxu0
    %v4924 = vadd.f32 0.0, %v4923
    %v4925 = vpop.f32.mrb[0].mxu0
    %4926 = vmatprep.mubr.bf16.mxu0 0
    %4927 = vmatmul.mubr.bf16.gmra.mrb[0].mxu0 %v4857
    %v4928 = vpop.f32.mrb[0].mxu0
    %v4929 = vadd.f32 0.0, %v4928
    %v4930 = vpop.f32.mrb[0].mxu0
    %v4931 = vpop.f32.mrb[0].mxu0
    %v4932 = vadd.f32 0.0, %v4931
    %v4933 = vpop.f32.mrb[0].mxu0
    %4934 = vmatprep.mubr.bf16.mxu0 0
    %4935 = vmatmul.mubr.bf16.gmra.mrb[0].mxu0 %v4860
    %v4936 = vpop.f32.mrb[0].mxu0
    %v4937 = vadd.f32 0.0, %v4936
    %v4938 = vpop.f32.mrb[0].mxu0
    %v4939 = vpop.f32.mrb[0].mxu0
    %v4940 = vadd.f32 0.0, %v4939
    %v4941 = vpop.f32.mrb[0].mxu0
    %4942 = vdwg.mxu0
    %v4943 = vadd.f32 %v4798, %v4897
    %v4944 = vadd.f32 %v4801, %v4900
    %v4945 = vadd.f32 %v4806, %v4905
    %v4946 = vadd.f32 %v4809, %v4908
    %v4947 = vadd.f32 %v4814, %v4913
    %v4948 = vadd.f32 %v4817, %v4916
    %v4949 = vadd.f32 %v4822, %v4921
    %v4950 = vadd.f32 %v4825, %v4924
    %v4951 = vadd.f32 %v4830, %v4929
    %v4952 = vadd.f32 %v4833, %v4932
    %v4953 = vadd.f32 %v4838, %v4937
    %v4954 = vadd.f32 %v4841, %v4940
    %v4955 = vpack.c.bf16 %v4944, %v4943
    %v4956 = vpack.c.bf16 %v4946, %v4945
    %v4957 = vpack.c.bf16 %v4948, %v4947
    %v4958 = vpack.c.bf16 %v4950, %v4949
    %v4959 = vpack.c.bf16 %v4952, %v4951
    %v4960 = vpack.c.bf16 %v4954, %v4953
    %v4961 = vunpack.c.l.bf16 %v4955
    %v4962 = vunpack.c.h.bf16 %v4955
    %v4963 = vunpack.c.l.bf16 %v4956
    %v4964 = vunpack.c.h.bf16 %v4956
    %v4965 = vunpack.c.l.bf16 %v4957
    %v4966 = vunpack.c.h.bf16 %v4957
    %v4967 = vunpack.c.l.bf16 %v4958
    %v4968 = vunpack.c.h.bf16 %v4958
    %v4969 = vunpack.c.l.bf16 %v4959
    %v4970 = vunpack.c.h.bf16 %v4959
    %v4971 = vunpack.c.l.bf16 %v4960
    %v4972 = vunpack.c.h.bf16 %v4960
    %v4973 = vsub.f32 %v4943, %v4961
    %v4974 = vsub.f32 %v4944, %v4962
    %v4975 = vsub.f32 %v4945, %v4963
    %v4976 = vsub.f32 %v4946, %v4964
    %v4977 = vsub.f32 %v4947, %v4965
    %v4978 = vsub.f32 %v4948, %v4966
    %v4979 = vsub.f32 %v4949, %v4967
    %v4980 = vsub.f32 %v4950, %v4968
    %v4981 = vsub.f32 %v4951, %v4969
    %v4982 = vsub.f32 %v4952, %v4970
    %v4983 = vsub.f32 %v4953, %v4971
    %v4984 = vsub.f32 %v4954, %v4972
    %v4985 = vpack.c.bf16 %v4974, %v4973
    %v4986 = vpack.c.bf16 %v4976, %v4975
    %v4987 = vpack.c.bf16 %v4978, %v4977
    %v4988 = vpack.c.bf16 %v4980, %v4979
    %v4989 = vpack.c.bf16 %v4982, %v4981
    %v4990 = vpack.c.bf16 %v4984, %v4983
    %4991 = vmatprep.subr.bf16.mxu0 0
    %4992 = vmatpush1.bf16.msra.mxu0 %v4955
    %4993 = vmatprep.subr.bf16.mxu0 0
    %4994 = vmatpush1.bf16.msra.mxu0 0
    %4995 = vmatprep.subr.bf16.mxu0 0
    %4996 = vmatpush1.bf16.msra.mxu0 0
    %4997 = vmatprep.subr.bf16.mxu0 0
    %4998 = vmatpush1.bf16.msra.mxu0 0
    %4999 = vmatprep.subr.bf16.mxu0 0
    %5000 = vmatpush1.bf16.msra.mxu0 0
    %5001 = vmatprep.subr.bf16.mxu0 0
    %5002 = vmatpush1.bf16.msra.mxu0 0
    %5003 = vmatprep.subr.bf16.mxu0 0
    %5004 = vmatpush1.bf16.msra.mxu0 0
    %5005 = vmatprep.subr.bf16.mxu0 0
    %5006 = vmatpush1.bf16.msra.mxu0 0
    %5007 = vmatprep.subr.bf16.mxu0 0
    %5008 = vmatpush1.bf16.msra.mxu0 0
    %5009 = vmatprep.subr.bf16.mxu0 0
    %5010 = vmatpush1.bf16.msra.mxu0 0
    %5011 = vmatprep.subr.bf16.mxu0 0
    %5012 = vmatpush1.bf16.msra.mxu0 0
    %5013 = vmatprep.subr.bf16.mxu0 0
    %5014 = vmatpush1.bf16.msra.mxu0 0
    %5015 = vmatprep.subr.bf16.mxu0 0
    %5016 = vmatpush1.bf16.msra.mxu0 0
    %5017 = vmatprep.subr.bf16.mxu0 0
    %5018 = vmatpush1.bf16.msra.mxu0 0
    %5019 = vmatprep.subr.bf16.mxu0 0
    %5020 = vmatpush1.bf16.msra.mxu0 0
    %5021 = vmatprep.subr.bf16.mxu0 0
    %5022 = vmatpush1.bf16.msra.mxu0 0
    %5023 = vmatprep.mubr.bf16.mxu0 0
    %5024 = vmatmul.mubr.bf16.gmra.mrb[0].mxu0 %v493
    %v5025 = vpop.f32.mrb[0].mxu0
    %v5026 = vadd.f32 0.0, %v5025
    %v5027 = vpop.f32.mrb[0].mxu0
    %v5028 = vpop.f32.mrb[0].mxu0
    %v5029 = vadd.f32 0.0, %v5028
    %v5030 = vpop.f32.mrb[0].mxu0
    %5031 = vdwg.mxu0
    %5032 = vmatprep.subr.bf16.mxu0 0
    %5033 = vmatpush1.bf16.msra.mxu0 %v4955
    %5034 = vmatprep.subr.bf16.mxu0 0
    %5035 = vmatpush1.bf16.msra.mxu0 0
    %5036 = vmatprep.subr.bf16.mxu0 0
    %5037 = vmatpush1.bf16.msra.mxu0 0
    %5038 = vmatprep.subr.bf16.mxu0 0
    %5039 = vmatpush1.bf16.msra.mxu0 0
    %5040 = vmatprep.subr.bf16.mxu0 0
    %5041 = vmatpush1.bf16.msra.mxu0 0
    %5042 = vmatprep.subr.bf16.mxu0 0
    %5043 = vmatpush1.bf16.msra.mxu0 0
    %5044 = vmatprep.subr.bf16.mxu0 0
    %5045 = vmatpush1.bf16.msra.mxu0 0
    %5046 = vmatprep.subr.bf16.mxu0 0
    %5047 = vmatpush1.bf16.msra.mxu0 0
    %5048 = vmatprep.subr.bf16.mxu0 0
    %5049 = vmatpush1.bf16.msra.mxu0 0
    %5050 = vmatprep.subr.bf16.mxu0 0
    %5051 = vmatpush1.bf16.msra.mxu0 0
    %5052 = vmatprep.subr.bf16.mxu0 0
    %5053 = vmatpush1.bf16.msra.mxu0 0
    %5054 = vmatprep.subr.bf16.mxu0 0
    %5055 = vmatpush1.bf16.msra.mxu0 0
    %5056 = vmatprep.subr.bf16.mxu0 0
    %5057 = vmatpush1.bf16.msra.mxu0 0
    %5058 = vmatprep.subr.bf16.mxu0 0
    %5059 = vmatpush1.bf16.msra.mxu0 0
    %5060 = vmatprep.subr.bf16.mxu0 0
    %5061 = vmatpush1.bf16.msra.mxu0 0
    %5062 = vmatprep.subr.bf16.mxu0 0
    %5063 = vmatpush1.bf16.msra.mxu0 0
    %5064 = vmatprep.mubr.bf16.mxu0 0
    %5065 = vmatmul.mubr.bf16.gmra.mrb[0].mxu0 %v542
    %v5066 = vpop.f32.mrb[0].mxu0
    %v5067 = vadd.f32 %v5026, %v5066
    %v5068 = vpop.f32.mrb[0].mxu0
    %v5069 = vpop.f32.mrb[0].mxu0
    %v5070 = vadd.f32 %v5029, %v5069
    %v5071 = vpop.f32.mrb[0].mxu0
    %5072 = vdwg.mxu0
    %5073 = vmatprep.subr.bf16.mxu0 0
    %5074 = vmatpush1.bf16.msra.mxu0 %v4985
    %5075 = vmatprep.subr.bf16.mxu0 0
    %5076 = vmatpush1.bf16.msra.mxu0 0
    %5077 = vmatprep.subr.bf16.mxu0 0
    %5078 = vmatpush1.bf16.msra.mxu0 0
    %5079 = vmatprep.subr.bf16.mxu0 0
    %5080 = vmatpush1.bf16.msra.mxu0 0
    %5081 = vmatprep.subr.bf16.mxu0 0
    %5082 = vmatpush1.bf16.msra.mxu0 0
    %5083 = vmatprep.subr.bf16.mxu0 0
    %5084 = vmatpush1.bf16.msra.mxu0 0
    %5085 = vmatprep.subr.bf16.mxu0 0
    %5086 = vmatpush1.bf16.msra.mxu0 0
    %5087 = vmatprep.subr.bf16.mxu0 0
    %5088 = vmatpush1.bf16.msra.mxu0 0
    %5089 = vmatprep.subr.bf16.mxu0 0
    %5090 = vmatpush1.bf16.msra.mxu0 0
    %5091 = vmatprep.subr.bf16.mxu0 0
    %5092 = vmatpush1.bf16.msra.mxu0 0
    %5093 = vmatprep.subr.bf16.mxu0 0
    %5094 = vmatpush1.bf16.msra.mxu0 0
    %5095 = vmatprep.subr.bf16.mxu0 0
    %5096 = vmatpush1.bf16.msra.mxu0 0
    %5097 = vmatprep.subr.bf16.mxu0 0
    %5098 = vmatpush1.bf16.msra.mxu0 0
    %5099 = vmatprep.subr.bf16.mxu0 0
    %5100 = vmatpush1.bf16.msra.mxu0 0
    %5101 = vmatprep.subr.bf16.mxu0 0
    %5102 = vmatpush1.bf16.msra.mxu0 0
    %5103 = vmatprep.subr.bf16.mxu0 0
    %5104 = vmatpush1.bf16.msra.mxu0 0
    %5105 = vmatprep.mubr.bf16.mxu0 0
    %5106 = vmatmul.mubr.bf16.gmra.mrb[0].mxu0 %v542
    %v5107 = vpop.f32.mrb[0].mxu0
    %v5108 = vadd.f32 0.0, %v5107
    %v5109 = vpop.f32.mrb[0].mxu0
    %v5110 = vpop.f32.mrb[0].mxu0
    %v5111 = vadd.f32 0.0, %v5110
    %v5112 = vpop.f32.mrb[0].mxu0
    %5113 = vdwg.mxu0
    %v5114 = vadd.f32 %v5067, %v5108
    %v5115 = vadd.f32 %v5070, %v5111
    %5116 = vmatprep.subr.bf16.mxu0 0
    %5117 = vmatpush1.bf16.msra.mxu0 %v4956
    %5118 = vmatprep.subr.bf16.mxu0 0
    %5119 = vmatpush1.bf16.msra.mxu0 0
    %5120 = vmatprep.subr.bf16.mxu0 0
    %5121 = vmatpush1.bf16.msra.mxu0 0
    %5122 = vmatprep.subr.bf16.mxu0 0
    %5123 = vmatpush1.bf16.msra.mxu0 0
    %5124 = vmatprep.subr.bf16.mxu0 0
    %5125 = vmatpush1.bf16.msra.mxu0 0
    %5126 = vmatprep.subr.bf16.mxu0 0
    %5127 = vmatpush1.bf16.msra.mxu0 0
    %5128 = vmatprep.subr.bf16.mxu0 0
    %5129 = vmatpush1.bf16.msra.mxu0 0
    %5130 = vmatprep.subr.bf16.mxu0 0
    %5131 = vmatpush1.bf16.msra.mxu0 0
    %5132 = vmatprep.subr.bf16.mxu0 0
    %5133 = vmatpush1.bf16.msra.mxu0 0
    %5134 = vmatprep.subr.bf16.mxu0 0
    %5135 = vmatpush1.bf16.msra.mxu0 0
    %5136 = vmatprep.subr.bf16.mxu0 0
    %5137 = vmatpush1.bf16.msra.mxu0 0
    %5138 = vmatprep.subr.bf16.mxu0 0
    %5139 = vmatpush1.bf16.msra.mxu0 0
    %5140 = vmatprep.subr.bf16.mxu0 0
    %5141 = vmatpush1.bf16.msra.mxu0 0
    %5142 = vmatprep.subr.bf16.mxu0 0
    %5143 = vmatpush1.bf16.msra.mxu0 0
    %5144 = vmatprep.subr.bf16.mxu0 0
    %5145 = vmatpush1.bf16.msra.mxu0 0
    %5146 = vmatprep.subr.bf16.mxu0 0
    %5147 = vmatpush1.bf16.msra.mxu0 0
    %5148 = vmatprep.mubr.bf16.mxu0 0
    %5149 = vmatmul.mubr.bf16.gmra.mrb[0].mxu0 %v493
    %v5150 = vpop.f32.mrb[0].mxu0
    %v5151 = vadd.f32 0.0, %v5150
    %v5152 = vpop.f32.mrb[0].mxu0
    %v5153 = vpop.f32.mrb[0].mxu0
    %v5154 = vadd.f32 0.0, %v5153
    %v5155 = vpop.f32.mrb[0].mxu0
    %5156 = vdwg.mxu0
    %5157 = vmatprep.subr.bf16.mxu0 0
    %5158 = vmatpush1.bf16.msra.mxu0 %v4956
    %5159 = vmatprep.subr.bf16.mxu0 0
    %5160 = vmatpush1.bf16.msra.mxu0 0
    %5161 = vmatprep.subr.bf16.mxu0 0
    %5162 = vmatpush1.bf16.msra.mxu0 0
    %5163 = vmatprep.subr.bf16.mxu0 0
    %5164 = vmatpush1.bf16.msra.mxu0 0
    %5165 = vmatprep.subr.bf16.mxu0 0
    %5166 = vmatpush1.bf16.msra.mxu0 0
    %5167 = vmatprep.subr.bf16.mxu0 0
    %5168 = vmatpush1.bf16.msra.mxu0 0
    %5169 = vmatprep.subr.bf16.mxu0 0
    %5170 = vmatpush1.bf16.msra.mxu0 0
    %5171 = vmatprep.subr.bf16.mxu0 0
    %5172 = vmatpush1.bf16.msra.mxu0 0
    %5173 = vmatprep.subr.bf16.mxu0 0
    %5174 = vmatpush1.bf16.msra.mxu0 0
    %5175 = vmatprep.subr.bf16.mxu0 0
    %5176 = vmatpush1.bf16.msra.mxu0 0
    %5177 = vmatprep.subr.bf16.mxu0 0
    %5178 = vmatpush1.bf16.msra.mxu0 0
    %5179 = vmatprep.subr.bf16.mxu0 0
    %5180 = vmatpush1.bf16.msra.mxu0 0
    %5181 = vmatprep.subr.bf16.mxu0 0
    %5182 = vmatpush1.bf16.msra.mxu0 0
    %5183 = vmatprep.subr.bf16.mxu0 0
    %5184 = vmatpush1.bf16.msra.mxu0 0
    %5185 = vmatprep.subr.bf16.mxu0 0
    %5186 = vmatpush1.bf16.msra.mxu0 0
    %5187 = vmatprep.subr.bf16.mxu0 0
    %5188 = vmatpush1.bf16.msra.mxu0 0
    %5189 = vmatprep.mubr.bf16.mxu0 0
    %5190 = vmatmul.mubr.bf16.gmra.mrb[0].mxu0 %v542
    %v5191 = vpop.f32.mrb[0].mxu0
    %v5192 = vadd.f32 %v5151, %v5191
    %v5193 = vpop.f32.mrb[0].mxu0
    %v5194 = vpop.f32.mrb[0].mxu0
    %v5195 = vadd.f32 %v5154, %v5194
    %v5196 = vpop.f32.mrb[0].mxu0
    %5197 = vdwg.mxu0
    %5198 = vmatprep.subr.bf16.mxu0 0
    %5199 = vmatpush1.bf16.msra.mxu0 %v4986
    %5200 = vmatprep.subr.bf16.mxu0 0
    %5201 = vmatpush1.bf16.msra.mxu0 0
    %5202 = vmatprep.subr.bf16.mxu0 0
    %5203 = vmatpush1.bf16.msra.mxu0 0
    %5204 = vmatprep.subr.bf16.mxu0 0
    %5205 = vmatpush1.bf16.msra.mxu0 0
    %5206 = vmatprep.subr.bf16.mxu0 0
    %5207 = vmatpush1.bf16.msra.mxu0 0
    %5208 = vmatprep.subr.bf16.mxu0 0
    %5209 = vmatpush1.bf16.msra.mxu0 0
    %5210 = vmatprep.subr.bf16.mxu0 0
    %5211 = vmatpush1.bf16.msra.mxu0 0
    %5212 = vmatprep.subr.bf16.mxu0 0
    %5213 = vmatpush1.bf16.msra.mxu0 0
    %5214 = vmatprep.subr.bf16.mxu0 0
    %5215 = vmatpush1.bf16.msra.mxu0 0
    %5216 = vmatprep.subr.bf16.mxu0 0
    %5217 = vmatpush1.bf16.msra.mxu0 0
    %5218 = vmatprep.subr.bf16.mxu0 0
    %5219 = vmatpush1.bf16.msra.mxu0 0
    %5220 = vmatprep.subr.bf16.mxu0 0
    %5221 = vmatpush1.bf16.msra.mxu0 0
    %5222 = vmatprep.subr.bf16.mxu0 0
    %5223 = vmatpush1.bf16.msra.mxu0 0
    %5224 = vmatprep.subr.bf16.mxu0 0
    %5225 = vmatpush1.bf16.msra.mxu0 0
    %5226 = vmatprep.subr.bf16.mxu0 0
    %5227 = vmatpush1.bf16.msra.mxu0 0
    %5228 = vmatprep.subr.bf16.mxu0 0
    %5229 = vmatpush1.bf16.msra.mxu0 0
    %5230 = vmatprep.mubr.bf16.mxu0 0
    %5231 = vmatmul.mubr.bf16.gmra.mrb[0].mxu0 %v542
    %v5232 = vpop.f32.mrb[0].mxu0
    %v5233 = vadd.f32 0.0, %v5232
    %v5234 = vpop.f32.mrb[0].mxu0
    %v5235 = vpop.f32.mrb[0].mxu0
    %v5236 = vadd.f32 0.0, %v5235
    %v5237 = vpop.f32.mrb[0].mxu0
    %5238 = vdwg.mxu0
    %v5239 = vadd.f32 %v5192, %v5233
    %v5240 = vadd.f32 %v5195, %v5236
    %5241 = vmatprep.subr.bf16.mxu0 0
    %5242 = vmatpush1.bf16.msra.mxu0 %v4957
    %5243 = vmatprep.subr.bf16.mxu0 0
    %5244 = vmatpush1.bf16.msra.mxu0 0
    %5245 = vmatprep.subr.bf16.mxu0 0
    %5246 = vmatpush1.bf16.msra.mxu0 0
    %5247 = vmatprep.subr.bf16.mxu0 0
    %5248 = vmatpush1.bf16.msra.mxu0 0
    %5249 = vmatprep.subr.bf16.mxu0 0
    %5250 = vmatpush1.bf16.msra.mxu0 0
    %5251 = vmatprep.subr.bf16.mxu0 0
    %5252 = vmatpush1.bf16.msra.mxu0 0
    %5253 = vmatprep.subr.bf16.mxu0 0
    %5254 = vmatpush1.bf16.msra.mxu0 0
    %5255 = vmatprep.subr.bf16.mxu0 0
    %5256 = vmatpush1.bf16.msra.mxu0 0
    %5257 = vmatprep.subr.bf16.mxu0 0
    %5258 = vmatpush1.bf16.msra.mxu0 0
    %5259 = vmatprep.subr.bf16.mxu0 0
    %5260 = vmatpush1.bf16.msra.mxu0 0
    %5261 = vmatprep.subr.bf16.mxu0 0
    %5262 = vmatpush1.bf16.msra.mxu0 0
    %5263 = vmatprep.subr.bf16.mxu0 0
    %5264 = vmatpush1.bf16.msra.mxu0 0
    %5265 = vmatprep.subr.bf16.mxu0 0
    %5266 = vmatpush1.bf16.msra.mxu0 0
    %5267 = vmatprep.subr.bf16.mxu0 0
    %5268 = vmatpush1.bf16.msra.mxu0 0
    %5269 = vmatprep.subr.bf16.mxu0 0
    %5270 = vmatpush1.bf16.msra.mxu0 0
    %5271 = vmatprep.subr.bf16.mxu0 0
    %5272 = vmatpush1.bf16.msra.mxu0 0
    %5273 = vmatprep.mubr.bf16.mxu0 0
    %5274 = vmatmul.mubr.bf16.gmra.mrb[0].mxu0 %v493
    %v5275 = vpop.f32.mrb[0].mxu0
    %v5276 = vadd.f32 0.0, %v5275
    %v5277 = vpop.f32.mrb[0].mxu0
    %v5278 = vpop.f32.mrb[0].mxu0
    %v5279 = vadd.f32 0.0, %v5278
    %v5280 = vpop.f32.mrb[0].mxu0
    %5281 = vdwg.mxu0
    %5282 = vmatprep.subr.bf16.mxu0 0
    %5283 = vmatpush1.bf16.msra.mxu0 %v4957
    %5284 = vmatprep.subr.bf16.mxu0 0
    %5285 = vmatpush1.bf16.msra.mxu0 0
    %5286 = vmatprep.subr.bf16.mxu0 0
    %5287 = vmatpush1.bf16.msra.mxu0 0
    %5288 = vmatprep.subr.bf16.mxu0 0
    %5289 = vmatpush1.bf16.msra.mxu0 0
    %5290 = vmatprep.subr.bf16.mxu0 0
    %5291 = vmatpush1.bf16.msra.mxu0 0
    %5292 = vmatprep.subr.bf16.mxu0 0
    %5293 = vmatpush1.bf16.msra.mxu0 0
    %5294 = vmatprep.subr.bf16.mxu0 0
    %5295 = vmatpush1.bf16.msra.mxu0 0
    %5296 = vmatprep.subr.bf16.mxu0 0
    %5297 = vmatpush1.bf16.msra.mxu0 0
    %5298 = vmatprep.subr.bf16.mxu0 0
    %5299 = vmatpush1.bf16.msra.mxu0 0
    %5300 = vmatprep.subr.bf16.mxu0 0
    %5301 = vmatpush1.bf16.msra.mxu0 0
    %5302 = vmatprep.subr.bf16.mxu0 0
    %5303 = vmatpush1.bf16.msra.mxu0 0
    %5304 = vmatprep.subr.bf16.mxu0 0
    %5305 = vmatpush1.bf16.msra.mxu0 0
    %5306 = vmatprep.subr.bf16.mxu0 0
    %5307 = vmatpush1.bf16.msra.mxu0 0
    %5308 = vmatprep.subr.bf16.mxu0 0
    %5309 = vmatpush1.bf16.msra.mxu0 0
    %5310 = vmatprep.subr.bf16.mxu0 0
    %5311 = vmatpush1.bf16.msra.mxu0 0
    %5312 = vmatprep.subr.bf16.mxu0 0
    %5313 = vmatpush1.bf16.msra.mxu0 0
    %5314 = vmatprep.mubr.bf16.mxu0 0
    %5315 = vmatmul.mubr.bf16.gmra.mrb[0].mxu0 %v542
    %v5316 = vpop.f32.mrb[0].mxu0
    %v5317 = vadd.f32 %v5276, %v5316
    %v5318 = vpop.f32.mrb[0].mxu0
    %v5319 = vpop.f32.mrb[0].mxu0
    %v5320 = vadd.f32 %v5279, %v5319
    %v5321 = vpop.f32.mrb[0].mxu0
    %5322 = vdwg.mxu0
    %5323 = vmatprep.subr.bf16.mxu0 0
    %5324 = vmatpush1.bf16.msra.mxu0 %v4987
    %5325 = vmatprep.subr.bf16.mxu0 0
    %5326 = vmatpush1.bf16.msra.mxu0 0
    %5327 = vmatprep.subr.bf16.mxu0 0
    %5328 = vmatpush1.bf16.msra.mxu0 0
    %5329 = vmatprep.subr.bf16.mxu0 0
    %5330 = vmatpush1.bf16.msra.mxu0 0
    %5331 = vmatprep.subr.bf16.mxu0 0
    %5332 = vmatpush1.bf16.msra.mxu0 0
    %5333 = vmatprep.subr.bf16.mxu0 0
    %5334 = vmatpush1.bf16.msra.mxu0 0
    %5335 = vmatprep.subr.bf16.mxu0 0
    %5336 = vmatpush1.bf16.msra.mxu0 0
    %5337 = vmatprep.subr.bf16.mxu0 0
    %5338 = vmatpush1.bf16.msra.mxu0 0
    %5339 = vmatprep.subr.bf16.mxu0 0
    %5340 = vmatpush1.bf16.msra.mxu0 0
    %5341 = vmatprep.subr.bf16.mxu0 0
    %5342 = vmatpush1.bf16.msra.mxu0 0
    %5343 = vmatprep.subr.bf16.mxu0 0
    %5344 = vmatpush1.bf16.msra.mxu0 0
    %5345 = vmatprep.subr.bf16.mxu0 0
    %5346 = vmatpush1.bf16.msra.mxu0 0
    %5347 = vmatprep.subr.bf16.mxu0 0
    %5348 = vmatpush1.bf16.msra.mxu0 0
    %5349 = vmatprep.subr.bf16.mxu0 0
    %5350 = vmatpush1.bf16.msra.mxu0 0
    %5351 = vmatprep.subr.bf16.mxu0 0
    %5352 = vmatpush1.bf16.msra.mxu0 0
    %5353 = vmatprep.subr.bf16.mxu0 0
    %5354 = vmatpush1.bf16.msra.mxu0 0
    %5355 = vmatprep.mubr.bf16.mxu0 0
    %5356 = vmatmul.mubr.bf16.gmra.mrb[0].mxu0 %v542
    %v5357 = vpop.f32.mrb[0].mxu0
    %v5358 = vadd.f32 0.0, %v5357
    %v5359 = vpop.f32.mrb[0].mxu0
    %v5360 = vpop.f32.mrb[0].mxu0
    %v5361 = vadd.f32 0.0, %v5360
    %v5362 = vpop.f32.mrb[0].mxu0
    %5363 = vdwg.mxu0
    %v5364 = vadd.f32 %v5317, %v5358
    %v5365 = vadd.f32 %v5320, %v5361
    %5366 = vmatprep.subr.bf16.mxu0 0
    %5367 = vmatpush1.bf16.msra.mxu0 %v4958
    %5368 = vmatprep.subr.bf16.mxu0 0
    %5369 = vmatpush1.bf16.msra.mxu0 0
    %5370 = vmatprep.subr.bf16.mxu0 0
    %5371 = vmatpush1.bf16.msra.mxu0 0
    %5372 = vmatprep.subr.bf16.mxu0 0
    %5373 = vmatpush1.bf16.msra.mxu0 0
    %5374 = vmatprep.subr.bf16.mxu0 0
    %5375 = vmatpush1.bf16.msra.mxu0 0
    %5376 = vmatprep.subr.bf16.mxu0 0
    %5377 = vmatpush1.bf16.msra.mxu0 0
    %5378 = vmatprep.subr.bf16.mxu0 0
    %5379 = vmatpush1.bf16.msra.mxu0 0
    %5380 = vmatprep.subr.bf16.mxu0 0
    %5381 = vmatpush1.bf16.msra.mxu0 0
    %5382 = vmatprep.subr.bf16.mxu0 0
    %5383 = vmatpush1.bf16.msra.mxu0 0
    %5384 = vmatprep.subr.bf16.mxu0 0
    %5385 = vmatpush1.bf16.msra.mxu0 0
    %5386 = vmatprep.subr.bf16.mxu0 0
    %5387 = vmatpush1.bf16.msra.mxu0 0
    %5388 = vmatprep.subr.bf16.mxu0 0
    %5389 = vmatpush1.bf16.msra.mxu0 0
    %5390 = vmatprep.subr.bf16.mxu0 0
    %5391 = vmatpush1.bf16.msra.mxu0 0
    %5392 = vmatprep.subr.bf16.mxu0 0
    %5393 = vmatpush1.bf16.msra.mxu0 0
    %5394 = vmatprep.subr.bf16.mxu0 0
    %5395 = vmatpush1.bf16.msra.mxu0 0
    %5396 = vmatprep.subr.bf16.mxu0 0
    %5397 = vmatpush1.bf16.msra.mxu0 0
    %5398 = vmatprep.mubr.bf16.mxu0 0
    %5399 = vmatmul.mubr.bf16.gmra.mrb[0].mxu0 %v493
    %v5400 = vpop.f32.mrb[0].mxu0
    %v5401 = vadd.f32 0.0, %v5400
    %v5402 = vpop.f32.mrb[0].mxu0
    %v5403 = vpop.f32.mrb[0].mxu0
    %v5404 = vadd.f32 0.0, %v5403
    %v5405 = vpop.f32.mrb[0].mxu0
    %5406 = vdwg.mxu0
    %5407 = vmatprep.subr.bf16.mxu0 0
    %5408 = vmatpush1.bf16.msra.mxu0 %v4958
    %5409 = vmatprep.subr.bf16.mxu0 0
    %5410 = vmatpush1.bf16.msra.mxu0 0
    %5411 = vmatprep.subr.bf16.mxu0 0
    %5412 = vmatpush1.bf16.msra.mxu0 0
    %5413 = vmatprep.subr.bf16.mxu0 0
    %5414 = vmatpush1.bf16.msra.mxu0 0
    %5415 = vmatprep.subr.bf16.mxu0 0
    %5416 = vmatpush1.bf16.msra.mxu0 0
    %5417 = vmatprep.subr.bf16.mxu0 0
    %5418 = vmatpush1.bf16.msra.mxu0 0
    %5419 = vmatprep.subr.bf16.mxu0 0
    %5420 = vmatpush1.bf16.msra.mxu0 0
    %5421 = vmatprep.subr.bf16.mxu0 0
    %5422 = vmatpush1.bf16.msra.mxu0 0
    %5423 = vmatprep.subr.bf16.mxu0 0
    %5424 = vmatpush1.bf16.msra.mxu0 0
    %5425 = vmatprep.subr.bf16.mxu0 0
    %5426 = vmatpush1.bf16.msra.mxu0 0
    %5427 = vmatprep.subr.bf16.mxu0 0
    %5428 = vmatpush1.bf16.msra.mxu0 0
    %5429 = vmatprep.subr.bf16.mxu0 0
    %5430 = vmatpush1.bf16.msra.mxu0 0
    %5431 = vmatprep.subr.bf16.mxu0 0
    %5432 = vmatpush1.bf16.msra.mxu0 0
    %5433 = vmatprep.subr.bf16.mxu0 0
    %5434 = vmatpush1.bf16.msra.mxu0 0
    %5435 = vmatprep.subr.bf16.mxu0 0
    %5436 = vmatpush1.bf16.msra.mxu0 0
    %5437 = vmatprep.subr.bf16.mxu0 0
    %5438 = vmatpush1.bf16.msra.mxu0 0
    %5439 = vmatprep.mubr.bf16.mxu0 0
    %5440 = vmatmul.mubr.bf16.gmra.mrb[0].mxu0 %v542
    %v5441 = vpop.f32.mrb[0].mxu0
    %v5442 = vadd.f32 %v5401, %v5441
    %v5443 = vpop.f32.mrb[0].mxu0
    %v5444 = vpop.f32.mrb[0].mxu0
    %v5445 = vadd.f32 %v5404, %v5444
    %v5446 = vpop.f32.mrb[0].mxu0
    %5447 = vdwg.mxu0
    %5448 = vmatprep.subr.bf16.mxu0 0
    %5449 = vmatpush1.bf16.msra.mxu0 %v4988
    %5450 = vmatprep.subr.bf16.mxu0 0
    %5451 = vmatpush1.bf16.msra.mxu0 0
    %5452 = vmatprep.subr.bf16.mxu0 0
    %5453 = vmatpush1.bf16.msra.mxu0 0
    %5454 = vmatprep.subr.bf16.mxu0 0
    %5455 = vmatpush1.bf16.msra.mxu0 0
    %5456 = vmatprep.subr.bf16.mxu0 0
    %5457 = vmatpush1.bf16.msra.mxu0 0
    %5458 = vmatprep.subr.bf16.mxu0 0
    %5459 = vmatpush1.bf16.msra.mxu0 0
    %5460 = vmatprep.subr.bf16.mxu0 0
    %5461 = vmatpush1.bf16.msra.mxu0 0
    %5462 = vmatprep.subr.bf16.mxu0 0
    %5463 = vmatpush1.bf16.msra.mxu0 0
    %5464 = vmatprep.subr.bf16.mxu0 0
    %5465 = vmatpush1.bf16.msra.mxu0 0
    %5466 = vmatprep.subr.bf16.mxu0 0
    %5467 = vmatpush1.bf16.msra.mxu0 0
    %5468 = vmatprep.subr.bf16.mxu0 0
    %5469 = vmatpush1.bf16.msra.mxu0 0
    %5470 = vmatprep.subr.bf16.mxu0 0
    %5471 = vmatpush1.bf16.msra.mxu0 0
    %5472 = vmatprep.subr.bf16.mxu0 0
    %5473 = vmatpush1.bf16.msra.mxu0 0
    %5474 = vmatprep.subr.bf16.mxu0 0
    %5475 = vmatpush1.bf16.msra.mxu0 0
    %5476 = vmatprep.subr.bf16.mxu0 0
    %5477 = vmatpush1.bf16.msra.mxu0 0
    %5478 = vmatprep.subr.bf16.mxu0 0
    %5479 = vmatpush1.bf16.msra.mxu0 0
    %5480 = vmatprep.mubr.bf16.mxu0 0
    %5481 = vmatmul.mubr.bf16.gmra.mrb[0].mxu0 %v542
    %v5482 = vpop.f32.mrb[0].mxu0
    %v5483 = vadd.f32 0.0, %v5482
    %v5484 = vpop.f32.mrb[0].mxu0
    %v5485 = vpop.f32.mrb[0].mxu0
    %v5486 = vadd.f32 0.0, %v5485
    %v5487 = vpop.f32.mrb[0].mxu0
    %5488 = vdwg.mxu0
    %v5489 = vadd.f32 %v5442, %v5483
    %v5490 = vadd.f32 %v5445, %v5486
    %5491 = vmatprep.subr.bf16.mxu0 0
    %5492 = vmatpush1.bf16.msra.mxu0 %v4959
    %5493 = vmatprep.subr.bf16.mxu0 0
    %5494 = vmatpush1.bf16.msra.mxu0 0
    %5495 = vmatprep.subr.bf16.mxu0 0
    %5496 = vmatpush1.bf16.msra.mxu0 0
    %5497 = vmatprep.subr.bf16.mxu0 0
    %5498 = vmatpush1.bf16.msra.mxu0 0
    %5499 = vmatprep.subr.bf16.mxu0 0
    %5500 = vmatpush1.bf16.msra.mxu0 0
    %5501 = vmatprep.subr.bf16.mxu0 0
    %5502 = vmatpush1.bf16.msra.mxu0 0
    %5503 = vmatprep.subr.bf16.mxu0 0
    %5504 = vmatpush1.bf16.msra.mxu0 0
    %5505 = vmatprep.subr.bf16.mxu0 0
    %5506 = vmatpush1.bf16.msra.mxu0 0
    %5507 = vmatprep.subr.bf16.mxu0 0
    %5508 = vmatpush1.bf16.msra.mxu0 0
    %5509 = vmatprep.subr.bf16.mxu0 0
    %5510 = vmatpush1.bf16.msra.mxu0 0
    %5511 = vmatprep.subr.bf16.mxu0 0
    %5512 = vmatpush1.bf16.msra.mxu0 0
    %5513 = vmatprep.subr.bf16.mxu0 0
    %5514 = vmatpush1.bf16.msra.mxu0 0
    %5515 = vmatprep.subr.bf16.mxu0 0
    %5516 = vmatpush1.bf16.msra.mxu0 0
    %5517 = vmatprep.subr.bf16.mxu0 0
    %5518 = vmatpush1.bf16.msra.mxu0 0
    %5519 = vmatprep.subr.bf16.mxu0 0
    %5520 = vmatpush1.bf16.msra.mxu0 0
    %5521 = vmatprep.subr.bf16.mxu0 0
    %5522 = vmatpush1.bf16.msra.mxu0 0
    %5523 = vmatprep.mubr.bf16.mxu0 0
    %5524 = vmatmul.mubr.bf16.gmra.mrb[0].mxu0 %v493
    %v5525 = vpop.f32.mrb[0].mxu0
    %v5526 = vadd.f32 0.0, %v5525
    %v5527 = vpop.f32.mrb[0].mxu0
    %v5528 = vpop.f32.mrb[0].mxu0
    %v5529 = vadd.f32 0.0, %v5528
    %v5530 = vpop.f32.mrb[0].mxu0
    %5531 = vdwg.mxu0
    %5532 = vmatprep.subr.bf16.mxu0 0
    %5533 = vmatpush1.bf16.msra.mxu0 %v4959
    %5534 = vmatprep.subr.bf16.mxu0 0
    %5535 = vmatpush1.bf16.msra.mxu0 0
    %5536 = vmatprep.subr.bf16.mxu0 0
    %5537 = vmatpush1.bf16.msra.mxu0 0
    %5538 = vmatprep.subr.bf16.mxu0 0
    %5539 = vmatpush1.bf16.msra.mxu0 0
    %5540 = vmatprep.subr.bf16.mxu0 0
    %5541 = vmatpush1.bf16.msra.mxu0 0
    %5542 = vmatprep.subr.bf16.mxu0 0
    %5543 = vmatpush1.bf16.msra.mxu0 0
    %5544 = vmatprep.subr.bf16.mxu0 0
    %5545 = vmatpush1.bf16.msra.mxu0 0
    %5546 = vmatprep.subr.bf16.mxu0 0
    %5547 = vmatpush1.bf16.msra.mxu0 0
    %5548 = vmatprep.subr.bf16.mxu0 0
    %5549 = vmatpush1.bf16.msra.mxu0 0
    %5550 = vmatprep.subr.bf16.mxu0 0
    %5551 = vmatpush1.bf16.msra.mxu0 0
    %5552 = vmatprep.subr.bf16.mxu0 0
    %5553 = vmatpush1.bf16.msra.mxu0 0
    %5554 = vmatprep.subr.bf16.mxu0 0
    %5555 = vmatpush1.bf16.msra.mxu0 0
    %5556 = vmatprep.subr.bf16.mxu0 0
    %5557 = vmatpush1.bf16.msra.mxu0 0
    %5558 = vmatprep.subr.bf16.mxu0 0
    %5559 = vmatpush1.bf16.msra.mxu0 0
    %5560 = vmatprep.subr.bf16.mxu0 0
    %5561 = vmatpush1.bf16.msra.mxu0 0
    %5562 = vmatprep.subr.bf16.mxu0 0
    %5563 = vmatpush1.bf16.msra.mxu0 0
    %5564 = vmatprep.mubr.bf16.mxu0 0
    %5565 = vmatmul.mubr.bf16.gmra.mrb[0].mxu0 %v542
    %v5566 = vpop.f32.mrb[0].mxu0
    %v5567 = vadd.f32 %v5526, %v5566
    %v5568 = vpop.f32.mrb[0].mxu0
    %v5569 = vpop.f32.mrb[0].mxu0
    %v5570 = vadd.f32 %v5529, %v5569
    %v5571 = vpop.f32.mrb[0].mxu0
    %5572 = vdwg.mxu0
    %5573 = vmatprep.subr.bf16.mxu0 0
    %5574 = vmatpush1.bf16.msra.mxu0 %v4989
    %5575 = vmatprep.subr.bf16.mxu0 0
    %5576 = vmatpush1.bf16.msra.mxu0 0
    %5577 = vmatprep.subr.bf16.mxu0 0
    %5578 = vmatpush1.bf16.msra.mxu0 0
    %5579 = vmatprep.subr.bf16.mxu0 0
    %5580 = vmatpush1.bf16.msra.mxu0 0
    %5581 = vmatprep.subr.bf16.mxu0 0
    %5582 = vmatpush1.bf16.msra.mxu0 0
    %5583 = vmatprep.subr.bf16.mxu0 0
    %5584 = vmatpush1.bf16.msra.mxu0 0
    %5585 = vmatprep.subr.bf16.mxu0 0
    %5586 = vmatpush1.bf16.msra.mxu0 0
    %5587 = vmatprep.subr.bf16.mxu0 0
    %5588 = vmatpush1.bf16.msra.mxu0 0
    %5589 = vmatprep.subr.bf16.mxu0 0
    %5590 = vmatpush1.bf16.msra.mxu0 0
    %5591 = vmatprep.subr.bf16.mxu0 0
    %5592 = vmatpush1.bf16.msra.mxu0 0
    %5593 = vmatprep.subr.bf16.mxu0 0
    %5594 = vmatpush1.bf16.msra.mxu0 0
    %5595 = vmatprep.subr.bf16.mxu0 0
    %5596 = vmatpush1.bf16.msra.mxu0 0
    %5597 = vmatprep.subr.bf16.mxu0 0
    %5598 = vmatpush1.bf16.msra.mxu0 0
    %5599 = vmatprep.subr.bf16.mxu0 0
    %5600 = vmatpush1.bf16.msra.mxu0 0
    %5601 = vmatprep.subr.bf16.mxu0 0
    %5602 = vmatpush1.bf16.msra.mxu0 0
    %5603 = vmatprep.subr.bf16.mxu0 0
    %5604 = vmatpush1.bf16.msra.mxu0 0
    %5605 = vmatprep.mubr.bf16.mxu0 0
    %5606 = vmatmul.mubr.bf16.gmra.mrb[0].mxu0 %v542
    %v5607 = vpop.f32.mrb[0].mxu0
    %v5608 = vadd.f32 0.0, %v5607
    %v5609 = vpop.f32.mrb[0].mxu0
    %v5610 = vpop.f32.mrb[0].mxu0
    %v5611 = vadd.f32 0.0, %v5610
    %v5612 = vpop.f32.mrb[0].mxu0
    %5613 = vdwg.mxu0
    %v5614 = vadd.f32 %v5567, %v5608
    %v5615 = vadd.f32 %v5570, %v5611
    %5616 = vmatprep.subr.bf16.mxu0 0
    %5617 = vmatpush1.bf16.msra.mxu0 %v4960
    %5618 = vmatprep.subr.bf16.mxu0 0
    %5619 = vmatpush1.bf16.msra.mxu0 0
    %5620 = vmatprep.subr.bf16.mxu0 0
    %5621 = vmatpush1.bf16.msra.mxu0 0
    %5622 = vmatprep.subr.bf16.mxu0 0
    %5623 = vmatpush1.bf16.msra.mxu0 0
    %5624 = vmatprep.subr.bf16.mxu0 0
    %5625 = vmatpush1.bf16.msra.mxu0 0
    %5626 = vmatprep.subr.bf16.mxu0 0
    %5627 = vmatpush1.bf16.msra.mxu0 0
    %5628 = vmatprep.subr.bf16.mxu0 0
    %5629 = vmatpush1.bf16.msra.mxu0 0
    %5630 = vmatprep.subr.bf16.mxu0 0
    %5631 = vmatpush1.bf16.msra.mxu0 0
    %5632 = vmatprep.subr.bf16.mxu0 0
    %5633 = vmatpush1.bf16.msra.mxu0 0
    %5634 = vmatprep.subr.bf16.mxu0 0
    %5635 = vmatpush1.bf16.msra.mxu0 0
    %5636 = vmatprep.subr.bf16.mxu0 0
    %5637 = vmatpush1.bf16.msra.mxu0 0
    %5638 = vmatprep.subr.bf16.mxu0 0
    %5639 = vmatpush1.bf16.msra.mxu0 0
    %5640 = vmatprep.subr.bf16.mxu0 0
    %5641 = vmatpush1.bf16.msra.mxu0 0
    %5642 = vmatprep.subr.bf16.mxu0 0
    %5643 = vmatpush1.bf16.msra.mxu0 0
    %5644 = vmatprep.subr.bf16.mxu0 0
    %5645 = vmatpush1.bf16.msra.mxu0 0
    %5646 = vmatprep.subr.bf16.mxu0 0
    %5647 = vmatpush1.bf16.msra.mxu0 0
    %5648 = vmatprep.mubr.bf16.mxu0 0
    %5649 = vmatmul.mubr.bf16.gmra.mrb[0].mxu0 %v493
    %v5650 = vpop.f32.mrb[0].mxu0
    %v5651 = vadd.f32 0.0, %v5650
    %v5652 = vpop.f32.mrb[0].mxu0
    %v5653 = vpop.f32.mrb[0].mxu0
    %v5654 = vadd.f32 0.0, %v5653
    %v5655 = vpop.f32.mrb[0].mxu0
    %5656 = vdwg.mxu0
    %5657 = vmatprep.subr.bf16.mxu0 0
    %5658 = vmatpush1.bf16.msra.mxu0 %v4960
    %5659 = vmatprep.subr.bf16.mxu0 0
    %5660 = vmatpush1.bf16.msra.mxu0 0
    %5661 = vmatprep.subr.bf16.mxu0 0
    %5662 = vmatpush1.bf16.msra.mxu0 0
    %5663 = vmatprep.subr.bf16.mxu0 0
    %5664 = vmatpush1.bf16.msra.mxu0 0
    %5665 = vmatprep.subr.bf16.mxu0 0
    %5666 = vmatpush1.bf16.msra.mxu0 0
    %5667 = vmatprep.subr.bf16.mxu0 0
    %5668 = vmatpush1.bf16.msra.mxu0 0
    %5669 = vmatprep.subr.bf16.mxu0 0
    %5670 = vmatpush1.bf16.msra.mxu0 0
    %5671 = vmatprep.subr.bf16.mxu0 0
    %5672 = vmatpush1.bf16.msra.mxu0 0
    %5673 = vmatprep.subr.bf16.mxu0 0
    %5674 = vmatpush1.bf16.msra.mxu0 0
    %5675 = vmatprep.subr.bf16.mxu0 0
    %5676 = vmatpush1.bf16.msra.mxu0 0
    %5677 = vmatprep.subr.bf16.mxu0 0
    %5678 = vmatpush1.bf16.msra.mxu0 0
    %5679 = vmatprep.subr.bf16.mxu0 0
    %5680 = vmatpush1.bf16.msra.mxu0 0
    %5681 = vmatprep.subr.bf16.mxu0 0
    %5682 = vmatpush1.bf16.msra.mxu0 0
    %5683 = vmatprep.subr.bf16.mxu0 0
    %5684 = vmatpush1.bf16.msra.mxu0 0
    %5685 = vmatprep.subr.bf16.mxu0 0
    %5686 = vmatpush1.bf16.msra.mxu0 0
    %5687 = vmatprep.subr.bf16.mxu0 0
    %5688 = vmatpush1.bf16.msra.mxu0 0
    %5689 = vmatprep.mubr.bf16.mxu0 0
    %5690 = vmatmul.mubr.bf16.gmra.mrb[0].mxu0 %v542
    %v5691 = vpop.f32.mrb[0].mxu0
    %v5692 = vadd.f32 %v5651, %v5691
    %v5693 = vpop.f32.mrb[0].mxu0
    %v5694 = vpop.f32.mrb[0].mxu0
    %v5695 = vadd.f32 %v5654, %v5694
    %v5696 = vpop.f32.mrb[0].mxu0
    %5697 = vdwg.mxu0
    %5698 = vmatprep.subr.bf16.mxu0 0
    %5699 = vmatpush1.bf16.msra.mxu0 %v4990
    %5700 = vmatprep.subr.bf16.mxu0 0
    %5701 = vmatpush1.bf16.msra.mxu0 0
    %5702 = vmatprep.subr.bf16.mxu0 0
    %5703 = vmatpush1.bf16.msra.mxu0 0
    %5704 = vmatprep.subr.bf16.mxu0 0
    %5705 = vmatpush1.bf16.msra.mxu0 0
    %5706 = vmatprep.subr.bf16.mxu0 0
    %5707 = vmatpush1.bf16.msra.mxu0 0
    %5708 = vmatprep.subr.bf16.mxu0 0
    %5709 = vmatpush1.bf16.msra.mxu0 0
    %5710 = vmatprep.subr.bf16.mxu0 0
    %5711 = vmatpush1.bf16.msra.mxu0 0
    %5712 = vmatprep.subr.bf16.mxu0 0
    %5713 = vmatpush1.bf16.msra.mxu0 0
    %5714 = vmatprep.subr.bf16.mxu0 0
    %5715 = vmatpush1.bf16.msra.mxu0 0
    %5716 = vmatprep.subr.bf16.mxu0 0
    %5717 = vmatpush1.bf16.msra.mxu0 0
    %5718 = vmatprep.subr.bf16.mxu0 0
    %5719 = vmatpush1.bf16.msra.mxu0 0
    %5720 = vmatprep.subr.bf16.mxu0 0
    %5721 = vmatpush1.bf16.msra.mxu0 0
    %5722 = vmatprep.subr.bf16.mxu0 0
    %5723 = vmatpush1.bf16.msra.mxu0 0
    %5724 = vmatprep.subr.bf16.mxu0 0
    %5725 = vmatpush1.bf16.msra.mxu0 0
    %5726 = vmatprep.subr.bf16.mxu0 0
    %5727 = vmatpush1.bf16.msra.mxu0 0
    %5728 = vmatprep.subr.bf16.mxu0 0
    %5729 = vmatpush1.bf16.msra.mxu0 0
    %5730 = vmatprep.mubr.bf16.mxu0 0
    %5731 = vmatmul.mubr.bf16.gmra.mrb[0].mxu0 %v542
    %v5732 = vpop.f32.mrb[0].mxu0
    %v5733 = vadd.f32 0.0, %v5732
    %v5734 = vpop.f32.mrb[0].mxu0
    %v5735 = vpop.f32.mrb[0].mxu0
    %v5736 = vadd.f32 0.0, %v5735
    %v5737 = vpop.f32.mrb[0].mxu0
    %5738 = vdwg.mxu0
    %v5739 = vadd.f32 %v5692, %v5733
    %v5740 = vadd.f32 %v5695, %v5736
    %v5741 = vmul.f32 %v626, %v626
    %v5742 = vmul.f32 %v627, %v627
    %v5743 = vmul.f32 %v751, %v751
    %v5744 = vmul.f32 %v752, %v752
    %v5745 = vmul.f32 %v876, %v876
    %v5746 = vmul.f32 %v877, %v877
    %v5747 = vmul.f32 %v1001, %v1001
    %v5748 = vmul.f32 %v1002, %v1002
    %v5749 = vmul.f32 %v1126, %v1126
    %v5750 = vmul.f32 %v1127, %v1127
    %v5751 = vmul.f32 %v1251, %v1251
    %v5752 = vmul.f32 %v1252, %v1252
    %v5753 = vmul.f32 %v1739, %v1739
    %v5754 = vmul.f32 %v1740, %v1740
    %v5755 = vmul.f32 %v1864, %v1864
    %v5756 = vmul.f32 %v1865, %v1865
    %v5757 = vmul.f32 %v1989, %v1989
    %v5758 = vmul.f32 %v1990, %v1990
    %v5759 = vmul.f32 %v2114, %v2114
    %v5760 = vmul.f32 %v2115, %v2115
    %v5761 = vmul.f32 %v2239, %v2239
    %v5762 = vmul.f32 %v2240, %v2240
    %v5763 = vmul.f32 %v2364, %v2364
    %v5764 = vmul.f32 %v2365, %v2365
    %v5765 = vmul.f32 %v626, %v1739
    %v5766 = vmul.f32 %v627, %v1740
    %v5767 = vmul.f32 %v751, %v1864
    %v5768 = vmul.f32 %v752, %v1865
    %v5769 = vmul.f32 %v876, %v1989
    %v5770 = vmul.f32 %v877, %v1990
    %v5771 = vmul.f32 %v1001, %v2114
    %v5772 = vmul.f32 %v1002, %v2115
    %v5773 = vmul.f32 %v1126, %v2239
    %v5774 = vmul.f32 %v1127, %v2240
    %v5775 = vmul.f32 %v1251, %v2364
    %v5776 = vmul.f32 %v1252, %v2365
    %v5777 = vsub.f32 %v2864, %v5741
    %v5778 = vsub.f32 %v2865, %v5742
    %v5779 = vsub.f32 %v2989, %v5743
    %v5780 = vsub.f32 %v2990, %v5744
    %v5781 = vsub.f32 %v3114, %v5745
    %v5782 = vsub.f32 %v3115, %v5746
    %v5783 = vsub.f32 %v3239, %v5747
    %v5784 = vsub.f32 %v3240, %v5748
    %v5785 = vsub.f32 %v3364, %v5749
    %v5786 = vsub.f32 %v3365, %v5750
    %v5787 = vsub.f32 %v3489, %v5751
    %v5788 = vsub.f32 %v3490, %v5752
    %v5789 = vsub.f32 %v3989, %v5753
    %v5790 = vsub.f32 %v3990, %v5754
    %v5791 = vsub.f32 %v4114, %v5755
    %v5792 = vsub.f32 %v4115, %v5756
    %v5793 = vsub.f32 %v4239, %v5757
    %v5794 = vsub.f32 %v4240, %v5758
    %v5795 = vsub.f32 %v4364, %v5759
    %v5796 = vsub.f32 %v4365, %v5760
    %v5797 = vsub.f32 %v4489, %v5761
    %v5798 = vsub.f32 %v4490, %v5762
    %v5799 = vsub.f32 %v4614, %v5763
    %v5800 = vsub.f32 %v4615, %v5764
    %v5801 = vsub.f32 %v5114, %v5765
    %v5802 = vsub.f32 %v5115, %v5766
    %v5803 = vsub.f32 %v5239, %v5767
    %v5804 = vsub.f32 %v5240, %v5768
    %v5805 = vsub.f32 %v5364, %v5769
    %v5806 = vsub.f32 %v5365, %v5770
    %v5807 = vsub.f32 %v5489, %v5771
    %v5808 = vsub.f32 %v5490, %v5772
    %v5809 = vsub.f32 %v5614, %v5773
    %v5810 = vsub.f32 %v5615, %v5774
    %v5811 = vsub.f32 %v5739, %v5775
    %v5812 = vsub.f32 %v5740, %v5776
    %v5813 = vmul.f32 %v5765, 2.0
    %v5814 = vmul.f32 %v5766, 2.0
    %v5815 = vmul.f32 %v5767, 2.0
    %v5816 = vmul.f32 %v5768, 2.0
    %v5817 = vmul.f32 %v5769, 2.0
    %v5818 = vmul.f32 %v5770, 2.0
    %v5819 = vmul.f32 %v5771, 2.0
    %v5820 = vmul.f32 %v5772, 2.0
    %v5821 = vmul.f32 %v5773, 2.0
    %v5822 = vmul.f32 %v5774, 2.0
    %v5823 = vmul.f32 %v5775, 2.0
    %v5824 = vmul.f32 %v5776, 2.0
    %v5825 = vadd.f32 %v5813, 0.0001
    %v5826 = vadd.f32 %v5814, 0.0001
    %v5827 = vadd.f32 %v5815, 0.0001
    %v5828 = vadd.f32 %v5816, 0.0001
    %v5829 = vadd.f32 %v5817, 0.0001
    %v5830 = vadd.f32 %v5818, 0.0001
    %v5831 = vadd.f32 %v5819, 0.0001
    %v5832 = vadd.f32 %v5820, 0.0001
    %v5833 = vadd.f32 %v5821, 0.0001
    %v5834 = vadd.f32 %v5822, 0.0001
    %v5835 = vadd.f32 %v5823, 0.0001
    %v5836 = vadd.f32 %v5824, 0.0001
    %v5837 = vmul.f32 %v5801, 2.0
    %v5838 = vmul.f32 %v5802, 2.0
    %v5839 = vmul.f32 %v5803, 2.0
    %v5840 = vmul.f32 %v5804, 2.0
    %v5841 = vmul.f32 %v5805, 2.0
    %v5842 = vmul.f32 %v5806, 2.0
    %v5843 = vmul.f32 %v5807, 2.0
    %v5844 = vmul.f32 %v5808, 2.0
    %v5845 = vmul.f32 %v5809, 2.0
    %v5846 = vmul.f32 %v5810, 2.0
    %v5847 = vmul.f32 %v5811, 2.0
    %v5848 = vmul.f32 %v5812, 2.0
    %v5849 = vadd.f32 %v5837, 0.0009
    %v5850 = vadd.f32 %v5838, 0.0009
    %v5851 = vadd.f32 %v5839, 0.0009
    %v5852 = vadd.f32 %v5840, 0.0009
    %v5853 = vadd.f32 %v5841, 0.0009
    %v5854 = vadd.f32 %v5842, 0.0009
    %v5855 = vadd.f32 %v5843, 0.0009
    %v5856 = vadd.f32 %v5844, 0.0009
    %v5857 = vadd.f32 %v5845, 0.0009
    %v5858 = vadd.f32 %v5846, 0.0009
    %v5859 = vadd.f32 %v5847, 0.0009
    %v5860 = vadd.f32 %v5848, 0.0009
    %v5861 = vmul.f32 %v5825, %v5849
    %v5862 = vmul.f32 %v5826, %v5850
    %v5863 = vmul.f32 %v5827, %v5851
    %v5864 = vmul.f32 %v5828, %v5852
    %v5865 = vmul.f32 %v5829, %v5853
    %v5866 = vmul.f32 %v5830, %v5854
    %v5867 = vmul.f32 %v5831, %v5855
    %v5868 = vmul.f32 %v5832, %v5856
    %v5869 = vmul.f32 %v5833, %v5857
    %v5870 = vmul.f32 %v5834, %v5858
    %v5871 = vmul.f32 %v5835, %v5859
    %v5872 = vmul.f32 %v5836, %v5860
    %v5873 = vadd.f32 %v5741, %v5753
    %v5874 = vadd.f32 %v5742, %v5754
    %v5875 = vadd.f32 %v5743, %v5755
    %v5876 = vadd.f32 %v5744, %v5756
    %v5877 = vadd.f32 %v5745, %v5757
    %v5878 = vadd.f32 %v5746, %v5758
    %v5879 = vadd.f32 %v5747, %v5759
    %v5880 = vadd.f32 %v5748, %v5760
    %v5881 = vadd.f32 %v5749, %v5761
    %v5882 = vadd.f32 %v5750, %v5762
    %v5883 = vadd.f32 %v5751, %v5763
    %v5884 = vadd.f32 %v5752, %v5764
    %v5885 = vadd.f32 %v5873, 0.0001
    %v5886 = vadd.f32 %v5874, 0.0001
    %v5887 = vadd.f32 %v5875, 0.0001
    %v5888 = vadd.f32 %v5876, 0.0001
    %v5889 = vadd.f32 %v5877, 0.0001
    %v5890 = vadd.f32 %v5878, 0.0001
    %v5891 = vadd.f32 %v5879, 0.0001
    %v5892 = vadd.f32 %v5880, 0.0001
    %v5893 = vadd.f32 %v5881, 0.0001
    %v5894 = vadd.f32 %v5882, 0.0001
    %v5895 = vadd.f32 %v5883, 0.0001
    %v5896 = vadd.f32 %v5884, 0.0001
    %v5897 = vadd.f32 %v5777, %v5789
    %v5898 = vadd.f32 %v5778, %v5790
    %v5899 = vadd.f32 %v5779, %v5791
    %v5900 = vadd.f32 %v5780, %v5792
    %v5901 = vadd.f32 %v5781, %v5793
    %v5902 = vadd.f32 %v5782, %v5794
    %v5903 = vadd.f32 %v5783, %v5795
    %v5904 = vadd.f32 %v5784, %v5796
    %v5905 = vadd.f32 %v5785, %v5797
    %v5906 = vadd.f32 %v5786, %v5798
    %v5907 = vadd.f32 %v5787, %v5799
    %v5908 = vadd.f32 %v5788, %v5800
    %v5909 = vadd.f32 %v5897, 0.0009
    %v5910 = vadd.f32 %v5898, 0.0009
    %v5911 = vadd.f32 %v5899, 0.0009
    %v5912 = vadd.f32 %v5900, 0.0009
    %v5913 = vadd.f32 %v5901, 0.0009
    %v5914 = vadd.f32 %v5902, 0.0009
    %v5915 = vadd.f32 %v5903, 0.0009
    %v5916 = vadd.f32 %v5904, 0.0009
    %v5917 = vadd.f32 %v5905, 0.0009
    %v5918 = vadd.f32 %v5906, 0.0009
    %v5919 = vadd.f32 %v5907, 0.0009
    %v5920 = vadd.f32 %v5908, 0.0009
    %v5921 = vmul.f32 %v5885, %v5909
    %v5922 = vmul.f32 %v5886, %v5910
    %v5923 = vmul.f32 %v5887, %v5911
    %v5924 = vmul.f32 %v5888, %v5912
    %v5925 = vmul.f32 %v5889, %v5913
    %v5926 = vmul.f32 %v5890, %v5914
    %v5927 = vmul.f32 %v5891, %v5915
    %v5928 = vmul.f32 %v5892, %v5916
    %v5929 = vmul.f32 %v5893, %v5917
    %v5930 = vmul.f32 %v5894, %v5918
    %v5931 = vmul.f32 %v5895, %v5919
    %v5932 = vmul.f32 %v5896, %v5920
    %v5933 = vrcp.pop %v5921
    %v5934 = vrcp.pop %v5922
    %v5935 = vrcp.pop %v5923
    %v5936 = vrcp.pop %v5924
    %v5937 = vrcp.pop %v5925
    %v5938 = vrcp.pop %v5926
    %v5939 = vrcp.pop %v5927
    %v5940 = vrcp.pop %v5928
    %v5941 = vrcp.pop %v5929
    %v5942 = vrcp.pop %v5930
    %v5943 = vrcp.pop %v5931
    %v5944 = vrcp.pop %v5932
    %v5945 = vmul.f32 %v5921, %v5933
    %v5946 = vmul.f32 %v5922, %v5934
    %v5947 = vmul.f32 %v5923, %v5935
    %v5948 = vmul.f32 %v5924, %v5936
    %v5949 = vmul.f32 %v5925, %v5937
    %v5950 = vmul.f32 %v5926, %v5938
    %v5951 = vmul.f32 %v5927, %v5939
    %v5952 = vmul.f32 %v5928, %v5940
    %v5953 = vmul.f32 %v5929, %v5941
    %v5954 = vmul.f32 %v5930, %v5942
    %v5955 = vmul.f32 %v5931, %v5943
    %v5956 = vmul.f32 %v5932, %v5944
    %v5957 = vsub.f32 2.0, %v5945
    %v5958 = vsub.f32 2.0, %v5946
    %v5959 = vsub.f32 2.0, %v5947
    %v5960 = vsub.f32 2.0, %v5948
    %v5961 = vsub.f32 2.0, %v5949
    %v5962 = vsub.f32 2.0, %v5950
    %v5963 = vsub.f32 2.0, %v5951
    %v5964 = vsub.f32 2.0, %v5952
    %v5965 = vsub.f32 2.0, %v5953
    %v5966 = vsub.f32 2.0, %v5954
    %v5967 = vsub.f32 2.0, %v5955
    %v5968 = vsub.f32 2.0, %v5956
    %v5969 = vmul.f32 %v5933, %v5957
    %v5970 = vmul.f32 %v5934, %v5958
    %v5971 = vmul.f32 %v5935, %v5959
    %v5972 = vmul.f32 %v5936, %v5960
    %v5973 = vmul.f32 %v5937, %v5961
    %v5974 = vmul.f32 %v5938, %v5962
    %v5975 = vmul.f32 %v5939, %v5963
    %v5976 = vmul.f32 %v5940, %v5964
    %v5977 = vmul.f32 %v5941, %v5965
    %v5978 = vmul.f32 %v5942, %v5966
    %v5979 = vmul.f32 %v5943, %v5967
    %v5980 = vmul.f32 %v5944, %v5968
    %v5981 = vmul.f32 %v5861, %v5969
    %v5982 = vmul.f32 %v5862, %v5970
    %v5983 = vmul.f32 %v5863, %v5971
    %v5984 = vmul.f32 %v5864, %v5972
    %v5985 = vmul.f32 %v5865, %v5973
    %v5986 = vmul.f32 %v5866, %v5974
    %v5987 = vmul.f32 %v5867, %v5975
    %v5988 = vmul.f32 %v5868, %v5976
    %v5989 = vmul.f32 %v5869, %v5977
    %v5990 = vmul.f32 %v5870, %v5978
    %v5991 = vmul.f32 %v5871, %v5979
    %v5992 = vmul.f32 %v5872, %v5980
    %v5993 = vsel %vm153, %v5981, 0.0
    %v5994 = vsel %vm153, %v5982, 0.0
    %v5995 = vadd.f32 %v5993, %v5994
    %v5996 = vrot.slane %v5995, 4
    %v5997 = vadd.f32 %v5995, %v5996
    %v5998 = vrot.slane %v5997, 2
    %v5999 = vadd.f32 %v5997, %v5998
    %v6000 = vrot.slane %v5999, 1
    %v6001 = vadd.f32 %v5999, %v6000
    %v6002 = vsel %vm153, %v5983, 0.0
    %v6003 = vsel %vm153, %v5984, 0.0
    %v6004 = vadd.f32 %v6002, %v6003
    %v6005 = vrot.slane %v6004, 4
    %v6006 = vadd.f32 %v6004, %v6005
    %v6007 = vrot.slane %v6006, 2
    %v6008 = vadd.f32 %v6006, %v6007
    %v6009 = vrot.slane %v6008, 1
    %v6010 = vadd.f32 %v6008, %v6009
    %v6011 = vsel %vm153, %v5985, 0.0
    %v6012 = vsel %vm153, %v5986, 0.0
    %v6013 = vadd.f32 %v6011, %v6012
    %v6014 = vrot.slane %v6013, 4
    %v6015 = vadd.f32 %v6013, %v6014
    %v6016 = vrot.slane %v6015, 2
    %v6017 = vadd.f32 %v6015, %v6016
    %v6018 = vrot.slane %v6017, 1
    %v6019 = vadd.f32 %v6017, %v6018
    %v6020 = vsel %vm153, %v5987, 0.0
    %v6021 = vsel %vm153, %v5988, 0.0
    %v6022 = vadd.f32 %v6020, %v6021
    %v6023 = vrot.slane %v6022, 4
    %v6024 = vadd.f32 %v6022, %v6023
    %v6025 = vrot.slane %v6024, 2
    %v6026 = vadd.f32 %v6024, %v6025
    %v6027 = vrot.slane %v6026, 1
    %v6028 = vadd.f32 %v6026, %v6027
    %v6029 = vsel %vm153, %v5989, 0.0
    %v6030 = vsel %vm153, %v5990, 0.0
    %v6031 = vadd.f32 %v6029, %v6030
    %v6032 = vrot.slane %v6031, 4
    %v6033 = vadd.f32 %v6031, %v6032
    %v6034 = vrot.slane %v6033, 2
    %v6035 = vadd.f32 %v6033, %v6034
    %v6036 = vrot.slane %v6035, 1
    %v6037 = vadd.f32 %v6035, %v6036
    %v6038 = vsel %vm153, %v5991, 0.0
    %v6039 = vsel %vm153, %v5992, 0.0
    %v6040 = vadd.f32 %v6038, %v6039
    %v6041 = vrot.slane %v6040, 4
    %v6042 = vadd.f32 %v6040, %v6041
    %v6043 = vrot.slane %v6042, 2
    %v6044 = vadd.f32 %v6042, %v6043
    %v6045 = vrot.slane %v6044, 1
    %v6046 = vadd.f32 %v6044, %v6045
    %vm6053 = vcmask 1041409
    %v6054 = vsel %vm6053, %v6010, %v6001
    %vm6055 = vcmask 1042434
    %v6056 = vsel %vm6055, %v6019, %v6054
    %vm6057 = vcmask 1043459
    %v6058 = vsel %vm6057, %v6028, %v6056
    %vm6059 = vcmask 1044484
    %v6060 = vsel %vm6059, %v6037, %v6058
    %vm6061 = vcmask 1045509
    %v6062 = vsel %vm6061, %v6046, %v6060
    %vm6064 = vcmask 128000
    %6065 = vst.msk [vmem:[%s6] sm:$0x3f] %vm6064, %v6062
    // Predicated region
    $region42: #{tpu_custom_call.1} parent=1 // pred_check
      _
    $region43: #{tpu_custom_call.1} parent=1 // pred_check_branch
      %6067 = sbr.rel (0) target = $region45
    $region44: #{tpu_custom_call.1} parent=1 // pred_region
      _
    $region45: #{tpu_custom_call.1} parent=1 // pred_fallthru
      _
    // Predicated region
    $region46: #{tpu_custom_call.1} parent=1 // pred_check
      _
    $region47: #{tpu_custom_call.1} parent=1 // pred_check_branch
      %6069 = sbr.rel (0) target = $region49
    $region48: #{tpu_custom_call.1} parent=1 // pred_region
      _
    $region49: #{tpu_custom_call.1} parent=1 // pred_fallthru
      _
    %6070 = vsyncpa [#allocation3], 1
    %6071 = vsyncpa [#allocation5], 1
    %6072 = vsyncpa [#allocation8], 1

</llo_original>
